<compile_context>
chip_gen: v7x
topology: tpu7x:2x2x1
jax: 0.10.0
libtpu: 0.0.40
codegen_flags: <defaults>
</compile_context>

<pallas_src>
import functools

import jax
import jax.numpy as jnp
from jax.experimental import pallas as pl
from jax.experimental.pallas import tpu as pltpu


def _round_up(x, m):
    return (x + m - 1) // m * m


# ----------------------------------------------------------------------------
# Fused Pallas kernel: mask + full_gold + conditional scorer + PAS loss partials
# ----------------------------------------------------------------------------
def _fullgold_kernel(hid_full_ref, hid_q_ref, attn_ref, ng_ref, tgt_ref,
                     wprd_ref, bprd_ref, warg_ref, barg_ref, wcond_ref,
                     out_ref, num_ref, den_ref, h_a_scr,
                     *, num_cases, seq_pad, seq_valid, hidden):
    """Grid = (batch, query-row tile).

    hid_full_ref : (1, S, H)      bf16  embeddings, full (padded) sequence (keys)
    hid_q_ref    : (1, TS, H)     bf16  embeddings, this query-row tile
    attn_ref     : (1, 1, S)      f32   attention mask over keys (1.0 = valid)
    ng_ref       : (1, TS, C*S)   int8  ng_token_mask for this row tile
    tgt_ref      : (1, TS, C*S)   bf16  target for this row tile
    wprd/warg/wcond : (C, H, H)   bf16  per-case weights
    bprd/barg    : (C, 1, H)      f32   per-case biases
    out_ref      : (1, TS, C*S)   f32   masked logits (native layout, flattened)
    num_ref/den_ref : (1, 1, 1)   f32   per-batch loss partials (revisited over tiles)
    h_a_scr      : (C, S, H)      bf16  VMEM scratch: argument reps, full sequence
    """
    C, S, H = num_cases, seq_pad, hidden
    qi = pl.program_id(1)
    neg = jnp.float32(-1024.0)
    scale = jnp.float32(1.0 / (hidden ** 0.5))

    # ---- once per batch element: full-sequence argument reps + zero loss acc ----
    @pl.when(qi == 0)
    def _():
        hid_full = hid_full_ref[0]                                    # (S, H) bf16
        for c in range(C):
            h_a_c = jnp.tanh(
                jnp.dot(hid_full, warg_ref[c],
                        preferred_element_type=jnp.float32) + barg_ref[c])
            h_a_scr[c] = h_a_c.astype(jnp.bfloat16)                   # (S, H)
        num_ref[...] = jnp.zeros_like(num_ref)
        den_ref[...] = jnp.zeros_like(den_ref)

    hid_q = hid_q_ref[0]                                              # (TS, H) bf16
    attn_row = attn_ref[0]                                            # (1, S)  f32

    # static bias that removes padded key columns from softmax / log-softmax so
    # padded math is numerically identical to the unpadded reference
    if seq_valid < S:
        pad_pen = jnp.where(
            jax.lax.broadcasted_iota(jnp.int32, (1, S), 1) < seq_valid,
            jnp.float32(0.0), jnp.float32(-1e30))                     # (1, S)

    num = jnp.zeros((1, 1), jnp.float32)
    den = jnp.zeros((1, 1), jnp.float32)

    # ---- single fused per-case loop: mask -> full_gold -> conditioning ->
    #      bilinear scores -> masked logits -> loss partials ----
    for c in range(C):
        sl = slice(c * S, (c + 1) * S)
        ng_c = ng_ref[0, :, sl].astype(jnp.float32)                   # (TS, S)
        tgt_c = tgt_ref[0, :, sl].astype(jnp.float32)                 # (TS, S)

        mask_c = ng_c * attn_row                                      # ng & attn
        inv_neg_c = (1.0 - mask_c) * neg                              # (~mask)*-1024
        if seq_valid < S:
            inv_neg_c = inv_neg_c + pad_pen

        # full_gold slice -> conditioning attention over keys
        pre_c = tgt_c + inv_neg_c
        m = jnp.max(pre_c, axis=-1, keepdims=True)
        e = jnp.exp(pre_c - m)
        p = e * pl.reciprocal(jnp.sum(e, axis=-1, keepdims=True), approx=True)

        # mixture of argument reps (keys over full sequence, from scratch)
        h_a_c = h_a_scr[c]                                            # (S, H) bf16
        cond_c = jnp.dot(p.astype(jnp.bfloat16), h_a_c,
                         preferred_element_type=jnp.float32)          # (TS, H)

        # predicate rep for this row tile + conditioning projection, scale folded
        h_p_c = jnp.tanh(jnp.dot(hid_q, wprd_ref[c],
                                 preferred_element_type=jnp.float32) + bprd_ref[c])
        h_q_c = (h_p_c + jnp.dot(cond_c.astype(jnp.bfloat16), wcond_ref[c],
                                 preferred_element_type=jnp.float32)) * scale

        # bilinear scores: contract last dims (no transpose in VMEM)
        scores_c = jax.lax.dot_general(
            h_q_c.astype(jnp.bfloat16), h_a_c,
            dimension_numbers=(((1,), (1,)), ((), ())),
            preferred_element_type=jnp.float32)                       # (TS, S)

        logits_c = scores_c + inv_neg_c
        out_ref[0, :, sl] = logits_c                                  # direct store

        # fused PAS cross-entropy partials (log-softmax over the key dim)
        lm = jnp.max(logits_c, axis=-1, keepdims=True)
        lse = jnp.log(jnp.sum(jnp.exp(logits_c - lm), axis=-1, keepdims=True)) + lm
        num = num + jnp.sum((lse - logits_c) * tgt_c, keepdims=True)
        den = den + jnp.sum(tgt_c, keepdims=True)

    num_ref[0] += num
    den_ref[0] += den


# ----------------------------------------------------------------------------
# pallas_call wrapper
# ----------------------------------------------------------------------------
def _conditional_scores_and_loss(hid, attn_f32, ng_i8, tgt_bf16, weights, *,
                                 num_cases, seq_valid, tile_rows=128):
    B, S_pad, H = hid.shape
    C = num_cases
    CS = C * S_pad
    TS = min(tile_rows, S_pad)
    assert S_pad % TS == 0
    n_qt = S_pad // TS

    kernel = functools.partial(_fullgold_kernel, num_cases=C, seq_pad=S_pad,
                               seq_valid=seq_valid, hidden=H)

    def wspec(shape):
        # constant index map + single buffer: weights stay resident, fetched once
        return pl.BlockSpec(shape, lambda b, q: (0,) * len(shape),
                            pipeline_mode=pl.Buffered(1))

    return pl.pallas_call(
        kernel,
        out_shape=(
            jax.ShapeDtypeStruct((B, S_pad, CS), jnp.float32),   # masked logits
            jax.ShapeDtypeStruct((B, 1, 1), jnp.float32),        # loss numerator
            jax.ShapeDtypeStruct((B, 1, 1), jnp.float32),        # loss denominator
        ),
        grid=(B, n_qt),
        in_specs=[
            pl.BlockSpec((1, S_pad, H), lambda b, q: (b, 0, 0)),   # hid, full seq (keys)
            pl.BlockSpec((1, TS, H), lambda b, q: (b, q, 0)),      # hid, query-row tile
            pl.BlockSpec((1, 1, S_pad), lambda b, q: (b, 0, 0)),   # attention mask (keys)
            pl.BlockSpec((1, TS, CS), lambda b, q: (b, q, 0)),     # ng mask  (int8)
            pl.BlockSpec((1, TS, CS), lambda b, q: (b, q, 0)),     # target   (bf16)
            wspec((C, H, H)), wspec((C, 1, H)),                    # predicate proj
            wspec((C, H, H)), wspec((C, 1, H)),                    # argument proj
            wspec((C, H, H)),                                      # conditioning proj
        ],
        out_specs=(
            pl.BlockSpec((1, TS, CS), lambda b, q: (b, q, 0)),
            pl.BlockSpec((1, 1, 1), lambda b, q: (b, 0, 0)),       # revisited over q
            pl.BlockSpec((1, 1, 1), lambda b, q: (b, 0, 0)),       # revisited over q
        ),
        scratch_shapes=[pltpu.VMEM((C, S_pad, H), jnp.bfloat16)],  # argument reps
        compiler_params=pltpu.CompilerParams(
            dimension_semantics=("parallel", "arbitrary"),
            vmem_limit_bytes=32 * 1024 * 1024),
    )(hid, hid, attn_f32, ng_i8, tgt_bf16,
      weights["w_prd"], weights["b_prd"],
      weights["w_arg"], weights["b_arg"], weights["w_cond"])


# ----------------------------------------------------------------------------
# Model glue (embeddings, dtype packing) + forward
# ----------------------------------------------------------------------------
def _pack_params(params):
    return {
        "w_prd": params["w_prd"].astype(jnp.bfloat16),    # (C, H, H)
        "b_prd": params["b_prd"].astype(jnp.float32),     # (C, 1, H)
        "w_arg": params["w_arg"].astype(jnp.bfloat16),
        "b_arg": params["b_arg"].astype(jnp.float32),
        "w_cond": params["w_cond"].astype(jnp.bfloat16),
    }


def full_gold_conditional_forward(params, input_ids, attention_mask, segment_ids,
                                  ng_token_mask, target, *, tile_rows=128):
    """Returns (loss, output) with output in the PyTorch layout (B, S, C, S)."""
    B, S, C, _ = ng_token_mask.shape
    H = params["word_emb"].shape[-1]

    LANE = 128
    S_pad = _round_up(max(S, LANE), LANE)        # lane-dense stores / aligned slices
    pad = S_pad - S

    # glue: token + segment embeddings (stand-in for the BERT encoder inputs)
    # TODO(synk): pretrained BERT encoder inside *ConditionalModel has no in-script
    # equivalent; replaced by deterministic embeddings + synthetic conditional scorer.
    hid = (params["word_emb"][input_ids]
           + params["seg_emb"][segment_ids]).astype(jnp.bfloat16)      # (B, S, H)

    if pad:
        hid = jnp.pad(hid, ((0, 0), (0, pad), (0, 0)))
        attention_mask = jnp.pad(attention_mask, ((0, 0), (0, pad)))
        ng_token_mask = jnp.pad(ng_token_mask, ((0, 0), (0, pad), (0, 0), (0, pad)))
        target = jnp.pad(target, ((0, 0), (0, pad), (0, 0), (0, pad)))

    # narrow dtypes into the kernel; mask & full_gold are built in-kernel
    attn_f32 = attention_mask.astype(jnp.float32).reshape(B, 1, S_pad)
    ng_i8 = ng_token_mask.astype(jnp.int8).reshape(B, S_pad, C * S_pad)
    tgt_bf16 = target.astype(jnp.bfloat16).reshape(B, S_pad, C * S_pad)

    weights = _pack_params(params)

    out_flat, num, den = _conditional_scores_and_loss(
        hid, attn_f32, ng_i8, tgt_bf16, weights,
        num_cases=C, seq_valid=S, tile_rows=tile_rows)

    loss = jnp.sum(num) / (jnp.sum(den) + 1e-6)
    output = out_flat.reshape(B, S_pad, C, S_pad)
    if pad:
        output = output[:, :S, :, :S]
    return loss, output


# ----------------------------------------------------------------------------
# Deterministic parameter init + example run
# ----------------------------------------------------------------------------
def init_params(key, vocab_size, num_segments, num_cases, hidden):
    ks = jax.random.split(key, 5)
    s = 0.1
    return {
        "word_emb": s * jax.random.normal(ks[0], (vocab_size, hidden), jnp.float32),
        "seg_emb":  s * jax.random.normal(ks[1], (num_segments, hidden), jnp.float32),
        "w_prd":    s * jax.random.normal(ks[2], (num_cases, hidden, hidden), jnp.float32),
        "b_prd":    jnp.zeros((num_cases, 1, hidden), jnp.float32),
        "w_arg":    s * jax.random.normal(ks[3], (num_cases, hidden, hidden), jnp.float32),
        "b_arg":    jnp.zeros((num_cases, 1, hidden), jnp.float32),
        "w_cond":   s * jax.random.normal(ks[4], (num_cases, hidden, hidden), jnp.float32),
    }


if __name__ == "__main__":
    B, S, C, H = 2, 8, 4, 32
    VOCAB, NSEG = 100, 2

    root = jax.random.PRNGKey(0)
    k_par, k_ids, k_seg, k_ng, k_tgt = jax.random.split(root, 5)

    params = init_params(k_par, VOCAB, NSEG, C, H)

    input_ids = jax.random.randint(k_ids, (B, S), 0, VOCAB, dtype=jnp.int32)
    segment_ids = jax.random.randint(k_seg, (B, S), 0, NSEG, dtype=jnp.int32)
    lengths = jnp.array([S, S - 2], dtype=jnp.int32)
    attention_mask = jnp.arange(S)[None, :] < lengths[:, None]          # (B, S) bool
    ng_token_mask = jax.random.uniform(k_ng, (B, S, C, S)) > 0.3        # bool
    target = (jax.random.uniform(k_tgt, (B, S, C, S)) < 0.15).astype(jnp.float32)

    forward = jax.jit(full_gold_conditional_forward)
    loss, output = forward(params, input_ids, attention_mask, segment_ids,
                           ng_token_mask, target)
    loss, output = jax.block_until_ready((loss, output))

    assert loss.shape == ()
    assert output.shape == (B, S, C, S)
    assert output.dtype == jnp.float32
    assert bool(jnp.isfinite(loss))
    assert bool(jnp.all(jnp.isfinite(output)))
    print("KERNEL_OK")
</pallas_src>

<mosaic_0001>
module attributes {stable_mosaic.version = 11 : i64} {
  func.func @_fullgold_kernel(%arg0: i32, %arg1: i32, %arg2: memref<1x128x32xbf16, #tpu.memory_space<vmem>>, %arg3: memref<1x128x32xbf16, #tpu.memory_space<vmem>>, %arg4: memref<1x1x128xf32, #tpu.memory_space<vmem>>, %arg5: memref<1x128x512xi8, #tpu.memory_space<vmem>>, %arg6: memref<1x128x512xbf16, #tpu.memory_space<vmem>>, %arg7: memref<4x32x32xbf16, #tpu.memory_space<vmem>>, %arg8: memref<4x1x32xf32, #tpu.memory_space<vmem>>, %arg9: memref<4x32x32xbf16, #tpu.memory_space<vmem>>, %arg10: memref<4x1x32xf32, #tpu.memory_space<vmem>>, %arg11: memref<4x32x32xbf16, #tpu.memory_space<vmem>>, %arg12: memref<1x128x512xf32, #tpu.memory_space<vmem>>, %arg13: memref<1x1x1xf32, #tpu.memory_space<vmem>>, %arg14: memref<1x1x1xf32, #tpu.memory_space<vmem>>, %arg15: memref<4x128x32xbf16, #tpu.memory_space<vmem>>) attributes {dimension_semantics = [#tpu.dimension_semantics<parallel>, #tpu.dimension_semantics<arbitrary>], iteration_bounds = array<i64: 2, 1>, scalar_prefetch = 0 : i64, scratch_operands = 1 : i64, tpu.core_type = #tpu.core_type<tc>, window_params = [{transform_indices = @transform_0, window_bounds = array<i64: 1, 128, 32>}, {transform_indices = @transform_1, window_bounds = array<i64: 1, 128, 32>}, {transform_indices = @transform_2, window_bounds = array<i64: 1, 1, 128>}, {transform_indices = @transform_3, window_bounds = array<i64: 1, 128, 512>}, {transform_indices = @transform_4, window_bounds = array<i64: 1, 128, 512>}, {pipeline_mode = #tpu.pipeline_mode<synchronous>, transform_indices = @transform_5, window_bounds = array<i64: 4, 32, 32>}, {pipeline_mode = #tpu.pipeline_mode<synchronous>, transform_indices = @transform_6, window_bounds = array<i64: 4, 1, 32>}, {pipeline_mode = #tpu.pipeline_mode<synchronous>, transform_indices = @transform_7, window_bounds = array<i64: 4, 32, 32>}, {pipeline_mode = #tpu.pipeline_mode<synchronous>, transform_indices = @transform_8, window_bounds = array<i64: 4, 1, 32>}, {pipeline_mode = #tpu.pipeline_mode<synchronous>, transform_indices = @transform_9, window_bounds = array<i64: 4, 32, 32>}, {transform_indices = @transform_10, window_bounds = array<i64: 1, 128, 512>}, {transform_indices = @transform_11, window_bounds = array<i64: 1, 1, 1>}, {transform_indices = @transform_12, window_bounds = array<i64: 1, 1, 1>}]} {
    %c0_i32 = arith.constant 0 : i32
    %0 = arith.cmpi eq, %arg1, %c0_i32 : i32
    %1 = arith.extui %0 : i1 to i32
    %c0_i32_0 = arith.constant 0 : i32
    %2 = arith.cmpi ne, %1, %c0_i32_0 : i32
    scf.if %2 {
      %c0_151 = arith.constant 0 : index
      %c0_152 = arith.constant 0 : index
      %c0_153 = arith.constant 0 : index
      %323 = vector.load %arg2[%c0_151, %c0_152, %c0_153] : memref<1x128x32xbf16, #tpu.memory_space<vmem>>, vector<1x128x32xbf16>
      %324 = vector.shape_cast %323 : vector<1x128x32xbf16> to vector<128x32xbf16>
      %c0_154 = arith.constant 0 : index
      %c0_155 = arith.constant 0 : index
      %c0_156 = arith.constant 0 : index
      %325 = vector.load %arg9[%c0_154, %c0_155, %c0_156] : memref<4x32x32xbf16, #tpu.memory_space<vmem>>, vector<1x32x32xbf16>
      %326 = vector.shape_cast %325 : vector<1x32x32xbf16> to vector<32x32xbf16>
      %cst_157 = arith.constant dense<0.000000e+00> : vector<128x32xf32>
      %327 = tpu.matmul %324, %326, %cst_157 {dimension_numbers = #tpu.dot_dimension_numbers<[1], [0], [0], [1], [0, 0, 1, 1], [], []>} : vector<128x32xbf16>, vector<32x32xbf16>, vector<128x32xf32> -> vector<128x32xf32>
      %c0_158 = arith.constant 0 : index
      %c0_159 = arith.constant 0 : index
      %c0_160 = arith.constant 0 : index
      %328 = vector.load %arg10[%c0_158, %c0_159, %c0_160] : memref<4x1x32xf32, #tpu.memory_space<vmem>>, vector<1x1x32xf32>
      %329 = vector.shape_cast %328 : vector<1x1x32xf32> to vector<1x32xf32>
      %330 = vector.broadcast %329 : vector<1x32xf32> to vector<128x32xf32>
      %331 = arith.addf %327, %330 : vector<128x32xf32>
      %332 = math.tanh %331 : vector<128x32xf32>
      %333 = arith.truncf %332 : vector<128x32xf32> to vector<128x32xbf16>
      %c0_161 = arith.constant 0 : index
      %c0_162 = arith.constant 0 : index
      %c0_163 = arith.constant 0 : index
      %334 = vector.load %arg15[%c0_161, %c0_162, %c0_163] : memref<4x128x32xbf16, #tpu.memory_space<vmem>>, vector<1x128x32xbf16>
      %335 = vector.shape_cast %334 : vector<1x128x32xbf16> to vector<128x32xbf16>
      %336 = vector.shape_cast %333 : vector<128x32xbf16> to vector<1x128x32xbf16>
      tpu.vector_store %arg15[%c0_161, %c0_162, %c0_163], %336 {strides = array<i32>} : memref<4x128x32xbf16, #tpu.memory_space<vmem>>, vector<1x128x32xbf16>,
      %c1_164 = arith.constant 1 : index
      %c0_165 = arith.constant 0 : index
      %c0_166 = arith.constant 0 : index
      %337 = vector.load %arg9[%c1_164, %c0_165, %c0_166] : memref<4x32x32xbf16, #tpu.memory_space<vmem>>, vector<1x32x32xbf16>
      %338 = vector.shape_cast %337 : vector<1x32x32xbf16> to vector<32x32xbf16>
      %cst_167 = arith.constant dense<0.000000e+00> : vector<128x32xf32>
      %339 = tpu.matmul %324, %338, %cst_167 {dimension_numbers = #tpu.dot_dimension_numbers<[1], [0], [0], [1], [0, 0, 1, 1], [], []>} : vector<128x32xbf16>, vector<32x32xbf16>, vector<128x32xf32> -> vector<128x32xf32>
      %c1_168 = arith.constant 1 : index
      %c0_169 = arith.constant 0 : index
      %c0_170 = arith.constant 0 : index
      %340 = vector.load %arg10[%c1_168, %c0_169, %c0_170] : memref<4x1x32xf32, #tpu.memory_space<vmem>>, vector<1x1x32xf32>
      %341 = vector.shape_cast %340 : vector<1x1x32xf32> to vector<1x32xf32>
      %342 = vector.broadcast %341 : vector<1x32xf32> to vector<128x32xf32>
      %343 = arith.addf %339, %342 : vector<128x32xf32>
      %344 = math.tanh %343 : vector<128x32xf32>
      %345 = arith.truncf %344 : vector<128x32xf32> to vector<128x32xbf16>
      %c1_171 = arith.constant 1 : index
      %c0_172 = arith.constant 0 : index
      %c0_173 = arith.constant 0 : index
      %346 = vector.load %arg15[%c1_171, %c0_172, %c0_173] : memref<4x128x32xbf16, #tpu.memory_space<vmem>>, vector<1x128x32xbf16>
      %347 = vector.shape_cast %346 : vector<1x128x32xbf16> to vector<128x32xbf16>
      %348 = vector.shape_cast %345 : vector<128x32xbf16> to vector<1x128x32xbf16>
      tpu.vector_store %arg15[%c1_171, %c0_172, %c0_173], %348 {strides = array<i32>} : memref<4x128x32xbf16, #tpu.memory_space<vmem>>, vector<1x128x32xbf16>,
      %c2_174 = arith.constant 2 : index
      %c0_175 = arith.constant 0 : index
      %c0_176 = arith.constant 0 : index
      %349 = vector.load %arg9[%c2_174, %c0_175, %c0_176] : memref<4x32x32xbf16, #tpu.memory_space<vmem>>, vector<1x32x32xbf16>
      %350 = vector.shape_cast %349 : vector<1x32x32xbf16> to vector<32x32xbf16>
      %cst_177 = arith.constant dense<0.000000e+00> : vector<128x32xf32>
      %351 = tpu.matmul %324, %350, %cst_177 {dimension_numbers = #tpu.dot_dimension_numbers<[1], [0], [0], [1], [0, 0, 1, 1], [], []>} : vector<128x32xbf16>, vector<32x32xbf16>, vector<128x32xf32> -> vector<128x32xf32>
      %c2_178 = arith.constant 2 : index
      %c0_179 = arith.constant 0 : index
      %c0_180 = arith.constant 0 : index
      %352 = vector.load %arg10[%c2_178, %c0_179, %c0_180] : memref<4x1x32xf32, #tpu.memory_space<vmem>>, vector<1x1x32xf32>
      %353 = vector.shape_cast %352 : vector<1x1x32xf32> to vector<1x32xf32>
      %354 = vector.broadcast %353 : vector<1x32xf32> to vector<128x32xf32>
      %355 = arith.addf %351, %354 : vector<128x32xf32>
      %356 = math.tanh %355 : vector<128x32xf32>
      %357 = arith.truncf %356 : vector<128x32xf32> to vector<128x32xbf16>
      %c2_181 = arith.constant 2 : index
      %c0_182 = arith.constant 0 : index
      %c0_183 = arith.constant 0 : index
      %358 = vector.load %arg15[%c2_181, %c0_182, %c0_183] : memref<4x128x32xbf16, #tpu.memory_space<vmem>>, vector<1x128x32xbf16>
      %359 = vector.shape_cast %358 : vector<1x128x32xbf16> to vector<128x32xbf16>
      %360 = vector.shape_cast %357 : vector<128x32xbf16> to vector<1x128x32xbf16>
      tpu.vector_store %arg15[%c2_181, %c0_182, %c0_183], %360 {strides = array<i32>} : memref<4x128x32xbf16, #tpu.memory_space<vmem>>, vector<1x128x32xbf16>,
      %c3_184 = arith.constant 3 : index
      %c0_185 = arith.constant 0 : index
      %c0_186 = arith.constant 0 : index
      %361 = vector.load %arg9[%c3_184, %c0_185, %c0_186] : memref<4x32x32xbf16, #tpu.memory_space<vmem>>, vector<1x32x32xbf16>
      %362 = vector.shape_cast %361 : vector<1x32x32xbf16> to vector<32x32xbf16>
      %cst_187 = arith.constant dense<0.000000e+00> : vector<128x32xf32>
      %363 = tpu.matmul %324, %362, %cst_187 {dimension_numbers = #tpu.dot_dimension_numbers<[1], [0], [0], [1], [0, 0, 1, 1], [], []>} : vector<128x32xbf16>, vector<32x32xbf16>, vector<128x32xf32> -> vector<128x32xf32>
      %c3_188 = arith.constant 3 : index
      %c0_189 = arith.constant 0 : index
      %c0_190 = arith.constant 0 : index
      %364 = vector.load %arg10[%c3_188, %c0_189, %c0_190] : memref<4x1x32xf32, #tpu.memory_space<vmem>>, vector<1x1x32xf32>
      %365 = vector.shape_cast %364 : vector<1x1x32xf32> to vector<1x32xf32>
      %366 = vector.broadcast %365 : vector<1x32xf32> to vector<128x32xf32>
      %367 = arith.addf %363, %366 : vector<128x32xf32>
      %368 = math.tanh %367 : vector<128x32xf32>
      %369 = arith.truncf %368 : vector<128x32xf32> to vector<128x32xbf16>
      %c3_191 = arith.constant 3 : index
      %c0_192 = arith.constant 0 : index
      %c0_193 = arith.constant 0 : index
      %370 = vector.load %arg15[%c3_191, %c0_192, %c0_193] : memref<4x128x32xbf16, #tpu.memory_space<vmem>>, vector<1x128x32xbf16>
      %371 = vector.shape_cast %370 : vector<1x128x32xbf16> to vector<128x32xbf16>
      %372 = vector.shape_cast %369 : vector<128x32xbf16> to vector<1x128x32xbf16>
      tpu.vector_store %arg15[%c3_191, %c0_192, %c0_193], %372 {strides = array<i32>} : memref<4x128x32xbf16, #tpu.memory_space<vmem>>, vector<1x128x32xbf16>,
      %cst_194 = arith.constant 0.000000e+00 : f32
      %373 = vector.broadcast %cst_194 : f32 to vector<1x1x1xf32>
      %c0_195 = arith.constant 0 : index
      %c0_196 = arith.constant 0 : index
      %c0_197 = arith.constant 0 : index
      %374 = vector.load %arg13[%c0_195, %c0_196, %c0_197] : memref<1x1x1xf32, #tpu.memory_space<vmem>>, vector<1x1x1xf32>
      tpu.vector_store %arg13[%c0_195, %c0_196, %c0_197], %373 {strides = array<i32>} : memref<1x1x1xf32, #tpu.memory_space<vmem>>, vector<1x1x1xf32>,
      %cst_198 = arith.constant 0.000000e+00 : f32
      %375 = vector.broadcast %cst_198 : f32 to vector<1x1x1xf32>
      %c0_199 = arith.constant 0 : index
      %c0_200 = arith.constant 0 : index
      %c0_201 = arith.constant 0 : index
      %376 = vector.load %arg14[%c0_199, %c0_200, %c0_201] : memref<1x1x1xf32, #tpu.memory_space<vmem>>, vector<1x1x1xf32>
      tpu.vector_store %arg14[%c0_199, %c0_200, %c0_201], %375 {strides = array<i32>} : memref<1x1x1xf32, #tpu.memory_space<vmem>>, vector<1x1x1xf32>,
    } else {
    }
    %c0 = arith.constant 0 : index
    %c0_1 = arith.constant 0 : index
    %c0_2 = arith.constant 0 : index
    %3 = vector.load %arg3[%c0, %c0_1, %c0_2] : memref<1x128x32xbf16, #tpu.memory_space<vmem>>, vector<1x128x32xbf16>
    %4 = vector.shape_cast %3 : vector<1x128x32xbf16> to vector<128x32xbf16>
    %c0_3 = arith.constant 0 : index
    %c0_4 = arith.constant 0 : index
    %c0_5 = arith.constant 0 : index
    %5 = vector.load %arg4[%c0_3, %c0_4, %c0_5] : memref<1x1x128xf32, #tpu.memory_space<vmem>>, vector<1x1x128xf32>
    %6 = vector.shape_cast %5 : vector<1x1x128xf32> to vector<1x128xf32>
    %7 = tpu.iota {dimensions = array<i32: 1>} : vector<1x128xi32>
    %c8_i32 = arith.constant 8 : i32
    %8 = vector.broadcast %c8_i32 : i32 to vector<1x128xi32>
    %9 = arith.cmpi slt, %7, %8 : vector<1x128xi32>
    %cst = arith.constant 0.000000e+00 : f32
    %cst_6 = arith.constant -1.000000e+30 : f32
    %10 = vector.broadcast %cst : f32 to vector<1x128xf32>
    %11 = vector.broadcast %cst_6 : f32 to vector<1x128xf32>
    %12 = arith.select %9, %10, %11 : vector<1x128xi1>, vector<1x128xf32>
    %cst_7 = arith.constant 0.000000e+00 : f32
    %13 = vector.broadcast %cst_7 : f32 to vector<1x1xf32>
    %cst_8 = arith.constant 0.000000e+00 : f32
    %14 = vector.broadcast %cst_8 : f32 to vector<1x1xf32>
    %c0_9 = arith.constant 0 : index
    %c0_10 = arith.constant 0 : index
    %c0_11 = arith.constant 0 : index
    %15 = vector.load %arg5[%c0_9, %c0_10, %c0_11] : memref<1x128x512xi8, #tpu.memory_space<vmem>>, vector<1x128x128xi8>
    %16 = vector.shape_cast %15 : vector<1x128x128xi8> to vector<128x128xi8>
    %17 = arith.sitofp %16 : vector<128x128xi8> to vector<128x128xf32>
    %c0_12 = arith.constant 0 : index
    %c0_13 = arith.constant 0 : index
    %c0_14 = arith.constant 0 : index
    %18 = vector.load %arg6[%c0_12, %c0_13, %c0_14] : memref<1x128x512xbf16, #tpu.memory_space<vmem>>, vector<1x128x128xbf16>
    %19 = vector.shape_cast %18 : vector<1x128x128xbf16> to vector<128x128xbf16>
    %20 = arith.extf %19 : vector<128x128xbf16> to vector<128x128xf32>
    %21 = vector.broadcast %6 : vector<1x128xf32> to vector<128x128xf32>
    %22 = arith.mulf %17, %21 : vector<128x128xf32>
    %cst_15 = arith.constant 1.000000e+00 : f32
    %23 = vector.broadcast %cst_15 : f32 to vector<128x128xf32>
    %24 = arith.subf %23, %22 : vector<128x128xf32>
    %cst_16 = arith.constant -1.024000e+03 : f32
    %25 = vector.broadcast %cst_16 : f32 to vector<128x128xf32>
    %26 = arith.mulf %24, %25 : vector<128x128xf32>
    %27 = vector.broadcast %12 : vector<1x128xf32> to vector<128x128xf32>
    %28 = arith.addf %26, %27 : vector<128x128xf32>
    %29 = arith.addf %20, %28 : vector<128x128xf32>
    %cst_17 = arith.constant dense<0xFF800000> : vector<128xf32>
    %30 = vector.multi_reduction <maximumf>, %29, %cst_17 [1] : vector<128x128xf32> to vector<128xf32>
    %31 = vector.shape_cast %30 : vector<128xf32> to vector<128x1xf32>
    %32 = vector.broadcast %31 : vector<128x1xf32> to vector<128x128xf32>
    %33 = arith.subf %29, %32 : vector<128x128xf32>
    %34 = math.exp %33 : vector<128x128xf32>
    %cst_18 = arith.constant dense<0.000000e+00> : vector<128xf32>
    %35 = vector.multi_reduction <add>, %34, %cst_18 [1] : vector<128x128xf32> to vector<128xf32>
    %36 = vector.shape_cast %35 : vector<128xf32> to vector<128x1xf32>
    %37 = tpu.reciprocal %36 {approx = true} : vector<128x1xf32> -> vector<128x1xf32>
    %38 = vector.broadcast %37 : vector<128x1xf32> to vector<128x128xf32>
    %39 = arith.mulf %34, %38 : vector<128x128xf32>
    %c0_19 = arith.constant 0 : index
    %c0_20 = arith.constant 0 : index
    %c0_21 = arith.constant 0 : index
    %40 = vector.load %arg15[%c0_19, %c0_20, %c0_21] : memref<4x128x32xbf16, #tpu.memory_space<vmem>>, vector<1x128x32xbf16>
    %41 = vector.shape_cast %40 : vector<1x128x32xbf16> to vector<128x32xbf16>
    %42 = arith.truncf %39 : vector<128x128xf32> to vector<128x128xbf16>
    %cst_22 = arith.constant dense<0.000000e+00> : vector<128x32xf32>
    %43 = tpu.matmul %42, %41, %cst_22 {dimension_numbers = #tpu.dot_dimension_numbers<[1], [0], [0], [1], [0, 0, 1, 1], [], []>} : vector<128x128xbf16>, vector<128x32xbf16>, vector<128x32xf32> -> vector<128x32xf32>
    %c0_23 = arith.constant 0 : index
    %c0_24 = arith.constant 0 : index
    %c0_25 = arith.constant 0 : index
    %44 = vector.load %arg7[%c0_23, %c0_24, %c0_25] : memref<4x32x32xbf16, #tpu.memory_space<vmem>>, vector<1x32x32xbf16>
    %45 = vector.shape_cast %44 : vector<1x32x32xbf16> to vector<32x32xbf16>
    %cst_26 = arith.constant dense<0.000000e+00> : vector<128x32xf32>
    %46 = tpu.matmul %4, %45, %cst_26 {dimension_numbers = #tpu.dot_dimension_numbers<[1], [0], [0], [1], [0, 0, 1, 1], [], []>} : vector<128x32xbf16>, vector<32x32xbf16>, vector<128x32xf32> -> vector<128x32xf32>
    %c0_27 = arith.constant 0 : index
    %c0_28 = arith.constant 0 : index
    %c0_29 = arith.constant 0 : index
    %47 = vector.load %arg8[%c0_27, %c0_28, %c0_29] : memref<4x1x32xf32, #tpu.memory_space<vmem>>, vector<1x1x32xf32>
    %48 = vector.shape_cast %47 : vector<1x1x32xf32> to vector<1x32xf32>
    %49 = vector.broadcast %48 : vector<1x32xf32> to vector<128x32xf32>
    %50 = arith.addf %46, %49 : vector<128x32xf32>
    %51 = math.tanh %50 : vector<128x32xf32>
    %52 = arith.truncf %43 : vector<128x32xf32> to vector<128x32xbf16>
    %c0_30 = arith.constant 0 : index
    %c0_31 = arith.constant 0 : index
    %c0_32 = arith.constant 0 : index
    %53 = vector.load %arg11[%c0_30, %c0_31, %c0_32] : memref<4x32x32xbf16, #tpu.memory_space<vmem>>, vector<1x32x32xbf16>
    %54 = vector.shape_cast %53 : vector<1x32x32xbf16> to vector<32x32xbf16>
    %cst_33 = arith.constant dense<0.000000e+00> : vector<128x32xf32>
    %55 = tpu.matmul %52, %54, %cst_33 {dimension_numbers = #tpu.dot_dimension_numbers<[1], [0], [0], [1], [0, 0, 1, 1], [], []>} : vector<128x32xbf16>, vector<32x32xbf16>, vector<128x32xf32> -> vector<128x32xf32>
    %56 = arith.addf %51, %55 : vector<128x32xf32>
    %cst_34 = arith.constant 0.176776692 : f32
    %57 = vector.broadcast %cst_34 : f32 to vector<128x32xf32>
    %58 = arith.mulf %56, %57 : vector<128x32xf32>
    %59 = arith.truncf %58 : vector<128x32xf32> to vector<128x32xbf16>
    %cst_35 = arith.constant dense<0.000000e+00> : vector<128x128xf32>
    %60 = tpu.matmul %59, %41, %cst_35 {dimension_numbers = #tpu.dot_dimension_numbers<[1], [1], [0], [0], [0, 0, 1, 0], [], []>} : vector<128x32xbf16>, vector<128x32xbf16>, vector<128x128xf32> -> vector<128x128xf32>
    %61 = arith.addf %60, %28 : vector<128x128xf32>
    %c0_36 = arith.constant 0 : index
    %c0_37 = arith.constant 0 : index
    %c0_38 = arith.constant 0 : index
    %62 = vector.load %arg12[%c0_36, %c0_37, %c0_38] : memref<1x128x512xf32, #tpu.memory_space<vmem>>, vector<1x128x128xf32>
    %63 = vector.shape_cast %62 : vector<1x128x128xf32> to vector<128x128xf32>
    %64 = vector.shape_cast %61 : vector<128x128xf32> to vector<1x128x128xf32>
    tpu.vector_store %arg12[%c0_36, %c0_37, %c0_38], %64 {strides = array<i32>} : memref<1x128x512xf32, #tpu.memory_space<vmem>>, vector<1x128x128xf32>,
    %cst_39 = arith.constant dense<0xFF800000> : vector<128xf32>
    %65 = vector.multi_reduction <maximumf>, %61, %cst_39 [1] : vector<128x128xf32> to vector<128xf32>
    %66 = vector.shape_cast %65 : vector<128xf32> to vector<128x1xf32>
    %67 = vector.broadcast %66 : vector<128x1xf32> to vector<128x128xf32>
    %68 = arith.subf %61, %67 : vector<128x128xf32>
    %69 = math.exp %68 : vector<128x128xf32>
    %cst_40 = arith.constant dense<0.000000e+00> : vector<128xf32>
    %70 = vector.multi_reduction <add>, %69, %cst_40 [1] : vector<128x128xf32> to vector<128xf32>
    %71 = vector.shape_cast %70 : vector<128xf32> to vector<128x1xf32>
    %72 = math.log %71 : vector<128x1xf32>
    %73 = arith.addf %72, %66 : vector<128x1xf32>
    %74 = vector.broadcast %73 : vector<128x1xf32> to vector<128x128xf32>
    %75 = arith.subf %74, %61 : vector<128x128xf32>
    %76 = arith.mulf %75, %20 : vector<128x128xf32>
    %77 = vector.shape_cast %76 : vector<128x128xf32> to vector<1x128x128xf32>
    %cst_41 = arith.constant dense<0.000000e+00> : vector<1xf32>
    %78 = vector.multi_reduction <add>, %77, %cst_41 [1, 2] : vector<1x128x128xf32> to vector<1xf32>
    %79 = vector.shape_cast %78 : vector<1xf32> to vector<1x1x1xf32>
    %80 = vector.extract %79[0, 0, 0] : f32 from vector<1x1x1xf32>
    %81 = vector.broadcast %80 : f32 to vector<1x1xf32>
    %82 = arith.addf %13, %81 : vector<1x1xf32>
    %83 = vector.shape_cast %20 : vector<128x128xf32> to vector<1x128x128xf32>
    %cst_42 = arith.constant dense<0.000000e+00> : vector<1xf32>
    %84 = vector.multi_reduction <add>, %83, %cst_42 [1, 2] : vector<1x128x128xf32> to vector<1xf32>
    %85 = vector.shape_cast %84 : vector<1xf32> to vector<1x1x1xf32>
    %86 = vector.extract %85[0, 0, 0] : f32 from vector<1x1x1xf32>
    %87 = vector.broadcast %86 : f32 to vector<1x1xf32>
    %88 = arith.addf %14, %87 : vector<1x1xf32>
    %c0_43 = arith.constant 0 : index
    %c0_44 = arith.constant 0 : index
    %c128 = arith.constant 128 : index
    %89 = vector.load %arg5[%c0_43, %c0_44, %c128] : memref<1x128x512xi8, #tpu.memory_space<vmem>>, vector<1x128x128xi8>
    %90 = vector.shape_cast %89 : vector<1x128x128xi8> to vector<128x128xi8>
    %91 = arith.sitofp %90 : vector<128x128xi8> to vector<128x128xf32>
    %c0_45 = arith.constant 0 : index
    %c0_46 = arith.constant 0 : index
    %c128_47 = arith.constant 128 : index
    %92 = vector.load %arg6[%c0_45, %c0_46, %c128_47] : memref<1x128x512xbf16, #tpu.memory_space<vmem>>, vector<1x128x128xbf16>
    %93 = vector.shape_cast %92 : vector<1x128x128xbf16> to vector<128x128xbf16>
    %94 = arith.extf %93 : vector<128x128xbf16> to vector<128x128xf32>
    %95 = vector.broadcast %6 : vector<1x128xf32> to vector<128x128xf32>
    %96 = arith.mulf %91, %95 : vector<128x128xf32>
    %cst_48 = arith.constant 1.000000e+00 : f32
    %97 = vector.broadcast %cst_48 : f32 to vector<128x128xf32>
    %98 = arith.subf %97, %96 : vector<128x128xf32>
    %cst_49 = arith.constant -1.024000e+03 : f32
    %99 = vector.broadcast %cst_49 : f32 to vector<128x128xf32>
    %100 = arith.mulf %98, %99 : vector<128x128xf32>
    %101 = vector.broadcast %12 : vector<1x128xf32> to vector<128x128xf32>
    %102 = arith.addf %100, %101 : vector<128x128xf32>
    %103 = arith.addf %94, %102 : vector<128x128xf32>
    %cst_50 = arith.constant dense<0xFF800000> : vector<128xf32>
    %104 = vector.multi_reduction <maximumf>, %103, %cst_50 [1] : vector<128x128xf32> to vector<128xf32>
    %105 = vector.shape_cast %104 : vector<128xf32> to vector<128x1xf32>
    %106 = vector.broadcast %105 : vector<128x1xf32> to vector<128x128xf32>
    %107 = arith.subf %103, %106 : vector<128x128xf32>
    %108 = math.exp %107 : vector<128x128xf32>
    %cst_51 = arith.constant dense<0.000000e+00> : vector<128xf32>
    %109 = vector.multi_reduction <add>, %108, %cst_51 [1] : vector<128x128xf32> to vector<128xf32>
    %110 = vector.shape_cast %109 : vector<128xf32> to vector<128x1xf32>
    %111 = tpu.reciprocal %110 {approx = true} : vector<128x1xf32> -> vector<128x1xf32>
    %112 = vector.broadcast %111 : vector<128x1xf32> to vector<128x128xf32>
    %113 = arith.mulf %108, %112 : vector<128x128xf32>
    %c1 = arith.constant 1 : index
    %c0_52 = arith.constant 0 : index
    %c0_53 = arith.constant 0 : index
    %114 = vector.load %arg15[%c1, %c0_52, %c0_53] : memref<4x128x32xbf16, #tpu.memory_space<vmem>>, vector<1x128x32xbf16>
    %115 = vector.shape_cast %114 : vector<1x128x32xbf16> to vector<128x32xbf16>
    %116 = arith.truncf %113 : vector<128x128xf32> to vector<128x128xbf16>
    %cst_54 = arith.constant dense<0.000000e+00> : vector<128x32xf32>
    %117 = tpu.matmul %116, %115, %cst_54 {dimension_numbers = #tpu.dot_dimension_numbers<[1], [0], [0], [1], [0, 0, 1, 1], [], []>} : vector<128x128xbf16>, vector<128x32xbf16>, vector<128x32xf32> -> vector<128x32xf32>
    %c1_55 = arith.constant 1 : index
    %c0_56 = arith.constant 0 : index
    %c0_57 = arith.constant 0 : index
    %118 = vector.load %arg7[%c1_55, %c0_56, %c0_57] : memref<4x32x32xbf16, #tpu.memory_space<vmem>>, vector<1x32x32xbf16>
    %119 = vector.shape_cast %118 : vector<1x32x32xbf16> to vector<32x32xbf16>
    %cst_58 = arith.constant dense<0.000000e+00> : vector<128x32xf32>
    %120 = tpu.matmul %4, %119, %cst_58 {dimension_numbers = #tpu.dot_dimension_numbers<[1], [0], [0], [1], [0, 0, 1, 1], [], []>} : vector<128x32xbf16>, vector<32x32xbf16>, vector<128x32xf32> -> vector<128x32xf32>
    %c1_59 = arith.constant 1 : index
    %c0_60 = arith.constant 0 : index
    %c0_61 = arith.constant 0 : index
    %121 = vector.load %arg8[%c1_59, %c0_60, %c0_61] : memref<4x1x32xf32, #tpu.memory_space<vmem>>, vector<1x1x32xf32>
    %122 = vector.shape_cast %121 : vector<1x1x32xf32> to vector<1x32xf32>
    %123 = vector.broadcast %122 : vector<1x32xf32> to vector<128x32xf32>
    %124 = arith.addf %120, %123 : vector<128x32xf32>
    %125 = math.tanh %124 : vector<128x32xf32>
    %126 = arith.truncf %117 : vector<128x32xf32> to vector<128x32xbf16>
    %c1_62 = arith.constant 1 : index
    %c0_63 = arith.constant 0 : index
    %c0_64 = arith.constant 0 : index
    %127 = vector.load %arg11[%c1_62, %c0_63, %c0_64] : memref<4x32x32xbf16, #tpu.memory_space<vmem>>, vector<1x32x32xbf16>
    %128 = vector.shape_cast %127 : vector<1x32x32xbf16> to vector<32x32xbf16>
    %cst_65 = arith.constant dense<0.000000e+00> : vector<128x32xf32>
    %129 = tpu.matmul %126, %128, %cst_65 {dimension_numbers = #tpu.dot_dimension_numbers<[1], [0], [0], [1], [0, 0, 1, 1], [], []>} : vector<128x32xbf16>, vector<32x32xbf16>, vector<128x32xf32> -> vector<128x32xf32>
    %130 = arith.addf %125, %129 : vector<128x32xf32>
    %cst_66 = arith.constant 0.176776692 : f32
    %131 = vector.broadcast %cst_66 : f32 to vector<128x32xf32>
    %132 = arith.mulf %130, %131 : vector<128x32xf32>
    %133 = arith.truncf %132 : vector<128x32xf32> to vector<128x32xbf16>
    %cst_67 = arith.constant dense<0.000000e+00> : vector<128x128xf32>
    %134 = tpu.matmul %133, %115, %cst_67 {dimension_numbers = #tpu.dot_dimension_numbers<[1], [1], [0], [0], [0, 0, 1, 0], [], []>} : vector<128x32xbf16>, vector<128x32xbf16>, vector<128x128xf32> -> vector<128x128xf32>
    %135 = arith.addf %134, %102 : vector<128x128xf32>
    %c0_68 = arith.constant 0 : index
    %c0_69 = arith.constant 0 : index
    %c128_70 = arith.constant 128 : index
    %136 = vector.load %arg12[%c0_68, %c0_69, %c128_70] : memref<1x128x512xf32, #tpu.memory_space<vmem>>, vector<1x128x128xf32>
    %137 = vector.shape_cast %136 : vector<1x128x128xf32> to vector<128x128xf32>
    %138 = vector.shape_cast %135 : vector<128x128xf32> to vector<1x128x128xf32>
    tpu.vector_store %arg12[%c0_68, %c0_69, %c128_70], %138 {strides = array<i32>} : memref<1x128x512xf32, #tpu.memory_space<vmem>>, vector<1x128x128xf32>,
    %cst_71 = arith.constant dense<0xFF800000> : vector<128xf32>
    %139 = vector.multi_reduction <maximumf>, %135, %cst_71 [1] : vector<128x128xf32> to vector<128xf32>
    %140 = vector.shape_cast %139 : vector<128xf32> to vector<128x1xf32>
    %141 = vector.broadcast %140 : vector<128x1xf32> to vector<128x128xf32>
    %142 = arith.subf %135, %141 : vector<128x128xf32>
    %143 = math.exp %142 : vector<128x128xf32>
    %cst_72 = arith.constant dense<0.000000e+00> : vector<128xf32>
    %144 = vector.multi_reduction <add>, %143, %cst_72 [1] : vector<128x128xf32> to vector<128xf32>
    %145 = vector.shape_cast %144 : vector<128xf32> to vector<128x1xf32>
    %146 = math.log %145 : vector<128x1xf32>
    %147 = arith.addf %146, %140 : vector<128x1xf32>
    %148 = vector.broadcast %147 : vector<128x1xf32> to vector<128x128xf32>
    %149 = arith.subf %148, %135 : vector<128x128xf32>
    %150 = arith.mulf %149, %94 : vector<128x128xf32>
    %151 = vector.shape_cast %150 : vector<128x128xf32> to vector<1x128x128xf32>
    %cst_73 = arith.constant dense<0.000000e+00> : vector<1xf32>
    %152 = vector.multi_reduction <add>, %151, %cst_73 [1, 2] : vector<1x128x128xf32> to vector<1xf32>
    %153 = vector.shape_cast %152 : vector<1xf32> to vector<1x1x1xf32>
    %154 = vector.extract %153[0, 0, 0] : f32 from vector<1x1x1xf32>
    %155 = vector.broadcast %154 : f32 to vector<1x1xf32>
    %156 = arith.addf %82, %155 : vector<1x1xf32>
    %157 = vector.shape_cast %94 : vector<128x128xf32> to vector<1x128x128xf32>
    %cst_74 = arith.constant dense<0.000000e+00> : vector<1xf32>
    %158 = vector.multi_reduction <add>, %157, %cst_74 [1, 2] : vector<1x128x128xf32> to vector<1xf32>
    %159 = vector.shape_cast %158 : vector<1xf32> to vector<1x1x1xf32>
    %160 = vector.extract %159[0, 0, 0] : f32 from vector<1x1x1xf32>
    %161 = vector.broadcast %160 : f32 to vector<1x1xf32>
    %162 = arith.addf %88, %161 : vector<1x1xf32>
    %c0_75 = arith.constant 0 : index
    %c0_76 = arith.constant 0 : index
    %c256 = arith.constant 256 : index
    %163 = vector.load %arg5[%c0_75, %c0_76, %c256] : memref<1x128x512xi8, #tpu.memory_space<vmem>>, vector<1x128x128xi8>
    %164 = vector.shape_cast %163 : vector<1x128x128xi8> to vector<128x128xi8>
    %165 = arith.sitofp %164 : vector<128x128xi8> to vector<128x128xf32>
    %c0_77 = arith.constant 0 : index
    %c0_78 = arith.constant 0 : index
    %c256_79 = arith.constant 256 : index
    %166 = vector.load %arg6[%c0_77, %c0_78, %c256_79] : memref<1x128x512xbf16, #tpu.memory_space<vmem>>, vector<1x128x128xbf16>
    %167 = vector.shape_cast %166 : vector<1x128x128xbf16> to vector<128x128xbf16>
    %168 = arith.extf %167 : vector<128x128xbf16> to vector<128x128xf32>
    %169 = vector.broadcast %6 : vector<1x128xf32> to vector<128x128xf32>
    %170 = arith.mulf %165, %169 : vector<128x128xf32>
    %cst_80 = arith.constant 1.000000e+00 : f32
    %171 = vector.broadcast %cst_80 : f32 to vector<128x128xf32>
    %172 = arith.subf %171, %170 : vector<128x128xf32>
    %cst_81 = arith.constant -1.024000e+03 : f32
    %173 = vector.broadcast %cst_81 : f32 to vector<128x128xf32>
    %174 = arith.mulf %172, %173 : vector<128x128xf32>
    %175 = vector.broadcast %12 : vector<1x128xf32> to vector<128x128xf32>
    %176 = arith.addf %174, %175 : vector<128x128xf32>
    %177 = arith.addf %168, %176 : vector<128x128xf32>
    %cst_82 = arith.constant dense<0xFF800000> : vector<128xf32>
    %178 = vector.multi_reduction <maximumf>, %177, %cst_82 [1] : vector<128x128xf32> to vector<128xf32>
    %179 = vector.shape_cast %178 : vector<128xf32> to vector<128x1xf32>
    %180 = vector.broadcast %179 : vector<128x1xf32> to vector<128x128xf32>
    %181 = arith.subf %177, %180 : vector<128x128xf32>
    %182 = math.exp %181 : vector<128x128xf32>
    %cst_83 = arith.constant dense<0.000000e+00> : vector<128xf32>
    %183 = vector.multi_reduction <add>, %182, %cst_83 [1] : vector<128x128xf32> to vector<128xf32>
    %184 = vector.shape_cast %183 : vector<128xf32> to vector<128x1xf32>
    %185 = tpu.reciprocal %184 {approx = true} : vector<128x1xf32> -> vector<128x1xf32>
    %186 = vector.broadcast %185 : vector<128x1xf32> to vector<128x128xf32>
    %187 = arith.mulf %182, %186 : vector<128x128xf32>
    %c2 = arith.constant 2 : index
    %c0_84 = arith.constant 0 : index
    %c0_85 = arith.constant 0 : index
    %188 = vector.load %arg15[%c2, %c0_84, %c0_85] : memref<4x128x32xbf16, #tpu.memory_space<vmem>>, vector<1x128x32xbf16>
    %189 = vector.shape_cast %188 : vector<1x128x32xbf16> to vector<128x32xbf16>
    %190 = arith.truncf %187 : vector<128x128xf32> to vector<128x128xbf16>
    %cst_86 = arith.constant dense<0.000000e+00> : vector<128x32xf32>
    %191 = tpu.matmul %190, %189, %cst_86 {dimension_numbers = #tpu.dot_dimension_numbers<[1], [0], [0], [1], [0, 0, 1, 1], [], []>} : vector<128x128xbf16>, vector<128x32xbf16>, vector<128x32xf32> -> vector<128x32xf32>
    %c2_87 = arith.constant 2 : index
    %c0_88 = arith.constant 0 : index
    %c0_89 = arith.constant 0 : index
    %192 = vector.load %arg7[%c2_87, %c0_88, %c0_89] : memref<4x32x32xbf16, #tpu.memory_space<vmem>>, vector<1x32x32xbf16>
    %193 = vector.shape_cast %192 : vector<1x32x32xbf16> to vector<32x32xbf16>
    %cst_90 = arith.constant dense<0.000000e+00> : vector<128x32xf32>
    %194 = tpu.matmul %4, %193, %cst_90 {dimension_numbers = #tpu.dot_dimension_numbers<[1], [0], [0], [1], [0, 0, 1, 1], [], []>} : vector<128x32xbf16>, vector<32x32xbf16>, vector<128x32xf32> -> vector<128x32xf32>
    %c2_91 = arith.constant 2 : index
    %c0_92 = arith.constant 0 : index
    %c0_93 = arith.constant 0 : index
    %195 = vector.load %arg8[%c2_91, %c0_92, %c0_93] : memref<4x1x32xf32, #tpu.memory_space<vmem>>, vector<1x1x32xf32>
    %196 = vector.shape_cast %195 : vector<1x1x32xf32> to vector<1x32xf32>
    %197 = vector.broadcast %196 : vector<1x32xf32> to vector<128x32xf32>
    %198 = arith.addf %194, %197 : vector<128x32xf32>
    %199 = math.tanh %198 : vector<128x32xf32>
    %200 = arith.truncf %191 : vector<128x32xf32> to vector<128x32xbf16>
    %c2_94 = arith.constant 2 : index
    %c0_95 = arith.constant 0 : index
    %c0_96 = arith.constant 0 : index
    %201 = vector.load %arg11[%c2_94, %c0_95, %c0_96] : memref<4x32x32xbf16, #tpu.memory_space<vmem>>, vector<1x32x32xbf16>
    %202 = vector.shape_cast %201 : vector<1x32x32xbf16> to vector<32x32xbf16>
    %cst_97 = arith.constant dense<0.000000e+00> : vector<128x32xf32>
    %203 = tpu.matmul %200, %202, %cst_97 {dimension_numbers = #tpu.dot_dimension_numbers<[1], [0], [0], [1], [0, 0, 1, 1], [], []>} : vector<128x32xbf16>, vector<32x32xbf16>, vector<128x32xf32> -> vector<128x32xf32>
    %204 = arith.addf %199, %203 : vector<128x32xf32>
    %cst_98 = arith.constant 0.176776692 : f32
    %205 = vector.broadcast %cst_98 : f32 to vector<128x32xf32>
    %206 = arith.mulf %204, %205 : vector<128x32xf32>
    %207 = arith.truncf %206 : vector<128x32xf32> to vector<128x32xbf16>
    %cst_99 = arith.constant dense<0.000000e+00> : vector<128x128xf32>
    %208 = tpu.matmul %207, %189, %cst_99 {dimension_numbers = #tpu.dot_dimension_numbers<[1], [1], [0], [0], [0, 0, 1, 0], [], []>} : vector<128x32xbf16>, vector<128x32xbf16>, vector<128x128xf32> -> vector<128x128xf32>
    %209 = arith.addf %208, %176 : vector<128x128xf32>
    %c0_100 = arith.constant 0 : index
    %c0_101 = arith.constant 0 : index
    %c256_102 = arith.constant 256 : index
    %210 = vector.load %arg12[%c0_100, %c0_101, %c256_102] : memref<1x128x512xf32, #tpu.memory_space<vmem>>, vector<1x128x128xf32>
    %211 = vector.shape_cast %210 : vector<1x128x128xf32> to vector<128x128xf32>
    %212 = vector.shape_cast %209 : vector<128x128xf32> to vector<1x128x128xf32>
    tpu.vector_store %arg12[%c0_100, %c0_101, %c256_102], %212 {strides = array<i32>} : memref<1x128x512xf32, #tpu.memory_space<vmem>>, vector<1x128x128xf32>,
    %cst_103 = arith.constant dense<0xFF800000> : vector<128xf32>
    %213 = vector.multi_reduction <maximumf>, %209, %cst_103 [1] : vector<128x128xf32> to vector<128xf32>
    %214 = vector.shape_cast %213 : vector<128xf32> to vector<128x1xf32>
    %215 = vector.broadcast %214 : vector<128x1xf32> to vector<128x128xf32>
    %216 = arith.subf %209, %215 : vector<128x128xf32>
    %217 = math.exp %216 : vector<128x128xf32>
    %cst_104 = arith.constant dense<0.000000e+00> : vector<128xf32>
    %218 = vector.multi_reduction <add>, %217, %cst_104 [1] : vector<128x128xf32> to vector<128xf32>
    %219 = vector.shape_cast %218 : vector<128xf32> to vector<128x1xf32>
    %220 = math.log %219 : vector<128x1xf32>
    %221 = arith.addf %220, %214 : vector<128x1xf32>
    %222 = vector.broadcast %221 : vector<128x1xf32> to vector<128x128xf32>
    %223 = arith.subf %222, %209 : vector<128x128xf32>
    %224 = arith.mulf %223, %168 : vector<128x128xf32>
    %225 = vector.shape_cast %224 : vector<128x128xf32> to vector<1x128x128xf32>
    %cst_105 = arith.constant dense<0.000000e+00> : vector<1xf32>
    %226 = vector.multi_reduction <add>, %225, %cst_105 [1, 2] : vector<1x128x128xf32> to vector<1xf32>
    %227 = vector.shape_cast %226 : vector<1xf32> to vector<1x1x1xf32>
    %228 = vector.extract %227[0, 0, 0] : f32 from vector<1x1x1xf32>
    %229 = vector.broadcast %228 : f32 to vector<1x1xf32>
    %230 = arith.addf %156, %229 : vector<1x1xf32>
    %231 = vector.shape_cast %168 : vector<128x128xf32> to vector<1x128x128xf32>
    %cst_106 = arith.constant dense<0.000000e+00> : vector<1xf32>
    %232 = vector.multi_reduction <add>, %231, %cst_106 [1, 2] : vector<1x128x128xf32> to vector<1xf32>
    %233 = vector.shape_cast %232 : vector<1xf32> to vector<1x1x1xf32>
    %234 = vector.extract %233[0, 0, 0] : f32 from vector<1x1x1xf32>
    %235 = vector.broadcast %234 : f32 to vector<1x1xf32>
    %236 = arith.addf %162, %235 : vector<1x1xf32>
    %c0_107 = arith.constant 0 : index
    %c0_108 = arith.constant 0 : index
    %c384 = arith.constant 384 : index
    %237 = vector.load %arg5[%c0_107, %c0_108, %c384] : memref<1x128x512xi8, #tpu.memory_space<vmem>>, vector<1x128x128xi8>
    %238 = vector.shape_cast %237 : vector<1x128x128xi8> to vector<128x128xi8>
    %239 = arith.sitofp %238 : vector<128x128xi8> to vector<128x128xf32>
    %c0_109 = arith.constant 0 : index
    %c0_110 = arith.constant 0 : index
    %c384_111 = arith.constant 384 : index
    %240 = vector.load %arg6[%c0_109, %c0_110, %c384_111] : memref<1x128x512xbf16, #tpu.memory_space<vmem>>, vector<1x128x128xbf16>
    %241 = vector.shape_cast %240 : vector<1x128x128xbf16> to vector<128x128xbf16>
    %242 = arith.extf %241 : vector<128x128xbf16> to vector<128x128xf32>
    %243 = vector.broadcast %6 : vector<1x128xf32> to vector<128x128xf32>
    %244 = arith.mulf %239, %243 : vector<128x128xf32>
    %cst_112 = arith.constant 1.000000e+00 : f32
    %245 = vector.broadcast %cst_112 : f32 to vector<128x128xf32>
    %246 = arith.subf %245, %244 : vector<128x128xf32>
    %cst_113 = arith.constant -1.024000e+03 : f32
    %247 = vector.broadcast %cst_113 : f32 to vector<128x128xf32>
    %248 = arith.mulf %246, %247 : vector<128x128xf32>
    %249 = vector.broadcast %12 : vector<1x128xf32> to vector<128x128xf32>
    %250 = arith.addf %248, %249 : vector<128x128xf32>
    %251 = arith.addf %242, %250 : vector<128x128xf32>
    %cst_114 = arith.constant dense<0xFF800000> : vector<128xf32>
    %252 = vector.multi_reduction <maximumf>, %251, %cst_114 [1] : vector<128x128xf32> to vector<128xf32>
    %253 = vector.shape_cast %252 : vector<128xf32> to vector<128x1xf32>
    %254 = vector.broadcast %253 : vector<128x1xf32> to vector<128x128xf32>
    %255 = arith.subf %251, %254 : vector<128x128xf32>
    %256 = math.exp %255 : vector<128x128xf32>
    %cst_115 = arith.constant dense<0.000000e+00> : vector<128xf32>
    %257 = vector.multi_reduction <add>, %256, %cst_115 [1] : vector<128x128xf32> to vector<128xf32>
    %258 = vector.shape_cast %257 : vector<128xf32> to vector<128x1xf32>
    %259 = tpu.reciprocal %258 {approx = true} : vector<128x1xf32> -> vector<128x1xf32>
    %260 = vector.broadcast %259 : vector<128x1xf32> to vector<128x128xf32>
    %261 = arith.mulf %256, %260 : vector<128x128xf32>
    %c3 = arith.constant 3 : index
    %c0_116 = arith.constant 0 : index
    %c0_117 = arith.constant 0 : index
    %262 = vector.load %arg15[%c3, %c0_116, %c0_117] : memref<4x128x32xbf16, #tpu.memory_space<vmem>>, vector<1x128x32xbf16>
    %263 = vector.shape_cast %262 : vector<1x128x32xbf16> to vector<128x32xbf16>
    %264 = arith.truncf %261 : vector<128x128xf32> to vector<128x128xbf16>
    %cst_118 = arith.constant dense<0.000000e+00> : vector<128x32xf32>
    %265 = tpu.matmul %264, %263, %cst_118 {dimension_numbers = #tpu.dot_dimension_numbers<[1], [0], [0], [1], [0, 0, 1, 1], [], []>} : vector<128x128xbf16>, vector<128x32xbf16>, vector<128x32xf32> -> vector<128x32xf32>
    %c3_119 = arith.constant 3 : index
    %c0_120 = arith.constant 0 : index
    %c0_121 = arith.constant 0 : index
    %266 = vector.load %arg7[%c3_119, %c0_120, %c0_121] : memref<4x32x32xbf16, #tpu.memory_space<vmem>>, vector<1x32x32xbf16>
    %267 = vector.shape_cast %266 : vector<1x32x32xbf16> to vector<32x32xbf16>
    %cst_122 = arith.constant dense<0.000000e+00> : vector<128x32xf32>
    %268 = tpu.matmul %4, %267, %cst_122 {dimension_numbers = #tpu.dot_dimension_numbers<[1], [0], [0], [1], [0, 0, 1, 1], [], []>} : vector<128x32xbf16>, vector<32x32xbf16>, vector<128x32xf32> -> vector<128x32xf32>
    %c3_123 = arith.constant 3 : index
    %c0_124 = arith.constant 0 : index
    %c0_125 = arith.constant 0 : index
    %269 = vector.load %arg8[%c3_123, %c0_124, %c0_125] : memref<4x1x32xf32, #tpu.memory_space<vmem>>, vector<1x1x32xf32>
    %270 = vector.shape_cast %269 : vector<1x1x32xf32> to vector<1x32xf32>
    %271 = vector.broadcast %270 : vector<1x32xf32> to vector<128x32xf32>
    %272 = arith.addf %268, %271 : vector<128x32xf32>
    %273 = math.tanh %272 : vector<128x32xf32>
    %274 = arith.truncf %265 : vector<128x32xf32> to vector<128x32xbf16>
    %c3_126 = arith.constant 3 : index
    %c0_127 = arith.constant 0 : index
    %c0_128 = arith.constant 0 : index
    %275 = vector.load %arg11[%c3_126, %c0_127, %c0_128] : memref<4x32x32xbf16, #tpu.memory_space<vmem>>, vector<1x32x32xbf16>
    %276 = vector.shape_cast %275 : vector<1x32x32xbf16> to vector<32x32xbf16>
    %cst_129 = arith.constant dense<0.000000e+00> : vector<128x32xf32>
    %277 = tpu.matmul %274, %276, %cst_129 {dimension_numbers = #tpu.dot_dimension_numbers<[1], [0], [0], [1], [0, 0, 1, 1], [], []>} : vector<128x32xbf16>, vector<32x32xbf16>, vector<128x32xf32> -> vector<128x32xf32>
    %278 = arith.addf %273, %277 : vector<128x32xf32>
    %cst_130 = arith.constant 0.176776692 : f32
    %279 = vector.broadcast %cst_130 : f32 to vector<128x32xf32>
    %280 = arith.mulf %278, %279 : vector<128x32xf32>
    %281 = arith.truncf %280 : vector<128x32xf32> to vector<128x32xbf16>
    %cst_131 = arith.constant dense<0.000000e+00> : vector<128x128xf32>
    %282 = tpu.matmul %281, %263, %cst_131 {dimension_numbers = #tpu.dot_dimension_numbers<[1], [1], [0], [0], [0, 0, 1, 0], [], []>} : vector<128x32xbf16>, vector<128x32xbf16>, vector<128x128xf32> -> vector<128x128xf32>
    %283 = arith.addf %282, %250 : vector<128x128xf32>
    %c0_132 = arith.constant 0 : index
    %c0_133 = arith.constant 0 : index
    %c384_134 = arith.constant 384 : index
    %284 = vector.load %arg12[%c0_132, %c0_133, %c384_134] : memref<1x128x512xf32, #tpu.memory_space<vmem>>, vector<1x128x128xf32>
    %285 = vector.shape_cast %284 : vector<1x128x128xf32> to vector<128x128xf32>
    %286 = vector.shape_cast %283 : vector<128x128xf32> to vector<1x128x128xf32>
    tpu.vector_store %arg12[%c0_132, %c0_133, %c384_134], %286 {strides = array<i32>} : memref<1x128x512xf32, #tpu.memory_space<vmem>>, vector<1x128x128xf32>,
    %cst_135 = arith.constant dense<0xFF800000> : vector<128xf32>
    %287 = vector.multi_reduction <maximumf>, %283, %cst_135 [1] : vector<128x128xf32> to vector<128xf32>
    %288 = vector.shape_cast %287 : vector<128xf32> to vector<128x1xf32>
    %289 = vector.broadcast %288 : vector<128x1xf32> to vector<128x128xf32>
    %290 = arith.subf %283, %289 : vector<128x128xf32>
    %291 = math.exp %290 : vector<128x128xf32>
    %cst_136 = arith.constant dense<0.000000e+00> : vector<128xf32>
    %292 = vector.multi_reduction <add>, %291, %cst_136 [1] : vector<128x128xf32> to vector<128xf32>
    %293 = vector.shape_cast %292 : vector<128xf32> to vector<128x1xf32>
    %294 = math.log %293 : vector<128x1xf32>
    %295 = arith.addf %294, %288 : vector<128x1xf32>
    %296 = vector.broadcast %295 : vector<128x1xf32> to vector<128x128xf32>
    %297 = arith.subf %296, %283 : vector<128x128xf32>
    %298 = arith.mulf %297, %242 : vector<128x128xf32>
    %299 = vector.shape_cast %298 : vector<128x128xf32> to vector<1x128x128xf32>
    %cst_137 = arith.constant dense<0.000000e+00> : vector<1xf32>
    %300 = vector.multi_reduction <add>, %299, %cst_137 [1, 2] : vector<1x128x128xf32> to vector<1xf32>
    %301 = vector.shape_cast %300 : vector<1xf32> to vector<1x1x1xf32>
    %302 = vector.extract %301[0, 0, 0] : f32 from vector<1x1x1xf32>
    %303 = vector.broadcast %302 : f32 to vector<1x1xf32>
    %304 = arith.addf %230, %303 : vector<1x1xf32>
    %305 = vector.shape_cast %242 : vector<128x128xf32> to vector<1x128x128xf32>
    %cst_138 = arith.constant dense<0.000000e+00> : vector<1xf32>
    %306 = vector.multi_reduction <add>, %305, %cst_138 [1, 2] : vector<1x128x128xf32> to vector<1xf32>
    %307 = vector.shape_cast %306 : vector<1xf32> to vector<1x1x1xf32>
    %308 = vector.extract %307[0, 0, 0] : f32 from vector<1x1x1xf32>
    %309 = vector.broadcast %308 : f32 to vector<1x1xf32>
    %310 = arith.addf %236, %309 : vector<1x1xf32>
    %c0_139 = arith.constant 0 : index
    %c0_140 = arith.constant 0 : index
    %c0_141 = arith.constant 0 : index
    %311 = vector.load %arg13[%c0_139, %c0_140, %c0_141] : memref<1x1x1xf32, #tpu.memory_space<vmem>>, vector<1x1x1xf32>
    %312 = vector.shape_cast %311 : vector<1x1x1xf32> to vector<1x1xf32>
    %313 = arith.addf %312, %304 : vector<1x1xf32>
    %c0_142 = arith.constant 0 : index
    %c0_143 = arith.constant 0 : index
    %c0_144 = arith.constant 0 : index
    %314 = vector.load %arg13[%c0_142, %c0_143, %c0_144] : memref<1x1x1xf32, #tpu.memory_space<vmem>>, vector<1x1x1xf32>
    %315 = vector.shape_cast %314 : vector<1x1x1xf32> to vector<1x1xf32>
    %316 = vector.shape_cast %313 : vector<1x1xf32> to vector<1x1x1xf32>
    tpu.vector_store %arg13[%c0_142, %c0_143, %c0_144], %316 {strides = array<i32>} : memref<1x1x1xf32, #tpu.memory_space<vmem>>, vector<1x1x1xf32>,
    %c0_145 = arith.constant 0 : index
    %c0_146 = arith.constant 0 : index
    %c0_147 = arith.constant 0 : index
    %317 = vector.load %arg14[%c0_145, %c0_146, %c0_147] : memref<1x1x1xf32, #tpu.memory_space<vmem>>, vector<1x1x1xf32>
    %318 = vector.shape_cast %317 : vector<1x1x1xf32> to vector<1x1xf32>
    %319 = arith.addf %318, %310 : vector<1x1xf32>
    %c0_148 = arith.constant 0 : index
    %c0_149 = arith.constant 0 : index
    %c0_150 = arith.constant 0 : index
    %320 = vector.load %arg14[%c0_148, %c0_149, %c0_150] : memref<1x1x1xf32, #tpu.memory_space<vmem>>, vector<1x1x1xf32>
    %321 = vector.shape_cast %320 : vector<1x1x1xf32> to vector<1x1xf32>
    %322 = vector.shape_cast %319 : vector<1x1xf32> to vector<1x1x1xf32>
    tpu.vector_store %arg14[%c0_148, %c0_149, %c0_150], %322 {strides = array<i32>} : memref<1x1x1xf32, #tpu.memory_space<vmem>>, vector<1x1x1xf32>,
    return
  }
  func.func @transform_0(%arg0: i32, %arg1: i32) -> (i32, i32, i32) {
    %c0_i32 = arith.constant 0 : i32
    %c0_i32_0 = arith.constant 0 : i32
    %c0_i32_1 = arith.constant 0 : i32
    return %arg0, %c0_i32, %c0_i32_0 : i32, i32, i32
  }
  func.func @transform_1(%arg0: i32, %arg1: i32) -> (i32, i32, i32) {
    %c0_i32 = arith.constant 0 : i32
    %c0_i32_0 = arith.constant 0 : i32
    return %arg0, %arg1, %c0_i32 : i32, i32, i32
  }
  func.func @transform_2(%arg0: i32, %arg1: i32) -> (i32, i32, i32) {
    %c0_i32 = arith.constant 0 : i32
    %c0_i32_0 = arith.constant 0 : i32
    %c0_i32_1 = arith.constant 0 : i32
    return %arg0, %c0_i32, %c0_i32_0 : i32, i32, i32
  }
  func.func @transform_3(%arg0: i32, %arg1: i32) -> (i32, i32, i32) {
    %c0_i32 = arith.constant 0 : i32
    %c0_i32_0 = arith.constant 0 : i32
    return %arg0, %arg1, %c0_i32 : i32, i32, i32
  }
  func.func @transform_4(%arg0: i32, %arg1: i32) -> (i32, i32, i32) {
    %c0_i32 = arith.constant 0 : i32
    %c0_i32_0 = arith.constant 0 : i32
    return %arg0, %arg1, %c0_i32 : i32, i32, i32
  }
  func.func @transform_5(%arg0: i32, %arg1: i32) -> (i32, i32, i32) {
    %c0_i32 = arith.constant 0 : i32
    %c0_i32_0 = arith.constant 0 : i32
    %c0_i32_1 = arith.constant 0 : i32
    %c0_i32_2 = arith.constant 0 : i32
    return %c0_i32, %c0_i32_0, %c0_i32_1 : i32, i32, i32
  }
  func.func @transform_6(%arg0: i32, %arg1: i32) -> (i32, i32, i32) {
    %c0_i32 = arith.constant 0 : i32
    %c0_i32_0 = arith.constant 0 : i32
    %c0_i32_1 = arith.constant 0 : i32
    %c0_i32_2 = arith.constant 0 : i32
    return %c0_i32, %c0_i32_0, %c0_i32_1 : i32, i32, i32
  }
  func.func @transform_7(%arg0: i32, %arg1: i32) -> (i32, i32, i32) {
    %c0_i32 = arith.constant 0 : i32
    %c0_i32_0 = arith.constant 0 : i32
    %c0_i32_1 = arith.constant 0 : i32
    %c0_i32_2 = arith.constant 0 : i32
    return %c0_i32, %c0_i32_0, %c0_i32_1 : i32, i32, i32
  }
  func.func @transform_8(%arg0: i32, %arg1: i32) -> (i32, i32, i32) {
    %c0_i32 = arith.constant 0 : i32
    %c0_i32_0 = arith.constant 0 : i32
    %c0_i32_1 = arith.constant 0 : i32
    %c0_i32_2 = arith.constant 0 : i32
    return %c0_i32, %c0_i32_0, %c0_i32_1 : i32, i32, i32
  }
  func.func @transform_9(%arg0: i32, %arg1: i32) -> (i32, i32, i32) {
    %c0_i32 = arith.constant 0 : i32
    %c0_i32_0 = arith.constant 0 : i32
    %c0_i32_1 = arith.constant 0 : i32
    %c0_i32_2 = arith.constant 0 : i32
    return %c0_i32, %c0_i32_0, %c0_i32_1 : i32, i32, i32
  }
  func.func @transform_10(%arg0: i32, %arg1: i32) -> (i32, i32, i32) {
    %c0_i32 = arith.constant 0 : i32
    %c0_i32_0 = arith.constant 0 : i32
    return %arg0, %arg1, %c0_i32 : i32, i32, i32
  }
  func.func @transform_11(%arg0: i32, %arg1: i32) -> (i32, i32, i32) {
    %c0_i32 = arith.constant 0 : i32
    %c0_i32_0 = arith.constant 0 : i32
    %c0_i32_1 = arith.constant 0 : i32
    return %arg0, %c0_i32, %c0_i32_0 : i32, i32, i32
  }
  func.func @transform_12(%arg0: i32, %arg1: i32) -> (i32, i32, i32) {
    %c0_i32 = arith.constant 0 : i32
    %c0_i32_0 = arith.constant 0 : i32
    %c0_i32_1 = arith.constant 0 : i32
    return %arg0, %c0_i32, %c0_i32_0 : i32, i32, i32
  }
}

</mosaic_0001>

<llo_original>
// kernel: full_gold_conditional_forward.1
$region0: #{full_gold_conditional_forward.1}
  #allocation0 [shape = 'u32[]', space=smem, size = 0x4, offset = 0x4, fixed_abs, tag = 'smem constant byte address 0x4 - core index']
  #allocation1 [shape = 'u32[144,128]{1,0:T(1,128)}', space=vmem, size = 0x12000, scoped, tag = 'internal scratch']
  #allocation2 [shape = 'bf16[4,128,32]{2,1,0:T(16,128)(2,1)}', space=vmem, size = 0x20000, scoped, tag = 'scratch operand']
  %s0 = inlined_call_operand.vmem [shape: bf16[2,128,32], index: 0, kind: input, shape index: {}, may-alias: {0,1}]
  %s1 = inlined_call_operand.vmem [shape: bf16[2,128,32], index: 1, kind: input, shape index: {}, may-alias: {0,1}]
  %s2 = inlined_call_operand.vmem [shape: f32[2,1,128], index: 2, kind: input, shape index: {}]
  %s3 = inlined_call_operand.vmem [shape: s8[2,128,512], index: 3, kind: input, shape index: {}]
  %s4 = inlined_call_operand.vmem [shape: bf16[2,128,512], index: 4, kind: input, shape index: {}]
  %s5 = inlined_call_operand.vmem [shape: bf16[4,32,32], index: 5, kind: input, shape index: {}]
  %s6 = inlined_call_operand.vmem [shape: f32[4,1,32], index: 6, kind: input, shape index: {}]
  %s7 = inlined_call_operand.vmem [shape: bf16[4,32,32], index: 7, kind: input, shape index: {}]
  %s8 = inlined_call_operand.vmem [shape: f32[4,1,32], index: 8, kind: input, shape index: {}]
  %s9 = inlined_call_operand.vmem [shape: bf16[4,32,32], index: 9, kind: input, shape index: {}]
  %s10 = inlined_call_operand.vmem [shape: f32[2,128,512], index: 10, kind: output, shape index: {0}]
  %s11 = inlined_call_operand.vmem [shape: f32[2,1,1], index: 11, kind: output, shape index: {1}]
  %s12 = inlined_call_operand.vmem [shape: f32[2,1,1], index: 12, kind: output, shape index: {2}]
  %13 = xla_tuple %s10, %s11, %s12
  %s14 = sld [smem:[#allocation0]]
  $region93: #{full_gold_conditional_forward.1} parent=0
    _
  %s16 = ssub.s32 1, %s14
  %s17 = scalar_select 0, %s16, %s14
  loop: start=0, step=1, limit=4
  $region2: #{full_gold_conditional_forward.1} parent=0 // loop_pre_header
    _
  $region3: #{full_gold_conditional_forward.1} parent=0 // loop_header
    %s19 = sphi 0, %s23
    %p20 = scmp.ge.s32.totalorder %s19, 4
    %s26 = sphi 0, %s38
    %s27 = sphi 0, %s34
    %s28 = sphi 0, %s26
    %s29 = sphi 0, %s27
    %s30 = sphi 0, %s28
    %s31 = sphi 0, %s29
    %s41 = sphi 0, %s43
    %s44 = sphi 0, %s41
    %s45 = sphi 0, %s44
    %s61 = sphi 0, %s45
    %s69 = sphi 0, %s71
    %s72 = sphi 0, %s69
    %s73 = sphi 0, %s72
    %s89 = sphi 0, %s73
    %s95 = sphi 0, %s97
    %s98 = sphi 0, %s95
    %s99 = sphi 0, %s98
    %s115 = sphi 0, %s99
    %s123 = sphi 0, %s125
    %s126 = sphi 0, %s123
    %s127 = sphi 0, %s126
    %s143 = sphi 0, %s127
    %s151 = sphi 0, %s153
    %s154 = sphi 0, %s151
    %s155 = sphi 0, %s154
    %s171 = sphi 0, %s155
    %s175 = sphi 0, %s175
    %s177 = sphi 0, %s175
    %s178 = sphi 0, %s177
    %s192 = sphi 0, %s178
    %s196 = sphi 0, %s196
    %s198 = sphi 0, %s196
    %s199 = sphi 0, %s198
    %s213 = sphi 0, %s199
    %s217 = sphi 0, %s217
    %s219 = sphi 0, %s217
    %s220 = sphi 0, %s219
    %s234 = sphi 0, %s220
    %s238 = sphi 0, %s238
    %s240 = sphi 0, %s238
    %s241 = sphi 0, %s240
    %s255 = sphi 0, %s241
    %s259 = sphi 0, %s259
    %s261 = sphi 0, %s259
    %s262 = sphi 0, %s261
    %s276 = sphi 0, %s262
    %s284 = sphi 0, %s286
    %s287 = sphi 0, %s284
    %s288 = sphi 0, %s287
    %s304 = sphi 0, %s288
    %s310 = sphi 0, %s312
    %s313 = sphi 0, %s310
    %s314 = sphi 0, %s313
    %s330 = sphi 0, %s314
    %s336 = sphi 0, %s338
    %s339 = sphi 0, %s336
    %s340 = sphi 0, %s339
    %s356 = sphi 0, %s340
  $region4: #{full_gold_conditional_forward.1} parent=0 // loop_header_branch
    %22 = sbr.rel (%p20) target = $region8
  $region5: #{full_gold_conditional_forward.1} parent=0 // loop_body
    %s24 = ssub.s32 %s19, 1
    %s25 = ssub.s32 %s19, 2
    %s32 = sadd.s32 1, %s27
    %p33 = scmp.ge.s32.totalorder %s32, 1
    %s34 = scalar_select %p33, 0, %s32
    %s35 = sadd.s32 1, %s26
    %s36 = scalar_select %p33, %s35, %s26
    %p37 = scmp.ge.s32.totalorder %s36, 2
    %s38 = scalar_select %p37, 0, %s36
    %s39 = ssub.s32 %s26, %s38
    %p40 = scmp.eq.s32.totalorder %s39, 0
    %s42 = sadd.s32 %s41, 1
    %s43 = scalar_select %p40, %s41, %s42
    %p46 = pneg %p40
    %p47 = scmp.eq.s32.totalorder %s19, 1
    %p48 = por %p46, %p47
    %p49 = scmp.ne.s32.totalorder %s41, %s44
    %p50 = scmp.eq.s32.totalorder %s19, 0
    %p51 = por %p49, %p50
    %p52 = scmp.ne.s32.totalorder %s41, %s44
    %p53 = scmp.eq.s32.totalorder %s24, 1
    %p54 = por %p52, %p53
    %p55 = scmp.ne.s32.totalorder %s44, %s45
    %p56 = scmp.eq.s32.totalorder %s24, 0
    %p57 = por %p55, %p56
    %p58 = scmp.ne.s32.totalorder %s44, %s45
    %p59 = scmp.eq.s32.totalorder %s25, 1
    %p60 = por %p58, %p59
    %p62 = scmp.ne.s32.totalorder %s45, %s61
    %p63 = scmp.eq.s32.totalorder %s25, 0
    %p64 = por %p62, %p63
    %s65 = ssub.s32 %s26, %s38
    %s66 = ssub.s32 %s27, %s34
    %s67 = sor.u32 %s65, %s66
    %p68 = scmp.eq.s32.totalorder %s67, 0
    %s70 = sadd.s32 %s69, 1
    %s71 = scalar_select %p68, %s69, %s70
    %p74 = pneg %p68
    %p75 = scmp.eq.s32.totalorder %s19, 1
    %p76 = por %p74, %p75
    %p77 = scmp.ne.s32.totalorder %s69, %s72
    %p78 = scmp.eq.s32.totalorder %s19, 0
    %p79 = por %p77, %p78
    %p80 = scmp.ne.s32.totalorder %s69, %s72
    %p81 = scmp.eq.s32.totalorder %s24, 1
    %p82 = por %p80, %p81
    %p83 = scmp.ne.s32.totalorder %s72, %s73
    %p84 = scmp.eq.s32.totalorder %s24, 0
    %p85 = por %p83, %p84
    %p86 = scmp.ne.s32.totalorder %s72, %s73
    %p87 = scmp.eq.s32.totalorder %s25, 1
    %p88 = por %p86, %p87
    %p90 = scmp.ne.s32.totalorder %s73, %s89
    %p91 = scmp.eq.s32.totalorder %s25, 0
    %p92 = por %p90, %p91
    %s93 = ssub.s32 %s26, %s38
    %p94 = scmp.eq.s32.totalorder %s93, 0
    %s96 = sadd.s32 %s95, 1
    %s97 = scalar_select %p94, %s95, %s96
    %p100 = pneg %p94
    %p101 = scmp.eq.s32.totalorder %s19, 1
    %p102 = por %p100, %p101
    %p103 = scmp.ne.s32.totalorder %s95, %s98
    %p104 = scmp.eq.s32.totalorder %s19, 0
    %p105 = por %p103, %p104
    %p106 = scmp.ne.s32.totalorder %s95, %s98
    %p107 = scmp.eq.s32.totalorder %s24, 1
    %p108 = por %p106, %p107
    %p109 = scmp.ne.s32.totalorder %s98, %s99
    %p110 = scmp.eq.s32.totalorder %s24, 0
    %p111 = por %p109, %p110
    %p112 = scmp.ne.s32.totalorder %s98, %s99
    %p113 = scmp.eq.s32.totalorder %s25, 1
    %p114 = por %p112, %p113
    %p116 = scmp.ne.s32.totalorder %s99, %s115
    %p117 = scmp.eq.s32.totalorder %s25, 0
    %p118 = por %p116, %p117
    %s119 = ssub.s32 %s26, %s38
    %s120 = ssub.s32 %s27, %s34
    %s121 = sor.u32 %s119, %s120
    %p122 = scmp.eq.s32.totalorder %s121, 0
    %s124 = sadd.s32 %s123, 1
    %s125 = scalar_select %p122, %s123, %s124
    %p128 = pneg %p122
    %p129 = scmp.eq.s32.totalorder %s19, 1
    %p130 = por %p128, %p129
    %p131 = scmp.ne.s32.totalorder %s123, %s126
    %p132 = scmp.eq.s32.totalorder %s19, 0
    %p133 = por %p131, %p132
    %p134 = scmp.ne.s32.totalorder %s123, %s126
    %p135 = scmp.eq.s32.totalorder %s24, 1
    %p136 = por %p134, %p135
    %p137 = scmp.ne.s32.totalorder %s126, %s127
    %p138 = scmp.eq.s32.totalorder %s24, 0
    %p139 = por %p137, %p138
    %p140 = scmp.ne.s32.totalorder %s126, %s127
    %p141 = scmp.eq.s32.totalorder %s25, 1
    %p142 = por %p140, %p141
    %p144 = scmp.ne.s32.totalorder %s127, %s143
    %p145 = scmp.eq.s32.totalorder %s25, 0
    %p146 = por %p144, %p145
    %s147 = ssub.s32 %s26, %s38
    %s148 = ssub.s32 %s27, %s34
    %s149 = sor.u32 %s147, %s148
    %p150 = scmp.eq.s32.totalorder %s149, 0
    %s152 = sadd.s32 %s151, 1
    %s153 = scalar_select %p150, %s151, %s152
    %p156 = pneg %p150
    %p157 = scmp.eq.s32.totalorder %s19, 1
    %p158 = por %p156, %p157
    %p159 = scmp.ne.s32.totalorder %s151, %s154
    %p160 = scmp.eq.s32.totalorder %s19, 0
    %p161 = por %p159, %p160
    %p162 = scmp.ne.s32.totalorder %s151, %s154
    %p163 = scmp.eq.s32.totalorder %s24, 1
    %p164 = por %p162, %p163
    %p165 = scmp.ne.s32.totalorder %s154, %s155
    %p166 = scmp.eq.s32.totalorder %s24, 0
    %p167 = por %p165, %p166
    %p168 = scmp.ne.s32.totalorder %s154, %s155
    %p169 = scmp.eq.s32.totalorder %s25, 1
    %p170 = por %p168, %p169
    %p172 = scmp.ne.s32.totalorder %s155, %s171
    %p173 = scmp.eq.s32.totalorder %s25, 0
    %p174 = por %p172, %p173
    %s176 = sadd.s32 %s175, 1
    %p179 = scmp.eq.s32.totalorder %s19, 1
    %p180 = scmp.ne.s32.totalorder %s175, %s177
    %p181 = scmp.eq.s32.totalorder %s19, 0
    %p182 = por %p180, %p181
    %p183 = scmp.ne.s32.totalorder %s175, %s177
    %p184 = scmp.eq.s32.totalorder %s24, 1
    %p185 = por %p183, %p184
    %p186 = scmp.ne.s32.totalorder %s177, %s178
    %p187 = scmp.eq.s32.totalorder %s24, 0
    %p188 = por %p186, %p187
    %p189 = scmp.ne.s32.totalorder %s177, %s178
    %p190 = scmp.eq.s32.totalorder %s25, 1
    %p191 = por %p189, %p190
    %p193 = scmp.ne.s32.totalorder %s178, %s192
    %p194 = scmp.eq.s32.totalorder %s25, 0
    %p195 = por %p193, %p194
    %s197 = sadd.s32 %s196, 1
    %p200 = scmp.eq.s32.totalorder %s19, 1
    %p201 = scmp.ne.s32.totalorder %s196, %s198
    %p202 = scmp.eq.s32.totalorder %s19, 0
    %p203 = por %p201, %p202
    %p204 = scmp.ne.s32.totalorder %s196, %s198
    %p205 = scmp.eq.s32.totalorder %s24, 1
    %p206 = por %p204, %p205
    %p207 = scmp.ne.s32.totalorder %s198, %s199
    %p208 = scmp.eq.s32.totalorder %s24, 0
    %p209 = por %p207, %p208
    %p210 = scmp.ne.s32.totalorder %s198, %s199
    %p211 = scmp.eq.s32.totalorder %s25, 1
    %p212 = por %p210, %p211
    %p214 = scmp.ne.s32.totalorder %s199, %s213
    %p215 = scmp.eq.s32.totalorder %s25, 0
    %p216 = por %p214, %p215
    %s218 = sadd.s32 %s217, 1
    %p221 = scmp.eq.s32.totalorder %s19, 1
    %p222 = scmp.ne.s32.totalorder %s217, %s219
    %p223 = scmp.eq.s32.totalorder %s19, 0
    %p224 = por %p222, %p223
    %p225 = scmp.ne.s32.totalorder %s217, %s219
    %p226 = scmp.eq.s32.totalorder %s24, 1
    %p227 = por %p225, %p226
    %p228 = scmp.ne.s32.totalorder %s219, %s220
    %p229 = scmp.eq.s32.totalorder %s24, 0
    %p230 = por %p228, %p229
    %p231 = scmp.ne.s32.totalorder %s219, %s220
    %p232 = scmp.eq.s32.totalorder %s25, 1
    %p233 = por %p231, %p232
    %p235 = scmp.ne.s32.totalorder %s220, %s234
    %p236 = scmp.eq.s32.totalorder %s25, 0
    %p237 = por %p235, %p236
    %s239 = sadd.s32 %s238, 1
    %p242 = scmp.eq.s32.totalorder %s19, 1
    %p243 = scmp.ne.s32.totalorder %s238, %s240
    %p244 = scmp.eq.s32.totalorder %s19, 0
    %p245 = por %p243, %p244
    %p246 = scmp.ne.s32.totalorder %s238, %s240
    %p247 = scmp.eq.s32.totalorder %s24, 1
    %p248 = por %p246, %p247
    %p249 = scmp.ne.s32.totalorder %s240, %s241
    %p250 = scmp.eq.s32.totalorder %s24, 0
    %p251 = por %p249, %p250
    %p252 = scmp.ne.s32.totalorder %s240, %s241
    %p253 = scmp.eq.s32.totalorder %s25, 1
    %p254 = por %p252, %p253
    %p256 = scmp.ne.s32.totalorder %s241, %s255
    %p257 = scmp.eq.s32.totalorder %s25, 0
    %p258 = por %p256, %p257
    %s260 = sadd.s32 %s259, 1
    %p263 = scmp.eq.s32.totalorder %s19, 1
    %p264 = scmp.ne.s32.totalorder %s259, %s261
    %p265 = scmp.eq.s32.totalorder %s19, 0
    %p266 = por %p264, %p265
    %p267 = scmp.ne.s32.totalorder %s259, %s261
    %p268 = scmp.eq.s32.totalorder %s24, 1
    %p269 = por %p267, %p268
    %p270 = scmp.ne.s32.totalorder %s261, %s262
    %p271 = scmp.eq.s32.totalorder %s24, 0
    %p272 = por %p270, %p271
    %p273 = scmp.ne.s32.totalorder %s261, %s262
    %p274 = scmp.eq.s32.totalorder %s25, 1
    %p275 = por %p273, %p274
    %p277 = scmp.ne.s32.totalorder %s262, %s276
    %p278 = scmp.eq.s32.totalorder %s25, 0
    %p279 = por %p277, %p278
    %s280 = ssub.s32 %s26, %s38
    %s281 = ssub.s32 %s27, %s34
    %s282 = sor.u32 %s280, %s281
    %p283 = scmp.eq.s32.totalorder %s282, 0
    %s285 = sadd.s32 %s284, 1
    %s286 = scalar_select %p283, %s284, %s285
    %p289 = pneg %p283
    %p290 = scmp.eq.s32.totalorder %s19, 1
    %p291 = por %p289, %p290
    %p292 = scmp.ne.s32.totalorder %s284, %s287
    %p293 = scmp.eq.s32.totalorder %s19, 0
    %p294 = por %p292, %p293
    %p295 = scmp.ne.s32.totalorder %s284, %s287
    %p296 = scmp.eq.s32.totalorder %s24, 1
    %p297 = por %p295, %p296
    %p298 = scmp.ne.s32.totalorder %s287, %s288
    %p299 = scmp.eq.s32.totalorder %s24, 0
    %p300 = por %p298, %p299
    %p301 = scmp.ne.s32.totalorder %s287, %s288
    %p302 = scmp.eq.s32.totalorder %s25, 1
    %p303 = por %p301, %p302
    %p305 = scmp.ne.s32.totalorder %s288, %s304
    %p306 = scmp.eq.s32.totalorder %s25, 0
    %p307 = por %p305, %p306
    %s308 = ssub.s32 %s26, %s38
    %p309 = scmp.eq.s32.totalorder %s308, 0
    %s311 = sadd.s32 %s310, 1
    %s312 = scalar_select %p309, %s310, %s311
    %p315 = pneg %p309
    %p316 = scmp.eq.s32.totalorder %s19, 1
    %p317 = por %p315, %p316
    %p318 = scmp.ne.s32.totalorder %s310, %s313
    %p319 = scmp.eq.s32.totalorder %s19, 0
    %p320 = por %p318, %p319
    %p321 = scmp.ne.s32.totalorder %s310, %s313
    %p322 = scmp.eq.s32.totalorder %s24, 1
    %p323 = por %p321, %p322
    %p324 = scmp.ne.s32.totalorder %s313, %s314
    %p325 = scmp.eq.s32.totalorder %s24, 0
    %p326 = por %p324, %p325
    %p327 = scmp.ne.s32.totalorder %s313, %s314
    %p328 = scmp.eq.s32.totalorder %s25, 1
    %p329 = por %p327, %p328
    %p331 = scmp.ne.s32.totalorder %s314, %s330
    %p332 = scmp.eq.s32.totalorder %s25, 0
    %p333 = por %p331, %p332
    %s334 = ssub.s32 %s26, %s38
    %p335 = scmp.eq.s32.totalorder %s334, 0
    %s337 = sadd.s32 %s336, 1
    %s338 = scalar_select %p335, %s336, %s337
    %p341 = pneg %p335
    %p342 = scmp.eq.s32.totalorder %s19, 1
    %p343 = por %p341, %p342
    %p344 = scmp.ne.s32.totalorder %s336, %s339
    %p345 = scmp.eq.s32.totalorder %s19, 0
    %p346 = por %p344, %p345
    %p347 = scmp.ne.s32.totalorder %s336, %s339
    %p348 = scmp.eq.s32.totalorder %s24, 1
    %p349 = por %p347, %p348
    %p350 = scmp.ne.s32.totalorder %s339, %s340
    %p351 = scmp.eq.s32.totalorder %s24, 0
    %p352 = por %p350, %p351
    %p353 = scmp.ne.s32.totalorder %s339, %s340
    %p354 = scmp.eq.s32.totalorder %s25, 1
    %p355 = por %p353, %p354
    %p357 = scmp.ne.s32.totalorder %s340, %s356
    %p358 = scmp.eq.s32.totalorder %s25, 0
    %p359 = por %p357, %p358
    %p360 = scmp.le.s32.totalorder 1, %s19
    %p361 = scmp.lt.s32.totalorder %s19, 3
    %p362 = pnand %p360, %p361
    %p363 = pneg %p362
    // Predicated region
    $region9: #{full_gold_conditional_forward.1} parent=5 // pred_check
      _
    $region10: #{full_gold_conditional_forward.1} parent=5 // pred_check_branch
      %365 = sbr.rel (%p362) target = $region12
    $region11: #{full_gold_conditional_forward.1} parent=5 // pred_region
      %s366 = ssub.s32 %s19, 1
      // Predicated region
      $region13: #{full_gold_conditional_forward.1} parent=11 // pred_check
        %p367 = pneg %p188
      $region14: #{full_gold_conditional_forward.1} parent=11 // pred_check_branch
        %369 = sbr.rel (%p367) target = $region16
      $region15: #{full_gold_conditional_forward.1} parent=11 // pred_region
        _
      $region16: #{full_gold_conditional_forward.1} parent=11 // pred_fallthru
        _
      // Predicated region
      $region17: #{full_gold_conditional_forward.1} parent=11 // pred_check
        %p370 = pneg %p209
      $region18: #{full_gold_conditional_forward.1} parent=11 // pred_check_branch
        %372 = sbr.rel (%p370) target = $region20
      $region19: #{full_gold_conditional_forward.1} parent=11 // pred_region
        _
      $region20: #{full_gold_conditional_forward.1} parent=11 // pred_fallthru
        _
      // Predicated region
      $region21: #{full_gold_conditional_forward.1} parent=11 // pred_check
        %p373 = pneg %p230
      $region22: #{full_gold_conditional_forward.1} parent=11 // pred_check_branch
        %375 = sbr.rel (%p373) target = $region24
      $region23: #{full_gold_conditional_forward.1} parent=11 // pred_region
        _
      $region24: #{full_gold_conditional_forward.1} parent=11 // pred_fallthru
        _
      // Predicated region
      $region25: #{full_gold_conditional_forward.1} parent=11 // pred_check
        %p376 = pneg %p251
      $region26: #{full_gold_conditional_forward.1} parent=11 // pred_check_branch
        %378 = sbr.rel (%p376) target = $region28
      $region27: #{full_gold_conditional_forward.1} parent=11 // pred_region
        _
      $region28: #{full_gold_conditional_forward.1} parent=11 // pred_fallthru
        _
      // Predicated region
      $region29: #{full_gold_conditional_forward.1} parent=11 // pred_check
        %p379 = pneg %p272
      $region30: #{full_gold_conditional_forward.1} parent=11 // pred_check_branch
        %381 = sbr.rel (%p379) target = $region32
      $region31: #{full_gold_conditional_forward.1} parent=11 // pred_region
        _
      $region32: #{full_gold_conditional_forward.1} parent=11 // pred_fallthru
        _
    $region12: #{full_gold_conditional_forward.1} parent=5 // pred_fallthru
      _
    %p382 = scmp.lt.s32.totalorder %s19, 2
    // Predicated region
    $region33: #{full_gold_conditional_forward.1} parent=5 // pred_check
      %p383 = pneg %p382
    $region34: #{full_gold_conditional_forward.1} parent=5 // pred_check_branch
      %385 = sbr.rel (%p383) target = $region36
    $region35: #{full_gold_conditional_forward.1} parent=5 // pred_region
      // Predicated region
      $region37: #{full_gold_conditional_forward.1} parent=35 // pred_check
        %p386 = pneg %p51
      $region38: #{full_gold_conditional_forward.1} parent=35 // pred_check_branch
        %388 = sbr.rel (%p386) target = $region40
      $region39: #{full_gold_conditional_forward.1} parent=35 // pred_region
        %p389 = scmp.lt.s32.totalorder %s26, 1
        %s390 = scalar_select %p389, %s26, 1
        %s391 = smul.addr %s390, 16
        %s392 = smul.addr %s391, 4
        %s393 = scalar_lea.vmem %s0, %s392
      $region40: #{full_gold_conditional_forward.1} parent=35 // pred_fallthru
        _
      // Predicated region
      $region41: #{full_gold_conditional_forward.1} parent=35 // pred_check
        %p394 = pneg %p79
      $region42: #{full_gold_conditional_forward.1} parent=35 // pred_check_branch
        %396 = sbr.rel (%p394) target = $region44
      $region43: #{full_gold_conditional_forward.1} parent=35 // pred_region
        %s397 = smul.u32 16, %s27
        %p398 = scmp.lt.s32.totalorder %s26, 1
        %s399 = scalar_select %p398, %s26, 1
        %p400 = scmp.lt.s32.totalorder %s397, 15
        %s401 = scalar_select %p400, %s397, 15
        %s402 = smul.addr %s399, 16
        %s403 = sadd.s32 %s401, %s402
        %s404 = smul.addr %s403, 4
        %s405 = scalar_lea.vmem %s1, %s404
        %s406 = smul.u32 16, %s27
      $region44: #{full_gold_conditional_forward.1} parent=35 // pred_fallthru
        _
      // Predicated region
      $region45: #{full_gold_conditional_forward.1} parent=35 // pred_check
        %p407 = pneg %p105
      $region46: #{full_gold_conditional_forward.1} parent=35 // pred_check_branch
        %409 = sbr.rel (%p407) target = $region48
      $region47: #{full_gold_conditional_forward.1} parent=35 // pred_region
        %p410 = scmp.lt.s32.totalorder %s26, 1
        %s411 = scalar_select %p410, %s26, 1
        %s412 = scalar_lea.vmem %s2, %s411
      $region48: #{full_gold_conditional_forward.1} parent=35 // pred_fallthru
        _
      // Predicated region
      $region49: #{full_gold_conditional_forward.1} parent=35 // pred_check
        %p413 = pneg %p133
      $region50: #{full_gold_conditional_forward.1} parent=35 // pred_check_branch
        %415 = sbr.rel (%p413) target = $region52
      $region51: #{full_gold_conditional_forward.1} parent=35 // pred_region
        %s416 = smul.u32 4, %s27
        %p417 = scmp.lt.s32.totalorder %s26, 1
        %s418 = scalar_select %p417, %s26, 1
        %p419 = scmp.lt.s32.totalorder %s416, 3
        %s420 = scalar_select %p419, %s416, 3
        %s421 = smul.addr %s420, 4
        %s422 = smul.addr %s418, 16
        %s423 = sadd.s32 %s421, %s422
        %s424 = smul.addr %s423, 8
        %s425 = scalar_lea.vmem %s3, %s424
        %s426 = smul.u32 4, %s27
      $region52: #{full_gold_conditional_forward.1} parent=35 // pred_fallthru
        _
      // Predicated region
      $region53: #{full_gold_conditional_forward.1} parent=35 // pred_check
        %p427 = pneg %p161
      $region54: #{full_gold_conditional_forward.1} parent=35 // pred_check_branch
        %429 = sbr.rel (%p427) target = $region56
      $region55: #{full_gold_conditional_forward.1} parent=35 // pred_region
        %s430 = smul.u32 16, %s27
        %p431 = scmp.lt.s32.totalorder %s26, 1
        %s432 = scalar_select %p431, %s26, 1
        %p433 = scmp.lt.s32.totalorder %s430, 15
        %s434 = scalar_select %p433, %s430, 15
        %s435 = smul.addr %s434, 4
        %s436 = smul.addr %s432, 64
        %s437 = sadd.s32 %s435, %s436
        %s438 = smul.addr %s437, 4
        %s439 = scalar_lea.vmem %s4, %s438
        %s440 = smul.u32 16, %s27
      $region56: #{full_gold_conditional_forward.1} parent=35 // pred_fallthru
        _
    $region36: #{full_gold_conditional_forward.1} parent=5 // pred_fallthru
      _
    %p441 = scmp.le.s32.totalorder 1, %s19
    %p442 = scmp.lt.s32.totalorder %s19, 3
    %p443 = pnand %p441, %p442
    %p444 = pneg %p443
    // Predicated region
    $region57: #{full_gold_conditional_forward.1} parent=5 // pred_check
      _
    $region58: #{full_gold_conditional_forward.1} parent=5 // pred_check_branch
      %446 = sbr.rel (%p443) target = $region60
    $region59: #{full_gold_conditional_forward.1} parent=5 // pred_region
      %s447 = ssub.s32 %s19, 1
      %p448 = scmp.lt.s32.totalorder %s28, 1
      %s449 = scalar_select %p448, %s28, 1
      %s450 = smul.addr %s449, 16
      %s451 = smul.addr %s450, 4
      %s452 = scalar_lea.vmem %s0, %s451
      %p453 = pneg %p57
      %p454 = pneg %p54
      %s455 = smul.u32 16, %s29
      %p456 = scmp.lt.s32.totalorder %s28, 1
      %s457 = scalar_select %p456, %s28, 1
      %p458 = scmp.lt.s32.totalorder %s455, 15
      %s459 = scalar_select %p458, %s455, 15
      %s460 = smul.addr %s457, 16
      %s461 = sadd.s32 %s459, %s460
      %s462 = smul.addr %s461, 4
      %s463 = scalar_lea.vmem %s1, %s462
      %p464 = pneg %p85
      %p465 = pneg %p82
      %p466 = scmp.lt.s32.totalorder %s28, 1
      %s467 = scalar_select %p466, %s28, 1
      %s468 = scalar_lea.vmem %s2, %s467
      %p469 = pneg %p111
      %p470 = pneg %p108
      %s471 = smul.u32 4, %s29
      %p472 = scmp.lt.s32.totalorder %s28, 1
      %s473 = scalar_select %p472, %s28, 1
      %p474 = scmp.lt.s32.totalorder %s471, 3
      %s475 = scalar_select %p474, %s471, 3
      %s476 = smul.addr %s475, 4
      %s477 = smul.addr %s473, 16
      %s478 = sadd.s32 %s476, %s477
      %s479 = smul.addr %s478, 8
      %s480 = scalar_lea.vmem %s3, %s479
      %p481 = pneg %p139
      %p482 = pneg %p136
      %s483 = smul.u32 16, %s29
      %p484 = scmp.lt.s32.totalorder %s28, 1
      %s485 = scalar_select %p484, %s28, 1
      %p486 = scmp.lt.s32.totalorder %s483, 15
      %s487 = scalar_select %p486, %s483, 15
      %s488 = smul.addr %s487, 4
      %s489 = smul.addr %s485, 64
      %s490 = sadd.s32 %s488, %s489
      %s491 = smul.addr %s490, 4
      %s492 = scalar_lea.vmem %s4, %s491
      %p493 = pneg %p167
      %p494 = pneg %p164
      %p495 = pneg %p188
      %p496 = pneg %p185
      %p497 = pneg %p209
      %p498 = pneg %p206
      %p499 = pneg %p230
      %p500 = pneg %p227
      %p501 = pneg %p251
      %p502 = pneg %p248
      %p503 = pneg %p272
      %p504 = pneg %p269
      %p505 = pneg %p300
      %p506 = pneg %p297
      %s507 = smul.u32 16, %s29
      %p508 = scmp.lt.s32.totalorder %s28, 1
      %s509 = scalar_select %p508, %s28, 1
      %p510 = scmp.lt.s32.totalorder %s507, 15
      %s511 = scalar_select %p510, %s507, 15
      %s512 = smul.addr %s511, 4
      %s513 = smul.addr %s509, 64
      %s514 = sadd.s32 %s512, %s513
      %s515 = smul.addr %s514, 8
      %s516 = scalar_lea.vmem %s10, %s515
      %p517 = pneg %p326
      %p518 = pneg %p323
      %p519 = scmp.lt.s32.totalorder %s28, 1
      %s520 = scalar_select %p519, %s28, 1
      %s521 = scalar_lea.vmem %s11, %s520
      %p522 = pneg %p352
      %p523 = pneg %p349
      %p524 = scmp.lt.s32.totalorder %s28, 1
      %s525 = scalar_select %p524, %s28, 1
      %s526 = scalar_lea.vmem %s12, %s525
      %p527 = scmp.lt.s32.totalorder %s28, 1
      %s528 = scalar_select %p527, %s28, 1
      %s529 = smul.addr %s528, 16
      %s530 = smul.addr %s529, 4
      %s531 = scalar_lea.vmem %s0, %s530
      %s532 = smul.u32 16, %s29
      %p533 = scmp.lt.s32.totalorder %s28, 1
      %s534 = scalar_select %p533, %s28, 1
      %p535 = scmp.lt.s32.totalorder %s532, 15
      %s536 = scalar_select %p535, %s532, 15
      %s537 = smul.addr %s534, 16
      %s538 = sadd.s32 %s536, %s537
      %s539 = smul.addr %s538, 4
      %s540 = scalar_lea.vmem %s1, %s539
      %s541 = smul.u32 16, %s29
      %p542 = scmp.lt.s32.totalorder %s28, 1
      %s543 = scalar_select %p542, %s28, 1
      %s544 = scalar_lea.vmem %s2, %s543
      %s545 = smul.u32 4, %s29
      %p546 = scmp.lt.s32.totalorder %s28, 1
      %s547 = scalar_select %p546, %s28, 1
      %p548 = scmp.lt.s32.totalorder %s545, 3
      %s549 = scalar_select %p548, %s545, 3
      %s550 = smul.addr %s549, 4
      %s551 = smul.addr %s547, 16
      %s552 = sadd.s32 %s550, %s551
      %s553 = smul.addr %s552, 8
      %s554 = scalar_lea.vmem %s3, %s553
      %s555 = smul.u32 4, %s29
      %s556 = smul.u32 16, %s29
      %p557 = scmp.lt.s32.totalorder %s28, 1
      %s558 = scalar_select %p557, %s28, 1
      %p559 = scmp.lt.s32.totalorder %s556, 15
      %s560 = scalar_select %p559, %s556, 15
      %s561 = smul.addr %s560, 4
      %s562 = smul.addr %s558, 64
      %s563 = sadd.s32 %s561, %s562
      %s564 = smul.addr %s563, 4
      %s565 = scalar_lea.vmem %s4, %s564
      %s566 = smul.u32 16, %s29
      %s567 = smul.u32 16, %s29
      %p568 = scmp.lt.s32.totalorder %s28, 1
      %s569 = scalar_select %p568, %s28, 1
      %p570 = scmp.lt.s32.totalorder %s567, 15
      %s571 = scalar_select %p570, %s567, 15
      %s572 = smul.addr %s571, 4
      %s573 = smul.addr %s569, 64
      %s574 = sadd.s32 %s572, %s573
      %s575 = smul.addr %s574, 8
      %s576 = scalar_lea.vmem %s10, %s575
      %s577 = smul.u32 16, %s29
      %p578 = scmp.lt.s32.totalorder %s28, 1
      %s579 = scalar_select %p578, %s28, 1
      %s580 = scalar_lea.vmem %s11, %s579
      %p581 = scmp.lt.s32.totalorder %s28, 1
      %s582 = scalar_select %p581, %s28, 1
      %s583 = scalar_lea.vmem %s12, %s582
      %p585 = scmp.eq.s32.totalorder %s29, 0
      // Predicated region
      $region61: #{full_gold_conditional_forward.1} parent=59 // pred_check
        %p586 = pneg %p585
      $region62: #{full_gold_conditional_forward.1} parent=59 // pred_check_branch
        %588 = sbr.rel (%p586) target = $region64
      $region63: #{full_gold_conditional_forward.1} parent=59 // pred_region
        %v589 = vld [vmem:[%s531] sm:$0xf]
        %v590 = vld [vmem:[%s531 + $0x4] sm:$0xf]
        %v591 = vld [vmem:[%s531 + $0x8] sm:$0xf]
        %v592 = vld [vmem:[%s531 + $0xc] sm:$0xf]
        %v593 = vld [vmem:[%s531 + $0x10] sm:$0xf]
        %v594 = vld [vmem:[%s531 + $0x14] sm:$0xf]
        %v595 = vld [vmem:[%s531 + $0x18] sm:$0xf]
        %v596 = vld [vmem:[%s531 + $0x1c] sm:$0xf]
        %v597 = vld [vmem:[%s531 + $0x20] sm:$0xf]
        %v598 = vld [vmem:[%s531 + $0x24] sm:$0xf]
        %v599 = vld [vmem:[%s531 + $0x28] sm:$0xf]
        %v600 = vld [vmem:[%s531 + $0x2c] sm:$0xf]
        %v601 = vld [vmem:[%s531 + $0x30] sm:$0xf]
        %v602 = vld [vmem:[%s531 + $0x34] sm:$0xf]
        %v603 = vld [vmem:[%s531 + $0x38] sm:$0xf]
        %v604 = vld [vmem:[%s531 + $0x3c] sm:$0xf]
        %v605 = vld [vmem:[%s7] sm:$0xf]
        %v606 = vld [vmem:[%s7 + $0x4] sm:$0xf]
        %v607 = vld [vmem:[%s7 + $0x8] sm:$0xf]
        %v608 = vld [vmem:[%s7 + $0xc] sm:$0xf]
        %v609 = vld [vmem:[%s8] sm:$0x1]
        %v611 = vlaneseq
        %v612 = vshrl.u32 %v611, 7
        %v613 = vsub.s32 0, %v612
        %v614 = vrot.slane %v609, %v613
        %v632 = vunpack.c.l.b16 %v589
        %v633 = vunpack.c.l.b16 %v590
        %v634 = vunpack.c.l.b16 %v591
        %v635 = vunpack.c.l.b16 %v592
        %v636 = vunpack.c.l.b16 %v593
        %v637 = vunpack.c.l.b16 %v594
        %v638 = vunpack.c.l.b16 %v595
        %v639 = vunpack.c.l.b16 %v596
        %v640 = vunpack.c.l.b16 %v597
        %v641 = vunpack.c.l.b16 %v598
        %v642 = vunpack.c.l.b16 %v599
        %v643 = vunpack.c.l.b16 %v600
        %v644 = vunpack.c.l.b16 %v601
        %v645 = vunpack.c.l.b16 %v602
        %v646 = vunpack.c.l.b16 %v603
        %v647 = vunpack.c.l.b16 %v604
        %v648 = vpack.c.b16 %v633, %v632
        %v649 = vpack.c.b16 %v635, %v634
        %v650 = vpack.c.b16 %v637, %v636
        %v651 = vpack.c.b16 %v639, %v638
        %v652 = vpack.c.b16 %v641, %v640
        %v653 = vpack.c.b16 %v643, %v642
        %v654 = vpack.c.b16 %v645, %v644
        %v655 = vpack.c.b16 %v647, %v646
        %v660 = vunpack.c.l.b16 %v605
        %v661 = vunpack.c.l.b16 %v606
        %v662 = vunpack.c.l.b16 %v607
        %v663 = vunpack.c.l.b16 %v608
        %v664 = vpack.c.b16 %v661, %v660
        %v665 = vpack.c.b16 %v663, %v662
        %vm668 = vcmask 261120
        %v670 = vsel %vm668, %v648, 0
        %v673 = vsel %vm668, %v649, 0
        %v676 = vsel %vm668, %v650, 0
        %v679 = vsel %vm668, %v651, 0
        %v682 = vsel %vm668, %v652, 0
        %v685 = vsel %vm668, %v653, 0
        %v688 = vsel %vm668, %v654, 0
        %v691 = vsel %vm668, %v655, 0
        %693 = vmatprep.subr.bf16.mxu0 0
        %694 = vmatpush1.bf16.msra.mxu0 %v664
        %695 = vmatprep.subr.bf16.mxu0 0
        %696 = vmatpush1.bf16.msra.mxu0 %v665
        %697 = vmatprep.subr.bf16.mxu0 0
        %698 = vmatpush1.bf16.msra.mxu0 0
        %699 = vmatprep.subr.bf16.mxu0 0
        %700 = vmatpush1.bf16.msra.mxu0 0
        %701 = vmatprep.subr.bf16.mxu0 0
        %702 = vmatpush1.bf16.msra.mxu0 0
        %703 = vmatprep.subr.bf16.mxu0 0
        %704 = vmatpush1.bf16.msra.mxu0 0
        %705 = vmatprep.subr.bf16.mxu0 0
        %706 = vmatpush1.bf16.msra.mxu0 0
        %707 = vmatprep.subr.bf16.mxu0 0
        %708 = vmatpush1.bf16.msra.mxu0 0
        %709 = vmatprep.subr.bf16.mxu0 0
        %710 = vmatpush1.bf16.msra.mxu0 0
        %711 = vmatprep.subr.bf16.mxu0 0
        %712 = vmatpush1.bf16.msra.mxu0 0
        %713 = vmatprep.subr.bf16.mxu0 0
        %714 = vmatpush1.bf16.msra.mxu0 0
        %715 = vmatprep.subr.bf16.mxu0 0
        %716 = vmatpush1.bf16.msra.mxu0 0
        %717 = vmatprep.subr.bf16.mxu0 0
        %718 = vmatpush1.bf16.msra.mxu0 0
        %719 = vmatprep.subr.bf16.mxu0 0
        %720 = vmatpush1.bf16.msra.mxu0 0
        %721 = vmatprep.subr.bf16.mxu0 0
        %722 = vmatpush1.bf16.msra.mxu0 0
        %723 = vmatprep.subr.bf16.mxu0 0
        %724 = vmatpush1.bf16.msra.mxu0 0
        %725 = vmatprep.mubr.bf16.mxu0 0
        %726 = vmatmul.mubr.bf16.gmra.mrb[0].mxu0 %v670
        %v727 = vpop.f32.mrb[0].mxu0
        %v728 = vadd.f32 %v614, %v727
        %v729 = vpop.f32.mrb[0].mxu0
        %v730 = vpop.f32.mrb[0].mxu0
        %v731 = vadd.f32 %v614, %v730
        %v732 = vpop.f32.mrb[0].mxu0
        %733 = vmatprep.mubr.bf16.mxu0 0
        %734 = vmatmul.mubr.bf16.gmra.mrb[0].mxu0 %v673
        %v735 = vpop.f32.mrb[0].mxu0
        %v736 = vadd.f32 %v614, %v735
        %v737 = vpop.f32.mrb[0].mxu0
        %v738 = vpop.f32.mrb[0].mxu0
        %v739 = vadd.f32 %v614, %v738
        %v740 = vpop.f32.mrb[0].mxu0
        %741 = vmatprep.mubr.bf16.mxu0 0
        %742 = vmatmul.mubr.bf16.gmra.mrb[0].mxu0 %v676
        %v743 = vpop.f32.mrb[0].mxu0
        %v744 = vadd.f32 %v614, %v743
        %v745 = vpop.f32.mrb[0].mxu0
        %v746 = vpop.f32.mrb[0].mxu0
        %v747 = vadd.f32 %v614, %v746
        %v748 = vpop.f32.mrb[0].mxu0
        %749 = vmatprep.mubr.bf16.mxu0 0
        %750 = vmatmul.mubr.bf16.gmra.mrb[0].mxu0 %v679
        %v751 = vpop.f32.mrb[0].mxu0
        %v752 = vadd.f32 %v614, %v751
        %v753 = vpop.f32.mrb[0].mxu0
        %v754 = vpop.f32.mrb[0].mxu0
        %v755 = vadd.f32 %v614, %v754
        %v756 = vpop.f32.mrb[0].mxu0
        %757 = vmatprep.mubr.bf16.mxu0 0
        %758 = vmatmul.mubr.bf16.gmra.mrb[0].mxu0 %v682
        %v759 = vpop.f32.mrb[0].mxu0
        %v760 = vadd.f32 %v614, %v759
        %v761 = vpop.f32.mrb[0].mxu0
        %v762 = vpop.f32.mrb[0].mxu0
        %v763 = vadd.f32 %v614, %v762
        %v764 = vpop.f32.mrb[0].mxu0
        %765 = vmatprep.mubr.bf16.mxu0 0
        %766 = vmatmul.mubr.bf16.gmra.mrb[0].mxu0 %v685
        %v767 = vpop.f32.mrb[0].mxu0
        %v768 = vadd.f32 %v614, %v767
        %v769 = vpop.f32.mrb[0].mxu0
        %v770 = vpop.f32.mrb[0].mxu0
        %v771 = vadd.f32 %v614, %v770
        %v772 = vpop.f32.mrb[0].mxu0
        %773 = vmatprep.mubr.bf16.mxu0 0
        %774 = vmatmul.mubr.bf16.gmra.mrb[0].mxu0 %v688
        %v775 = vpop.f32.mrb[0].mxu0
        %v776 = vadd.f32 %v614, %v775
        %v777 = vpop.f32.mrb[0].mxu0
        %v778 = vpop.f32.mrb[0].mxu0
        %v779 = vadd.f32 %v614, %v778
        %v780 = vpop.f32.mrb[0].mxu0
        %781 = vmatprep.mubr.bf16.mxu0 0
        %782 = vmatmul.mubr.bf16.gmra.mrb[0].mxu0 %v691
        %v783 = vpop.f32.mrb[0].mxu0
        %v784 = vadd.f32 %v614, %v783
        %v785 = vpop.f32.mrb[0].mxu0
        %v786 = vpop.f32.mrb[0].mxu0
        %v787 = vadd.f32 %v614, %v786
        %v788 = vpop.f32.mrb[0].mxu0
        %789 = vdwg.mxu0
        %v790 = vtanh.pop %v728
        %v791 = vtanh.pop %v731
        %v792 = vtanh.pop %v736
        %v793 = vtanh.pop %v739
        %v794 = vtanh.pop %v744
        %v795 = vtanh.pop %v747
        %v796 = vtanh.pop %v752
        %v797 = vtanh.pop %v755
        %v798 = vtanh.pop %v760
        %v799 = vtanh.pop %v763
        %v800 = vtanh.pop %v768
        %v801 = vtanh.pop %v771
        %v802 = vtanh.pop %v776
        %v803 = vtanh.pop %v779
        %v804 = vtanh.pop %v784
        %v805 = vtanh.pop %v787
        %v806 = vpack.c.bf16 %v791, %v790
        %v807 = vpack.c.bf16 %v793, %v792
        %v808 = vpack.c.bf16 %v795, %v794
        %v809 = vpack.c.bf16 %v797, %v796
        %v810 = vpack.c.bf16 %v799, %v798
        %v811 = vpack.c.bf16 %v801, %v800
        %v812 = vpack.c.bf16 %v803, %v802
        %v813 = vpack.c.bf16 %v805, %v804
        %814 = vst.msk [vmem:[#allocation2] sm:$0xff] %vm668, %v806
        %815 = vst.msk [vmem:[#allocation2 + $0x8] sm:$0xff] %vm668, %v807
        %816 = vst.msk [vmem:[#allocation2 + $0x10] sm:$0xff] %vm668, %v808
        %817 = vst.msk [vmem:[#allocation2 + $0x18] sm:$0xff] %vm668, %v809
        %818 = vst.msk [vmem:[#allocation2 + $0x20] sm:$0xff] %vm668, %v810
        %819 = vst.msk [vmem:[#allocation2 + $0x28] sm:$0xff] %vm668, %v811
        %820 = vst.msk [vmem:[#allocation2 + $0x30] sm:$0xff] %vm668, %v812
        %821 = vst.msk [vmem:[#allocation2 + $0x38] sm:$0xff] %vm668, %v813
        %s822 = scalar_lea.vmem %s7, 16
        %v823 = vld [vmem:[%s822] sm:$0xf]
        %v824 = vld [vmem:[%s822 + $0x4] sm:$0xf]
        %v825 = vld [vmem:[%s822 + $0x8] sm:$0xf]
        %v826 = vld [vmem:[%s822 + $0xc] sm:$0xf]
        %s827 = scalar_lea.vmem %s8, 1
        %v828 = vld [vmem:[%s827] sm:$0x1]
        %v830 = vlaneseq
        %v831 = vshrl.u32 %v830, 7
        %v832 = vsub.s32 0, %v831
        %v833 = vrot.slane %v828, %v832
        %v839 = vunpack.c.l.b16 %v823
        %v840 = vunpack.c.l.b16 %v824
        %v841 = vunpack.c.l.b16 %v825
        %v842 = vunpack.c.l.b16 %v826
        %v843 = vpack.c.b16 %v840, %v839
        %v844 = vpack.c.b16 %v842, %v841
        %847 = vmatprep.subr.bf16.mxu0 0
        %848 = vmatpush1.bf16.msra.mxu0 %v843
        %849 = vmatprep.subr.bf16.mxu0 0
        %850 = vmatpush1.bf16.msra.mxu0 %v844
        %851 = vmatprep.subr.bf16.mxu0 0
        %852 = vmatpush1.bf16.msra.mxu0 0
        %853 = vmatprep.subr.bf16.mxu0 0
        %854 = vmatpush1.bf16.msra.mxu0 0
        %855 = vmatprep.subr.bf16.mxu0 0
        %856 = vmatpush1.bf16.msra.mxu0 0
        %857 = vmatprep.subr.bf16.mxu0 0
        %858 = vmatpush1.bf16.msra.mxu0 0
        %859 = vmatprep.subr.bf16.mxu0 0
        %860 = vmatpush1.bf16.msra.mxu0 0
        %861 = vmatprep.subr.bf16.mxu0 0
        %862 = vmatpush1.bf16.msra.mxu0 0
        %863 = vmatprep.subr.bf16.mxu0 0
        %864 = vmatpush1.bf16.msra.mxu0 0
        %865 = vmatprep.subr.bf16.mxu0 0
        %866 = vmatpush1.bf16.msra.mxu0 0
        %867 = vmatprep.subr.bf16.mxu0 0
        %868 = vmatpush1.bf16.msra.mxu0 0
        %869 = vmatprep.subr.bf16.mxu0 0
        %870 = vmatpush1.bf16.msra.mxu0 0
        %871 = vmatprep.subr.bf16.mxu0 0
        %872 = vmatpush1.bf16.msra.mxu0 0
        %873 = vmatprep.subr.bf16.mxu0 0
        %874 = vmatpush1.bf16.msra.mxu0 0
        %875 = vmatprep.subr.bf16.mxu0 0
        %876 = vmatpush1.bf16.msra.mxu0 0
        %877 = vmatprep.subr.bf16.mxu0 0
        %878 = vmatpush1.bf16.msra.mxu0 0
        %879 = vmatprep.mubr.bf16.mxu0 0
        %880 = vmatmul.mubr.bf16.gmra.mrb[0].mxu0 %v670
        %v881 = vpop.f32.mrb[0].mxu0
        %v882 = vadd.f32 %v833, %v881
        %v883 = vpop.f32.mrb[0].mxu0
        %v884 = vpop.f32.mrb[0].mxu0
        %v885 = vadd.f32 %v833, %v884
        %v886 = vpop.f32.mrb[0].mxu0
        %887 = vmatprep.mubr.bf16.mxu0 0
        %888 = vmatmul.mubr.bf16.gmra.mrb[0].mxu0 %v673
        %v889 = vpop.f32.mrb[0].mxu0
        %v890 = vadd.f32 %v833, %v889
        %v891 = vpop.f32.mrb[0].mxu0
        %v892 = vpop.f32.mrb[0].mxu0
        %v893 = vadd.f32 %v833, %v892
        %v894 = vpop.f32.mrb[0].mxu0
        %895 = vmatprep.mubr.bf16.mxu0 0
        %896 = vmatmul.mubr.bf16.gmra.mrb[0].mxu0 %v676
        %v897 = vpop.f32.mrb[0].mxu0
        %v898 = vadd.f32 %v833, %v897
        %v899 = vpop.f32.mrb[0].mxu0
        %v900 = vpop.f32.mrb[0].mxu0
        %v901 = vadd.f32 %v833, %v900
        %v902 = vpop.f32.mrb[0].mxu0
        %903 = vmatprep.mubr.bf16.mxu0 0
        %904 = vmatmul.mubr.bf16.gmra.mrb[0].mxu0 %v679
        %v905 = vpop.f32.mrb[0].mxu0
        %v906 = vadd.f32 %v833, %v905
        %v907 = vpop.f32.mrb[0].mxu0
        %v908 = vpop.f32.mrb[0].mxu0
        %v909 = vadd.f32 %v833, %v908
        %v910 = vpop.f32.mrb[0].mxu0
        %911 = vmatprep.mubr.bf16.mxu0 0
        %912 = vmatmul.mubr.bf16.gmra.mrb[0].mxu0 %v682
        %v913 = vpop.f32.mrb[0].mxu0
        %v914 = vadd.f32 %v833, %v913
        %v915 = vpop.f32.mrb[0].mxu0
        %v916 = vpop.f32.mrb[0].mxu0
        %v917 = vadd.f32 %v833, %v916
        %v918 = vpop.f32.mrb[0].mxu0
        %919 = vmatprep.mubr.bf16.mxu0 0
        %920 = vmatmul.mubr.bf16.gmra.mrb[0].mxu0 %v685
        %v921 = vpop.f32.mrb[0].mxu0
        %v922 = vadd.f32 %v833, %v921
        %v923 = vpop.f32.mrb[0].mxu0
        %v924 = vpop.f32.mrb[0].mxu0
        %v925 = vadd.f32 %v833, %v924
        %v926 = vpop.f32.mrb[0].mxu0
        %927 = vmatprep.mubr.bf16.mxu0 0
        %928 = vmatmul.mubr.bf16.gmra.mrb[0].mxu0 %v688
        %v929 = vpop.f32.mrb[0].mxu0
        %v930 = vadd.f32 %v833, %v929
        %v931 = vpop.f32.mrb[0].mxu0
        %v932 = vpop.f32.mrb[0].mxu0
        %v933 = vadd.f32 %v833, %v932
        %v934 = vpop.f32.mrb[0].mxu0
        %935 = vmatprep.mubr.bf16.mxu0 0
        %936 = vmatmul.mubr.bf16.gmra.mrb[0].mxu0 %v691
        %v937 = vpop.f32.mrb[0].mxu0
        %v938 = vadd.f32 %v833, %v937
        %v939 = vpop.f32.mrb[0].mxu0
        %v940 = vpop.f32.mrb[0].mxu0
        %v941 = vadd.f32 %v833, %v940
        %v942 = vpop.f32.mrb[0].mxu0
        %943 = vdwg.mxu0
        %v944 = vtanh.pop %v882
        %v945 = vtanh.pop %v885
        %v946 = vtanh.pop %v890
        %v947 = vtanh.pop %v893
        %v948 = vtanh.pop %v898
        %v949 = vtanh.pop %v901
        %v950 = vtanh.pop %v906
        %v951 = vtanh.pop %v909
        %v952 = vtanh.pop %v914
        %v953 = vtanh.pop %v917
        %v954 = vtanh.pop %v922
        %v955 = vtanh.pop %v925
        %v956 = vtanh.pop %v930
        %v957 = vtanh.pop %v933
        %v958 = vtanh.pop %v938
        %v959 = vtanh.pop %v941
        %v960 = vpack.c.bf16 %v945, %v944
        %v961 = vpack.c.bf16 %v947, %v946
        %v962 = vpack.c.bf16 %v949, %v948
        %v963 = vpack.c.bf16 %v951, %v950
        %v964 = vpack.c.bf16 %v953, %v952
        %v965 = vpack.c.bf16 %v955, %v954
        %v966 = vpack.c.bf16 %v957, %v956
        %v967 = vpack.c.bf16 %v959, %v958
        %s968 = scalar_lea.vmem [#allocation2], 64
        %969 = vst.msk [vmem:[%s968] sm:$0xff] %vm668, %v960
        %970 = vst.msk [vmem:[%s968 + $0x8] sm:$0xff] %vm668, %v961
        %971 = vst.msk [vmem:[%s968 + $0x10] sm:$0xff] %vm668, %v962
        %972 = vst.msk [vmem:[%s968 + $0x18] sm:$0xff] %vm668, %v963
        %973 = vst.msk [vmem:[%s968 + $0x20] sm:$0xff] %vm668, %v964
        %974 = vst.msk [vmem:[%s968 + $0x28] sm:$0xff] %vm668, %v965
        %975 = vst.msk [vmem:[%s968 + $0x30] sm:$0xff] %vm668, %v966
        %976 = vst.msk [vmem:[%s968 + $0x38] sm:$0xff] %vm668, %v967
        %s977 = scalar_lea.vmem %s7, 32
        %v978 = vld [vmem:[%s977] sm:$0xf]
        %v979 = vld [vmem:[%s977 + $0x4] sm:$0xf]
        %v980 = vld [vmem:[%s977 + $0x8] sm:$0xf]
        %v981 = vld [vmem:[%s977 + $0xc] sm:$0xf]
        %s982 = scalar_lea.vmem %s8, 2
        %v983 = vld [vmem:[%s982] sm:$0x1]
        %v985 = vlaneseq
        %v986 = vshrl.u32 %v985, 7
        %v987 = vsub.s32 0, %v986
        %v988 = vrot.slane %v983, %v987
        %v994 = vunpack.c.l.b16 %v978
        %v995 = vunpack.c.l.b16 %v979
        %v996 = vunpack.c.l.b16 %v980
        %v997 = vunpack.c.l.b16 %v981
        %v998 = vpack.c.b16 %v995, %v994
        %v999 = vpack.c.b16 %v997, %v996
        %1002 = vmatprep.subr.bf16.mxu0 0
        %1003 = vmatpush1.bf16.msra.mxu0 %v998
        %1004 = vmatprep.subr.bf16.mxu0 0
        %1005 = vmatpush1.bf16.msra.mxu0 %v999
        %1006 = vmatprep.subr.bf16.mxu0 0
        %1007 = vmatpush1.bf16.msra.mxu0 0
        %1008 = vmatprep.subr.bf16.mxu0 0
        %1009 = vmatpush1.bf16.msra.mxu0 0
        %1010 = vmatprep.subr.bf16.mxu0 0
        %1011 = vmatpush1.bf16.msra.mxu0 0
        %1012 = vmatprep.subr.bf16.mxu0 0
        %1013 = vmatpush1.bf16.msra.mxu0 0
        %1014 = vmatprep.subr.bf16.mxu0 0
        %1015 = vmatpush1.bf16.msra.mxu0 0
        %1016 = vmatprep.subr.bf16.mxu0 0
        %1017 = vmatpush1.bf16.msra.mxu0 0
        %1018 = vmatprep.subr.bf16.mxu0 0
        %1019 = vmatpush1.bf16.msra.mxu0 0
        %1020 = vmatprep.subr.bf16.mxu0 0
        %1021 = vmatpush1.bf16.msra.mxu0 0
        %1022 = vmatprep.subr.bf16.mxu0 0
        %1023 = vmatpush1.bf16.msra.mxu0 0
        %1024 = vmatprep.subr.bf16.mxu0 0
        %1025 = vmatpush1.bf16.msra.mxu0 0
        %1026 = vmatprep.subr.bf16.mxu0 0
        %1027 = vmatpush1.bf16.msra.mxu0 0
        %1028 = vmatprep.subr.bf16.mxu0 0
        %1029 = vmatpush1.bf16.msra.mxu0 0
        %1030 = vmatprep.subr.bf16.mxu0 0
        %1031 = vmatpush1.bf16.msra.mxu0 0
        %1032 = vmatprep.subr.bf16.mxu0 0
        %1033 = vmatpush1.bf16.msra.mxu0 0
        %1034 = vmatprep.mubr.bf16.mxu0 0
        %1035 = vmatmul.mubr.bf16.gmra.mrb[0].mxu0 %v670
        %v1036 = vpop.f32.mrb[0].mxu0
        %v1037 = vadd.f32 %v988, %v1036
        %v1038 = vpop.f32.mrb[0].mxu0
        %v1039 = vpop.f32.mrb[0].mxu0
        %v1040 = vadd.f32 %v988, %v1039
        %v1041 = vpop.f32.mrb[0].mxu0
        %1042 = vmatprep.mubr.bf16.mxu0 0
        %1043 = vmatmul.mubr.bf16.gmra.mrb[0].mxu0 %v673
        %v1044 = vpop.f32.mrb[0].mxu0
        %v1045 = vadd.f32 %v988, %v1044
        %v1046 = vpop.f32.mrb[0].mxu0
        %v1047 = vpop.f32.mrb[0].mxu0
        %v1048 = vadd.f32 %v988, %v1047
        %v1049 = vpop.f32.mrb[0].mxu0
        %1050 = vmatprep.mubr.bf16.mxu0 0
        %1051 = vmatmul.mubr.bf16.gmra.mrb[0].mxu0 %v676
        %v1052 = vpop.f32.mrb[0].mxu0
        %v1053 = vadd.f32 %v988, %v1052
        %v1054 = vpop.f32.mrb[0].mxu0
        %v1055 = vpop.f32.mrb[0].mxu0
        %v1056 = vadd.f32 %v988, %v1055
        %v1057 = vpop.f32.mrb[0].mxu0
        %1058 = vmatprep.mubr.bf16.mxu0 0
        %1059 = vmatmul.mubr.bf16.gmra.mrb[0].mxu0 %v679
        %v1060 = vpop.f32.mrb[0].mxu0
        %v1061 = vadd.f32 %v988, %v1060
        %v1062 = vpop.f32.mrb[0].mxu0
        %v1063 = vpop.f32.mrb[0].mxu0
        %v1064 = vadd.f32 %v988, %v1063
        %v1065 = vpop.f32.mrb[0].mxu0
        %1066 = vmatprep.mubr.bf16.mxu0 0
        %1067 = vmatmul.mubr.bf16.gmra.mrb[0].mxu0 %v682
        %v1068 = vpop.f32.mrb[0].mxu0
        %v1069 = vadd.f32 %v988, %v1068
        %v1070 = vpop.f32.mrb[0].mxu0
        %v1071 = vpop.f32.mrb[0].mxu0
        %v1072 = vadd.f32 %v988, %v1071
        %v1073 = vpop.f32.mrb[0].mxu0
        %1074 = vmatprep.mubr.bf16.mxu0 0
        %1075 = vmatmul.mubr.bf16.gmra.mrb[0].mxu0 %v685
        %v1076 = vpop.f32.mrb[0].mxu0
        %v1077 = vadd.f32 %v988, %v1076
        %v1078 = vpop.f32.mrb[0].mxu0
        %v1079 = vpop.f32.mrb[0].mxu0
        %v1080 = vadd.f32 %v988, %v1079
        %v1081 = vpop.f32.mrb[0].mxu0
        %1082 = vmatprep.mubr.bf16.mxu0 0
        %1083 = vmatmul.mubr.bf16.gmra.mrb[0].mxu0 %v688
        %v1084 = vpop.f32.mrb[0].mxu0
        %v1085 = vadd.f32 %v988, %v1084
        %v1086 = vpop.f32.mrb[0].mxu0
        %v1087 = vpop.f32.mrb[0].mxu0
        %v1088 = vadd.f32 %v988, %v1087
        %v1089 = vpop.f32.mrb[0].mxu0
        %1090 = vmatprep.mubr.bf16.mxu0 0
        %1091 = vmatmul.mubr.bf16.gmra.mrb[0].mxu0 %v691
        %v1092 = vpop.f32.mrb[0].mxu0
        %v1093 = vadd.f32 %v988, %v1092
        %v1094 = vpop.f32.mrb[0].mxu0
        %v1095 = vpop.f32.mrb[0].mxu0
        %v1096 = vadd.f32 %v988, %v1095
        %v1097 = vpop.f32.mrb[0].mxu0
        %1098 = vdwg.mxu0
        %v1099 = vtanh.pop %v1037
        %v1100 = vtanh.pop %v1040
        %v1101 = vtanh.pop %v1045
        %v1102 = vtanh.pop %v1048
        %v1103 = vtanh.pop %v1053
        %v1104 = vtanh.pop %v1056
        %v1105 = vtanh.pop %v1061
        %v1106 = vtanh.pop %v1064
        %v1107 = vtanh.pop %v1069
        %v1108 = vtanh.pop %v1072
        %v1109 = vtanh.pop %v1077
        %v1110 = vtanh.pop %v1080
        %v1111 = vtanh.pop %v1085
        %v1112 = vtanh.pop %v1088
        %v1113 = vtanh.pop %v1093
        %v1114 = vtanh.pop %v1096
        %v1115 = vpack.c.bf16 %v1100, %v1099
        %v1116 = vpack.c.bf16 %v1102, %v1101
        %v1117 = vpack.c.bf16 %v1104, %v1103
        %v1118 = vpack.c.bf16 %v1106, %v1105
        %v1119 = vpack.c.bf16 %v1108, %v1107
        %v1120 = vpack.c.bf16 %v1110, %v1109
        %v1121 = vpack.c.bf16 %v1112, %v1111
        %v1122 = vpack.c.bf16 %v1114, %v1113
        %s1123 = scalar_lea.vmem [#allocation2], 128
        %1124 = vst.msk [vmem:[%s1123] sm:$0xff] %vm668, %v1115
        %1125 = vst.msk [vmem:[%s1123 + $0x8] sm:$0xff] %vm668, %v1116
        %1126 = vst.msk [vmem:[%s1123 + $0x10] sm:$0xff] %vm668, %v1117
        %1127 = vst.msk [vmem:[%s1123 + $0x18] sm:$0xff] %vm668, %v1118
        %1128 = vst.msk [vmem:[%s1123 + $0x20] sm:$0xff] %vm668, %v1119
        %1129 = vst.msk [vmem:[%s1123 + $0x28] sm:$0xff] %vm668, %v1120
        %1130 = vst.msk [vmem:[%s1123 + $0x30] sm:$0xff] %vm668, %v1121
        %1131 = vst.msk [vmem:[%s1123 + $0x38] sm:$0xff] %vm668, %v1122
        %s1132 = scalar_lea.vmem %s7, 48
        %v1133 = vld [vmem:[%s1132] sm:$0xf]
        %v1134 = vld [vmem:[%s1132 + $0x4] sm:$0xf]
        %v1135 = vld [vmem:[%s1132 + $0x8] sm:$0xf]
        %v1136 = vld [vmem:[%s1132 + $0xc] sm:$0xf]
        %s1137 = scalar_lea.vmem %s8, 3
        %v1138 = vld [vmem:[%s1137] sm:$0x1]
        %v1140 = vlaneseq
        %v1141 = vshrl.u32 %v1140, 7
        %v1142 = vsub.s32 0, %v1141
        %v1143 = vrot.slane %v1138, %v1142
        %v1149 = vunpack.c.l.b16 %v1133
        %v1150 = vunpack.c.l.b16 %v1134
        %v1151 = vunpack.c.l.b16 %v1135
        %v1152 = vunpack.c.l.b16 %v1136
        %v1153 = vpack.c.b16 %v1150, %v1149
        %v1154 = vpack.c.b16 %v1152, %v1151
        %1157 = vmatprep.subr.bf16.mxu0 0
        %1158 = vmatpush1.bf16.msra.mxu0 %v1153
        %1159 = vmatprep.subr.bf16.mxu0 0
        %1160 = vmatpush1.bf16.msra.mxu0 %v1154
        %1161 = vmatprep.subr.bf16.mxu0 0
        %1162 = vmatpush1.bf16.msra.mxu0 0
        %1163 = vmatprep.subr.bf16.mxu0 0
        %1164 = vmatpush1.bf16.msra.mxu0 0
        %1165 = vmatprep.subr.bf16.mxu0 0
        %1166 = vmatpush1.bf16.msra.mxu0 0
        %1167 = vmatprep.subr.bf16.mxu0 0
        %1168 = vmatpush1.bf16.msra.mxu0 0
        %1169 = vmatprep.subr.bf16.mxu0 0
        %1170 = vmatpush1.bf16.msra.mxu0 0
        %1171 = vmatprep.subr.bf16.mxu0 0
        %1172 = vmatpush1.bf16.msra.mxu0 0
        %1173 = vmatprep.subr.bf16.mxu0 0
        %1174 = vmatpush1.bf16.msra.mxu0 0
        %1175 = vmatprep.subr.bf16.mxu0 0
        %1176 = vmatpush1.bf16.msra.mxu0 0
        %1177 = vmatprep.subr.bf16.mxu0 0
        %1178 = vmatpush1.bf16.msra.mxu0 0
        %1179 = vmatprep.subr.bf16.mxu0 0
        %1180 = vmatpush1.bf16.msra.mxu0 0
        %1181 = vmatprep.subr.bf16.mxu0 0
        %1182 = vmatpush1.bf16.msra.mxu0 0
        %1183 = vmatprep.subr.bf16.mxu0 0
        %1184 = vmatpush1.bf16.msra.mxu0 0
        %1185 = vmatprep.subr.bf16.mxu0 0
        %1186 = vmatpush1.bf16.msra.mxu0 0
        %1187 = vmatprep.subr.bf16.mxu0 0
        %1188 = vmatpush1.bf16.msra.mxu0 0
        %1189 = vmatprep.mubr.bf16.mxu0 0
        %1190 = vmatmul.mubr.bf16.gmra.mrb[0].mxu0 %v670
        %v1191 = vpop.f32.mrb[0].mxu0
        %v1192 = vadd.f32 %v1143, %v1191
        %v1193 = vpop.f32.mrb[0].mxu0
        %v1194 = vpop.f32.mrb[0].mxu0
        %v1195 = vadd.f32 %v1143, %v1194
        %v1196 = vpop.f32.mrb[0].mxu0
        %1197 = vmatprep.mubr.bf16.mxu0 0
        %1198 = vmatmul.mubr.bf16.gmra.mrb[0].mxu0 %v673
        %v1199 = vpop.f32.mrb[0].mxu0
        %v1200 = vadd.f32 %v1143, %v1199
        %v1201 = vpop.f32.mrb[0].mxu0
        %v1202 = vpop.f32.mrb[0].mxu0
        %v1203 = vadd.f32 %v1143, %v1202
        %v1204 = vpop.f32.mrb[0].mxu0
        %1205 = vmatprep.mubr.bf16.mxu0 0
        %1206 = vmatmul.mubr.bf16.gmra.mrb[0].mxu0 %v676
        %v1207 = vpop.f32.mrb[0].mxu0
        %v1208 = vadd.f32 %v1143, %v1207
        %v1209 = vpop.f32.mrb[0].mxu0
        %v1210 = vpop.f32.mrb[0].mxu0
        %v1211 = vadd.f32 %v1143, %v1210
        %v1212 = vpop.f32.mrb[0].mxu0
        %1213 = vmatprep.mubr.bf16.mxu0 0
        %1214 = vmatmul.mubr.bf16.gmra.mrb[0].mxu0 %v679
        %v1215 = vpop.f32.mrb[0].mxu0
        %v1216 = vadd.f32 %v1143, %v1215
        %v1217 = vpop.f32.mrb[0].mxu0
        %v1218 = vpop.f32.mrb[0].mxu0
        %v1219 = vadd.f32 %v1143, %v1218
        %v1220 = vpop.f32.mrb[0].mxu0
        %1221 = vmatprep.mubr.bf16.mxu0 0
        %1222 = vmatmul.mubr.bf16.gmra.mrb[0].mxu0 %v682
        %v1223 = vpop.f32.mrb[0].mxu0
        %v1224 = vadd.f32 %v1143, %v1223
        %v1225 = vpop.f32.mrb[0].mxu0
        %v1226 = vpop.f32.mrb[0].mxu0
        %v1227 = vadd.f32 %v1143, %v1226
        %v1228 = vpop.f32.mrb[0].mxu0
        %1229 = vmatprep.mubr.bf16.mxu0 0
        %1230 = vmatmul.mubr.bf16.gmra.mrb[0].mxu0 %v685
        %v1231 = vpop.f32.mrb[0].mxu0
        %v1232 = vadd.f32 %v1143, %v1231
        %v1233 = vpop.f32.mrb[0].mxu0
        %v1234 = vpop.f32.mrb[0].mxu0
        %v1235 = vadd.f32 %v1143, %v1234
        %v1236 = vpop.f32.mrb[0].mxu0
        %1237 = vmatprep.mubr.bf16.mxu0 0
        %1238 = vmatmul.mubr.bf16.gmra.mrb[0].mxu0 %v688
        %v1239 = vpop.f32.mrb[0].mxu0
        %v1240 = vadd.f32 %v1143, %v1239
        %v1241 = vpop.f32.mrb[0].mxu0
        %v1242 = vpop.f32.mrb[0].mxu0
        %v1243 = vadd.f32 %v1143, %v1242
        %v1244 = vpop.f32.mrb[0].mxu0
        %1245 = vmatprep.mubr.bf16.mxu0 0
        %1246 = vmatmul.mubr.bf16.gmra.mrb[0].mxu0 %v691
        %v1247 = vpop.f32.mrb[0].mxu0
        %v1248 = vadd.f32 %v1143, %v1247
        %v1249 = vpop.f32.mrb[0].mxu0
        %v1250 = vpop.f32.mrb[0].mxu0
        %v1251 = vadd.f32 %v1143, %v1250
        %v1252 = vpop.f32.mrb[0].mxu0
        %1253 = vdwg.mxu0
        %v1254 = vtanh.pop %v1192
        %v1255 = vtanh.pop %v1195
        %v1256 = vtanh.pop %v1200
        %v1257 = vtanh.pop %v1203
        %v1258 = vtanh.pop %v1208
        %v1259 = vtanh.pop %v1211
        %v1260 = vtanh.pop %v1216
        %v1261 = vtanh.pop %v1219
        %v1262 = vtanh.pop %v1224
        %v1263 = vtanh.pop %v1227
        %v1264 = vtanh.pop %v1232
        %v1265 = vtanh.pop %v1235
        %v1266 = vtanh.pop %v1240
        %v1267 = vtanh.pop %v1243
        %v1268 = vtanh.pop %v1248
        %v1269 = vtanh.pop %v1251
        %v1270 = vpack.c.bf16 %v1255, %v1254
        %v1271 = vpack.c.bf16 %v1257, %v1256
        %v1272 = vpack.c.bf16 %v1259, %v1258
        %v1273 = vpack.c.bf16 %v1261, %v1260
        %v1274 = vpack.c.bf16 %v1263, %v1262
        %v1275 = vpack.c.bf16 %v1265, %v1264
        %v1276 = vpack.c.bf16 %v1267, %v1266
        %v1277 = vpack.c.bf16 %v1269, %v1268
        %s1278 = scalar_lea.vmem [#allocation2], 192
        %1279 = vst.msk [vmem:[%s1278] sm:$0xff] %vm668, %v1270
        %1280 = vst.msk [vmem:[%s1278 + $0x8] sm:$0xff] %vm668, %v1271
        %1281 = vst.msk [vmem:[%s1278 + $0x10] sm:$0xff] %vm668, %v1272
        %1282 = vst.msk [vmem:[%s1278 + $0x18] sm:$0xff] %vm668, %v1273
        %1283 = vst.msk [vmem:[%s1278 + $0x20] sm:$0xff] %vm668, %v1274
        %1284 = vst.msk [vmem:[%s1278 + $0x28] sm:$0xff] %vm668, %v1275
        %1285 = vst.msk [vmem:[%s1278 + $0x30] sm:$0xff] %vm668, %v1276
        %1286 = vst.msk [vmem:[%s1278 + $0x38] sm:$0xff] %vm668, %v1277
        %vm1287 = vcmask 0
        %1288 = vst.msk [vmem:[%s580] sm:$0x1] %vm1287, 0.0
        %1289 = vst.msk [vmem:[%s583] sm:$0x1] %vm1287, 0.0
      $region64: #{full_gold_conditional_forward.1} parent=59 // pred_fallthru
        _
      %v1290 = vld [vmem:[%s540] sm:$0xf]
      %v1291 = vld [vmem:[%s540 + $0x4] sm:$0xf]
      %v1292 = vld [vmem:[%s540 + $0x8] sm:$0xf]
      %v1293 = vld [vmem:[%s540 + $0xc] sm:$0xf]
      %v1294 = vld [vmem:[%s540 + $0x10] sm:$0xf]
      %v1295 = vld [vmem:[%s540 + $0x14] sm:$0xf]
      %v1296 = vld [vmem:[%s540 + $0x18] sm:$0xf]
      %v1297 = vld [vmem:[%s540 + $0x1c] sm:$0xf]
      %v1298 = vld [vmem:[%s540 + $0x20] sm:$0xf]
      %v1299 = vld [vmem:[%s540 + $0x24] sm:$0xf]
      %v1300 = vld [vmem:[%s540 + $0x28] sm:$0xf]
      %v1301 = vld [vmem:[%s540 + $0x2c] sm:$0xf]
      %v1302 = vld [vmem:[%s540 + $0x30] sm:$0xf]
      %v1303 = vld [vmem:[%s540 + $0x34] sm:$0xf]
      %v1304 = vld [vmem:[%s540 + $0x38] sm:$0xf]
      %v1305 = vld [vmem:[%s540 + $0x3c] sm:$0xf]
      %v1306 = vld [vmem:[%s544] sm:$0x1]
      %v1307 = vlaneseq
      %v1308 = vand.u32 %v1307, 127
      %vm1309 = vcmp.lt.s32.totalorder %v1308, 8
      %v1310 = vsel %vm1309, 0.0, -1e+30
      %v1311 = vld [vmem:[%s554] sm:$0xff]
      %v1312 = vld [vmem:[%s554 + $0x20] sm:$0xff]
      %v1313 = vld [vmem:[%s554 + $0x40] sm:$0xff]
      %v1314 = vld [vmem:[%s554 + $0x60] sm:$0xff]
      %v1315 = vunpack.c.0.s8 %v1311
      %v1316 = vunpack.c.1.s8 %v1311
      %v1317 = vunpack.c.2.s8 %v1311
      %v1318 = vunpack.c.3.s8 %v1311
      %v1319 = vunpack.c.0.s8 %v1312
      %v1320 = vunpack.c.1.s8 %v1312
      %v1321 = vunpack.c.2.s8 %v1312
      %v1322 = vunpack.c.3.s8 %v1312
      %v1323 = vunpack.c.0.s8 %v1313
      %v1324 = vunpack.c.1.s8 %v1313
      %v1325 = vunpack.c.2.s8 %v1313
      %v1326 = vunpack.c.3.s8 %v1313
      %v1327 = vunpack.c.0.s8 %v1314
      %v1328 = vunpack.c.1.s8 %v1314
      %v1329 = vunpack.c.2.s8 %v1314
      %v1330 = vunpack.c.3.s8 %v1314
      %v1331 = vcvt.s32.f32 %v1315
      %v1332 = vcvt.s32.f32 %v1316
      %v1333 = vcvt.s32.f32 %v1317
      %v1334 = vcvt.s32.f32 %v1318
      %v1335 = vcvt.s32.f32 %v1319
      %v1336 = vcvt.s32.f32 %v1320
      %v1337 = vcvt.s32.f32 %v1321
      %v1338 = vcvt.s32.f32 %v1322
      %v1339 = vcvt.s32.f32 %v1323
      %v1340 = vcvt.s32.f32 %v1324
      %v1341 = vcvt.s32.f32 %v1325
      %v1342 = vcvt.s32.f32 %v1326
      %v1343 = vcvt.s32.f32 %v1327
      %v1344 = vcvt.s32.f32 %v1328
      %v1345 = vcvt.s32.f32 %v1329
      %v1346 = vcvt.s32.f32 %v1330
      %v1347 = vld [vmem:[%s565] sm:$0xf]
      %v1348 = vld [vmem:[%s565 + $0x10] sm:$0xf]
      %v1349 = vld [vmem:[%s565 + $0x20] sm:$0xf]
      %v1350 = vld [vmem:[%s565 + $0x30] sm:$0xf]
      %v1351 = vld [vmem:[%s565 + $0x40] sm:$0xf]
      %v1352 = vld [vmem:[%s565 + $0x50] sm:$0xf]
      %v1353 = vld [vmem:[%s565 + $0x60] sm:$0xf]
      %v1354 = vld [vmem:[%s565 + $0x70] sm:$0xf]
      %v1355 = vld [vmem:[%s565 + $0x80] sm:$0xf]
      %v1356 = vld [vmem:[%s565 + $0x90] sm:$0xf]
      %v1357 = vld [vmem:[%s565 + $0xa0] sm:$0xf]
      %v1358 = vld [vmem:[%s565 + $0xb0] sm:$0xf]
      %v1359 = vld [vmem:[%s565 + $0xc0] sm:$0xf]
      %v1360 = vld [vmem:[%s565 + $0xd0] sm:$0xf]
      %v1361 = vld [vmem:[%s565 + $0xe0] sm:$0xf]
      %v1362 = vld [vmem:[%s565 + $0xf0] sm:$0xf]
      %v1363 = vunpack.c.l.bf16 %v1347
      %v1364 = vunpack.c.l.bf16 %v1348
      %v1365 = vunpack.c.l.bf16 %v1349
      %v1366 = vunpack.c.l.bf16 %v1350
      %v1367 = vunpack.c.l.bf16 %v1351
      %v1368 = vunpack.c.l.bf16 %v1352
      %v1369 = vunpack.c.l.bf16 %v1353
      %v1370 = vunpack.c.l.bf16 %v1354
      %v1371 = vunpack.c.l.bf16 %v1355
      %v1372 = vunpack.c.l.bf16 %v1356
      %v1373 = vunpack.c.l.bf16 %v1357
      %v1374 = vunpack.c.l.bf16 %v1358
      %v1375 = vunpack.c.l.bf16 %v1359
      %v1376 = vunpack.c.l.bf16 %v1360
      %v1377 = vunpack.c.l.bf16 %v1361
      %v1378 = vunpack.c.l.bf16 %v1362
      %v1380 = vlaneseq
      %v1381 = vshrl.u32 %v1380, 7
      %v1382 = vsub.s32 0, %v1381
      %v1383 = vrot.slane %v1306, %v1382
      %v1385 = vmul.f32 %v1331, %v1383
      %v1386 = vmul.f32 %v1332, %v1383
      %v1387 = vmul.f32 %v1333, %v1383
      %v1388 = vmul.f32 %v1334, %v1383
      %v1389 = vmul.f32 %v1335, %v1383
      %v1390 = vmul.f32 %v1336, %v1383
      %v1391 = vmul.f32 %v1337, %v1383
      %v1392 = vmul.f32 %v1338, %v1383
      %v1393 = vmul.f32 %v1339, %v1383
      %v1394 = vmul.f32 %v1340, %v1383
      %v1395 = vmul.f32 %v1341, %v1383
      %v1396 = vmul.f32 %v1342, %v1383
      %v1397 = vmul.f32 %v1343, %v1383
      %v1398 = vmul.f32 %v1344, %v1383
      %v1399 = vmul.f32 %v1345, %v1383
      %v1400 = vmul.f32 %v1346, %v1383
      %v1401 = vsub.f32 1.0, %v1385
      %v1402 = vsub.f32 1.0, %v1386
      %v1403 = vsub.f32 1.0, %v1387
      %v1404 = vsub.f32 1.0, %v1388
      %v1405 = vsub.f32 1.0, %v1389
      %v1406 = vsub.f32 1.0, %v1390
      %v1407 = vsub.f32 1.0, %v1391
      %v1408 = vsub.f32 1.0, %v1392
      %v1409 = vsub.f32 1.0, %v1393
      %v1410 = vsub.f32 1.0, %v1394
      %v1411 = vsub.f32 1.0, %v1395
      %v1412 = vsub.f32 1.0, %v1396
      %v1413 = vsub.f32 1.0, %v1397
      %v1414 = vsub.f32 1.0, %v1398
      %v1415 = vsub.f32 1.0, %v1399
      %v1416 = vsub.f32 1.0, %v1400
      %v1417 = vmul.f32 %v1401, -1024.0
      %v1418 = vmul.f32 %v1402, -1024.0
      %v1419 = vmul.f32 %v1403, -1024.0
      %v1420 = vmul.f32 %v1404, -1024.0
      %v1421 = vmul.f32 %v1405, -1024.0
      %v1422 = vmul.f32 %v1406, -1024.0
      %v1423 = vmul.f32 %v1407, -1024.0
      %v1424 = vmul.f32 %v1408, -1024.0
      %v1425 = vmul.f32 %v1409, -1024.0
      %v1426 = vmul.f32 %v1410, -1024.0
      %v1427 = vmul.f32 %v1411, -1024.0
      %v1428 = vmul.f32 %v1412, -1024.0
      %v1429 = vmul.f32 %v1413, -1024.0
      %v1430 = vmul.f32 %v1414, -1024.0
      %v1431 = vmul.f32 %v1415, -1024.0
      %v1432 = vmul.f32 %v1416, -1024.0
      %v1433 = vadd.f32 %v1417, %v1310
      %v1434 = vadd.f32 %v1418, %v1310
      %v1435 = vadd.f32 %v1419, %v1310
      %v1436 = vadd.f32 %v1420, %v1310
      %v1437 = vadd.f32 %v1421, %v1310
      %v1438 = vadd.f32 %v1422, %v1310
      %v1439 = vadd.f32 %v1423, %v1310
      %v1440 = vadd.f32 %v1424, %v1310
      %v1441 = vadd.f32 %v1425, %v1310
      %v1442 = vadd.f32 %v1426, %v1310
      %v1443 = vadd.f32 %v1427, %v1310
      %v1444 = vadd.f32 %v1428, %v1310
      %v1445 = vadd.f32 %v1429, %v1310
      %v1446 = vadd.f32 %v1430, %v1310
      %v1447 = vadd.f32 %v1431, %v1310
      %v1448 = vadd.f32 %v1432, %v1310
      %v1449 = vadd.f32 %v1363, %v1433
      %v1450 = vadd.f32 %v1364, %v1434
      %v1451 = vadd.f32 %v1365, %v1435
      %v1452 = vadd.f32 %v1366, %v1436
      %v1453 = vadd.f32 %v1367, %v1437
      %v1454 = vadd.f32 %v1368, %v1438
      %v1455 = vadd.f32 %v1369, %v1439
      %v1456 = vadd.f32 %v1370, %v1440
      %v1457 = vadd.f32 %v1371, %v1441
      %v1458 = vadd.f32 %v1372, %v1442
      %v1459 = vadd.f32 %v1373, %v1443
      %v1460 = vadd.f32 %v1374, %v1444
      %v1461 = vadd.f32 %v1375, %v1445
      %v1462 = vadd.f32 %v1376, %v1446
      %v1463 = vadd.f32 %v1377, %v1447
      %v1464 = vadd.f32 %v1378, %v1448
      %1465 = vmax.xlane.f32.xlu0 %v1449
      %v1466 = vpop.xlane.xlu0 %1465
      %1467 = vmax.xlane.f32.xlu0 %v1450
      %v1468 = vpop.xlane.xlu0 %1467
      %1469 = vmax.xlane.f32.xlu0 %v1451
      %v1470 = vpop.xlane.xlu0 %1469
      %1471 = vmax.xlane.f32.xlu0 %v1452
      %v1472 = vpop.xlane.xlu0 %1471
      %1473 = vmax.xlane.f32.xlu0 %v1453
      %v1474 = vpop.xlane.xlu0 %1473
      %1475 = vmax.xlane.f32.xlu0 %v1454
      %v1476 = vpop.xlane.xlu0 %1475
      %1477 = vmax.xlane.f32.xlu0 %v1455
      %v1478 = vpop.xlane.xlu0 %1477
      %1479 = vmax.xlane.f32.xlu0 %v1456
      %v1480 = vpop.xlane.xlu0 %1479
      %1481 = vmax.xlane.f32.xlu0 %v1457
      %v1482 = vpop.xlane.xlu0 %1481
      %1483 = vmax.xlane.f32.xlu0 %v1458
      %v1484 = vpop.xlane.xlu0 %1483
      %1485 = vmax.xlane.f32.xlu0 %v1459
      %v1486 = vpop.xlane.xlu0 %1485
      %1487 = vmax.xlane.f32.xlu0 %v1460
      %v1488 = vpop.xlane.xlu0 %1487
      %1489 = vmax.xlane.f32.xlu0 %v1461
      %v1490 = vpop.xlane.xlu0 %1489
      %1491 = vmax.xlane.f32.xlu0 %v1462
      %v1492 = vpop.xlane.xlu0 %1491
      %1493 = vmax.xlane.f32.xlu0 %v1463
      %v1494 = vpop.xlane.xlu0 %1493
      %1495 = vmax.xlane.f32.xlu0 %v1464
      %v1496 = vpop.xlane.xlu0 %1495
      %v1497 = vsub.f32 %v1449, %v1466
      %v1498 = vsub.f32 %v1450, %v1468
      %v1499 = vsub.f32 %v1451, %v1470
      %v1500 = vsub.f32 %v1452, %v1472
      %v1501 = vsub.f32 %v1453, %v1474
      %v1502 = vsub.f32 %v1454, %v1476
      %v1503 = vsub.f32 %v1455, %v1478
      %v1504 = vsub.f32 %v1456, %v1480
      %v1505 = vsub.f32 %v1457, %v1482
      %v1506 = vsub.f32 %v1458, %v1484
      %v1507 = vsub.f32 %v1459, %v1486
      %v1508 = vsub.f32 %v1460, %v1488
      %v1509 = vsub.f32 %v1461, %v1490
      %v1510 = vsub.f32 %v1462, %v1492
      %v1511 = vsub.f32 %v1463, %v1494
      %v1512 = vsub.f32 %v1464, %v1496
      %v1513 = vmul.f32 %v1497, 1.442695
      %v1514 = vpow.pop %v1513
      %v1515 = vmul.f32 %v1498, 1.442695
      %v1516 = vpow.pop %v1515
      %v1517 = vmul.f32 %v1499, 1.442695
      %v1518 = vpow.pop %v1517
      %v1519 = vmul.f32 %v1500, 1.442695
      %v1520 = vpow.pop %v1519
      %v1521 = vmul.f32 %v1501, 1.442695
      %v1522 = vpow.pop %v1521
      %v1523 = vmul.f32 %v1502, 1.442695
      %v1524 = vpow.pop %v1523
      %v1525 = vmul.f32 %v1503, 1.442695
      %v1526 = vpow.pop %v1525
      %v1527 = vmul.f32 %v1504, 1.442695
      %v1528 = vpow.pop %v1527
      %v1529 = vmul.f32 %v1505, 1.442695
      %v1530 = vpow.pop %v1529
      %v1531 = vmul.f32 %v1506, 1.442695
      %v1532 = vpow.pop %v1531
      %v1533 = vmul.f32 %v1507, 1.442695
      %v1534 = vpow.pop %v1533
      %v1535 = vmul.f32 %v1508, 1.442695
      %v1536 = vpow.pop %v1535
      %v1537 = vmul.f32 %v1509, 1.442695
      %v1538 = vpow.pop %v1537
      %v1539 = vmul.f32 %v1510, 1.442695
      %v1540 = vpow.pop %v1539
      %v1541 = vmul.f32 %v1511, 1.442695
      %v1542 = vpow.pop %v1541
      %v1543 = vmul.f32 %v1512, 1.442695
      %v1544 = vpow.pop %v1543
      %1545 = vadd.xlane.f32.xlu0 %v1514
      %v1546 = vpop.xlane.xlu0 %1545
      %1547 = vadd.xlane.f32.xlu0 %v1516
      %v1548 = vpop.xlane.xlu0 %1547
      %1549 = vadd.xlane.f32.xlu0 %v1518
      %v1550 = vpop.xlane.xlu0 %1549
      %1551 = vadd.xlane.f32.xlu0 %v1520
      %v1552 = vpop.xlane.xlu0 %1551
      %1553 = vadd.xlane.f32.xlu0 %v1522
      %v1554 = vpop.xlane.xlu0 %1553
      %1555 = vadd.xlane.f32.xlu0 %v1524
      %v1556 = vpop.xlane.xlu0 %1555
      %1557 = vadd.xlane.f32.xlu0 %v1526
      %v1558 = vpop.xlane.xlu0 %1557
      %1559 = vadd.xlane.f32.xlu0 %v1528
      %v1560 = vpop.xlane.xlu0 %1559
      %1561 = vadd.xlane.f32.xlu0 %v1530
      %v1562 = vpop.xlane.xlu0 %1561
      %1563 = vadd.xlane.f32.xlu0 %v1532
      %v1564 = vpop.xlane.xlu0 %1563
      %1565 = vadd.xlane.f32.xlu0 %v1534
      %v1566 = vpop.xlane.xlu0 %1565
      %1567 = vadd.xlane.f32.xlu0 %v1536
      %v1568 = vpop.xlane.xlu0 %1567
      %1569 = vadd.xlane.f32.xlu0 %v1538
      %v1570 = vpop.xlane.xlu0 %1569
      %1571 = vadd.xlane.f32.xlu0 %v1540
      %v1572 = vpop.xlane.xlu0 %1571
      %1573 = vadd.xlane.f32.xlu0 %v1542
      %v1574 = vpop.xlane.xlu0 %1573
      %1575 = vadd.xlane.f32.xlu0 %v1544
      %v1576 = vpop.xlane.xlu0 %1575
      %v1577 = vrcp.pop %v1546
      %v1578 = vrcp.pop %v1548
      %v1579 = vrcp.pop %v1550
      %v1580 = vrcp.pop %v1552
      %v1581 = vrcp.pop %v1554
      %v1582 = vrcp.pop %v1556
      %v1583 = vrcp.pop %v1558
      %v1584 = vrcp.pop %v1560
      %v1585 = vrcp.pop %v1562
      %v1586 = vrcp.pop %v1564
      %v1587 = vrcp.pop %v1566
      %v1588 = vrcp.pop %v1568
      %v1589 = vrcp.pop %v1570
      %v1590 = vrcp.pop %v1572
      %v1591 = vrcp.pop %v1574
      %v1592 = vrcp.pop %v1576
      %v1593 = vmul.f32 %v1514, %v1577
      %v1594 = vmul.f32 %v1516, %v1578
      %v1595 = vmul.f32 %v1518, %v1579
      %v1596 = vmul.f32 %v1520, %v1580
      %v1597 = vmul.f32 %v1522, %v1581
      %v1598 = vmul.f32 %v1524, %v1582
      %v1599 = vmul.f32 %v1526, %v1583
      %v1600 = vmul.f32 %v1528, %v1584
      %v1601 = vmul.f32 %v1530, %v1585
      %v1602 = vmul.f32 %v1532, %v1586
      %v1603 = vmul.f32 %v1534, %v1587
      %v1604 = vmul.f32 %v1536, %v1588
      %v1605 = vmul.f32 %v1538, %v1589
      %v1606 = vmul.f32 %v1540, %v1590
      %v1607 = vmul.f32 %v1542, %v1591
      %v1608 = vmul.f32 %v1544, %v1592
      %v1609 = vld [vmem:[#allocation2] sm:$0xff]
      %v1610 = vld [vmem:[#allocation2 + $0x8] sm:$0xff]
      %v1611 = vld [vmem:[#allocation2 + $0x10] sm:$0xff]
      %v1612 = vld [vmem:[#allocation2 + $0x18] sm:$0xff]
      %v1613 = vld [vmem:[#allocation2 + $0x20] sm:$0xff]
      %v1614 = vld [vmem:[#allocation2 + $0x28] sm:$0xff]
      %v1615 = vld [vmem:[#allocation2 + $0x30] sm:$0xff]
      %v1616 = vld [vmem:[#allocation2 + $0x38] sm:$0xff]
      %v1617 = vpack.c.bf16 %v1594, %v1593
      %v1618 = vpack.c.bf16 %v1596, %v1595
      %v1619 = vpack.c.bf16 %v1598, %v1597
      %v1620 = vpack.c.bf16 %v1600, %v1599
      %v1621 = vpack.c.bf16 %v1602, %v1601
      %v1622 = vpack.c.bf16 %v1604, %v1603
      %v1623 = vpack.c.bf16 %v1606, %v1605
      %v1624 = vpack.c.bf16 %v1608, %v1607
      %1625 = vmatprep.subr.bf16.mxu0 0
      %1626 = vmatpush1.bf16.msra.mxu0 %v1609
      %1627 = vmatprep.subr.bf16.mxu0 0
      %1628 = vmatpush1.bf16.msra.mxu0 %v1610
      %1629 = vmatprep.subr.bf16.mxu0 0
      %1630 = vmatpush1.bf16.msra.mxu0 %v1611
      %1631 = vmatprep.subr.bf16.mxu0 0
      %1632 = vmatpush1.bf16.msra.mxu0 %v1612
      %1633 = vmatprep.subr.bf16.mxu0 0
      %1634 = vmatpush1.bf16.msra.mxu0 %v1613
      %1635 = vmatprep.subr.bf16.mxu0 0
      %1636 = vmatpush1.bf16.msra.mxu0 %v1614
      %1637 = vmatprep.subr.bf16.mxu0 0
      %1638 = vmatpush1.bf16.msra.mxu0 %v1615
      %1639 = vmatprep.subr.bf16.mxu0 0
      %1640 = vmatpush1.bf16.msra.mxu0 %v1616
      %1641 = vmatprep.subr.bf16.mxu0 0
      %1642 = vmatpush1.bf16.msra.mxu0 0
      %1643 = vmatprep.subr.bf16.mxu0 0
      %1644 = vmatpush1.bf16.msra.mxu0 0
      %1645 = vmatprep.subr.bf16.mxu0 0
      %1646 = vmatpush1.bf16.msra.mxu0 0
      %1647 = vmatprep.subr.bf16.mxu0 0
      %1648 = vmatpush1.bf16.msra.mxu0 0
      %1649 = vmatprep.subr.bf16.mxu0 0
      %1650 = vmatpush1.bf16.msra.mxu0 0
      %1651 = vmatprep.subr.bf16.mxu0 0
      %1652 = vmatpush1.bf16.msra.mxu0 0
      %1653 = vmatprep.subr.bf16.mxu0 0
      %1654 = vmatpush1.bf16.msra.mxu0 0
      %1655 = vmatprep.subr.bf16.mxu0 0
      %1656 = vmatpush1.bf16.msra.mxu0 0
      %1657 = vmatprep.mubr.bf16.mxu0 0
      %1658 = vmatmul.mubr.bf16.gmra.mrb[0].mxu0 %v1617
      %v1659 = vpop.f32.mrb[0].mxu0
      %v1660 = vadd.f32 0.0, %v1659
      %v1661 = vpop.f32.mrb[0].mxu0
      %v1662 = vpop.f32.mrb[0].mxu0
      %v1663 = vadd.f32 0.0, %v1662
      %v1664 = vpop.f32.mrb[0].mxu0
      %1665 = vmatprep.mubr.bf16.mxu0 0
      %1666 = vmatmul.mubr.bf16.gmra.mrb[0].mxu0 %v1618
      %v1667 = vpop.f32.mrb[0].mxu0
      %v1668 = vadd.f32 0.0, %v1667
      %v1669 = vpop.f32.mrb[0].mxu0
      %v1670 = vpop.f32.mrb[0].mxu0
      %v1671 = vadd.f32 0.0, %v1670
      %v1672 = vpop.f32.mrb[0].mxu0
      %1673 = vmatprep.mubr.bf16.mxu0 0
      %1674 = vmatmul.mubr.bf16.gmra.mrb[0].mxu0 %v1619
      %v1675 = vpop.f32.mrb[0].mxu0
      %v1676 = vadd.f32 0.0, %v1675
      %v1677 = vpop.f32.mrb[0].mxu0
      %v1678 = vpop.f32.mrb[0].mxu0
      %v1679 = vadd.f32 0.0, %v1678
      %v1680 = vpop.f32.mrb[0].mxu0
      %1681 = vmatprep.mubr.bf16.mxu0 0
      %1682 = vmatmul.mubr.bf16.gmra.mrb[0].mxu0 %v1620
      %v1683 = vpop.f32.mrb[0].mxu0
      %v1684 = vadd.f32 0.0, %v1683
      %v1685 = vpop.f32.mrb[0].mxu0
      %v1686 = vpop.f32.mrb[0].mxu0
      %v1687 = vadd.f32 0.0, %v1686
      %v1688 = vpop.f32.mrb[0].mxu0
      %1689 = vmatprep.mubr.bf16.mxu0 0
      %1690 = vmatmul.mubr.bf16.gmra.mrb[0].mxu0 %v1621
      %v1691 = vpop.f32.mrb[0].mxu0
      %v1692 = vadd.f32 0.0, %v1691
      %v1693 = vpop.f32.mrb[0].mxu0
      %v1694 = vpop.f32.mrb[0].mxu0
      %v1695 = vadd.f32 0.0, %v1694
      %v1696 = vpop.f32.mrb[0].mxu0
      %1697 = vmatprep.mubr.bf16.mxu0 0
      %1698 = vmatmul.mubr.bf16.gmra.mrb[0].mxu0 %v1622
      %v1699 = vpop.f32.mrb[0].mxu0
      %v1700 = vadd.f32 0.0, %v1699
      %v1701 = vpop.f32.mrb[0].mxu0
      %v1702 = vpop.f32.mrb[0].mxu0
      %v1703 = vadd.f32 0.0, %v1702
      %v1704 = vpop.f32.mrb[0].mxu0
      %1705 = vmatprep.mubr.bf16.mxu0 0
      %1706 = vmatmul.mubr.bf16.gmra.mrb[0].mxu0 %v1623
      %v1707 = vpop.f32.mrb[0].mxu0
      %v1708 = vadd.f32 0.0, %v1707
      %v1709 = vpop.f32.mrb[0].mxu0
      %v1710 = vpop.f32.mrb[0].mxu0
      %v1711 = vadd.f32 0.0, %v1710
      %v1712 = vpop.f32.mrb[0].mxu0
      %1713 = vmatprep.mubr.bf16.mxu0 0
      %1714 = vmatmul.mubr.bf16.gmra.mrb[0].mxu0 %v1624
      %v1715 = vpop.f32.mrb[0].mxu0
      %v1716 = vadd.f32 0.0, %v1715
      %v1717 = vpop.f32.mrb[0].mxu0
      %v1718 = vpop.f32.mrb[0].mxu0
      %v1719 = vadd.f32 0.0, %v1718
      %v1720 = vpop.f32.mrb[0].mxu0
      %1721 = vdwg.mxu0
      %v1722 = vld [vmem:[%s5] sm:$0xf]
      %v1723 = vld [vmem:[%s5 + $0x4] sm:$0xf]
      %v1724 = vld [vmem:[%s5 + $0x8] sm:$0xf]
      %v1725 = vld [vmem:[%s5 + $0xc] sm:$0xf]
      %v1726 = vld [vmem:[%s6] sm:$0x1]
      %v1728 = vlaneseq
      %v1729 = vshrl.u32 %v1728, 7
      %v1730 = vsub.s32 0, %v1729
      %v1731 = vrot.slane %v1726, %v1730
      %v1749 = vunpack.c.l.b16 %v1290
      %v1750 = vunpack.c.l.b16 %v1291
      %v1751 = vunpack.c.l.b16 %v1292
      %v1752 = vunpack.c.l.b16 %v1293
      %v1753 = vunpack.c.l.b16 %v1294
      %v1754 = vunpack.c.l.b16 %v1295
      %v1755 = vunpack.c.l.b16 %v1296
      %v1756 = vunpack.c.l.b16 %v1297
      %v1757 = vunpack.c.l.b16 %v1298
      %v1758 = vunpack.c.l.b16 %v1299
      %v1759 = vunpack.c.l.b16 %v1300
      %v1760 = vunpack.c.l.b16 %v1301
      %v1761 = vunpack.c.l.b16 %v1302
      %v1762 = vunpack.c.l.b16 %v1303
      %v1763 = vunpack.c.l.b16 %v1304
      %v1764 = vunpack.c.l.b16 %v1305
      %v1765 = vpack.c.b16 %v1750, %v1749
      %v1766 = vpack.c.b16 %v1752, %v1751
      %v1767 = vpack.c.b16 %v1754, %v1753
      %v1768 = vpack.c.b16 %v1756, %v1755
      %v1769 = vpack.c.b16 %v1758, %v1757
      %v1770 = vpack.c.b16 %v1760, %v1759
      %v1771 = vpack.c.b16 %v1762, %v1761
      %v1772 = vpack.c.b16 %v1764, %v1763
      %v1777 = vunpack.c.l.b16 %v1722
      %v1778 = vunpack.c.l.b16 %v1723
      %v1779 = vunpack.c.l.b16 %v1724
      %v1780 = vunpack.c.l.b16 %v1725
      %v1781 = vpack.c.b16 %v1778, %v1777
      %v1782 = vpack.c.b16 %v1780, %v1779
      %vm1785 = vcmask 261120
      %v1787 = vsel %vm1785, %v1765, 0
      %v1790 = vsel %vm1785, %v1766, 0
      %v1793 = vsel %vm1785, %v1767, 0
      %v1796 = vsel %vm1785, %v1768, 0
      %v1799 = vsel %vm1785, %v1769, 0
      %v1802 = vsel %vm1785, %v1770, 0
      %v1805 = vsel %vm1785, %v1771, 0
      %v1808 = vsel %vm1785, %v1772, 0
      %1810 = vmatprep.subr.bf16.mxu0 0
      %1811 = vmatpush1.bf16.msra.mxu0 %v1781
      %1812 = vmatprep.subr.bf16.mxu0 0
      %1813 = vmatpush1.bf16.msra.mxu0 %v1782
      %1814 = vmatprep.subr.bf16.mxu0 0
      %1815 = vmatpush1.bf16.msra.mxu0 0
      %1816 = vmatprep.subr.bf16.mxu0 0
      %1817 = vmatpush1.bf16.msra.mxu0 0
      %1818 = vmatprep.subr.bf16.mxu0 0
      %1819 = vmatpush1.bf16.msra.mxu0 0
      %1820 = vmatprep.subr.bf16.mxu0 0
      %1821 = vmatpush1.bf16.msra.mxu0 0
      %1822 = vmatprep.subr.bf16.mxu0 0
      %1823 = vmatpush1.bf16.msra.mxu0 0
      %1824 = vmatprep.subr.bf16.mxu0 0
      %1825 = vmatpush1.bf16.msra.mxu0 0
      %1826 = vmatprep.subr.bf16.mxu0 0
      %1827 = vmatpush1.bf16.msra.mxu0 0
      %1828 = vmatprep.subr.bf16.mxu0 0
      %1829 = vmatpush1.bf16.msra.mxu0 0
      %1830 = vmatprep.subr.bf16.mxu0 0
      %1831 = vmatpush1.bf16.msra.mxu0 0
      %1832 = vmatprep.subr.bf16.mxu0 0
      %1833 = vmatpush1.bf16.msra.mxu0 0
      %1834 = vmatprep.subr.bf16.mxu0 0
      %1835 = vmatpush1.bf16.msra.mxu0 0
      %1836 = vmatprep.subr.bf16.mxu0 0
      %1837 = vmatpush1.bf16.msra.mxu0 0
      %1838 = vmatprep.subr.bf16.mxu0 0
      %1839 = vmatpush1.bf16.msra.mxu0 0
      %1840 = vmatprep.subr.bf16.mxu0 0
      %1841 = vmatpush1.bf16.msra.mxu0 0
      %1842 = vmatprep.mubr.bf16.mxu0 0
      %1843 = vmatmul.mubr.bf16.gmra.mrb[0].mxu0 %v1787
      %v1844 = vpop.f32.mrb[0].mxu0
      %v1845 = vadd.f32 %v1731, %v1844
      %v1846 = vpop.f32.mrb[0].mxu0
      %v1847 = vpop.f32.mrb[0].mxu0
      %v1848 = vadd.f32 %v1731, %v1847
      %v1849 = vpop.f32.mrb[0].mxu0
      %1850 = vmatprep.mubr.bf16.mxu0 0
      %1851 = vmatmul.mubr.bf16.gmra.mrb[0].mxu0 %v1790
      %v1852 = vpop.f32.mrb[0].mxu0
      %v1853 = vadd.f32 %v1731, %v1852
      %v1854 = vpop.f32.mrb[0].mxu0
      %v1855 = vpop.f32.mrb[0].mxu0
      %v1856 = vadd.f32 %v1731, %v1855
      %v1857 = vpop.f32.mrb[0].mxu0
      %1858 = vmatprep.mubr.bf16.mxu0 0
      %1859 = vmatmul.mubr.bf16.gmra.mrb[0].mxu0 %v1793
      %v1860 = vpop.f32.mrb[0].mxu0
      %v1861 = vadd.f32 %v1731, %v1860
      %v1862 = vpop.f32.mrb[0].mxu0
      %v1863 = vpop.f32.mrb[0].mxu0
      %v1864 = vadd.f32 %v1731, %v1863
      %v1865 = vpop.f32.mrb[0].mxu0
      %1866 = vmatprep.mubr.bf16.mxu0 0
      %1867 = vmatmul.mubr.bf16.gmra.mrb[0].mxu0 %v1796
      %v1868 = vpop.f32.mrb[0].mxu0
      %v1869 = vadd.f32 %v1731, %v1868
      %v1870 = vpop.f32.mrb[0].mxu0
      %v1871 = vpop.f32.mrb[0].mxu0
      %v1872 = vadd.f32 %v1731, %v1871
      %v1873 = vpop.f32.mrb[0].mxu0
      %1874 = vmatprep.mubr.bf16.mxu0 0
      %1875 = vmatmul.mubr.bf16.gmra.mrb[0].mxu0 %v1799
      %v1876 = vpop.f32.mrb[0].mxu0
      %v1877 = vadd.f32 %v1731, %v1876
      %v1878 = vpop.f32.mrb[0].mxu0
      %v1879 = vpop.f32.mrb[0].mxu0
      %v1880 = vadd.f32 %v1731, %v1879
      %v1881 = vpop.f32.mrb[0].mxu0
      %1882 = vmatprep.mubr.bf16.mxu0 0
      %1883 = vmatmul.mubr.bf16.gmra.mrb[0].mxu0 %v1802
      %v1884 = vpop.f32.mrb[0].mxu0
      %v1885 = vadd.f32 %v1731, %v1884
      %v1886 = vpop.f32.mrb[0].mxu0
      %v1887 = vpop.f32.mrb[0].mxu0
      %v1888 = vadd.f32 %v1731, %v1887
      %v1889 = vpop.f32.mrb[0].mxu0
      %1890 = vmatprep.mubr.bf16.mxu0 0
      %1891 = vmatmul.mubr.bf16.gmra.mrb[0].mxu0 %v1805
      %v1892 = vpop.f32.mrb[0].mxu0
      %v1893 = vadd.f32 %v1731, %v1892
      %v1894 = vpop.f32.mrb[0].mxu0
      %v1895 = vpop.f32.mrb[0].mxu0
      %v1896 = vadd.f32 %v1731, %v1895
      %v1897 = vpop.f32.mrb[0].mxu0
      %1898 = vmatprep.mubr.bf16.mxu0 0
      %1899 = vmatmul.mubr.bf16.gmra.mrb[0].mxu0 %v1808
      %v1900 = vpop.f32.mrb[0].mxu0
      %v1901 = vadd.f32 %v1731, %v1900
      %v1902 = vpop.f32.mrb[0].mxu0
      %v1903 = vpop.f32.mrb[0].mxu0
      %v1904 = vadd.f32 %v1731, %v1903
      %v1905 = vpop.f32.mrb[0].mxu0
      %1906 = vdwg.mxu0
      %v1907 = vtanh.pop %v1845
      %v1908 = vtanh.pop %v1848
      %v1909 = vtanh.pop %v1853
      %v1910 = vtanh.pop %v1856
      %v1911 = vtanh.pop %v1861
      %v1912 = vtanh.pop %v1864
      %v1913 = vtanh.pop %v1869
      %v1914 = vtanh.pop %v1872
      %v1915 = vtanh.pop %v1877
      %v1916 = vtanh.pop %v1880
      %v1917 = vtanh.pop %v1885
      %v1918 = vtanh.pop %v1888
      %v1919 = vtanh.pop %v1893
      %v1920 = vtanh.pop %v1896
      %v1921 = vtanh.pop %v1901
      %v1922 = vtanh.pop %v1904
      %v1923 = vpack.c.bf16 %v1663, %v1660
      %v1924 = vpack.c.bf16 %v1671, %v1668
      %v1925 = vpack.c.bf16 %v1679, %v1676
      %v1926 = vpack.c.bf16 %v1687, %v1684
      %v1927 = vpack.c.bf16 %v1695, %v1692
      %v1928 = vpack.c.bf16 %v1703, %v1700
      %v1929 = vpack.c.bf16 %v1711, %v1708
      %v1930 = vpack.c.bf16 %v1719, %v1716
      %v1931 = vld [vmem:[%s9] sm:$0xf]
      %v1932 = vld [vmem:[%s9 + $0x4] sm:$0xf]
      %v1933 = vld [vmem:[%s9 + $0x8] sm:$0xf]
      %v1934 = vld [vmem:[%s9 + $0xc] sm:$0xf]
      %v1939 = vunpack.c.l.b16 %v1931
      %v1940 = vunpack.c.l.b16 %v1932
      %v1941 = vunpack.c.l.b16 %v1933
      %v1942 = vunpack.c.l.b16 %v1934
      %v1943 = vpack.c.b16 %v1940, %v1939
      %v1944 = vpack.c.b16 %v1942, %v1941
      %v1948 = vsel %vm1785, %v1923, 0
      %v1951 = vsel %vm1785, %v1924, 0
      %v1954 = vsel %vm1785, %v1925, 0
      %v1957 = vsel %vm1785, %v1926, 0
      %v1960 = vsel %vm1785, %v1927, 0
      %v1963 = vsel %vm1785, %v1928, 0
      %v1966 = vsel %vm1785, %v1929, 0
      %v1969 = vsel %vm1785, %v1930, 0
      %1971 = vmatprep.subr.bf16.mxu0 0
      %1972 = vmatpush1.bf16.msra.mxu0 %v1943
      %1973 = vmatprep.subr.bf16.mxu0 0
      %1974 = vmatpush1.bf16.msra.mxu0 %v1944
      %1975 = vmatprep.subr.bf16.mxu0 0
      %1976 = vmatpush1.bf16.msra.mxu0 0
      %1977 = vmatprep.subr.bf16.mxu0 0
      %1978 = vmatpush1.bf16.msra.mxu0 0
      %1979 = vmatprep.subr.bf16.mxu0 0
      %1980 = vmatpush1.bf16.msra.mxu0 0
      %1981 = vmatprep.subr.bf16.mxu0 0
      %1982 = vmatpush1.bf16.msra.mxu0 0
      %1983 = vmatprep.subr.bf16.mxu0 0
      %1984 = vmatpush1.bf16.msra.mxu0 0
      %1985 = vmatprep.subr.bf16.mxu0 0
      %1986 = vmatpush1.bf16.msra.mxu0 0
      %1987 = vmatprep.subr.bf16.mxu0 0
      %1988 = vmatpush1.bf16.msra.mxu0 0
      %1989 = vmatprep.subr.bf16.mxu0 0
      %1990 = vmatpush1.bf16.msra.mxu0 0
      %1991 = vmatprep.subr.bf16.mxu0 0
      %1992 = vmatpush1.bf16.msra.mxu0 0
      %1993 = vmatprep.subr.bf16.mxu0 0
      %1994 = vmatpush1.bf16.msra.mxu0 0
      %1995 = vmatprep.subr.bf16.mxu0 0
      %1996 = vmatpush1.bf16.msra.mxu0 0
      %1997 = vmatprep.subr.bf16.mxu0 0
      %1998 = vmatpush1.bf16.msra.mxu0 0
      %1999 = vmatprep.subr.bf16.mxu0 0
      %2000 = vmatpush1.bf16.msra.mxu0 0
      %2001 = vmatprep.subr.bf16.mxu0 0
      %2002 = vmatpush1.bf16.msra.mxu0 0
      %2003 = vmatprep.mubr.bf16.mxu0 0
      %2004 = vmatmul.mubr.bf16.gmra.mrb[0].mxu0 %v1948
      %v2005 = vpop.f32.mrb[0].mxu0
      %v2006 = vadd.f32 0.0, %v2005
      %v2007 = vpop.f32.mrb[0].mxu0
      %v2008 = vpop.f32.mrb[0].mxu0
      %v2009 = vadd.f32 0.0, %v2008
      %v2010 = vpop.f32.mrb[0].mxu0
      %2011 = vmatprep.mubr.bf16.mxu0 0
      %2012 = vmatmul.mubr.bf16.gmra.mrb[0].mxu0 %v1951
      %v2013 = vpop.f32.mrb[0].mxu0
      %v2014 = vadd.f32 0.0, %v2013
      %v2015 = vpop.f32.mrb[0].mxu0
      %v2016 = vpop.f32.mrb[0].mxu0
      %v2017 = vadd.f32 0.0, %v2016
      %v2018 = vpop.f32.mrb[0].mxu0
      %2019 = vmatprep.mubr.bf16.mxu0 0
      %2020 = vmatmul.mubr.bf16.gmra.mrb[0].mxu0 %v1954
      %v2021 = vpop.f32.mrb[0].mxu0
      %v2022 = vadd.f32 0.0, %v2021
      %v2023 = vpop.f32.mrb[0].mxu0
      %v2024 = vpop.f32.mrb[0].mxu0
      %v2025 = vadd.f32 0.0, %v2024
      %v2026 = vpop.f32.mrb[0].mxu0
      %2027 = vmatprep.mubr.bf16.mxu0 0
      %2028 = vmatmul.mubr.bf16.gmra.mrb[0].mxu0 %v1957
      %v2029 = vpop.f32.mrb[0].mxu0
      %v2030 = vadd.f32 0.0, %v2029
      %v2031 = vpop.f32.mrb[0].mxu0
      %v2032 = vpop.f32.mrb[0].mxu0
      %v2033 = vadd.f32 0.0, %v2032
      %v2034 = vpop.f32.mrb[0].mxu0
      %2035 = vmatprep.mubr.bf16.mxu0 0
      %2036 = vmatmul.mubr.bf16.gmra.mrb[0].mxu0 %v1960
      %v2037 = vpop.f32.mrb[0].mxu0
      %v2038 = vadd.f32 0.0, %v2037
      %v2039 = vpop.f32.mrb[0].mxu0
      %v2040 = vpop.f32.mrb[0].mxu0
      %v2041 = vadd.f32 0.0, %v2040
      %v2042 = vpop.f32.mrb[0].mxu0
      %2043 = vmatprep.mubr.bf16.mxu0 0
      %2044 = vmatmul.mubr.bf16.gmra.mrb[0].mxu0 %v1963
      %v2045 = vpop.f32.mrb[0].mxu0
      %v2046 = vadd.f32 0.0, %v2045
      %v2047 = vpop.f32.mrb[0].mxu0
      %v2048 = vpop.f32.mrb[0].mxu0
      %v2049 = vadd.f32 0.0, %v2048
      %v2050 = vpop.f32.mrb[0].mxu0
      %2051 = vmatprep.mubr.bf16.mxu0 0
      %2052 = vmatmul.mubr.bf16.gmra.mrb[0].mxu0 %v1966
      %v2053 = vpop.f32.mrb[0].mxu0
      %v2054 = vadd.f32 0.0, %v2053
      %v2055 = vpop.f32.mrb[0].mxu0
      %v2056 = vpop.f32.mrb[0].mxu0
      %v2057 = vadd.f32 0.0, %v2056
      %v2058 = vpop.f32.mrb[0].mxu0
      %2059 = vmatprep.mubr.bf16.mxu0 0
      %2060 = vmatmul.mubr.bf16.gmra.mrb[0].mxu0 %v1969
      %v2061 = vpop.f32.mrb[0].mxu0
      %v2062 = vadd.f32 0.0, %v2061
      %v2063 = vpop.f32.mrb[0].mxu0
      %v2064 = vpop.f32.mrb[0].mxu0
      %v2065 = vadd.f32 0.0, %v2064
      %v2066 = vpop.f32.mrb[0].mxu0
      %2067 = vdwg.mxu0
      %v2068 = vadd.f32 %v1907, %v2006
      %v2069 = vadd.f32 %v1908, %v2009
      %v2070 = vadd.f32 %v1909, %v2014
      %v2071 = vadd.f32 %v1910, %v2017
      %v2072 = vadd.f32 %v1911, %v2022
      %v2073 = vadd.f32 %v1912, %v2025
      %v2074 = vadd.f32 %v1913, %v2030
      %v2075 = vadd.f32 %v1914, %v2033
      %v2076 = vadd.f32 %v1915, %v2038
      %v2077 = vadd.f32 %v1916, %v2041
      %v2078 = vadd.f32 %v1917, %v2046
      %v2079 = vadd.f32 %v1918, %v2049
      %v2080 = vadd.f32 %v1919, %v2054
      %v2081 = vadd.f32 %v1920, %v2057
      %v2082 = vadd.f32 %v1921, %v2062
      %v2083 = vadd.f32 %v1922, %v2065
      %v2084 = vmul.f32 %v2068, 0.17677669
      %v2085 = vmul.f32 %v2069, 0.17677669
      %v2086 = vmul.f32 %v2070, 0.17677669
      %v2087 = vmul.f32 %v2071, 0.17677669
      %v2088 = vmul.f32 %v2072, 0.17677669
      %v2089 = vmul.f32 %v2073, 0.17677669
      %v2090 = vmul.f32 %v2074, 0.17677669
      %v2091 = vmul.f32 %v2075, 0.17677669
      %v2092 = vmul.f32 %v2076, 0.17677669
      %v2093 = vmul.f32 %v2077, 0.17677669
      %v2094 = vmul.f32 %v2078, 0.17677669
      %v2095 = vmul.f32 %v2079, 0.17677669
      %v2096 = vmul.f32 %v2080, 0.17677669
      %v2097 = vmul.f32 %v2081, 0.17677669
      %v2098 = vmul.f32 %v2082, 0.17677669
      %v2099 = vmul.f32 %v2083, 0.17677669
      %v2100 = vpack.c.bf16 %v2085, %v2084
      %v2101 = vpack.c.bf16 %v2087, %v2086
      %v2102 = vpack.c.bf16 %v2089, %v2088
      %v2103 = vpack.c.bf16 %v2091, %v2090
      %v2104 = vpack.c.bf16 %v2093, %v2092
      %v2105 = vpack.c.bf16 %v2095, %v2094
      %v2106 = vpack.c.bf16 %v2097, %v2096
      %v2107 = vpack.c.bf16 %v2099, %v2098
      %v2109 = vsel %vm1785, %v2100, 0
      %v2112 = vsel %vm1785, %v2101, 0
      %v2115 = vsel %vm1785, %v2102, 0
      %v2118 = vsel %vm1785, %v2103, 0
      %v2121 = vsel %vm1785, %v2104, 0
      %v2124 = vsel %vm1785, %v2105, 0
      %v2127 = vsel %vm1785, %v2106, 0
      %v2130 = vsel %vm1785, %v2107, 0
      %v2133 = vsel %vm1785, %v1609, 0
      %v2136 = vsel %vm1785, %v1610, 0
      %v2139 = vsel %vm1785, %v1611, 0
      %v2142 = vsel %vm1785, %v1612, 0
      %v2145 = vsel %vm1785, %v1613, 0
      %v2148 = vsel %vm1785, %v1614, 0
      %v2151 = vsel %vm1785, %v1615, 0
      %v2154 = vsel %vm1785, %v1616, 0
      %2156 = vmatprep.subr.bf16.mxu0 0
      %2157 = vmatpush1.bf16.xpose.msra.mxu0 %v2133
      %2158 = vmatprep.subr.bf16.mxu0 0
      %2159 = vmatpush1.bf16.xpose.msra.mxu0 %v2136
      %2160 = vmatprep.subr.bf16.mxu0 0
      %2161 = vmatpush1.bf16.xpose.msra.mxu0 %v2139
      %2162 = vmatprep.subr.bf16.mxu0 0
      %2163 = vmatpush1.bf16.xpose.msra.mxu0 %v2142
      %2164 = vmatprep.subr.bf16.mxu0 0
      %2165 = vmatpush1.bf16.xpose.msra.mxu0 %v2145
      %2166 = vmatprep.subr.bf16.mxu0 0
      %2167 = vmatpush1.bf16.xpose.msra.mxu0 %v2148
      %2168 = vmatprep.subr.bf16.mxu0 0
      %2169 = vmatpush1.bf16.xpose.msra.mxu0 %v2151
      %2170 = vmatprep.subr.bf16.mxu0 0
      %2171 = vmatpush1.bf16.xpose.msra.mxu0 %v2154
      %2172 = vmatprep.subr.bf16.mxu0 0
      %2173 = vmatpush1.bf16.xpose.msra.mxu0 0
      %2174 = vmatprep.subr.bf16.mxu0 0
      %2175 = vmatpush1.bf16.xpose.msra.mxu0 0
      %2176 = vmatprep.subr.bf16.mxu0 0
      %2177 = vmatpush1.bf16.xpose.msra.mxu0 0
      %2178 = vmatprep.subr.bf16.mxu0 0
      %2179 = vmatpush1.bf16.xpose.msra.mxu0 0
      %2180 = vmatprep.subr.bf16.mxu0 0
      %2181 = vmatpush1.bf16.xpose.msra.mxu0 0
      %2182 = vmatprep.subr.bf16.mxu0 0
      %2183 = vmatpush1.bf16.xpose.msra.mxu0 0
      %2184 = vmatprep.subr.bf16.mxu0 0
      %2185 = vmatpush1.bf16.xpose.msra.mxu0 0
      %2186 = vmatprep.subr.bf16.mxu0 0
      %2187 = vmatpush1.bf16.xpose.msra.mxu0 0
      %2188 = vmatprep.mubr.bf16.mxu0 0
      %2189 = vmatmul.mubr.bf16.gmra.mrb[0].mxu0 %v2109
      %v2190 = vpop.f32.mrb[0].mxu0
      %v2191 = vadd.f32 %v1433, %v2190
      %v2192 = vpop.f32.mrb[0].mxu0
      %v2193 = vpop.f32.mrb[0].mxu0
      %v2194 = vadd.f32 %v1434, %v2193
      %v2195 = vpop.f32.mrb[0].mxu0
      %2196 = vmatprep.mubr.bf16.mxu0 0
      %2197 = vmatmul.mubr.bf16.gmra.mrb[0].mxu0 %v2112
      %v2198 = vpop.f32.mrb[0].mxu0
      %v2199 = vadd.f32 %v1435, %v2198
      %v2200 = vpop.f32.mrb[0].mxu0
      %v2201 = vpop.f32.mrb[0].mxu0
      %v2202 = vadd.f32 %v1436, %v2201
      %v2203 = vpop.f32.mrb[0].mxu0
      %2204 = vmatprep.mubr.bf16.mxu0 0
      %2205 = vmatmul.mubr.bf16.gmra.mrb[0].mxu0 %v2115
      %v2206 = vpop.f32.mrb[0].mxu0
      %v2207 = vadd.f32 %v1437, %v2206
      %v2208 = vpop.f32.mrb[0].mxu0
      %v2209 = vpop.f32.mrb[0].mxu0
      %v2210 = vadd.f32 %v1438, %v2209
      %v2211 = vpop.f32.mrb[0].mxu0
      %2212 = vmatprep.mubr.bf16.mxu0 0
      %2213 = vmatmul.mubr.bf16.gmra.mrb[0].mxu0 %v2118
      %v2214 = vpop.f32.mrb[0].mxu0
      %v2215 = vadd.f32 %v1439, %v2214
      %v2216 = vpop.f32.mrb[0].mxu0
      %v2217 = vpop.f32.mrb[0].mxu0
      %v2218 = vadd.f32 %v1440, %v2217
      %v2219 = vpop.f32.mrb[0].mxu0
      %2220 = vmatprep.mubr.bf16.mxu0 0
      %2221 = vmatmul.mubr.bf16.gmra.mrb[0].mxu0 %v2121
      %v2222 = vpop.f32.mrb[0].mxu0
      %v2223 = vadd.f32 %v1441, %v2222
      %v2224 = vpop.f32.mrb[0].mxu0
      %v2225 = vpop.f32.mrb[0].mxu0
      %v2226 = vadd.f32 %v1442, %v2225
      %v2227 = vpop.f32.mrb[0].mxu0
      %2228 = vmatprep.mubr.bf16.mxu0 0
      %2229 = vmatmul.mubr.bf16.gmra.mrb[0].mxu0 %v2124
      %v2230 = vpop.f32.mrb[0].mxu0
      %v2231 = vadd.f32 %v1443, %v2230
      %v2232 = vpop.f32.mrb[0].mxu0
      %v2233 = vpop.f32.mrb[0].mxu0
      %v2234 = vadd.f32 %v1444, %v2233
      %v2235 = vpop.f32.mrb[0].mxu0
      %2236 = vmatprep.mubr.bf16.mxu0 0
      %2237 = vmatmul.mubr.bf16.gmra.mrb[0].mxu0 %v2127
      %v2238 = vpop.f32.mrb[0].mxu0
      %v2239 = vadd.f32 %v1445, %v2238
      %v2240 = vpop.f32.mrb[0].mxu0
      %v2241 = vpop.f32.mrb[0].mxu0
      %v2242 = vadd.f32 %v1446, %v2241
      %v2243 = vpop.f32.mrb[0].mxu0
      %2244 = vmatprep.mubr.bf16.mxu0 0
      %2245 = vmatmul.mubr.bf16.gmra.mrb[0].mxu0 %v2130
      %v2246 = vpop.f32.mrb[0].mxu0
      %v2247 = vadd.f32 %v1447, %v2246
      %v2248 = vpop.f32.mrb[0].mxu0
      %v2249 = vpop.f32.mrb[0].mxu0
      %v2250 = vadd.f32 %v1448, %v2249
      %v2251 = vpop.f32.mrb[0].mxu0
      %2252 = vdwg.mxu0
      %2253 = vst [vmem:[%s576] sm:$0xff] %v2191
      %2254 = vst [vmem:[%s576 + $0x20] sm:$0xff] %v2194
      %2255 = vst [vmem:[%s576 + $0x40] sm:$0xff] %v2199
      %2256 = vst [vmem:[%s576 + $0x60] sm:$0xff] %v2202
      %2257 = vst [vmem:[%s576 + $0x80] sm:$0xff] %v2207
      %2258 = vst [vmem:[%s576 + $0xa0] sm:$0xff] %v2210
      %2259 = vst [vmem:[%s576 + $0xc0] sm:$0xff] %v2215
      %2260 = vst [vmem:[%s576 + $0xe0] sm:$0xff] %v2218
      %2261 = vst [vmem:[%s576 + $0x100] sm:$0xff] %v2223
      %2262 = vst [vmem:[%s576 + $0x120] sm:$0xff] %v2226
      %2263 = vst [vmem:[%s576 + $0x140] sm:$0xff] %v2231
      %2264 = vst [vmem:[%s576 + $0x160] sm:$0xff] %v2234
      %2265 = vst [vmem:[%s576 + $0x180] sm:$0xff] %v2239
      %2266 = vst [vmem:[%s576 + $0x1a0] sm:$0xff] %v2242
      %2267 = vst [vmem:[%s576 + $0x1c0] sm:$0xff] %v2247
      %2268 = vst [vmem:[%s576 + $0x1e0] sm:$0xff] %v2250
      %2269 = vmax.xlane.f32.xlu0 %v2191
      %v2270 = vpop.xlane.xlu0 %2269
      %2271 = vmax.xlane.f32.xlu0 %v2194
      %v2272 = vpop.xlane.xlu0 %2271
      %2273 = vmax.xlane.f32.xlu0 %v2199
      %v2274 = vpop.xlane.xlu0 %2273
      %2275 = vmax.xlane.f32.xlu0 %v2202
      %v2276 = vpop.xlane.xlu0 %2275
      %2277 = vmax.xlane.f32.xlu0 %v2207
      %v2278 = vpop.xlane.xlu0 %2277
      %2279 = vmax.xlane.f32.xlu0 %v2210
      %v2280 = vpop.xlane.xlu0 %2279
      %2281 = vmax.xlane.f32.xlu0 %v2215
      %v2282 = vpop.xlane.xlu0 %2281
      %2283 = vmax.xlane.f32.xlu0 %v2218
      %v2284 = vpop.xlane.xlu0 %2283
      %2285 = vmax.xlane.f32.xlu0 %v2223
      %v2286 = vpop.xlane.xlu0 %2285
      %2287 = vmax.xlane.f32.xlu0 %v2226
      %v2288 = vpop.xlane.xlu0 %2287
      %2289 = vmax.xlane.f32.xlu0 %v2231
      %v2290 = vpop.xlane.xlu0 %2289
      %2291 = vmax.xlane.f32.xlu0 %v2234
      %v2292 = vpop.xlane.xlu0 %2291
      %2293 = vmax.xlane.f32.xlu0 %v2239
      %v2294 = vpop.xlane.xlu0 %2293
      %2295 = vmax.xlane.f32.xlu0 %v2242
      %v2296 = vpop.xlane.xlu0 %2295
      %2297 = vmax.xlane.f32.xlu0 %v2247
      %v2298 = vpop.xlane.xlu0 %2297
      %2299 = vmax.xlane.f32.xlu0 %v2250
      %v2300 = vpop.xlane.xlu0 %2299
      %v2301 = vsub.f32 %v2191, %v2270
      %v2302 = vsub.f32 %v2194, %v2272
      %v2303 = vsub.f32 %v2199, %v2274
      %v2304 = vsub.f32 %v2202, %v2276
      %v2305 = vsub.f32 %v2207, %v2278
      %v2306 = vsub.f32 %v2210, %v2280
      %v2307 = vsub.f32 %v2215, %v2282
      %v2308 = vsub.f32 %v2218, %v2284
      %v2309 = vsub.f32 %v2223, %v2286
      %v2310 = vsub.f32 %v2226, %v2288
      %v2311 = vsub.f32 %v2231, %v2290
      %v2312 = vsub.f32 %v2234, %v2292
      %v2313 = vsub.f32 %v2239, %v2294
      %v2314 = vsub.f32 %v2242, %v2296
      %v2315 = vsub.f32 %v2247, %v2298
      %v2316 = vsub.f32 %v2250, %v2300
      %v2317 = vmul.f32 %v2301, 1.442695
      %v2318 = vpow.pop %v2317
      %v2319 = vmul.f32 %v2302, 1.442695
      %v2320 = vpow.pop %v2319
      %v2321 = vmul.f32 %v2303, 1.442695
      %v2322 = vpow.pop %v2321
      %v2323 = vmul.f32 %v2304, 1.442695
      %v2324 = vpow.pop %v2323
      %v2325 = vmul.f32 %v2305, 1.442695
      %v2326 = vpow.pop %v2325
      %v2327 = vmul.f32 %v2306, 1.442695
      %v2328 = vpow.pop %v2327
      %v2329 = vmul.f32 %v2307, 1.442695
      %v2330 = vpow.pop %v2329
      %v2331 = vmul.f32 %v2308, 1.442695
      %v2332 = vpow.pop %v2331
      %v2333 = vmul.f32 %v2309, 1.442695
      %v2334 = vpow.pop %v2333
      %v2335 = vmul.f32 %v2310, 1.442695
      %v2336 = vpow.pop %v2335
      %v2337 = vmul.f32 %v2311, 1.442695
      %v2338 = vpow.pop %v2337
      %v2339 = vmul.f32 %v2312, 1.442695
      %v2340 = vpow.pop %v2339
      %v2341 = vmul.f32 %v2313, 1.442695
      %v2342 = vpow.pop %v2341
      %v2343 = vmul.f32 %v2314, 1.442695
      %v2344 = vpow.pop %v2343
      %v2345 = vmul.f32 %v2315, 1.442695
      %v2346 = vpow.pop %v2345
      %v2347 = vmul.f32 %v2316, 1.442695
      %v2348 = vpow.pop %v2347
      %2349 = vadd.xlane.f32.xlu0 %v2318
      %v2350 = vpop.xlane.xlu0 %2349
      %2351 = vadd.xlane.f32.xlu0 %v2320
      %v2352 = vpop.xlane.xlu0 %2351
      %2353 = vadd.xlane.f32.xlu0 %v2322
      %v2354 = vpop.xlane.xlu0 %2353
      %2355 = vadd.xlane.f32.xlu0 %v2324
      %v2356 = vpop.xlane.xlu0 %2355
      %2357 = vadd.xlane.f32.xlu0 %v2326
      %v2358 = vpop.xlane.xlu0 %2357
      %2359 = vadd.xlane.f32.xlu0 %v2328
      %v2360 = vpop.xlane.xlu0 %2359
      %2361 = vadd.xlane.f32.xlu0 %v2330
      %v2362 = vpop.xlane.xlu0 %2361
      %2363 = vadd.xlane.f32.xlu0 %v2332
      %v2364 = vpop.xlane.xlu0 %2363
      %2365 = vadd.xlane.f32.xlu0 %v2334
      %v2366 = vpop.xlane.xlu0 %2365
      %2367 = vadd.xlane.f32.xlu0 %v2336
      %v2368 = vpop.xlane.xlu0 %2367
      %2369 = vadd.xlane.f32.xlu0 %v2338
      %v2370 = vpop.xlane.xlu0 %2369
      %2371 = vadd.xlane.f32.xlu0 %v2340
      %v2372 = vpop.xlane.xlu0 %2371
      %2373 = vadd.xlane.f32.xlu0 %v2342
      %v2374 = vpop.xlane.xlu0 %2373
      %2375 = vadd.xlane.f32.xlu0 %v2344
      %v2376 = vpop.xlane.xlu0 %2375
      %2377 = vadd.xlane.f32.xlu0 %v2346
      %v2378 = vpop.xlane.xlu0 %2377
      %2379 = vadd.xlane.f32.xlu0 %v2348
      %v2380 = vpop.xlane.xlu0 %2379
      %v2381 = vlog2.pop %v2350
      %v2382 = vmul.f32 %v2381, 0.6931472
      %v2383 = vlog2.pop %v2352
      %v2384 = vmul.f32 %v2383, 0.6931472
      %v2385 = vlog2.pop %v2354
      %v2386 = vmul.f32 %v2385, 0.6931472
      %v2387 = vlog2.pop %v2356
      %v2388 = vmul.f32 %v2387, 0.6931472
      %v2389 = vlog2.pop %v2358
      %v2390 = vmul.f32 %v2389, 0.6931472
      %v2391 = vlog2.pop %v2360
      %v2392 = vmul.f32 %v2391, 0.6931472
      %v2393 = vlog2.pop %v2362
      %v2394 = vmul.f32 %v2393, 0.6931472
      %v2395 = vlog2.pop %v2364
      %v2396 = vmul.f32 %v2395, 0.6931472
      %v2397 = vlog2.pop %v2366
      %v2398 = vmul.f32 %v2397, 0.6931472
      %v2399 = vlog2.pop %v2368
      %v2400 = vmul.f32 %v2399, 0.6931472
      %v2401 = vlog2.pop %v2370
      %v2402 = vmul.f32 %v2401, 0.6931472
      %v2403 = vlog2.pop %v2372
      %v2404 = vmul.f32 %v2403, 0.6931472
      %v2405 = vlog2.pop %v2374
      %v2406 = vmul.f32 %v2405, 0.6931472
      %v2407 = vlog2.pop %v2376
      %v2408 = vmul.f32 %v2407, 0.6931472
      %v2409 = vlog2.pop %v2378
      %v2410 = vmul.f32 %v2409, 0.6931472
      %v2411 = vlog2.pop %v2380
      %v2412 = vmul.f32 %v2411, 0.6931472
      %v2413 = vadd.f32 %v2382, %v2270
      %v2414 = vadd.f32 %v2384, %v2272
      %v2415 = vadd.f32 %v2386, %v2274
      %v2416 = vadd.f32 %v2388, %v2276
      %v2417 = vadd.f32 %v2390, %v2278
      %v2418 = vadd.f32 %v2392, %v2280
      %v2419 = vadd.f32 %v2394, %v2282
      %v2420 = vadd.f32 %v2396, %v2284
      %v2421 = vadd.f32 %v2398, %v2286
      %v2422 = vadd.f32 %v2400, %v2288
      %v2423 = vadd.f32 %v2402, %v2290
      %v2424 = vadd.f32 %v2404, %v2292
      %v2425 = vadd.f32 %v2406, %v2294
      %v2426 = vadd.f32 %v2408, %v2296
      %v2427 = vadd.f32 %v2410, %v2298
      %v2428 = vadd.f32 %v2412, %v2300
      %v2429 = vsub.f32 %v2413, %v2191
      %v2430 = vsub.f32 %v2414, %v2194
      %v2431 = vsub.f32 %v2415, %v2199
      %v2432 = vsub.f32 %v2416, %v2202
      %v2433 = vsub.f32 %v2417, %v2207
      %v2434 = vsub.f32 %v2418, %v2210
      %v2435 = vsub.f32 %v2419, %v2215
      %v2436 = vsub.f32 %v2420, %v2218
      %v2437 = vsub.f32 %v2421, %v2223
      %v2438 = vsub.f32 %v2422, %v2226
      %v2439 = vsub.f32 %v2423, %v2231
      %v2440 = vsub.f32 %v2424, %v2234
      %v2441 = vsub.f32 %v2425, %v2239
      %v2442 = vsub.f32 %v2426, %v2242
      %v2443 = vsub.f32 %v2427, %v2247
      %v2444 = vsub.f32 %v2428, %v2250
      %v2445 = vmul.f32 %v2429, %v1363
      %v2446 = vmul.f32 %v2430, %v1364
      %v2447 = vmul.f32 %v2431, %v1365
      %v2448 = vmul.f32 %v2432, %v1366
      %v2449 = vmul.f32 %v2433, %v1367
      %v2450 = vmul.f32 %v2434, %v1368
      %v2451 = vmul.f32 %v2435, %v1369
      %v2452 = vmul.f32 %v2436, %v1370
      %v2453 = vmul.f32 %v2437, %v1371
      %v2454 = vmul.f32 %v2438, %v1372
      %v2455 = vmul.f32 %v2439, %v1373
      %v2456 = vmul.f32 %v2440, %v1374
      %v2457 = vmul.f32 %v2441, %v1375
      %v2458 = vmul.f32 %v2442, %v1376
      %v2459 = vmul.f32 %v2443, %v1377
      %v2460 = vmul.f32 %v2444, %v1378
      %v2461 = vadd.f32 %v2445, %v2446
      %v2462 = vadd.f32 %v2461, %v2447
      %v2463 = vadd.f32 %v2462, %v2448
      %v2464 = vadd.f32 %v2463, %v2449
      %v2465 = vadd.f32 %v2464, %v2450
      %v2466 = vadd.f32 %v2465, %v2451
      %v2467 = vadd.f32 %v2466, %v2452
      %v2468 = vadd.f32 %v2467, %v2453
      %v2469 = vadd.f32 %v2468, %v2454
      %v2470 = vadd.f32 %v2469, %v2455
      %v2471 = vadd.f32 %v2470, %v2456
      %v2472 = vadd.f32 %v2471, %v2457
      %v2473 = vadd.f32 %v2472, %v2458
      %v2474 = vadd.f32 %v2473, %v2459
      %v2475 = vadd.f32 %v2474, %v2460
      %2476 = vadd.xlane.f32.xlu0 %v2475
      %v2477 = vpop.xlane.xlu0 %2476
      %v2478 = vrot.slane %v2477, 4
      %v2479 = vadd.f32 %v2477, %v2478
      %v2480 = vrot.slane %v2479, 2
      %v2481 = vadd.f32 %v2479, %v2480
      %v2482 = vrot.slane %v2481, 1
      %v2483 = vadd.f32 %v2481, %v2482
      %s2484 = vtos %v2483
      %v2485 = vstv %s2484
      %v2486 = vadd.f32 %v2485, 0.0
      %v2487 = vadd.f32 %v1363, %v1364
      %v2488 = vadd.f32 %v2487, %v1365
      %v2489 = vadd.f32 %v2488, %v1366
      %v2490 = vadd.f32 %v2489, %v1367
      %v2491 = vadd.f32 %v2490, %v1368
      %v2492 = vadd.f32 %v2491, %v1369
      %v2493 = vadd.f32 %v2492, %v1370
      %v2494 = vadd.f32 %v2493, %v1371
      %v2495 = vadd.f32 %v2494, %v1372
      %v2496 = vadd.f32 %v2495, %v1373
      %v2497 = vadd.f32 %v2496, %v1374
      %v2498 = vadd.f32 %v2497, %v1375
      %v2499 = vadd.f32 %v2498, %v1376
      %v2500 = vadd.f32 %v2499, %v1377
      %v2501 = vadd.f32 %v2500, %v1378
      %2502 = vadd.xlane.f32.xlu0 %v2501
      %v2503 = vpop.xlane.xlu0 %2502
      %v2504 = vrot.slane %v2503, 4
      %v2505 = vadd.f32 %v2503, %v2504
      %v2506 = vrot.slane %v2505, 2
      %v2507 = vadd.f32 %v2505, %v2506
      %v2508 = vrot.slane %v2507, 1
      %v2509 = vadd.f32 %v2507, %v2508
      %s2510 = vtos %v2509
      %v2511 = vstv %s2510
      %v2512 = vadd.f32 %v2511, 0.0
      %v2513 = vld [vmem:[%s554 + $0x8] sm:$0xff]
      %v2514 = vld [vmem:[%s554 + $0x28] sm:$0xff]
      %v2515 = vld [vmem:[%s554 + $0x48] sm:$0xff]
      %v2516 = vld [vmem:[%s554 + $0x68] sm:$0xff]
      %v2517 = vunpack.c.0.s8 %v2513
      %v2518 = vunpack.c.1.s8 %v2513
      %v2519 = vunpack.c.2.s8 %v2513
      %v2520 = vunpack.c.3.s8 %v2513
      %v2521 = vunpack.c.0.s8 %v2514
      %v2522 = vunpack.c.1.s8 %v2514
      %v2523 = vunpack.c.2.s8 %v2514
      %v2524 = vunpack.c.3.s8 %v2514
      %v2525 = vunpack.c.0.s8 %v2515
      %v2526 = vunpack.c.1.s8 %v2515
      %v2527 = vunpack.c.2.s8 %v2515
      %v2528 = vunpack.c.3.s8 %v2515
      %v2529 = vunpack.c.0.s8 %v2516
      %v2530 = vunpack.c.1.s8 %v2516
      %v2531 = vunpack.c.2.s8 %v2516
      %v2532 = vunpack.c.3.s8 %v2516
      %v2533 = vcvt.s32.f32 %v2517
      %v2534 = vcvt.s32.f32 %v2518
      %v2535 = vcvt.s32.f32 %v2519
      %v2536 = vcvt.s32.f32 %v2520
      %v2537 = vcvt.s32.f32 %v2521
      %v2538 = vcvt.s32.f32 %v2522
      %v2539 = vcvt.s32.f32 %v2523
      %v2540 = vcvt.s32.f32 %v2524
      %v2541 = vcvt.s32.f32 %v2525
      %v2542 = vcvt.s32.f32 %v2526
      %v2543 = vcvt.s32.f32 %v2527
      %v2544 = vcvt.s32.f32 %v2528
      %v2545 = vcvt.s32.f32 %v2529
      %v2546 = vcvt.s32.f32 %v2530
      %v2547 = vcvt.s32.f32 %v2531
      %v2548 = vcvt.s32.f32 %v2532
      %v2549 = vld [vmem:[%s565 + $0x4] sm:$0xf]
      %v2550 = vld [vmem:[%s565 + $0x14] sm:$0xf]
      %v2551 = vld [vmem:[%s565 + $0x24] sm:$0xf]
      %v2552 = vld [vmem:[%s565 + $0x34] sm:$0xf]
      %v2553 = vld [vmem:[%s565 + $0x44] sm:$0xf]
      %v2554 = vld [vmem:[%s565 + $0x54] sm:$0xf]
      %v2555 = vld [vmem:[%s565 + $0x64] sm:$0xf]
      %v2556 = vld [vmem:[%s565 + $0x74] sm:$0xf]
      %v2557 = vld [vmem:[%s565 + $0x84] sm:$0xf]
      %v2558 = vld [vmem:[%s565 + $0x94] sm:$0xf]
      %v2559 = vld [vmem:[%s565 + $0xa4] sm:$0xf]
      %v2560 = vld [vmem:[%s565 + $0xb4] sm:$0xf]
      %v2561 = vld [vmem:[%s565 + $0xc4] sm:$0xf]
      %v2562 = vld [vmem:[%s565 + $0xd4] sm:$0xf]
      %v2563 = vld [vmem:[%s565 + $0xe4] sm:$0xf]
      %v2564 = vld [vmem:[%s565 + $0xf4] sm:$0xf]
      %v2565 = vunpack.c.l.bf16 %v2549
      %v2566 = vunpack.c.l.bf16 %v2550
      %v2567 = vunpack.c.l.bf16 %v2551
      %v2568 = vunpack.c.l.bf16 %v2552
      %v2569 = vunpack.c.l.bf16 %v2553
      %v2570 = vunpack.c.l.bf16 %v2554
      %v2571 = vunpack.c.l.bf16 %v2555
      %v2572 = vunpack.c.l.bf16 %v2556
      %v2573 = vunpack.c.l.bf16 %v2557
      %v2574 = vunpack.c.l.bf16 %v2558
      %v2575 = vunpack.c.l.bf16 %v2559
      %v2576 = vunpack.c.l.bf16 %v2560
      %v2577 = vunpack.c.l.bf16 %v2561
      %v2578 = vunpack.c.l.bf16 %v2562
      %v2579 = vunpack.c.l.bf16 %v2563
      %v2580 = vunpack.c.l.bf16 %v2564
      %v2581 = vmul.f32 %v2533, %v1383
      %v2582 = vmul.f32 %v2534, %v1383
      %v2583 = vmul.f32 %v2535, %v1383
      %v2584 = vmul.f32 %v2536, %v1383
      %v2585 = vmul.f32 %v2537, %v1383
      %v2586 = vmul.f32 %v2538, %v1383
      %v2587 = vmul.f32 %v2539, %v1383
      %v2588 = vmul.f32 %v2540, %v1383
      %v2589 = vmul.f32 %v2541, %v1383
      %v2590 = vmul.f32 %v2542, %v1383
      %v2591 = vmul.f32 %v2543, %v1383
      %v2592 = vmul.f32 %v2544, %v1383
      %v2593 = vmul.f32 %v2545, %v1383
      %v2594 = vmul.f32 %v2546, %v1383
      %v2595 = vmul.f32 %v2547, %v1383
      %v2596 = vmul.f32 %v2548, %v1383
      %v2597 = vsub.f32 1.0, %v2581
      %v2598 = vsub.f32 1.0, %v2582
      %v2599 = vsub.f32 1.0, %v2583
      %v2600 = vsub.f32 1.0, %v2584
      %v2601 = vsub.f32 1.0, %v2585
      %v2602 = vsub.f32 1.0, %v2586
      %v2603 = vsub.f32 1.0, %v2587
      %v2604 = vsub.f32 1.0, %v2588
      %v2605 = vsub.f32 1.0, %v2589
      %v2606 = vsub.f32 1.0, %v2590
      %v2607 = vsub.f32 1.0, %v2591
      %v2608 = vsub.f32 1.0, %v2592
      %v2609 = vsub.f32 1.0, %v2593
      %v2610 = vsub.f32 1.0, %v2594
      %v2611 = vsub.f32 1.0, %v2595
      %v2612 = vsub.f32 1.0, %v2596
      %v2613 = vmul.f32 %v2597, -1024.0
      %v2614 = vmul.f32 %v2598, -1024.0
      %v2615 = vmul.f32 %v2599, -1024.0
      %v2616 = vmul.f32 %v2600, -1024.0
      %v2617 = vmul.f32 %v2601, -1024.0
      %v2618 = vmul.f32 %v2602, -1024.0
      %v2619 = vmul.f32 %v2603, -1024.0
      %v2620 = vmul.f32 %v2604, -1024.0
      %v2621 = vmul.f32 %v2605, -1024.0
      %v2622 = vmul.f32 %v2606, -1024.0
      %v2623 = vmul.f32 %v2607, -1024.0
      %v2624 = vmul.f32 %v2608, -1024.0
      %v2625 = vmul.f32 %v2609, -1024.0
      %v2626 = vmul.f32 %v2610, -1024.0
      %v2627 = vmul.f32 %v2611, -1024.0
      %v2628 = vmul.f32 %v2612, -1024.0
      %v2629 = vadd.f32 %v2613, %v1310
      %v2630 = vadd.f32 %v2614, %v1310
      %v2631 = vadd.f32 %v2615, %v1310
      %v2632 = vadd.f32 %v2616, %v1310
      %v2633 = vadd.f32 %v2617, %v1310
      %v2634 = vadd.f32 %v2618, %v1310
      %v2635 = vadd.f32 %v2619, %v1310
      %v2636 = vadd.f32 %v2620, %v1310
      %v2637 = vadd.f32 %v2621, %v1310
      %v2638 = vadd.f32 %v2622, %v1310
      %v2639 = vadd.f32 %v2623, %v1310
      %v2640 = vadd.f32 %v2624, %v1310
      %v2641 = vadd.f32 %v2625, %v1310
      %v2642 = vadd.f32 %v2626, %v1310
      %v2643 = vadd.f32 %v2627, %v1310
      %v2644 = vadd.f32 %v2628, %v1310
      %v2645 = vadd.f32 %v2565, %v2629
      %v2646 = vadd.f32 %v2566, %v2630
      %v2647 = vadd.f32 %v2567, %v2631
      %v2648 = vadd.f32 %v2568, %v2632
      %v2649 = vadd.f32 %v2569, %v2633
      %v2650 = vadd.f32 %v2570, %v2634
      %v2651 = vadd.f32 %v2571, %v2635
      %v2652 = vadd.f32 %v2572, %v2636
      %v2653 = vadd.f32 %v2573, %v2637
      %v2654 = vadd.f32 %v2574, %v2638
      %v2655 = vadd.f32 %v2575, %v2639
      %v2656 = vadd.f32 %v2576, %v2640
      %v2657 = vadd.f32 %v2577, %v2641
      %v2658 = vadd.f32 %v2578, %v2642
      %v2659 = vadd.f32 %v2579, %v2643
      %v2660 = vadd.f32 %v2580, %v2644
      %2661 = vmax.xlane.f32.xlu0 %v2645
      %v2662 = vpop.xlane.xlu0 %2661
      %2663 = vmax.xlane.f32.xlu0 %v2646
      %v2664 = vpop.xlane.xlu0 %2663
      %2665 = vmax.xlane.f32.xlu0 %v2647
      %v2666 = vpop.xlane.xlu0 %2665
      %2667 = vmax.xlane.f32.xlu0 %v2648
      %v2668 = vpop.xlane.xlu0 %2667
      %2669 = vmax.xlane.f32.xlu0 %v2649
      %v2670 = vpop.xlane.xlu0 %2669
      %2671 = vmax.xlane.f32.xlu0 %v2650
      %v2672 = vpop.xlane.xlu0 %2671
      %2673 = vmax.xlane.f32.xlu0 %v2651
      %v2674 = vpop.xlane.xlu0 %2673
      %2675 = vmax.xlane.f32.xlu0 %v2652
      %v2676 = vpop.xlane.xlu0 %2675
      %2677 = vmax.xlane.f32.xlu0 %v2653
      %v2678 = vpop.xlane.xlu0 %2677
      %2679 = vmax.xlane.f32.xlu0 %v2654
      %v2680 = vpop.xlane.xlu0 %2679
      %2681 = vmax.xlane.f32.xlu0 %v2655
      %v2682 = vpop.xlane.xlu0 %2681
      %2683 = vmax.xlane.f32.xlu0 %v2656
      %v2684 = vpop.xlane.xlu0 %2683
      %2685 = vmax.xlane.f32.xlu0 %v2657
      %v2686 = vpop.xlane.xlu0 %2685
      %2687 = vmax.xlane.f32.xlu0 %v2658
      %v2688 = vpop.xlane.xlu0 %2687
      %2689 = vmax.xlane.f32.xlu0 %v2659
      %v2690 = vpop.xlane.xlu0 %2689
      %2691 = vmax.xlane.f32.xlu0 %v2660
      %v2692 = vpop.xlane.xlu0 %2691
      %v2693 = vsub.f32 %v2645, %v2662
      %v2694 = vsub.f32 %v2646, %v2664
      %v2695 = vsub.f32 %v2647, %v2666
      %v2696 = vsub.f32 %v2648, %v2668
      %v2697 = vsub.f32 %v2649, %v2670
      %v2698 = vsub.f32 %v2650, %v2672
      %v2699 = vsub.f32 %v2651, %v2674
      %v2700 = vsub.f32 %v2652, %v2676
      %v2701 = vsub.f32 %v2653, %v2678
      %v2702 = vsub.f32 %v2654, %v2680
      %v2703 = vsub.f32 %v2655, %v2682
      %v2704 = vsub.f32 %v2656, %v2684
      %v2705 = vsub.f32 %v2657, %v2686
      %v2706 = vsub.f32 %v2658, %v2688
      %v2707 = vsub.f32 %v2659, %v2690
      %v2708 = vsub.f32 %v2660, %v2692
      %v2709 = vmul.f32 %v2693, 1.442695
      %v2710 = vpow.pop %v2709
      %v2711 = vmul.f32 %v2694, 1.442695
      %v2712 = vpow.pop %v2711
      %v2713 = vmul.f32 %v2695, 1.442695
      %v2714 = vpow.pop %v2713
      %v2715 = vmul.f32 %v2696, 1.442695
      %v2716 = vpow.pop %v2715
      %v2717 = vmul.f32 %v2697, 1.442695
      %v2718 = vpow.pop %v2717
      %v2719 = vmul.f32 %v2698, 1.442695
      %v2720 = vpow.pop %v2719
      %v2721 = vmul.f32 %v2699, 1.442695
      %v2722 = vpow.pop %v2721
      %v2723 = vmul.f32 %v2700, 1.442695
      %v2724 = vpow.pop %v2723
      %v2725 = vmul.f32 %v2701, 1.442695
      %v2726 = vpow.pop %v2725
      %v2727 = vmul.f32 %v2702, 1.442695
      %v2728 = vpow.pop %v2727
      %v2729 = vmul.f32 %v2703, 1.442695
      %v2730 = vpow.pop %v2729
      %v2731 = vmul.f32 %v2704, 1.442695
      %v2732 = vpow.pop %v2731
      %v2733 = vmul.f32 %v2705, 1.442695
      %v2734 = vpow.pop %v2733
      %v2735 = vmul.f32 %v2706, 1.442695
      %v2736 = vpow.pop %v2735
      %v2737 = vmul.f32 %v2707, 1.442695
      %v2738 = vpow.pop %v2737
      %v2739 = vmul.f32 %v2708, 1.442695
      %v2740 = vpow.pop %v2739
      %2741 = vadd.xlane.f32.xlu0 %v2710
      %v2742 = vpop.xlane.xlu0 %2741
      %2743 = vadd.xlane.f32.xlu0 %v2712
      %v2744 = vpop.xlane.xlu0 %2743
      %2745 = vadd.xlane.f32.xlu0 %v2714
      %v2746 = vpop.xlane.xlu0 %2745
      %2747 = vadd.xlane.f32.xlu0 %v2716
      %v2748 = vpop.xlane.xlu0 %2747
      %2749 = vadd.xlane.f32.xlu0 %v2718
      %v2750 = vpop.xlane.xlu0 %2749
      %2751 = vadd.xlane.f32.xlu0 %v2720
      %v2752 = vpop.xlane.xlu0 %2751
      %2753 = vadd.xlane.f32.xlu0 %v2722
      %v2754 = vpop.xlane.xlu0 %2753
      %2755 = vadd.xlane.f32.xlu0 %v2724
      %v2756 = vpop.xlane.xlu0 %2755
      %2757 = vadd.xlane.f32.xlu0 %v2726
      %v2758 = vpop.xlane.xlu0 %2757
      %2759 = vadd.xlane.f32.xlu0 %v2728
      %v2760 = vpop.xlane.xlu0 %2759
      %2761 = vadd.xlane.f32.xlu0 %v2730
      %v2762 = vpop.xlane.xlu0 %2761
      %2763 = vadd.xlane.f32.xlu0 %v2732
      %v2764 = vpop.xlane.xlu0 %2763
      %2765 = vadd.xlane.f32.xlu0 %v2734
      %v2766 = vpop.xlane.xlu0 %2765
      %2767 = vadd.xlane.f32.xlu0 %v2736
      %v2768 = vpop.xlane.xlu0 %2767
      %2769 = vadd.xlane.f32.xlu0 %v2738
      %v2770 = vpop.xlane.xlu0 %2769
      %2771 = vadd.xlane.f32.xlu0 %v2740
      %v2772 = vpop.xlane.xlu0 %2771
      %v2773 = vrcp.pop %v2742
      %v2774 = vrcp.pop %v2744
      %v2775 = vrcp.pop %v2746
      %v2776 = vrcp.pop %v2748
      %v2777 = vrcp.pop %v2750
      %v2778 = vrcp.pop %v2752
      %v2779 = vrcp.pop %v2754
      %v2780 = vrcp.pop %v2756
      %v2781 = vrcp.pop %v2758
      %v2782 = vrcp.pop %v2760
      %v2783 = vrcp.pop %v2762
      %v2784 = vrcp.pop %v2764
      %v2785 = vrcp.pop %v2766
      %v2786 = vrcp.pop %v2768
      %v2787 = vrcp.pop %v2770
      %v2788 = vrcp.pop %v2772
      %v2789 = vmul.f32 %v2710, %v2773
      %v2790 = vmul.f32 %v2712, %v2774
      %v2791 = vmul.f32 %v2714, %v2775
      %v2792 = vmul.f32 %v2716, %v2776
      %v2793 = vmul.f32 %v2718, %v2777
      %v2794 = vmul.f32 %v2720, %v2778
      %v2795 = vmul.f32 %v2722, %v2779
      %v2796 = vmul.f32 %v2724, %v2780
      %v2797 = vmul.f32 %v2726, %v2781
      %v2798 = vmul.f32 %v2728, %v2782
      %v2799 = vmul.f32 %v2730, %v2783
      %v2800 = vmul.f32 %v2732, %v2784
      %v2801 = vmul.f32 %v2734, %v2785
      %v2802 = vmul.f32 %v2736, %v2786
      %v2803 = vmul.f32 %v2738, %v2787
      %v2804 = vmul.f32 %v2740, %v2788
      %s2805 = scalar_lea.vmem [#allocation2], 64
      %v2806 = vld [vmem:[%s2805] sm:$0xff]
      %v2807 = vld [vmem:[%s2805 + $0x8] sm:$0xff]
      %v2808 = vld [vmem:[%s2805 + $0x10] sm:$0xff]
      %v2809 = vld [vmem:[%s2805 + $0x18] sm:$0xff]
      %v2810 = vld [vmem:[%s2805 + $0x20] sm:$0xff]
      %v2811 = vld [vmem:[%s2805 + $0x28] sm:$0xff]
      %v2812 = vld [vmem:[%s2805 + $0x30] sm:$0xff]
      %v2813 = vld [vmem:[%s2805 + $0x38] sm:$0xff]
      %v2814 = vpack.c.bf16 %v2790, %v2789
      %v2815 = vpack.c.bf16 %v2792, %v2791
      %v2816 = vpack.c.bf16 %v2794, %v2793
      %v2817 = vpack.c.bf16 %v2796, %v2795
      %v2818 = vpack.c.bf16 %v2798, %v2797
      %v2819 = vpack.c.bf16 %v2800, %v2799
      %v2820 = vpack.c.bf16 %v2802, %v2801
      %v2821 = vpack.c.bf16 %v2804, %v2803
      %2822 = vmatprep.subr.bf16.mxu0 0
      %2823 = vmatpush1.bf16.msra.mxu0 %v2806
      %2824 = vmatprep.subr.bf16.mxu0 0
      %2825 = vmatpush1.bf16.msra.mxu0 %v2807
      %2826 = vmatprep.subr.bf16.mxu0 0
      %2827 = vmatpush1.bf16.msra.mxu0 %v2808
      %2828 = vmatprep.subr.bf16.mxu0 0
      %2829 = vmatpush1.bf16.msra.mxu0 %v2809
      %2830 = vmatprep.subr.bf16.mxu0 0
      %2831 = vmatpush1.bf16.msra.mxu0 %v2810
      %2832 = vmatprep.subr.bf16.mxu0 0
      %2833 = vmatpush1.bf16.msra.mxu0 %v2811
      %2834 = vmatprep.subr.bf16.mxu0 0
      %2835 = vmatpush1.bf16.msra.mxu0 %v2812
      %2836 = vmatprep.subr.bf16.mxu0 0
      %2837 = vmatpush1.bf16.msra.mxu0 %v2813
      %2838 = vmatprep.subr.bf16.mxu0 0
      %2839 = vmatpush1.bf16.msra.mxu0 0
      %2840 = vmatprep.subr.bf16.mxu0 0
      %2841 = vmatpush1.bf16.msra.mxu0 0
      %2842 = vmatprep.subr.bf16.mxu0 0
      %2843 = vmatpush1.bf16.msra.mxu0 0
      %2844 = vmatprep.subr.bf16.mxu0 0
      %2845 = vmatpush1.bf16.msra.mxu0 0
      %2846 = vmatprep.subr.bf16.mxu0 0
      %2847 = vmatpush1.bf16.msra.mxu0 0
      %2848 = vmatprep.subr.bf16.mxu0 0
      %2849 = vmatpush1.bf16.msra.mxu0 0
      %2850 = vmatprep.subr.bf16.mxu0 0
      %2851 = vmatpush1.bf16.msra.mxu0 0
      %2852 = vmatprep.subr.bf16.mxu0 0
      %2853 = vmatpush1.bf16.msra.mxu0 0
      %2854 = vmatprep.mubr.bf16.mxu0 0
      %2855 = vmatmul.mubr.bf16.gmra.mrb[0].mxu0 %v2814
      %v2856 = vpop.f32.mrb[0].mxu0
      %v2857 = vadd.f32 0.0, %v2856
      %v2858 = vpop.f32.mrb[0].mxu0
      %v2859 = vpop.f32.mrb[0].mxu0
      %v2860 = vadd.f32 0.0, %v2859
      %v2861 = vpop.f32.mrb[0].mxu0
      %2862 = vmatprep.mubr.bf16.mxu0 0
      %2863 = vmatmul.mubr.bf16.gmra.mrb[0].mxu0 %v2815
      %v2864 = vpop.f32.mrb[0].mxu0
      %v2865 = vadd.f32 0.0, %v2864
      %v2866 = vpop.f32.mrb[0].mxu0
      %v2867 = vpop.f32.mrb[0].mxu0
      %v2868 = vadd.f32 0.0, %v2867
      %v2869 = vpop.f32.mrb[0].mxu0
      %2870 = vmatprep.mubr.bf16.mxu0 0
      %2871 = vmatmul.mubr.bf16.gmra.mrb[0].mxu0 %v2816
      %v2872 = vpop.f32.mrb[0].mxu0
      %v2873 = vadd.f32 0.0, %v2872
      %v2874 = vpop.f32.mrb[0].mxu0
      %v2875 = vpop.f32.mrb[0].mxu0
      %v2876 = vadd.f32 0.0, %v2875
      %v2877 = vpop.f32.mrb[0].mxu0
      %2878 = vmatprep.mubr.bf16.mxu0 0
      %2879 = vmatmul.mubr.bf16.gmra.mrb[0].mxu0 %v2817
      %v2880 = vpop.f32.mrb[0].mxu0
      %v2881 = vadd.f32 0.0, %v2880
      %v2882 = vpop.f32.mrb[0].mxu0
      %v2883 = vpop.f32.mrb[0].mxu0
      %v2884 = vadd.f32 0.0, %v2883
      %v2885 = vpop.f32.mrb[0].mxu0
      %2886 = vmatprep.mubr.bf16.mxu0 0
      %2887 = vmatmul.mubr.bf16.gmra.mrb[0].mxu0 %v2818
      %v2888 = vpop.f32.mrb[0].mxu0
      %v2889 = vadd.f32 0.0, %v2888
      %v2890 = vpop.f32.mrb[0].mxu0
      %v2891 = vpop.f32.mrb[0].mxu0
      %v2892 = vadd.f32 0.0, %v2891
      %v2893 = vpop.f32.mrb[0].mxu0
      %2894 = vmatprep.mubr.bf16.mxu0 0
      %2895 = vmatmul.mubr.bf16.gmra.mrb[0].mxu0 %v2819
      %v2896 = vpop.f32.mrb[0].mxu0
      %v2897 = vadd.f32 0.0, %v2896
      %v2898 = vpop.f32.mrb[0].mxu0
      %v2899 = vpop.f32.mrb[0].mxu0
      %v2900 = vadd.f32 0.0, %v2899
      %v2901 = vpop.f32.mrb[0].mxu0
      %2902 = vmatprep.mubr.bf16.mxu0 0
      %2903 = vmatmul.mubr.bf16.gmra.mrb[0].mxu0 %v2820
      %v2904 = vpop.f32.mrb[0].mxu0
      %v2905 = vadd.f32 0.0, %v2904
      %v2906 = vpop.f32.mrb[0].mxu0
      %v2907 = vpop.f32.mrb[0].mxu0
      %v2908 = vadd.f32 0.0, %v2907
      %v2909 = vpop.f32.mrb[0].mxu0
      %2910 = vmatprep.mubr.bf16.mxu0 0
      %2911 = vmatmul.mubr.bf16.gmra.mrb[0].mxu0 %v2821
      %v2912 = vpop.f32.mrb[0].mxu0
      %v2913 = vadd.f32 0.0, %v2912
      %v2914 = vpop.f32.mrb[0].mxu0
      %v2915 = vpop.f32.mrb[0].mxu0
      %v2916 = vadd.f32 0.0, %v2915
      %v2917 = vpop.f32.mrb[0].mxu0
      %2918 = vdwg.mxu0
      %s2919 = scalar_lea.vmem %s5, 16
      %v2920 = vld [vmem:[%s2919] sm:$0xf]
      %v2921 = vld [vmem:[%s2919 + $0x4] sm:$0xf]
      %v2922 = vld [vmem:[%s2919 + $0x8] sm:$0xf]
      %v2923 = vld [vmem:[%s2919 + $0xc] sm:$0xf]
      %s2924 = scalar_lea.vmem %s6, 1
      %v2925 = vld [vmem:[%s2924] sm:$0x1]
      %v2927 = vlaneseq
      %v2928 = vshrl.u32 %v2927, 7
      %v2929 = vsub.s32 0, %v2928
      %v2930 = vrot.slane %v2925, %v2929
      %v2936 = vunpack.c.l.b16 %v2920
      %v2937 = vunpack.c.l.b16 %v2921
      %v2938 = vunpack.c.l.b16 %v2922
      %v2939 = vunpack.c.l.b16 %v2923
      %v2940 = vpack.c.b16 %v2937, %v2936
      %v2941 = vpack.c.b16 %v2939, %v2938
      %2944 = vmatprep.subr.bf16.mxu0 0
      %2945 = vmatpush1.bf16.msra.mxu0 %v2940
      %2946 = vmatprep.subr.bf16.mxu0 0
      %2947 = vmatpush1.bf16.msra.mxu0 %v2941
      %2948 = vmatprep.subr.bf16.mxu0 0
      %2949 = vmatpush1.bf16.msra.mxu0 0
      %2950 = vmatprep.subr.bf16.mxu0 0
      %2951 = vmatpush1.bf16.msra.mxu0 0
      %2952 = vmatprep.subr.bf16.mxu0 0
      %2953 = vmatpush1.bf16.msra.mxu0 0
      %2954 = vmatprep.subr.bf16.mxu0 0
      %2955 = vmatpush1.bf16.msra.mxu0 0
      %2956 = vmatprep.subr.bf16.mxu0 0
      %2957 = vmatpush1.bf16.msra.mxu0 0
      %2958 = vmatprep.subr.bf16.mxu0 0
      %2959 = vmatpush1.bf16.msra.mxu0 0
      %2960 = vmatprep.subr.bf16.mxu0 0
      %2961 = vmatpush1.bf16.msra.mxu0 0
      %2962 = vmatprep.subr.bf16.mxu0 0
      %2963 = vmatpush1.bf16.msra.mxu0 0
      %2964 = vmatprep.subr.bf16.mxu0 0
      %2965 = vmatpush1.bf16.msra.mxu0 0
      %2966 = vmatprep.subr.bf16.mxu0 0
      %2967 = vmatpush1.bf16.msra.mxu0 0
      %2968 = vmatprep.subr.bf16.mxu0 0
      %2969 = vmatpush1.bf16.msra.mxu0 0
      %2970 = vmatprep.subr.bf16.mxu0 0
      %2971 = vmatpush1.bf16.msra.mxu0 0
      %2972 = vmatprep.subr.bf16.mxu0 0
      %2973 = vmatpush1.bf16.msra.mxu0 0
      %2974 = vmatprep.subr.bf16.mxu0 0
      %2975 = vmatpush1.bf16.msra.mxu0 0
      %2976 = vmatprep.mubr.bf16.mxu0 0
      %2977 = vmatmul.mubr.bf16.gmra.mrb[0].mxu0 %v1787
      %v2978 = vpop.f32.mrb[0].mxu0
      %v2979 = vadd.f32 %v2930, %v2978
      %v2980 = vpop.f32.mrb[0].mxu0
      %v2981 = vpop.f32.mrb[0].mxu0
      %v2982 = vadd.f32 %v2930, %v2981
      %v2983 = vpop.f32.mrb[0].mxu0
      %2984 = vmatprep.mubr.bf16.mxu0 0
      %2985 = vmatmul.mubr.bf16.gmra.mrb[0].mxu0 %v1790
      %v2986 = vpop.f32.mrb[0].mxu0
      %v2987 = vadd.f32 %v2930, %v2986
      %v2988 = vpop.f32.mrb[0].mxu0
      %v2989 = vpop.f32.mrb[0].mxu0
      %v2990 = vadd.f32 %v2930, %v2989
      %v2991 = vpop.f32.mrb[0].mxu0
      %2992 = vmatprep.mubr.bf16.mxu0 0
      %2993 = vmatmul.mubr.bf16.gmra.mrb[0].mxu0 %v1793
      %v2994 = vpop.f32.mrb[0].mxu0
      %v2995 = vadd.f32 %v2930, %v2994
      %v2996 = vpop.f32.mrb[0].mxu0
      %v2997 = vpop.f32.mrb[0].mxu0
      %v2998 = vadd.f32 %v2930, %v2997
      %v2999 = vpop.f32.mrb[0].mxu0
      %3000 = vmatprep.mubr.bf16.mxu0 0
      %3001 = vmatmul.mubr.bf16.gmra.mrb[0].mxu0 %v1796
      %v3002 = vpop.f32.mrb[0].mxu0
      %v3003 = vadd.f32 %v2930, %v3002
      %v3004 = vpop.f32.mrb[0].mxu0
      %v3005 = vpop.f32.mrb[0].mxu0
      %v3006 = vadd.f32 %v2930, %v3005
      %v3007 = vpop.f32.mrb[0].mxu0
      %3008 = vmatprep.mubr.bf16.mxu0 0
      %3009 = vmatmul.mubr.bf16.gmra.mrb[0].mxu0 %v1799
      %v3010 = vpop.f32.mrb[0].mxu0
      %v3011 = vadd.f32 %v2930, %v3010
      %v3012 = vpop.f32.mrb[0].mxu0
      %v3013 = vpop.f32.mrb[0].mxu0
      %v3014 = vadd.f32 %v2930, %v3013
      %v3015 = vpop.f32.mrb[0].mxu0
      %3016 = vmatprep.mubr.bf16.mxu0 0
      %3017 = vmatmul.mubr.bf16.gmra.mrb[0].mxu0 %v1802
      %v3018 = vpop.f32.mrb[0].mxu0
      %v3019 = vadd.f32 %v2930, %v3018
      %v3020 = vpop.f32.mrb[0].mxu0
      %v3021 = vpop.f32.mrb[0].mxu0
      %v3022 = vadd.f32 %v2930, %v3021
      %v3023 = vpop.f32.mrb[0].mxu0
      %3024 = vmatprep.mubr.bf16.mxu0 0
      %3025 = vmatmul.mubr.bf16.gmra.mrb[0].mxu0 %v1805
      %v3026 = vpop.f32.mrb[0].mxu0
      %v3027 = vadd.f32 %v2930, %v3026
      %v3028 = vpop.f32.mrb[0].mxu0
      %v3029 = vpop.f32.mrb[0].mxu0
      %v3030 = vadd.f32 %v2930, %v3029
      %v3031 = vpop.f32.mrb[0].mxu0
      %3032 = vmatprep.mubr.bf16.mxu0 0
      %3033 = vmatmul.mubr.bf16.gmra.mrb[0].mxu0 %v1808
      %v3034 = vpop.f32.mrb[0].mxu0
      %v3035 = vadd.f32 %v2930, %v3034
      %v3036 = vpop.f32.mrb[0].mxu0
      %v3037 = vpop.f32.mrb[0].mxu0
      %v3038 = vadd.f32 %v2930, %v3037
      %v3039 = vpop.f32.mrb[0].mxu0
      %3040 = vdwg.mxu0
      %v3041 = vtanh.pop %v2979
      %v3042 = vtanh.pop %v2982
      %v3043 = vtanh.pop %v2987
      %v3044 = vtanh.pop %v2990
      %v3045 = vtanh.pop %v2995
      %v3046 = vtanh.pop %v2998
      %v3047 = vtanh.pop %v3003
      %v3048 = vtanh.pop %v3006
      %v3049 = vtanh.pop %v3011
      %v3050 = vtanh.pop %v3014
      %v3051 = vtanh.pop %v3019
      %v3052 = vtanh.pop %v3022
      %v3053 = vtanh.pop %v3027
      %v3054 = vtanh.pop %v3030
      %v3055 = vtanh.pop %v3035
      %v3056 = vtanh.pop %v3038
      %v3057 = vpack.c.bf16 %v2860, %v2857
      %v3058 = vpack.c.bf16 %v2868, %v2865
      %v3059 = vpack.c.bf16 %v2876, %v2873
      %v3060 = vpack.c.bf16 %v2884, %v2881
      %v3061 = vpack.c.bf16 %v2892, %v2889
      %v3062 = vpack.c.bf16 %v2900, %v2897
      %v3063 = vpack.c.bf16 %v2908, %v2905
      %v3064 = vpack.c.bf16 %v2916, %v2913
      %s3065 = scalar_lea.vmem %s9, 16
      %v3066 = vld [vmem:[%s3065] sm:$0xf]
      %v3067 = vld [vmem:[%s3065 + $0x4] sm:$0xf]
      %v3068 = vld [vmem:[%s3065 + $0x8] sm:$0xf]
      %v3069 = vld [vmem:[%s3065 + $0xc] sm:$0xf]
      %v3074 = vunpack.c.l.b16 %v3066
      %v3075 = vunpack.c.l.b16 %v3067
      %v3076 = vunpack.c.l.b16 %v3068
      %v3077 = vunpack.c.l.b16 %v3069
      %v3078 = vpack.c.b16 %v3075, %v3074
      %v3079 = vpack.c.b16 %v3077, %v3076
      %v3083 = vsel %vm1785, %v3057, 0
      %v3086 = vsel %vm1785, %v3058, 0
      %v3089 = vsel %vm1785, %v3059, 0
      %v3092 = vsel %vm1785, %v3060, 0
      %v3095 = vsel %vm1785, %v3061, 0
      %v3098 = vsel %vm1785, %v3062, 0
      %v3101 = vsel %vm1785, %v3063, 0
      %v3104 = vsel %vm1785, %v3064, 0
      %3106 = vmatprep.subr.bf16.mxu0 0
      %3107 = vmatpush1.bf16.msra.mxu0 %v3078
      %3108 = vmatprep.subr.bf16.mxu0 0
      %3109 = vmatpush1.bf16.msra.mxu0 %v3079
      %3110 = vmatprep.subr.bf16.mxu0 0
      %3111 = vmatpush1.bf16.msra.mxu0 0
      %3112 = vmatprep.subr.bf16.mxu0 0
      %3113 = vmatpush1.bf16.msra.mxu0 0
      %3114 = vmatprep.subr.bf16.mxu0 0
      %3115 = vmatpush1.bf16.msra.mxu0 0
      %3116 = vmatprep.subr.bf16.mxu0 0
      %3117 = vmatpush1.bf16.msra.mxu0 0
      %3118 = vmatprep.subr.bf16.mxu0 0
      %3119 = vmatpush1.bf16.msra.mxu0 0
      %3120 = vmatprep.subr.bf16.mxu0 0
      %3121 = vmatpush1.bf16.msra.mxu0 0
      %3122 = vmatprep.subr.bf16.mxu0 0
      %3123 = vmatpush1.bf16.msra.mxu0 0
      %3124 = vmatprep.subr.bf16.mxu0 0
      %3125 = vmatpush1.bf16.msra.mxu0 0
      %3126 = vmatprep.subr.bf16.mxu0 0
      %3127 = vmatpush1.bf16.msra.mxu0 0
      %3128 = vmatprep.subr.bf16.mxu0 0
      %3129 = vmatpush1.bf16.msra.mxu0 0
      %3130 = vmatprep.subr.bf16.mxu0 0
      %3131 = vmatpush1.bf16.msra.mxu0 0
      %3132 = vmatprep.subr.bf16.mxu0 0
      %3133 = vmatpush1.bf16.msra.mxu0 0
      %3134 = vmatprep.subr.bf16.mxu0 0
      %3135 = vmatpush1.bf16.msra.mxu0 0
      %3136 = vmatprep.subr.bf16.mxu0 0
      %3137 = vmatpush1.bf16.msra.mxu0 0
      %3138 = vmatprep.mubr.bf16.mxu0 0
      %3139 = vmatmul.mubr.bf16.gmra.mrb[0].mxu0 %v3083
      %v3140 = vpop.f32.mrb[0].mxu0
      %v3141 = vadd.f32 0.0, %v3140
      %v3142 = vpop.f32.mrb[0].mxu0
      %v3143 = vpop.f32.mrb[0].mxu0
      %v3144 = vadd.f32 0.0, %v3143
      %v3145 = vpop.f32.mrb[0].mxu0
      %3146 = vmatprep.mubr.bf16.mxu0 0
      %3147 = vmatmul.mubr.bf16.gmra.mrb[0].mxu0 %v3086
      %v3148 = vpop.f32.mrb[0].mxu0
      %v3149 = vadd.f32 0.0, %v3148
      %v3150 = vpop.f32.mrb[0].mxu0
      %v3151 = vpop.f32.mrb[0].mxu0
      %v3152 = vadd.f32 0.0, %v3151
      %v3153 = vpop.f32.mrb[0].mxu0
      %3154 = vmatprep.mubr.bf16.mxu0 0
      %3155 = vmatmul.mubr.bf16.gmra.mrb[0].mxu0 %v3089
      %v3156 = vpop.f32.mrb[0].mxu0
      %v3157 = vadd.f32 0.0, %v3156
      %v3158 = vpop.f32.mrb[0].mxu0
      %v3159 = vpop.f32.mrb[0].mxu0
      %v3160 = vadd.f32 0.0, %v3159
      %v3161 = vpop.f32.mrb[0].mxu0
      %3162 = vmatprep.mubr.bf16.mxu0 0
      %3163 = vmatmul.mubr.bf16.gmra.mrb[0].mxu0 %v3092
      %v3164 = vpop.f32.mrb[0].mxu0
      %v3165 = vadd.f32 0.0, %v3164
      %v3166 = vpop.f32.mrb[0].mxu0
      %v3167 = vpop.f32.mrb[0].mxu0
      %v3168 = vadd.f32 0.0, %v3167
      %v3169 = vpop.f32.mrb[0].mxu0
      %3170 = vmatprep.mubr.bf16.mxu0 0
      %3171 = vmatmul.mubr.bf16.gmra.mrb[0].mxu0 %v3095
      %v3172 = vpop.f32.mrb[0].mxu0
      %v3173 = vadd.f32 0.0, %v3172
      %v3174 = vpop.f32.mrb[0].mxu0
      %v3175 = vpop.f32.mrb[0].mxu0
      %v3176 = vadd.f32 0.0, %v3175
      %v3177 = vpop.f32.mrb[0].mxu0
      %3178 = vmatprep.mubr.bf16.mxu0 0
      %3179 = vmatmul.mubr.bf16.gmra.mrb[0].mxu0 %v3098
      %v3180 = vpop.f32.mrb[0].mxu0
      %v3181 = vadd.f32 0.0, %v3180
      %v3182 = vpop.f32.mrb[0].mxu0
      %v3183 = vpop.f32.mrb[0].mxu0
      %v3184 = vadd.f32 0.0, %v3183
      %v3185 = vpop.f32.mrb[0].mxu0
      %3186 = vmatprep.mubr.bf16.mxu0 0
      %3187 = vmatmul.mubr.bf16.gmra.mrb[0].mxu0 %v3101
      %v3188 = vpop.f32.mrb[0].mxu0
      %v3189 = vadd.f32 0.0, %v3188
      %v3190 = vpop.f32.mrb[0].mxu0
      %v3191 = vpop.f32.mrb[0].mxu0
      %v3192 = vadd.f32 0.0, %v3191
      %v3193 = vpop.f32.mrb[0].mxu0
      %3194 = vmatprep.mubr.bf16.mxu0 0
      %3195 = vmatmul.mubr.bf16.gmra.mrb[0].mxu0 %v3104
      %v3196 = vpop.f32.mrb[0].mxu0
      %v3197 = vadd.f32 0.0, %v3196
      %v3198 = vpop.f32.mrb[0].mxu0
      %v3199 = vpop.f32.mrb[0].mxu0
      %v3200 = vadd.f32 0.0, %v3199
      %v3201 = vpop.f32.mrb[0].mxu0
      %3202 = vdwg.mxu0
      %v3203 = vadd.f32 %v3041, %v3141
      %v3204 = vadd.f32 %v3042, %v3144
      %v3205 = vadd.f32 %v3043, %v3149
      %v3206 = vadd.f32 %v3044, %v3152
      %v3207 = vadd.f32 %v3045, %v3157
      %v3208 = vadd.f32 %v3046, %v3160
      %v3209 = vadd.f32 %v3047, %v3165
      %v3210 = vadd.f32 %v3048, %v3168
      %v3211 = vadd.f32 %v3049, %v3173
      %v3212 = vadd.f32 %v3050, %v3176
      %v3213 = vadd.f32 %v3051, %v3181
      %v3214 = vadd.f32 %v3052, %v3184
      %v3215 = vadd.f32 %v3053, %v3189
      %v3216 = vadd.f32 %v3054, %v3192
      %v3217 = vadd.f32 %v3055, %v3197
      %v3218 = vadd.f32 %v3056, %v3200
      %v3219 = vmul.f32 %v3203, 0.17677669
      %v3220 = vmul.f32 %v3204, 0.17677669
      %v3221 = vmul.f32 %v3205, 0.17677669
      %v3222 = vmul.f32 %v3206, 0.17677669
      %v3223 = vmul.f32 %v3207, 0.17677669
      %v3224 = vmul.f32 %v3208, 0.17677669
      %v3225 = vmul.f32 %v3209, 0.17677669
      %v3226 = vmul.f32 %v3210, 0.17677669
      %v3227 = vmul.f32 %v3211, 0.17677669
      %v3228 = vmul.f32 %v3212, 0.17677669
      %v3229 = vmul.f32 %v3213, 0.17677669
      %v3230 = vmul.f32 %v3214, 0.17677669
      %v3231 = vmul.f32 %v3215, 0.17677669
      %v3232 = vmul.f32 %v3216, 0.17677669
      %v3233 = vmul.f32 %v3217, 0.17677669
      %v3234 = vmul.f32 %v3218, 0.17677669
      %v3235 = vpack.c.bf16 %v3220, %v3219
      %v3236 = vpack.c.bf16 %v3222, %v3221
      %v3237 = vpack.c.bf16 %v3224, %v3223
      %v3238 = vpack.c.bf16 %v3226, %v3225
      %v3239 = vpack.c.bf16 %v3228, %v3227
      %v3240 = vpack.c.bf16 %v3230, %v3229
      %v3241 = vpack.c.bf16 %v3232, %v3231
      %v3242 = vpack.c.bf16 %v3234, %v3233
      %v3244 = vsel %vm1785, %v3235, 0
      %v3247 = vsel %vm1785, %v3236, 0
      %v3250 = vsel %vm1785, %v3237, 0
      %v3253 = vsel %vm1785, %v3238, 0
      %v3256 = vsel %vm1785, %v3239, 0
      %v3259 = vsel %vm1785, %v3240, 0
      %v3262 = vsel %vm1785, %v3241, 0
      %v3265 = vsel %vm1785, %v3242, 0
      %v3268 = vsel %vm1785, %v2806, 0
      %v3271 = vsel %vm1785, %v2807, 0
      %v3274 = vsel %vm1785, %v2808, 0
      %v3277 = vsel %vm1785, %v2809, 0
      %v3280 = vsel %vm1785, %v2810, 0
      %v3283 = vsel %vm1785, %v2811, 0
      %v3286 = vsel %vm1785, %v2812, 0
      %v3289 = vsel %vm1785, %v2813, 0
      %3291 = vmatprep.subr.bf16.mxu0 0
      %3292 = vmatpush1.bf16.xpose.msra.mxu0 %v3268
      %3293 = vmatprep.subr.bf16.mxu0 0
      %3294 = vmatpush1.bf16.xpose.msra.mxu0 %v3271
      %3295 = vmatprep.subr.bf16.mxu0 0
      %3296 = vmatpush1.bf16.xpose.msra.mxu0 %v3274
      %3297 = vmatprep.subr.bf16.mxu0 0
      %3298 = vmatpush1.bf16.xpose.msra.mxu0 %v3277
      %3299 = vmatprep.subr.bf16.mxu0 0
      %3300 = vmatpush1.bf16.xpose.msra.mxu0 %v3280
      %3301 = vmatprep.subr.bf16.mxu0 0
      %3302 = vmatpush1.bf16.xpose.msra.mxu0 %v3283
      %3303 = vmatprep.subr.bf16.mxu0 0
      %3304 = vmatpush1.bf16.xpose.msra.mxu0 %v3286
      %3305 = vmatprep.subr.bf16.mxu0 0
      %3306 = vmatpush1.bf16.xpose.msra.mxu0 %v3289
      %3307 = vmatprep.subr.bf16.mxu0 0
      %3308 = vmatpush1.bf16.xpose.msra.mxu0 0
      %3309 = vmatprep.subr.bf16.mxu0 0
      %3310 = vmatpush1.bf16.xpose.msra.mxu0 0
      %3311 = vmatprep.subr.bf16.mxu0 0
      %3312 = vmatpush1.bf16.xpose.msra.mxu0 0
      %3313 = vmatprep.subr.bf16.mxu0 0
      %3314 = vmatpush1.bf16.xpose.msra.mxu0 0
      %3315 = vmatprep.subr.bf16.mxu0 0
      %3316 = vmatpush1.bf16.xpose.msra.mxu0 0
      %3317 = vmatprep.subr.bf16.mxu0 0
      %3318 = vmatpush1.bf16.xpose.msra.mxu0 0
      %3319 = vmatprep.subr.bf16.mxu0 0
      %3320 = vmatpush1.bf16.xpose.msra.mxu0 0
      %3321 = vmatprep.subr.bf16.mxu0 0
      %3322 = vmatpush1.bf16.xpose.msra.mxu0 0
      %3323 = vmatprep.mubr.bf16.mxu0 0
      %3324 = vmatmul.mubr.bf16.gmra.mrb[0].mxu0 %v3244
      %v3325 = vpop.f32.mrb[0].mxu0
      %v3326 = vadd.f32 %v2629, %v3325
      %v3327 = vpop.f32.mrb[0].mxu0
      %v3328 = vpop.f32.mrb[0].mxu0
      %v3329 = vadd.f32 %v2630, %v3328
      %v3330 = vpop.f32.mrb[0].mxu0
      %3331 = vmatprep.mubr.bf16.mxu0 0
      %3332 = vmatmul.mubr.bf16.gmra.mrb[0].mxu0 %v3247
      %v3333 = vpop.f32.mrb[0].mxu0
      %v3334 = vadd.f32 %v2631, %v3333
      %v3335 = vpop.f32.mrb[0].mxu0
      %v3336 = vpop.f32.mrb[0].mxu0
      %v3337 = vadd.f32 %v2632, %v3336
      %v3338 = vpop.f32.mrb[0].mxu0
      %3339 = vmatprep.mubr.bf16.mxu0 0
      %3340 = vmatmul.mubr.bf16.gmra.mrb[0].mxu0 %v3250
      %v3341 = vpop.f32.mrb[0].mxu0
      %v3342 = vadd.f32 %v2633, %v3341
      %v3343 = vpop.f32.mrb[0].mxu0
      %v3344 = vpop.f32.mrb[0].mxu0
      %v3345 = vadd.f32 %v2634, %v3344
      %v3346 = vpop.f32.mrb[0].mxu0
      %3347 = vmatprep.mubr.bf16.mxu0 0
      %3348 = vmatmul.mubr.bf16.gmra.mrb[0].mxu0 %v3253
      %v3349 = vpop.f32.mrb[0].mxu0
      %v3350 = vadd.f32 %v2635, %v3349
      %v3351 = vpop.f32.mrb[0].mxu0
      %v3352 = vpop.f32.mrb[0].mxu0
      %v3353 = vadd.f32 %v2636, %v3352
      %v3354 = vpop.f32.mrb[0].mxu0
      %3355 = vmatprep.mubr.bf16.mxu0 0
      %3356 = vmatmul.mubr.bf16.gmra.mrb[0].mxu0 %v3256
      %v3357 = vpop.f32.mrb[0].mxu0
      %v3358 = vadd.f32 %v2637, %v3357
      %v3359 = vpop.f32.mrb[0].mxu0
      %v3360 = vpop.f32.mrb[0].mxu0
      %v3361 = vadd.f32 %v2638, %v3360
      %v3362 = vpop.f32.mrb[0].mxu0
      %3363 = vmatprep.mubr.bf16.mxu0 0
      %3364 = vmatmul.mubr.bf16.gmra.mrb[0].mxu0 %v3259
      %v3365 = vpop.f32.mrb[0].mxu0
      %v3366 = vadd.f32 %v2639, %v3365
      %v3367 = vpop.f32.mrb[0].mxu0
      %v3368 = vpop.f32.mrb[0].mxu0
      %v3369 = vadd.f32 %v2640, %v3368
      %v3370 = vpop.f32.mrb[0].mxu0
      %3371 = vmatprep.mubr.bf16.mxu0 0
      %3372 = vmatmul.mubr.bf16.gmra.mrb[0].mxu0 %v3262
      %v3373 = vpop.f32.mrb[0].mxu0
      %v3374 = vadd.f32 %v2641, %v3373
      %v3375 = vpop.f32.mrb[0].mxu0
      %v3376 = vpop.f32.mrb[0].mxu0
      %v3377 = vadd.f32 %v2642, %v3376
      %v3378 = vpop.f32.mrb[0].mxu0
      %3379 = vmatprep.mubr.bf16.mxu0 0
      %3380 = vmatmul.mubr.bf16.gmra.mrb[0].mxu0 %v3265
      %v3381 = vpop.f32.mrb[0].mxu0
      %v3382 = vadd.f32 %v2643, %v3381
      %v3383 = vpop.f32.mrb[0].mxu0
      %v3384 = vpop.f32.mrb[0].mxu0
      %v3385 = vadd.f32 %v2644, %v3384
      %v3386 = vpop.f32.mrb[0].mxu0
      %3387 = vdwg.mxu0
      %3388 = vst [vmem:[%s576 + $0x8] sm:$0xff] %v3326
      %3389 = vst [vmem:[%s576 + $0x28] sm:$0xff] %v3329
      %3390 = vst [vmem:[%s576 + $0x48] sm:$0xff] %v3334
      %3391 = vst [vmem:[%s576 + $0x68] sm:$0xff] %v3337
      %3392 = vst [vmem:[%s576 + $0x88] sm:$0xff] %v3342
      %3393 = vst [vmem:[%s576 + $0xa8] sm:$0xff] %v3345
      %3394 = vst [vmem:[%s576 + $0xc8] sm:$0xff] %v3350
      %3395 = vst [vmem:[%s576 + $0xe8] sm:$0xff] %v3353
      %3396 = vst [vmem:[%s576 + $0x108] sm:$0xff] %v3358
      %3397 = vst [vmem:[%s576 + $0x128] sm:$0xff] %v3361
      %3398 = vst [vmem:[%s576 + $0x148] sm:$0xff] %v3366
      %3399 = vst [vmem:[%s576 + $0x168] sm:$0xff] %v3369
      %3400 = vst [vmem:[%s576 + $0x188] sm:$0xff] %v3374
      %3401 = vst [vmem:[%s576 + $0x1a8] sm:$0xff] %v3377
      %3402 = vst [vmem:[%s576 + $0x1c8] sm:$0xff] %v3382
      %3403 = vst [vmem:[%s576 + $0x1e8] sm:$0xff] %v3385
      %3404 = vmax.xlane.f32.xlu0 %v3326
      %v3405 = vpop.xlane.xlu0 %3404
      %3406 = vmax.xlane.f32.xlu0 %v3329
      %v3407 = vpop.xlane.xlu0 %3406
      %3408 = vmax.xlane.f32.xlu0 %v3334
      %v3409 = vpop.xlane.xlu0 %3408
      %3410 = vmax.xlane.f32.xlu0 %v3337
      %v3411 = vpop.xlane.xlu0 %3410
      %3412 = vmax.xlane.f32.xlu0 %v3342
      %v3413 = vpop.xlane.xlu0 %3412
      %3414 = vmax.xlane.f32.xlu0 %v3345
      %v3415 = vpop.xlane.xlu0 %3414
      %3416 = vmax.xlane.f32.xlu0 %v3350
      %v3417 = vpop.xlane.xlu0 %3416
      %3418 = vmax.xlane.f32.xlu0 %v3353
      %v3419 = vpop.xlane.xlu0 %3418
      %3420 = vmax.xlane.f32.xlu0 %v3358
      %v3421 = vpop.xlane.xlu0 %3420
      %3422 = vmax.xlane.f32.xlu0 %v3361
      %v3423 = vpop.xlane.xlu0 %3422
      %3424 = vmax.xlane.f32.xlu0 %v3366
      %v3425 = vpop.xlane.xlu0 %3424
      %3426 = vmax.xlane.f32.xlu0 %v3369
      %v3427 = vpop.xlane.xlu0 %3426
      %3428 = vmax.xlane.f32.xlu0 %v3374
      %v3429 = vpop.xlane.xlu0 %3428
      %3430 = vmax.xlane.f32.xlu0 %v3377
      %v3431 = vpop.xlane.xlu0 %3430
      %3432 = vmax.xlane.f32.xlu0 %v3382
      %v3433 = vpop.xlane.xlu0 %3432
      %3434 = vmax.xlane.f32.xlu0 %v3385
      %v3435 = vpop.xlane.xlu0 %3434
      %v3436 = vsub.f32 %v3326, %v3405
      %v3437 = vsub.f32 %v3329, %v3407
      %v3438 = vsub.f32 %v3334, %v3409
      %v3439 = vsub.f32 %v3337, %v3411
      %v3440 = vsub.f32 %v3342, %v3413
      %v3441 = vsub.f32 %v3345, %v3415
      %v3442 = vsub.f32 %v3350, %v3417
      %v3443 = vsub.f32 %v3353, %v3419
      %v3444 = vsub.f32 %v3358, %v3421
      %v3445 = vsub.f32 %v3361, %v3423
      %v3446 = vsub.f32 %v3366, %v3425
      %v3447 = vsub.f32 %v3369, %v3427
      %v3448 = vsub.f32 %v3374, %v3429
      %v3449 = vsub.f32 %v3377, %v3431
      %v3450 = vsub.f32 %v3382, %v3433
      %v3451 = vsub.f32 %v3385, %v3435
      %v3452 = vmul.f32 %v3436, 1.442695
      %v3453 = vpow.pop %v3452
      %v3454 = vmul.f32 %v3437, 1.442695
      %v3455 = vpow.pop %v3454
      %v3456 = vmul.f32 %v3438, 1.442695
      %v3457 = vpow.pop %v3456
      %v3458 = vmul.f32 %v3439, 1.442695
      %v3459 = vpow.pop %v3458
      %v3460 = vmul.f32 %v3440, 1.442695
      %v3461 = vpow.pop %v3460
      %v3462 = vmul.f32 %v3441, 1.442695
      %v3463 = vpow.pop %v3462
      %v3464 = vmul.f32 %v3442, 1.442695
      %v3465 = vpow.pop %v3464
      %v3466 = vmul.f32 %v3443, 1.442695
      %v3467 = vpow.pop %v3466
      %v3468 = vmul.f32 %v3444, 1.442695
      %v3469 = vpow.pop %v3468
      %v3470 = vmul.f32 %v3445, 1.442695
      %v3471 = vpow.pop %v3470
      %v3472 = vmul.f32 %v3446, 1.442695
      %v3473 = vpow.pop %v3472
      %v3474 = vmul.f32 %v3447, 1.442695
      %v3475 = vpow.pop %v3474
      %v3476 = vmul.f32 %v3448, 1.442695
      %v3477 = vpow.pop %v3476
      %v3478 = vmul.f32 %v3449, 1.442695
      %v3479 = vpow.pop %v3478
      %v3480 = vmul.f32 %v3450, 1.442695
      %v3481 = vpow.pop %v3480
      %v3482 = vmul.f32 %v3451, 1.442695
      %v3483 = vpow.pop %v3482
      %3484 = vadd.xlane.f32.xlu0 %v3453
      %v3485 = vpop.xlane.xlu0 %3484
      %3486 = vadd.xlane.f32.xlu0 %v3455
      %v3487 = vpop.xlane.xlu0 %3486
      %3488 = vadd.xlane.f32.xlu0 %v3457
      %v3489 = vpop.xlane.xlu0 %3488
      %3490 = vadd.xlane.f32.xlu0 %v3459
      %v3491 = vpop.xlane.xlu0 %3490
      %3492 = vadd.xlane.f32.xlu0 %v3461
      %v3493 = vpop.xlane.xlu0 %3492
      %3494 = vadd.xlane.f32.xlu0 %v3463
      %v3495 = vpop.xlane.xlu0 %3494
      %3496 = vadd.xlane.f32.xlu0 %v3465
      %v3497 = vpop.xlane.xlu0 %3496
      %3498 = vadd.xlane.f32.xlu0 %v3467
      %v3499 = vpop.xlane.xlu0 %3498
      %3500 = vadd.xlane.f32.xlu0 %v3469
      %v3501 = vpop.xlane.xlu0 %3500
      %3502 = vadd.xlane.f32.xlu0 %v3471
      %v3503 = vpop.xlane.xlu0 %3502
      %3504 = vadd.xlane.f32.xlu0 %v3473
      %v3505 = vpop.xlane.xlu0 %3504
      %3506 = vadd.xlane.f32.xlu0 %v3475
      %v3507 = vpop.xlane.xlu0 %3506
      %3508 = vadd.xlane.f32.xlu0 %v3477
      %v3509 = vpop.xlane.xlu0 %3508
      %3510 = vadd.xlane.f32.xlu0 %v3479
      %v3511 = vpop.xlane.xlu0 %3510
      %3512 = vadd.xlane.f32.xlu0 %v3481
      %v3513 = vpop.xlane.xlu0 %3512
      %3514 = vadd.xlane.f32.xlu0 %v3483
      %v3515 = vpop.xlane.xlu0 %3514
      %v3516 = vlog2.pop %v3485
      %v3517 = vmul.f32 %v3516, 0.6931472
      %v3518 = vlog2.pop %v3487
      %v3519 = vmul.f32 %v3518, 0.6931472
      %v3520 = vlog2.pop %v3489
      %v3521 = vmul.f32 %v3520, 0.6931472
      %v3522 = vlog2.pop %v3491
      %v3523 = vmul.f32 %v3522, 0.6931472
      %v3524 = vlog2.pop %v3493
      %v3525 = vmul.f32 %v3524, 0.6931472
      %v3526 = vlog2.pop %v3495
      %v3527 = vmul.f32 %v3526, 0.6931472
      %v3528 = vlog2.pop %v3497
      %v3529 = vmul.f32 %v3528, 0.6931472
      %v3530 = vlog2.pop %v3499
      %v3531 = vmul.f32 %v3530, 0.6931472
      %v3532 = vlog2.pop %v3501
      %v3533 = vmul.f32 %v3532, 0.6931472
      %v3534 = vlog2.pop %v3503
      %v3535 = vmul.f32 %v3534, 0.6931472
      %v3536 = vlog2.pop %v3505
      %v3537 = vmul.f32 %v3536, 0.6931472
      %v3538 = vlog2.pop %v3507
      %v3539 = vmul.f32 %v3538, 0.6931472
      %v3540 = vlog2.pop %v3509
      %v3541 = vmul.f32 %v3540, 0.6931472
      %v3542 = vlog2.pop %v3511
      %v3543 = vmul.f32 %v3542, 0.6931472
      %v3544 = vlog2.pop %v3513
      %v3545 = vmul.f32 %v3544, 0.6931472
      %v3546 = vlog2.pop %v3515
      %v3547 = vmul.f32 %v3546, 0.6931472
      %v3548 = vadd.f32 %v3517, %v3405
      %v3549 = vadd.f32 %v3519, %v3407
      %v3550 = vadd.f32 %v3521, %v3409
      %v3551 = vadd.f32 %v3523, %v3411
      %v3552 = vadd.f32 %v3525, %v3413
      %v3553 = vadd.f32 %v3527, %v3415
      %v3554 = vadd.f32 %v3529, %v3417
      %v3555 = vadd.f32 %v3531, %v3419
      %v3556 = vadd.f32 %v3533, %v3421
      %v3557 = vadd.f32 %v3535, %v3423
      %v3558 = vadd.f32 %v3537, %v3425
      %v3559 = vadd.f32 %v3539, %v3427
      %v3560 = vadd.f32 %v3541, %v3429
      %v3561 = vadd.f32 %v3543, %v3431
      %v3562 = vadd.f32 %v3545, %v3433
      %v3563 = vadd.f32 %v3547, %v3435
      %v3564 = vsub.f32 %v3548, %v3326
      %v3565 = vsub.f32 %v3549, %v3329
      %v3566 = vsub.f32 %v3550, %v3334
      %v3567 = vsub.f32 %v3551, %v3337
      %v3568 = vsub.f32 %v3552, %v3342
      %v3569 = vsub.f32 %v3553, %v3345
      %v3570 = vsub.f32 %v3554, %v3350
      %v3571 = vsub.f32 %v3555, %v3353
      %v3572 = vsub.f32 %v3556, %v3358
      %v3573 = vsub.f32 %v3557, %v3361
      %v3574 = vsub.f32 %v3558, %v3366
      %v3575 = vsub.f32 %v3559, %v3369
      %v3576 = vsub.f32 %v3560, %v3374
      %v3577 = vsub.f32 %v3561, %v3377
      %v3578 = vsub.f32 %v3562, %v3382
      %v3579 = vsub.f32 %v3563, %v3385
      %v3580 = vmul.f32 %v3564, %v2565
      %v3581 = vmul.f32 %v3565, %v2566
      %v3582 = vmul.f32 %v3566, %v2567
      %v3583 = vmul.f32 %v3567, %v2568
      %v3584 = vmul.f32 %v3568, %v2569
      %v3585 = vmul.f32 %v3569, %v2570
      %v3586 = vmul.f32 %v3570, %v2571
      %v3587 = vmul.f32 %v3571, %v2572
      %v3588 = vmul.f32 %v3572, %v2573
      %v3589 = vmul.f32 %v3573, %v2574
      %v3590 = vmul.f32 %v3574, %v2575
      %v3591 = vmul.f32 %v3575, %v2576
      %v3592 = vmul.f32 %v3576, %v2577
      %v3593 = vmul.f32 %v3577, %v2578
      %v3594 = vmul.f32 %v3578, %v2579
      %v3595 = vmul.f32 %v3579, %v2580
      %v3596 = vadd.f32 %v3580, %v3581
      %v3597 = vadd.f32 %v3596, %v3582
      %v3598 = vadd.f32 %v3597, %v3583
      %v3599 = vadd.f32 %v3598, %v3584
      %v3600 = vadd.f32 %v3599, %v3585
      %v3601 = vadd.f32 %v3600, %v3586
      %v3602 = vadd.f32 %v3601, %v3587
      %v3603 = vadd.f32 %v3602, %v3588
      %v3604 = vadd.f32 %v3603, %v3589
      %v3605 = vadd.f32 %v3604, %v3590
      %v3606 = vadd.f32 %v3605, %v3591
      %v3607 = vadd.f32 %v3606, %v3592
      %v3608 = vadd.f32 %v3607, %v3593
      %v3609 = vadd.f32 %v3608, %v3594
      %v3610 = vadd.f32 %v3609, %v3595
      %3611 = vadd.xlane.f32.xlu0 %v3610
      %v3612 = vpop.xlane.xlu0 %3611
      %v3613 = vrot.slane %v3612, 4
      %v3614 = vadd.f32 %v3612, %v3613
      %v3615 = vrot.slane %v3614, 2
      %v3616 = vadd.f32 %v3614, %v3615
      %v3617 = vrot.slane %v3616, 1
      %v3618 = vadd.f32 %v3616, %v3617
      %s3619 = vtos %v3618
      %v3620 = vstv %s3619
      %v3621 = vadd.f32 %v2486, %v3620
      %v3622 = vadd.f32 %v2565, %v2566
      %v3623 = vadd.f32 %v3622, %v2567
      %v3624 = vadd.f32 %v3623, %v2568
      %v3625 = vadd.f32 %v3624, %v2569
      %v3626 = vadd.f32 %v3625, %v2570
      %v3627 = vadd.f32 %v3626, %v2571
      %v3628 = vadd.f32 %v3627, %v2572
      %v3629 = vadd.f32 %v3628, %v2573
      %v3630 = vadd.f32 %v3629, %v2574
      %v3631 = vadd.f32 %v3630, %v2575
      %v3632 = vadd.f32 %v3631, %v2576
      %v3633 = vadd.f32 %v3632, %v2577
      %v3634 = vadd.f32 %v3633, %v2578
      %v3635 = vadd.f32 %v3634, %v2579
      %v3636 = vadd.f32 %v3635, %v2580
      %3637 = vadd.xlane.f32.xlu0 %v3636
      %v3638 = vpop.xlane.xlu0 %3637
      %v3639 = vrot.slane %v3638, 4
      %v3640 = vadd.f32 %v3638, %v3639
      %v3641 = vrot.slane %v3640, 2
      %v3642 = vadd.f32 %v3640, %v3641
      %v3643 = vrot.slane %v3642, 1
      %v3644 = vadd.f32 %v3642, %v3643
      %s3645 = vtos %v3644
      %v3646 = vstv %s3645
      %v3647 = vadd.f32 %v2512, %v3646
      %v3648 = vld [vmem:[%s554 + $0x10] sm:$0xff]
      %v3649 = vld [vmem:[%s554 + $0x30] sm:$0xff]
      %v3650 = vld [vmem:[%s554 + $0x50] sm:$0xff]
      %v3651 = vld [vmem:[%s554 + $0x70] sm:$0xff]
      %v3652 = vunpack.c.0.s8 %v3648
      %v3653 = vunpack.c.1.s8 %v3648
      %v3654 = vunpack.c.2.s8 %v3648
      %v3655 = vunpack.c.3.s8 %v3648
      %v3656 = vunpack.c.0.s8 %v3649
      %v3657 = vunpack.c.1.s8 %v3649
      %v3658 = vunpack.c.2.s8 %v3649
      %v3659 = vunpack.c.3.s8 %v3649
      %v3660 = vunpack.c.0.s8 %v3650
      %v3661 = vunpack.c.1.s8 %v3650
      %v3662 = vunpack.c.2.s8 %v3650
      %v3663 = vunpack.c.3.s8 %v3650
      %v3664 = vunpack.c.0.s8 %v3651
      %v3665 = vunpack.c.1.s8 %v3651
      %v3666 = vunpack.c.2.s8 %v3651
      %v3667 = vunpack.c.3.s8 %v3651
      %v3668 = vcvt.s32.f32 %v3652
      %v3669 = vcvt.s32.f32 %v3653
      %v3670 = vcvt.s32.f32 %v3654
      %v3671 = vcvt.s32.f32 %v3655
      %v3672 = vcvt.s32.f32 %v3656
      %v3673 = vcvt.s32.f32 %v3657
      %v3674 = vcvt.s32.f32 %v3658
      %v3675 = vcvt.s32.f32 %v3659
      %v3676 = vcvt.s32.f32 %v3660
      %v3677 = vcvt.s32.f32 %v3661
      %v3678 = vcvt.s32.f32 %v3662
      %v3679 = vcvt.s32.f32 %v3663
      %v3680 = vcvt.s32.f32 %v3664
      %v3681 = vcvt.s32.f32 %v3665
      %v3682 = vcvt.s32.f32 %v3666
      %v3683 = vcvt.s32.f32 %v3667
      %v3684 = vld [vmem:[%s565 + $0x8] sm:$0xf]
      %v3685 = vld [vmem:[%s565 + $0x18] sm:$0xf]
      %v3686 = vld [vmem:[%s565 + $0x28] sm:$0xf]
      %v3687 = vld [vmem:[%s565 + $0x38] sm:$0xf]
      %v3688 = vld [vmem:[%s565 + $0x48] sm:$0xf]
      %v3689 = vld [vmem:[%s565 + $0x58] sm:$0xf]
      %v3690 = vld [vmem:[%s565 + $0x68] sm:$0xf]
      %v3691 = vld [vmem:[%s565 + $0x78] sm:$0xf]
      %v3692 = vld [vmem:[%s565 + $0x88] sm:$0xf]
      %v3693 = vld [vmem:[%s565 + $0x98] sm:$0xf]
      %v3694 = vld [vmem:[%s565 + $0xa8] sm:$0xf]
      %v3695 = vld [vmem:[%s565 + $0xb8] sm:$0xf]
      %v3696 = vld [vmem:[%s565 + $0xc8] sm:$0xf]
      %v3697 = vld [vmem:[%s565 + $0xd8] sm:$0xf]
      %v3698 = vld [vmem:[%s565 + $0xe8] sm:$0xf]
      %v3699 = vld [vmem:[%s565 + $0xf8] sm:$0xf]
      %v3700 = vunpack.c.l.bf16 %v3684
      %v3701 = vunpack.c.l.bf16 %v3685
      %v3702 = vunpack.c.l.bf16 %v3686
      %v3703 = vunpack.c.l.bf16 %v3687
      %v3704 = vunpack.c.l.bf16 %v3688
      %v3705 = vunpack.c.l.bf16 %v3689
      %v3706 = vunpack.c.l.bf16 %v3690
      %v3707 = vunpack.c.l.bf16 %v3691
      %v3708 = vunpack.c.l.bf16 %v3692
      %v3709 = vunpack.c.l.bf16 %v3693
      %v3710 = vunpack.c.l.bf16 %v3694
      %v3711 = vunpack.c.l.bf16 %v3695
      %v3712 = vunpack.c.l.bf16 %v3696
      %v3713 = vunpack.c.l.bf16 %v3697
      %v3714 = vunpack.c.l.bf16 %v3698
      %v3715 = vunpack.c.l.bf16 %v3699
      %v3716 = vmul.f32 %v3668, %v1383
      %v3717 = vmul.f32 %v3669, %v1383
      %v3718 = vmul.f32 %v3670, %v1383
      %v3719 = vmul.f32 %v3671, %v1383
      %v3720 = vmul.f32 %v3672, %v1383
      %v3721 = vmul.f32 %v3673, %v1383
      %v3722 = vmul.f32 %v3674, %v1383
      %v3723 = vmul.f32 %v3675, %v1383
      %v3724 = vmul.f32 %v3676, %v1383
      %v3725 = vmul.f32 %v3677, %v1383
      %v3726 = vmul.f32 %v3678, %v1383
      %v3727 = vmul.f32 %v3679, %v1383
      %v3728 = vmul.f32 %v3680, %v1383
      %v3729 = vmul.f32 %v3681, %v1383
      %v3730 = vmul.f32 %v3682, %v1383
      %v3731 = vmul.f32 %v3683, %v1383
      %v3732 = vsub.f32 1.0, %v3716
      %v3733 = vsub.f32 1.0, %v3717
      %v3734 = vsub.f32 1.0, %v3718
      %v3735 = vsub.f32 1.0, %v3719
      %v3736 = vsub.f32 1.0, %v3720
      %v3737 = vsub.f32 1.0, %v3721
      %v3738 = vsub.f32 1.0, %v3722
      %v3739 = vsub.f32 1.0, %v3723
      %v3740 = vsub.f32 1.0, %v3724
      %v3741 = vsub.f32 1.0, %v3725
      %v3742 = vsub.f32 1.0, %v3726
      %v3743 = vsub.f32 1.0, %v3727
      %v3744 = vsub.f32 1.0, %v3728
      %v3745 = vsub.f32 1.0, %v3729
      %v3746 = vsub.f32 1.0, %v3730
      %v3747 = vsub.f32 1.0, %v3731
      %v3748 = vmul.f32 %v3732, -1024.0
      %v3749 = vmul.f32 %v3733, -1024.0
      %v3750 = vmul.f32 %v3734, -1024.0
      %v3751 = vmul.f32 %v3735, -1024.0
      %v3752 = vmul.f32 %v3736, -1024.0
      %v3753 = vmul.f32 %v3737, -1024.0
      %v3754 = vmul.f32 %v3738, -1024.0
      %v3755 = vmul.f32 %v3739, -1024.0
      %v3756 = vmul.f32 %v3740, -1024.0
      %v3757 = vmul.f32 %v3741, -1024.0
      %v3758 = vmul.f32 %v3742, -1024.0
      %v3759 = vmul.f32 %v3743, -1024.0
      %v3760 = vmul.f32 %v3744, -1024.0
      %v3761 = vmul.f32 %v3745, -1024.0
      %v3762 = vmul.f32 %v3746, -1024.0
      %v3763 = vmul.f32 %v3747, -1024.0
      %v3764 = vadd.f32 %v3748, %v1310
      %v3765 = vadd.f32 %v3749, %v1310
      %v3766 = vadd.f32 %v3750, %v1310
      %v3767 = vadd.f32 %v3751, %v1310
      %v3768 = vadd.f32 %v3752, %v1310
      %v3769 = vadd.f32 %v3753, %v1310
      %v3770 = vadd.f32 %v3754, %v1310
      %v3771 = vadd.f32 %v3755, %v1310
      %v3772 = vadd.f32 %v3756, %v1310
      %v3773 = vadd.f32 %v3757, %v1310
      %v3774 = vadd.f32 %v3758, %v1310
      %v3775 = vadd.f32 %v3759, %v1310
      %v3776 = vadd.f32 %v3760, %v1310
      %v3777 = vadd.f32 %v3761, %v1310
      %v3778 = vadd.f32 %v3762, %v1310
      %v3779 = vadd.f32 %v3763, %v1310
      %v3780 = vadd.f32 %v3700, %v3764
      %v3781 = vadd.f32 %v3701, %v3765
      %v3782 = vadd.f32 %v3702, %v3766
      %v3783 = vadd.f32 %v3703, %v3767
      %v3784 = vadd.f32 %v3704, %v3768
      %v3785 = vadd.f32 %v3705, %v3769
      %v3786 = vadd.f32 %v3706, %v3770
      %v3787 = vadd.f32 %v3707, %v3771
      %v3788 = vadd.f32 %v3708, %v3772
      %v3789 = vadd.f32 %v3709, %v3773
      %v3790 = vadd.f32 %v3710, %v3774
      %v3791 = vadd.f32 %v3711, %v3775
      %v3792 = vadd.f32 %v3712, %v3776
      %v3793 = vadd.f32 %v3713, %v3777
      %v3794 = vadd.f32 %v3714, %v3778
      %v3795 = vadd.f32 %v3715, %v3779
      %3796 = vmax.xlane.f32.xlu0 %v3780
      %v3797 = vpop.xlane.xlu0 %3796
      %3798 = vmax.xlane.f32.xlu0 %v3781
      %v3799 = vpop.xlane.xlu0 %3798
      %3800 = vmax.xlane.f32.xlu0 %v3782
      %v3801 = vpop.xlane.xlu0 %3800
      %3802 = vmax.xlane.f32.xlu0 %v3783
      %v3803 = vpop.xlane.xlu0 %3802
      %3804 = vmax.xlane.f32.xlu0 %v3784
      %v3805 = vpop.xlane.xlu0 %3804
      %3806 = vmax.xlane.f32.xlu0 %v3785
      %v3807 = vpop.xlane.xlu0 %3806
      %3808 = vmax.xlane.f32.xlu0 %v3786
      %v3809 = vpop.xlane.xlu0 %3808
      %3810 = vmax.xlane.f32.xlu0 %v3787
      %v3811 = vpop.xlane.xlu0 %3810
      %3812 = vmax.xlane.f32.xlu0 %v3788
      %v3813 = vpop.xlane.xlu0 %3812
      %3814 = vmax.xlane.f32.xlu0 %v3789
      %v3815 = vpop.xlane.xlu0 %3814
      %3816 = vmax.xlane.f32.xlu0 %v3790
      %v3817 = vpop.xlane.xlu0 %3816
      %3818 = vmax.xlane.f32.xlu0 %v3791
      %v3819 = vpop.xlane.xlu0 %3818
      %3820 = vmax.xlane.f32.xlu0 %v3792
      %v3821 = vpop.xlane.xlu0 %3820
      %3822 = vmax.xlane.f32.xlu0 %v3793
      %v3823 = vpop.xlane.xlu0 %3822
      %3824 = vmax.xlane.f32.xlu0 %v3794
      %v3825 = vpop.xlane.xlu0 %3824
      %3826 = vmax.xlane.f32.xlu0 %v3795
      %v3827 = vpop.xlane.xlu0 %3826
      %v3828 = vsub.f32 %v3780, %v3797
      %v3829 = vsub.f32 %v3781, %v3799
      %v3830 = vsub.f32 %v3782, %v3801
      %v3831 = vsub.f32 %v3783, %v3803
      %v3832 = vsub.f32 %v3784, %v3805
      %v3833 = vsub.f32 %v3785, %v3807
      %v3834 = vsub.f32 %v3786, %v3809
      %v3835 = vsub.f32 %v3787, %v3811
      %v3836 = vsub.f32 %v3788, %v3813
      %v3837 = vsub.f32 %v3789, %v3815
      %v3838 = vsub.f32 %v3790, %v3817
      %v3839 = vsub.f32 %v3791, %v3819
      %v3840 = vsub.f32 %v3792, %v3821
      %v3841 = vsub.f32 %v3793, %v3823
      %v3842 = vsub.f32 %v3794, %v3825
      %v3843 = vsub.f32 %v3795, %v3827
      %v3844 = vmul.f32 %v3828, 1.442695
      %v3845 = vpow.pop %v3844
      %v3846 = vmul.f32 %v3829, 1.442695
      %v3847 = vpow.pop %v3846
      %v3848 = vmul.f32 %v3830, 1.442695
      %v3849 = vpow.pop %v3848
      %v3850 = vmul.f32 %v3831, 1.442695
      %v3851 = vpow.pop %v3850
      %v3852 = vmul.f32 %v3832, 1.442695
      %v3853 = vpow.pop %v3852
      %v3854 = vmul.f32 %v3833, 1.442695
      %v3855 = vpow.pop %v3854
      %v3856 = vmul.f32 %v3834, 1.442695
      %v3857 = vpow.pop %v3856
      %v3858 = vmul.f32 %v3835, 1.442695
      %v3859 = vpow.pop %v3858
      %v3860 = vmul.f32 %v3836, 1.442695
      %v3861 = vpow.pop %v3860
      %v3862 = vmul.f32 %v3837, 1.442695
      %v3863 = vpow.pop %v3862
      %v3864 = vmul.f32 %v3838, 1.442695
      %v3865 = vpow.pop %v3864
      %v3866 = vmul.f32 %v3839, 1.442695
      %v3867 = vpow.pop %v3866
      %v3868 = vmul.f32 %v3840, 1.442695
      %v3869 = vpow.pop %v3868
      %v3870 = vmul.f32 %v3841, 1.442695
      %v3871 = vpow.pop %v3870
      %v3872 = vmul.f32 %v3842, 1.442695
      %v3873 = vpow.pop %v3872
      %v3874 = vmul.f32 %v3843, 1.442695
      %v3875 = vpow.pop %v3874
      %3876 = vadd.xlane.f32.xlu0 %v3845
      %v3877 = vpop.xlane.xlu0 %3876
      %3878 = vadd.xlane.f32.xlu0 %v3847
      %v3879 = vpop.xlane.xlu0 %3878
      %3880 = vadd.xlane.f32.xlu0 %v3849
      %v3881 = vpop.xlane.xlu0 %3880
      %3882 = vadd.xlane.f32.xlu0 %v3851
      %v3883 = vpop.xlane.xlu0 %3882
      %3884 = vadd.xlane.f32.xlu0 %v3853
      %v3885 = vpop.xlane.xlu0 %3884
      %3886 = vadd.xlane.f32.xlu0 %v3855
      %v3887 = vpop.xlane.xlu0 %3886
      %3888 = vadd.xlane.f32.xlu0 %v3857
      %v3889 = vpop.xlane.xlu0 %3888
      %3890 = vadd.xlane.f32.xlu0 %v3859
      %v3891 = vpop.xlane.xlu0 %3890
      %3892 = vadd.xlane.f32.xlu0 %v3861
      %v3893 = vpop.xlane.xlu0 %3892
      %3894 = vadd.xlane.f32.xlu0 %v3863
      %v3895 = vpop.xlane.xlu0 %3894
      %3896 = vadd.xlane.f32.xlu0 %v3865
      %v3897 = vpop.xlane.xlu0 %3896
      %3898 = vadd.xlane.f32.xlu0 %v3867
      %v3899 = vpop.xlane.xlu0 %3898
      %3900 = vadd.xlane.f32.xlu0 %v3869
      %v3901 = vpop.xlane.xlu0 %3900
      %3902 = vadd.xlane.f32.xlu0 %v3871
      %v3903 = vpop.xlane.xlu0 %3902
      %3904 = vadd.xlane.f32.xlu0 %v3873
      %v3905 = vpop.xlane.xlu0 %3904
      %3906 = vadd.xlane.f32.xlu0 %v3875
      %v3907 = vpop.xlane.xlu0 %3906
      %v3908 = vrcp.pop %v3877
      %v3909 = vrcp.pop %v3879
      %v3910 = vrcp.pop %v3881
      %v3911 = vrcp.pop %v3883
      %v3912 = vrcp.pop %v3885
      %v3913 = vrcp.pop %v3887
      %v3914 = vrcp.pop %v3889
      %v3915 = vrcp.pop %v3891
      %v3916 = vrcp.pop %v3893
      %v3917 = vrcp.pop %v3895
      %v3918 = vrcp.pop %v3897
      %v3919 = vrcp.pop %v3899
      %v3920 = vrcp.pop %v3901
      %v3921 = vrcp.pop %v3903
      %v3922 = vrcp.pop %v3905
      %v3923 = vrcp.pop %v3907
      %v3924 = vmul.f32 %v3845, %v3908
      %v3925 = vmul.f32 %v3847, %v3909
      %v3926 = vmul.f32 %v3849, %v3910
      %v3927 = vmul.f32 %v3851, %v3911
      %v3928 = vmul.f32 %v3853, %v3912
      %v3929 = vmul.f32 %v3855, %v3913
      %v3930 = vmul.f32 %v3857, %v3914
      %v3931 = vmul.f32 %v3859, %v3915
      %v3932 = vmul.f32 %v3861, %v3916
      %v3933 = vmul.f32 %v3863, %v3917
      %v3934 = vmul.f32 %v3865, %v3918
      %v3935 = vmul.f32 %v3867, %v3919
      %v3936 = vmul.f32 %v3869, %v3920
      %v3937 = vmul.f32 %v3871, %v3921
      %v3938 = vmul.f32 %v3873, %v3922
      %v3939 = vmul.f32 %v3875, %v3923
      %s3940 = scalar_lea.vmem [#allocation2], 128
      %v3941 = vld [vmem:[%s3940] sm:$0xff]
      %v3942 = vld [vmem:[%s3940 + $0x8] sm:$0xff]
      %v3943 = vld [vmem:[%s3940 + $0x10] sm:$0xff]
      %v3944 = vld [vmem:[%s3940 + $0x18] sm:$0xff]
      %v3945 = vld [vmem:[%s3940 + $0x20] sm:$0xff]
      %v3946 = vld [vmem:[%s3940 + $0x28] sm:$0xff]
      %v3947 = vld [vmem:[%s3940 + $0x30] sm:$0xff]
      %v3948 = vld [vmem:[%s3940 + $0x38] sm:$0xff]
      %v3949 = vpack.c.bf16 %v3925, %v3924
      %v3950 = vpack.c.bf16 %v3927, %v3926
      %v3951 = vpack.c.bf16 %v3929, %v3928
      %v3952 = vpack.c.bf16 %v3931, %v3930
      %v3953 = vpack.c.bf16 %v3933, %v3932
      %v3954 = vpack.c.bf16 %v3935, %v3934
      %v3955 = vpack.c.bf16 %v3937, %v3936
      %v3956 = vpack.c.bf16 %v3939, %v3938
      %3957 = vmatprep.subr.bf16.mxu0 0
      %3958 = vmatpush1.bf16.msra.mxu0 %v3941
      %3959 = vmatprep.subr.bf16.mxu0 0
      %3960 = vmatpush1.bf16.msra.mxu0 %v3942
      %3961 = vmatprep.subr.bf16.mxu0 0
      %3962 = vmatpush1.bf16.msra.mxu0 %v3943
      %3963 = vmatprep.subr.bf16.mxu0 0
      %3964 = vmatpush1.bf16.msra.mxu0 %v3944
      %3965 = vmatprep.subr.bf16.mxu0 0
      %3966 = vmatpush1.bf16.msra.mxu0 %v3945
      %3967 = vmatprep.subr.bf16.mxu0 0
      %3968 = vmatpush1.bf16.msra.mxu0 %v3946
      %3969 = vmatprep.subr.bf16.mxu0 0
      %3970 = vmatpush1.bf16.msra.mxu0 %v3947
      %3971 = vmatprep.subr.bf16.mxu0 0
      %3972 = vmatpush1.bf16.msra.mxu0 %v3948
      %3973 = vmatprep.subr.bf16.mxu0 0
      %3974 = vmatpush1.bf16.msra.mxu0 0
      %3975 = vmatprep.subr.bf16.mxu0 0
      %3976 = vmatpush1.bf16.msra.mxu0 0
      %3977 = vmatprep.subr.bf16.mxu0 0
      %3978 = vmatpush1.bf16.msra.mxu0 0
      %3979 = vmatprep.subr.bf16.mxu0 0
      %3980 = vmatpush1.bf16.msra.mxu0 0
      %3981 = vmatprep.subr.bf16.mxu0 0
      %3982 = vmatpush1.bf16.msra.mxu0 0
      %3983 = vmatprep.subr.bf16.mxu0 0
      %3984 = vmatpush1.bf16.msra.mxu0 0
      %3985 = vmatprep.subr.bf16.mxu0 0
      %3986 = vmatpush1.bf16.msra.mxu0 0
      %3987 = vmatprep.subr.bf16.mxu0 0
      %3988 = vmatpush1.bf16.msra.mxu0 0
      %3989 = vmatprep.mubr.bf16.mxu0 0
      %3990 = vmatmul.mubr.bf16.gmra.mrb[0].mxu0 %v3949
      %v3991 = vpop.f32.mrb[0].mxu0
      %v3992 = vadd.f32 0.0, %v3991
      %v3993 = vpop.f32.mrb[0].mxu0
      %v3994 = vpop.f32.mrb[0].mxu0
      %v3995 = vadd.f32 0.0, %v3994
      %v3996 = vpop.f32.mrb[0].mxu0
      %3997 = vmatprep.mubr.bf16.mxu0 0
      %3998 = vmatmul.mubr.bf16.gmra.mrb[0].mxu0 %v3950
      %v3999 = vpop.f32.mrb[0].mxu0
      %v4000 = vadd.f32 0.0, %v3999
      %v4001 = vpop.f32.mrb[0].mxu0
      %v4002 = vpop.f32.mrb[0].mxu0
      %v4003 = vadd.f32 0.0, %v4002
      %v4004 = vpop.f32.mrb[0].mxu0
      %4005 = vmatprep.mubr.bf16.mxu0 0
      %4006 = vmatmul.mubr.bf16.gmra.mrb[0].mxu0 %v3951
      %v4007 = vpop.f32.mrb[0].mxu0
      %v4008 = vadd.f32 0.0, %v4007
      %v4009 = vpop.f32.mrb[0].mxu0
      %v4010 = vpop.f32.mrb[0].mxu0
      %v4011 = vadd.f32 0.0, %v4010
      %v4012 = vpop.f32.mrb[0].mxu0
      %4013 = vmatprep.mubr.bf16.mxu0 0
      %4014 = vmatmul.mubr.bf16.gmra.mrb[0].mxu0 %v3952
      %v4015 = vpop.f32.mrb[0].mxu0
      %v4016 = vadd.f32 0.0, %v4015
      %v4017 = vpop.f32.mrb[0].mxu0
      %v4018 = vpop.f32.mrb[0].mxu0
      %v4019 = vadd.f32 0.0, %v4018
      %v4020 = vpop.f32.mrb[0].mxu0
      %4021 = vmatprep.mubr.bf16.mxu0 0
      %4022 = vmatmul.mubr.bf16.gmra.mrb[0].mxu0 %v3953
      %v4023 = vpop.f32.mrb[0].mxu0
      %v4024 = vadd.f32 0.0, %v4023
      %v4025 = vpop.f32.mrb[0].mxu0
      %v4026 = vpop.f32.mrb[0].mxu0
      %v4027 = vadd.f32 0.0, %v4026
      %v4028 = vpop.f32.mrb[0].mxu0
      %4029 = vmatprep.mubr.bf16.mxu0 0
      %4030 = vmatmul.mubr.bf16.gmra.mrb[0].mxu0 %v3954
      %v4031 = vpop.f32.mrb[0].mxu0
      %v4032 = vadd.f32 0.0, %v4031
      %v4033 = vpop.f32.mrb[0].mxu0
      %v4034 = vpop.f32.mrb[0].mxu0
      %v4035 = vadd.f32 0.0, %v4034
      %v4036 = vpop.f32.mrb[0].mxu0
      %4037 = vmatprep.mubr.bf16.mxu0 0
      %4038 = vmatmul.mubr.bf16.gmra.mrb[0].mxu0 %v3955
      %v4039 = vpop.f32.mrb[0].mxu0
      %v4040 = vadd.f32 0.0, %v4039
      %v4041 = vpop.f32.mrb[0].mxu0
      %v4042 = vpop.f32.mrb[0].mxu0
      %v4043 = vadd.f32 0.0, %v4042
      %v4044 = vpop.f32.mrb[0].mxu0
      %4045 = vmatprep.mubr.bf16.mxu0 0
      %4046 = vmatmul.mubr.bf16.gmra.mrb[0].mxu0 %v3956
      %v4047 = vpop.f32.mrb[0].mxu0
      %v4048 = vadd.f32 0.0, %v4047
      %v4049 = vpop.f32.mrb[0].mxu0
      %v4050 = vpop.f32.mrb[0].mxu0
      %v4051 = vadd.f32 0.0, %v4050
      %v4052 = vpop.f32.mrb[0].mxu0
      %4053 = vdwg.mxu0
      %s4054 = scalar_lea.vmem %s5, 32
      %v4055 = vld [vmem:[%s4054] sm:$0xf]
      %v4056 = vld [vmem:[%s4054 + $0x4] sm:$0xf]
      %v4057 = vld [vmem:[%s4054 + $0x8] sm:$0xf]
      %v4058 = vld [vmem:[%s4054 + $0xc] sm:$0xf]
      %s4059 = scalar_lea.vmem %s6, 2
      %v4060 = vld [vmem:[%s4059] sm:$0x1]
      %v4062 = vlaneseq
      %v4063 = vshrl.u32 %v4062, 7
      %v4064 = vsub.s32 0, %v4063
      %v4065 = vrot.slane %v4060, %v4064
      %v4071 = vunpack.c.l.b16 %v4055
      %v4072 = vunpack.c.l.b16 %v4056
      %v4073 = vunpack.c.l.b16 %v4057
      %v4074 = vunpack.c.l.b16 %v4058
      %v4075 = vpack.c.b16 %v4072, %v4071
      %v4076 = vpack.c.b16 %v4074, %v4073
      %4079 = vmatprep.subr.bf16.mxu0 0
      %4080 = vmatpush1.bf16.msra.mxu0 %v4075
      %4081 = vmatprep.subr.bf16.mxu0 0
      %4082 = vmatpush1.bf16.msra.mxu0 %v4076
      %4083 = vmatprep.subr.bf16.mxu0 0
      %4084 = vmatpush1.bf16.msra.mxu0 0
      %4085 = vmatprep.subr.bf16.mxu0 0
      %4086 = vmatpush1.bf16.msra.mxu0 0
      %4087 = vmatprep.subr.bf16.mxu0 0
      %4088 = vmatpush1.bf16.msra.mxu0 0
      %4089 = vmatprep.subr.bf16.mxu0 0
      %4090 = vmatpush1.bf16.msra.mxu0 0
      %4091 = vmatprep.subr.bf16.mxu0 0
      %4092 = vmatpush1.bf16.msra.mxu0 0
      %4093 = vmatprep.subr.bf16.mxu0 0
      %4094 = vmatpush1.bf16.msra.mxu0 0
      %4095 = vmatprep.subr.bf16.mxu0 0
      %4096 = vmatpush1.bf16.msra.mxu0 0
      %4097 = vmatprep.subr.bf16.mxu0 0
      %4098 = vmatpush1.bf16.msra.mxu0 0
      %4099 = vmatprep.subr.bf16.mxu0 0
      %4100 = vmatpush1.bf16.msra.mxu0 0
      %4101 = vmatprep.subr.bf16.mxu0 0
      %4102 = vmatpush1.bf16.msra.mxu0 0
      %4103 = vmatprep.subr.bf16.mxu0 0
      %4104 = vmatpush1.bf16.msra.mxu0 0
      %4105 = vmatprep.subr.bf16.mxu0 0
      %4106 = vmatpush1.bf16.msra.mxu0 0
      %4107 = vmatprep.subr.bf16.mxu0 0
      %4108 = vmatpush1.bf16.msra.mxu0 0
      %4109 = vmatprep.subr.bf16.mxu0 0
      %4110 = vmatpush1.bf16.msra.mxu0 0
      %4111 = vmatprep.mubr.bf16.mxu0 0
      %4112 = vmatmul.mubr.bf16.gmra.mrb[0].mxu0 %v1787
      %v4113 = vpop.f32.mrb[0].mxu0
      %v4114 = vadd.f32 %v4065, %v4113
      %v4115 = vpop.f32.mrb[0].mxu0
      %v4116 = vpop.f32.mrb[0].mxu0
      %v4117 = vadd.f32 %v4065, %v4116
      %v4118 = vpop.f32.mrb[0].mxu0
      %4119 = vmatprep.mubr.bf16.mxu0 0
      %4120 = vmatmul.mubr.bf16.gmra.mrb[0].mxu0 %v1790
      %v4121 = vpop.f32.mrb[0].mxu0
      %v4122 = vadd.f32 %v4065, %v4121
      %v4123 = vpop.f32.mrb[0].mxu0
      %v4124 = vpop.f32.mrb[0].mxu0
      %v4125 = vadd.f32 %v4065, %v4124
      %v4126 = vpop.f32.mrb[0].mxu0
      %4127 = vmatprep.mubr.bf16.mxu0 0
      %4128 = vmatmul.mubr.bf16.gmra.mrb[0].mxu0 %v1793
      %v4129 = vpop.f32.mrb[0].mxu0
      %v4130 = vadd.f32 %v4065, %v4129
      %v4131 = vpop.f32.mrb[0].mxu0
      %v4132 = vpop.f32.mrb[0].mxu0
      %v4133 = vadd.f32 %v4065, %v4132
      %v4134 = vpop.f32.mrb[0].mxu0
      %4135 = vmatprep.mubr.bf16.mxu0 0
      %4136 = vmatmul.mubr.bf16.gmra.mrb[0].mxu0 %v1796
      %v4137 = vpop.f32.mrb[0].mxu0
      %v4138 = vadd.f32 %v4065, %v4137
      %v4139 = vpop.f32.mrb[0].mxu0
      %v4140 = vpop.f32.mrb[0].mxu0
      %v4141 = vadd.f32 %v4065, %v4140
      %v4142 = vpop.f32.mrb[0].mxu0
      %4143 = vmatprep.mubr.bf16.mxu0 0
      %4144 = vmatmul.mubr.bf16.gmra.mrb[0].mxu0 %v1799
      %v4145 = vpop.f32.mrb[0].mxu0
      %v4146 = vadd.f32 %v4065, %v4145
      %v4147 = vpop.f32.mrb[0].mxu0
      %v4148 = vpop.f32.mrb[0].mxu0
      %v4149 = vadd.f32 %v4065, %v4148
      %v4150 = vpop.f32.mrb[0].mxu0
      %4151 = vmatprep.mubr.bf16.mxu0 0
      %4152 = vmatmul.mubr.bf16.gmra.mrb[0].mxu0 %v1802
      %v4153 = vpop.f32.mrb[0].mxu0
      %v4154 = vadd.f32 %v4065, %v4153
      %v4155 = vpop.f32.mrb[0].mxu0
      %v4156 = vpop.f32.mrb[0].mxu0
      %v4157 = vadd.f32 %v4065, %v4156
      %v4158 = vpop.f32.mrb[0].mxu0
      %4159 = vmatprep.mubr.bf16.mxu0 0
      %4160 = vmatmul.mubr.bf16.gmra.mrb[0].mxu0 %v1805
      %v4161 = vpop.f32.mrb[0].mxu0
      %v4162 = vadd.f32 %v4065, %v4161
      %v4163 = vpop.f32.mrb[0].mxu0
      %v4164 = vpop.f32.mrb[0].mxu0
      %v4165 = vadd.f32 %v4065, %v4164
      %v4166 = vpop.f32.mrb[0].mxu0
      %4167 = vmatprep.mubr.bf16.mxu0 0
      %4168 = vmatmul.mubr.bf16.gmra.mrb[0].mxu0 %v1808
      %v4169 = vpop.f32.mrb[0].mxu0
      %v4170 = vadd.f32 %v4065, %v4169
      %v4171 = vpop.f32.mrb[0].mxu0
      %v4172 = vpop.f32.mrb[0].mxu0
      %v4173 = vadd.f32 %v4065, %v4172
      %v4174 = vpop.f32.mrb[0].mxu0
      %4175 = vdwg.mxu0
      %v4176 = vtanh.pop %v4114
      %v4177 = vtanh.pop %v4117
      %v4178 = vtanh.pop %v4122
      %v4179 = vtanh.pop %v4125
      %v4180 = vtanh.pop %v4130
      %v4181 = vtanh.pop %v4133
      %v4182 = vtanh.pop %v4138
      %v4183 = vtanh.pop %v4141
      %v4184 = vtanh.pop %v4146
      %v4185 = vtanh.pop %v4149
      %v4186 = vtanh.pop %v4154
      %v4187 = vtanh.pop %v4157
      %v4188 = vtanh.pop %v4162
      %v4189 = vtanh.pop %v4165
      %v4190 = vtanh.pop %v4170
      %v4191 = vtanh.pop %v4173
      %v4192 = vpack.c.bf16 %v3995, %v3992
      %v4193 = vpack.c.bf16 %v4003, %v4000
      %v4194 = vpack.c.bf16 %v4011, %v4008
      %v4195 = vpack.c.bf16 %v4019, %v4016
      %v4196 = vpack.c.bf16 %v4027, %v4024
      %v4197 = vpack.c.bf16 %v4035, %v4032
      %v4198 = vpack.c.bf16 %v4043, %v4040
      %v4199 = vpack.c.bf16 %v4051, %v4048
      %s4200 = scalar_lea.vmem %s9, 32
      %v4201 = vld [vmem:[%s4200] sm:$0xf]
      %v4202 = vld [vmem:[%s4200 + $0x4] sm:$0xf]
      %v4203 = vld [vmem:[%s4200 + $0x8] sm:$0xf]
      %v4204 = vld [vmem:[%s4200 + $0xc] sm:$0xf]
      %v4209 = vunpack.c.l.b16 %v4201
      %v4210 = vunpack.c.l.b16 %v4202
      %v4211 = vunpack.c.l.b16 %v4203
      %v4212 = vunpack.c.l.b16 %v4204
      %v4213 = vpack.c.b16 %v4210, %v4209
      %v4214 = vpack.c.b16 %v4212, %v4211
      %v4218 = vsel %vm1785, %v4192, 0
      %v4221 = vsel %vm1785, %v4193, 0
      %v4224 = vsel %vm1785, %v4194, 0
      %v4227 = vsel %vm1785, %v4195, 0
      %v4230 = vsel %vm1785, %v4196, 0
      %v4233 = vsel %vm1785, %v4197, 0
      %v4236 = vsel %vm1785, %v4198, 0
      %v4239 = vsel %vm1785, %v4199, 0
      %4241 = vmatprep.subr.bf16.mxu0 0
      %4242 = vmatpush1.bf16.msra.mxu0 %v4213
      %4243 = vmatprep.subr.bf16.mxu0 0
      %4244 = vmatpush1.bf16.msra.mxu0 %v4214
      %4245 = vmatprep.subr.bf16.mxu0 0
      %4246 = vmatpush1.bf16.msra.mxu0 0
      %4247 = vmatprep.subr.bf16.mxu0 0
      %4248 = vmatpush1.bf16.msra.mxu0 0
      %4249 = vmatprep.subr.bf16.mxu0 0
      %4250 = vmatpush1.bf16.msra.mxu0 0
      %4251 = vmatprep.subr.bf16.mxu0 0
      %4252 = vmatpush1.bf16.msra.mxu0 0
      %4253 = vmatprep.subr.bf16.mxu0 0
      %4254 = vmatpush1.bf16.msra.mxu0 0
      %4255 = vmatprep.subr.bf16.mxu0 0
      %4256 = vmatpush1.bf16.msra.mxu0 0
      %4257 = vmatprep.subr.bf16.mxu0 0
      %4258 = vmatpush1.bf16.msra.mxu0 0
      %4259 = vmatprep.subr.bf16.mxu0 0
      %4260 = vmatpush1.bf16.msra.mxu0 0
      %4261 = vmatprep.subr.bf16.mxu0 0
      %4262 = vmatpush1.bf16.msra.mxu0 0
      %4263 = vmatprep.subr.bf16.mxu0 0
      %4264 = vmatpush1.bf16.msra.mxu0 0
      %4265 = vmatprep.subr.bf16.mxu0 0
      %4266 = vmatpush1.bf16.msra.mxu0 0
      %4267 = vmatprep.subr.bf16.mxu0 0
      %4268 = vmatpush1.bf16.msra.mxu0 0
      %4269 = vmatprep.subr.bf16.mxu0 0
      %4270 = vmatpush1.bf16.msra.mxu0 0
      %4271 = vmatprep.subr.bf16.mxu0 0
      %4272 = vmatpush1.bf16.msra.mxu0 0
      %4273 = vmatprep.mubr.bf16.mxu0 0
      %4274 = vmatmul.mubr.bf16.gmra.mrb[0].mxu0 %v4218
      %v4275 = vpop.f32.mrb[0].mxu0
      %v4276 = vadd.f32 0.0, %v4275
      %v4277 = vpop.f32.mrb[0].mxu0
      %v4278 = vpop.f32.mrb[0].mxu0
      %v4279 = vadd.f32 0.0, %v4278
      %v4280 = vpop.f32.mrb[0].mxu0
      %4281 = vmatprep.mubr.bf16.mxu0 0
      %4282 = vmatmul.mubr.bf16.gmra.mrb[0].mxu0 %v4221
      %v4283 = vpop.f32.mrb[0].mxu0
      %v4284 = vadd.f32 0.0, %v4283
      %v4285 = vpop.f32.mrb[0].mxu0
      %v4286 = vpop.f32.mrb[0].mxu0
      %v4287 = vadd.f32 0.0, %v4286
      %v4288 = vpop.f32.mrb[0].mxu0
      %4289 = vmatprep.mubr.bf16.mxu0 0
      %4290 = vmatmul.mubr.bf16.gmra.mrb[0].mxu0 %v4224
      %v4291 = vpop.f32.mrb[0].mxu0
      %v4292 = vadd.f32 0.0, %v4291
      %v4293 = vpop.f32.mrb[0].mxu0
      %v4294 = vpop.f32.mrb[0].mxu0
      %v4295 = vadd.f32 0.0, %v4294
      %v4296 = vpop.f32.mrb[0].mxu0
      %4297 = vmatprep.mubr.bf16.mxu0 0
      %4298 = vmatmul.mubr.bf16.gmra.mrb[0].mxu0 %v4227
      %v4299 = vpop.f32.mrb[0].mxu0
      %v4300 = vadd.f32 0.0, %v4299
      %v4301 = vpop.f32.mrb[0].mxu0
      %v4302 = vpop.f32.mrb[0].mxu0
      %v4303 = vadd.f32 0.0, %v4302
      %v4304 = vpop.f32.mrb[0].mxu0
      %4305 = vmatprep.mubr.bf16.mxu0 0
      %4306 = vmatmul.mubr.bf16.gmra.mrb[0].mxu0 %v4230
      %v4307 = vpop.f32.mrb[0].mxu0
      %v4308 = vadd.f32 0.0, %v4307
      %v4309 = vpop.f32.mrb[0].mxu0
      %v4310 = vpop.f32.mrb[0].mxu0
      %v4311 = vadd.f32 0.0, %v4310
      %v4312 = vpop.f32.mrb[0].mxu0
      %4313 = vmatprep.mubr.bf16.mxu0 0
      %4314 = vmatmul.mubr.bf16.gmra.mrb[0].mxu0 %v4233
      %v4315 = vpop.f32.mrb[0].mxu0
      %v4316 = vadd.f32 0.0, %v4315
      %v4317 = vpop.f32.mrb[0].mxu0
      %v4318 = vpop.f32.mrb[0].mxu0
      %v4319 = vadd.f32 0.0, %v4318
      %v4320 = vpop.f32.mrb[0].mxu0
      %4321 = vmatprep.mubr.bf16.mxu0 0
      %4322 = vmatmul.mubr.bf16.gmra.mrb[0].mxu0 %v4236
      %v4323 = vpop.f32.mrb[0].mxu0
      %v4324 = vadd.f32 0.0, %v4323
      %v4325 = vpop.f32.mrb[0].mxu0
      %v4326 = vpop.f32.mrb[0].mxu0
      %v4327 = vadd.f32 0.0, %v4326
      %v4328 = vpop.f32.mrb[0].mxu0
      %4329 = vmatprep.mubr.bf16.mxu0 0
      %4330 = vmatmul.mubr.bf16.gmra.mrb[0].mxu0 %v4239
      %v4331 = vpop.f32.mrb[0].mxu0
      %v4332 = vadd.f32 0.0, %v4331
      %v4333 = vpop.f32.mrb[0].mxu0
      %v4334 = vpop.f32.mrb[0].mxu0
      %v4335 = vadd.f32 0.0, %v4334
      %v4336 = vpop.f32.mrb[0].mxu0
      %4337 = vdwg.mxu0
      %v4338 = vadd.f32 %v4176, %v4276
      %v4339 = vadd.f32 %v4177, %v4279
      %v4340 = vadd.f32 %v4178, %v4284
      %v4341 = vadd.f32 %v4179, %v4287
      %v4342 = vadd.f32 %v4180, %v4292
      %v4343 = vadd.f32 %v4181, %v4295
      %v4344 = vadd.f32 %v4182, %v4300
      %v4345 = vadd.f32 %v4183, %v4303
      %v4346 = vadd.f32 %v4184, %v4308
      %v4347 = vadd.f32 %v4185, %v4311
      %v4348 = vadd.f32 %v4186, %v4316
      %v4349 = vadd.f32 %v4187, %v4319
      %v4350 = vadd.f32 %v4188, %v4324
      %v4351 = vadd.f32 %v4189, %v4327
      %v4352 = vadd.f32 %v4190, %v4332
      %v4353 = vadd.f32 %v4191, %v4335
      %v4354 = vmul.f32 %v4338, 0.17677669
      %v4355 = vmul.f32 %v4339, 0.17677669
      %v4356 = vmul.f32 %v4340, 0.17677669
      %v4357 = vmul.f32 %v4341, 0.17677669
      %v4358 = vmul.f32 %v4342, 0.17677669
      %v4359 = vmul.f32 %v4343, 0.17677669
      %v4360 = vmul.f32 %v4344, 0.17677669
      %v4361 = vmul.f32 %v4345, 0.17677669
      %v4362 = vmul.f32 %v4346, 0.17677669
      %v4363 = vmul.f32 %v4347, 0.17677669
      %v4364 = vmul.f32 %v4348, 0.17677669
      %v4365 = vmul.f32 %v4349, 0.17677669
      %v4366 = vmul.f32 %v4350, 0.17677669
      %v4367 = vmul.f32 %v4351, 0.17677669
      %v4368 = vmul.f32 %v4352, 0.17677669
      %v4369 = vmul.f32 %v4353, 0.17677669
      %v4370 = vpack.c.bf16 %v4355, %v4354
      %v4371 = vpack.c.bf16 %v4357, %v4356
      %v4372 = vpack.c.bf16 %v4359, %v4358
      %v4373 = vpack.c.bf16 %v4361, %v4360
      %v4374 = vpack.c.bf16 %v4363, %v4362
      %v4375 = vpack.c.bf16 %v4365, %v4364
      %v4376 = vpack.c.bf16 %v4367, %v4366
      %v4377 = vpack.c.bf16 %v4369, %v4368
      %v4379 = vsel %vm1785, %v4370, 0
      %v4382 = vsel %vm1785, %v4371, 0
      %v4385 = vsel %vm1785, %v4372, 0
      %v4388 = vsel %vm1785, %v4373, 0
      %v4391 = vsel %vm1785, %v4374, 0
      %v4394 = vsel %vm1785, %v4375, 0
      %v4397 = vsel %vm1785, %v4376, 0
      %v4400 = vsel %vm1785, %v4377, 0
      %v4403 = vsel %vm1785, %v3941, 0
      %v4406 = vsel %vm1785, %v3942, 0
      %v4409 = vsel %vm1785, %v3943, 0
      %v4412 = vsel %vm1785, %v3944, 0
      %v4415 = vsel %vm1785, %v3945, 0
      %v4418 = vsel %vm1785, %v3946, 0
      %v4421 = vsel %vm1785, %v3947, 0
      %v4424 = vsel %vm1785, %v3948, 0
      %4426 = vmatprep.subr.bf16.mxu0 0
      %4427 = vmatpush1.bf16.xpose.msra.mxu0 %v4403
      %4428 = vmatprep.subr.bf16.mxu0 0
      %4429 = vmatpush1.bf16.xpose.msra.mxu0 %v4406
      %4430 = vmatprep.subr.bf16.mxu0 0
      %4431 = vmatpush1.bf16.xpose.msra.mxu0 %v4409
      %4432 = vmatprep.subr.bf16.mxu0 0
      %4433 = vmatpush1.bf16.xpose.msra.mxu0 %v4412
      %4434 = vmatprep.subr.bf16.mxu0 0
      %4435 = vmatpush1.bf16.xpose.msra.mxu0 %v4415
      %4436 = vmatprep.subr.bf16.mxu0 0
      %4437 = vmatpush1.bf16.xpose.msra.mxu0 %v4418
      %4438 = vmatprep.subr.bf16.mxu0 0
      %4439 = vmatpush1.bf16.xpose.msra.mxu0 %v4421
      %4440 = vmatprep.subr.bf16.mxu0 0
      %4441 = vmatpush1.bf16.xpose.msra.mxu0 %v4424
      %4442 = vmatprep.subr.bf16.mxu0 0
      %4443 = vmatpush1.bf16.xpose.msra.mxu0 0
      %4444 = vmatprep.subr.bf16.mxu0 0
      %4445 = vmatpush1.bf16.xpose.msra.mxu0 0
      %4446 = vmatprep.subr.bf16.mxu0 0
      %4447 = vmatpush1.bf16.xpose.msra.mxu0 0
      %4448 = vmatprep.subr.bf16.mxu0 0
      %4449 = vmatpush1.bf16.xpose.msra.mxu0 0
      %4450 = vmatprep.subr.bf16.mxu0 0
      %4451 = vmatpush1.bf16.xpose.msra.mxu0 0
      %4452 = vmatprep.subr.bf16.mxu0 0
      %4453 = vmatpush1.bf16.xpose.msra.mxu0 0
      %4454 = vmatprep.subr.bf16.mxu0 0
      %4455 = vmatpush1.bf16.xpose.msra.mxu0 0
      %4456 = vmatprep.subr.bf16.mxu0 0
      %4457 = vmatpush1.bf16.xpose.msra.mxu0 0
      %4458 = vmatprep.mubr.bf16.mxu0 0
      %4459 = vmatmul.mubr.bf16.gmra.mrb[0].mxu0 %v4379
      %v4460 = vpop.f32.mrb[0].mxu0
      %v4461 = vadd.f32 %v3764, %v4460
      %v4462 = vpop.f32.mrb[0].mxu0
      %v4463 = vpop.f32.mrb[0].mxu0
      %v4464 = vadd.f32 %v3765, %v4463
      %v4465 = vpop.f32.mrb[0].mxu0
      %4466 = vmatprep.mubr.bf16.mxu0 0
      %4467 = vmatmul.mubr.bf16.gmra.mrb[0].mxu0 %v4382
      %v4468 = vpop.f32.mrb[0].mxu0
      %v4469 = vadd.f32 %v3766, %v4468
      %v4470 = vpop.f32.mrb[0].mxu0
      %v4471 = vpop.f32.mrb[0].mxu0
      %v4472 = vadd.f32 %v3767, %v4471
      %v4473 = vpop.f32.mrb[0].mxu0
      %4474 = vmatprep.mubr.bf16.mxu0 0
      %4475 = vmatmul.mubr.bf16.gmra.mrb[0].mxu0 %v4385
      %v4476 = vpop.f32.mrb[0].mxu0
      %v4477 = vadd.f32 %v3768, %v4476
      %v4478 = vpop.f32.mrb[0].mxu0
      %v4479 = vpop.f32.mrb[0].mxu0
      %v4480 = vadd.f32 %v3769, %v4479
      %v4481 = vpop.f32.mrb[0].mxu0
      %4482 = vmatprep.mubr.bf16.mxu0 0
      %4483 = vmatmul.mubr.bf16.gmra.mrb[0].mxu0 %v4388
      %v4484 = vpop.f32.mrb[0].mxu0
      %v4485 = vadd.f32 %v3770, %v4484
      %v4486 = vpop.f32.mrb[0].mxu0
      %v4487 = vpop.f32.mrb[0].mxu0
      %v4488 = vadd.f32 %v3771, %v4487
      %v4489 = vpop.f32.mrb[0].mxu0
      %4490 = vmatprep.mubr.bf16.mxu0 0
      %4491 = vmatmul.mubr.bf16.gmra.mrb[0].mxu0 %v4391
      %v4492 = vpop.f32.mrb[0].mxu0
      %v4493 = vadd.f32 %v3772, %v4492
      %v4494 = vpop.f32.mrb[0].mxu0
      %v4495 = vpop.f32.mrb[0].mxu0
      %v4496 = vadd.f32 %v3773, %v4495
      %v4497 = vpop.f32.mrb[0].mxu0
      %4498 = vmatprep.mubr.bf16.mxu0 0
      %4499 = vmatmul.mubr.bf16.gmra.mrb[0].mxu0 %v4394
      %v4500 = vpop.f32.mrb[0].mxu0
      %v4501 = vadd.f32 %v3774, %v4500
      %v4502 = vpop.f32.mrb[0].mxu0
      %v4503 = vpop.f32.mrb[0].mxu0
      %v4504 = vadd.f32 %v3775, %v4503
      %v4505 = vpop.f32.mrb[0].mxu0
      %4506 = vmatprep.mubr.bf16.mxu0 0
      %4507 = vmatmul.mubr.bf16.gmra.mrb[0].mxu0 %v4397
      %v4508 = vpop.f32.mrb[0].mxu0
      %v4509 = vadd.f32 %v3776, %v4508
      %v4510 = vpop.f32.mrb[0].mxu0
      %v4511 = vpop.f32.mrb[0].mxu0
      %v4512 = vadd.f32 %v3777, %v4511
      %v4513 = vpop.f32.mrb[0].mxu0
      %4514 = vmatprep.mubr.bf16.mxu0 0
      %4515 = vmatmul.mubr.bf16.gmra.mrb[0].mxu0 %v4400
      %v4516 = vpop.f32.mrb[0].mxu0
      %v4517 = vadd.f32 %v3778, %v4516
      %v4518 = vpop.f32.mrb[0].mxu0
      %v4519 = vpop.f32.mrb[0].mxu0
      %v4520 = vadd.f32 %v3779, %v4519
      %v4521 = vpop.f32.mrb[0].mxu0
      %4522 = vdwg.mxu0
      %4523 = vst [vmem:[%s576 + $0x10] sm:$0xff] %v4461
      %4524 = vst [vmem:[%s576 + $0x30] sm:$0xff] %v4464
      %4525 = vst [vmem:[%s576 + $0x50] sm:$0xff] %v4469
      %4526 = vst [vmem:[%s576 + $0x70] sm:$0xff] %v4472
      %4527 = vst [vmem:[%s576 + $0x90] sm:$0xff] %v4477
      %4528 = vst [vmem:[%s576 + $0xb0] sm:$0xff] %v4480
      %4529 = vst [vmem:[%s576 + $0xd0] sm:$0xff] %v4485
      %4530 = vst [vmem:[%s576 + $0xf0] sm:$0xff] %v4488
      %4531 = vst [vmem:[%s576 + $0x110] sm:$0xff] %v4493
      %4532 = vst [vmem:[%s576 + $0x130] sm:$0xff] %v4496
      %4533 = vst [vmem:[%s576 + $0x150] sm:$0xff] %v4501
      %4534 = vst [vmem:[%s576 + $0x170] sm:$0xff] %v4504
      %4535 = vst [vmem:[%s576 + $0x190] sm:$0xff] %v4509
      %4536 = vst [vmem:[%s576 + $0x1b0] sm:$0xff] %v4512
      %4537 = vst [vmem:[%s576 + $0x1d0] sm:$0xff] %v4517
      %4538 = vst [vmem:[%s576 + $0x1f0] sm:$0xff] %v4520
      %4539 = vmax.xlane.f32.xlu0 %v4461
      %v4540 = vpop.xlane.xlu0 %4539
      %4541 = vmax.xlane.f32.xlu0 %v4464
      %v4542 = vpop.xlane.xlu0 %4541
      %4543 = vmax.xlane.f32.xlu0 %v4469
      %v4544 = vpop.xlane.xlu0 %4543
      %4545 = vmax.xlane.f32.xlu0 %v4472
      %v4546 = vpop.xlane.xlu0 %4545
      %4547 = vmax.xlane.f32.xlu0 %v4477
      %v4548 = vpop.xlane.xlu0 %4547
      %4549 = vmax.xlane.f32.xlu0 %v4480
      %v4550 = vpop.xlane.xlu0 %4549
      %4551 = vmax.xlane.f32.xlu0 %v4485
      %v4552 = vpop.xlane.xlu0 %4551
      %4553 = vmax.xlane.f32.xlu0 %v4488
      %v4554 = vpop.xlane.xlu0 %4553
      %4555 = vmax.xlane.f32.xlu0 %v4493
      %v4556 = vpop.xlane.xlu0 %4555
      %4557 = vmax.xlane.f32.xlu0 %v4496
      %v4558 = vpop.xlane.xlu0 %4557
      %4559 = vmax.xlane.f32.xlu0 %v4501
      %v4560 = vpop.xlane.xlu0 %4559
      %4561 = vmax.xlane.f32.xlu0 %v4504
      %v4562 = vpop.xlane.xlu0 %4561
      %4563 = vmax.xlane.f32.xlu0 %v4509
      %v4564 = vpop.xlane.xlu0 %4563
      %4565 = vmax.xlane.f32.xlu0 %v4512
      %v4566 = vpop.xlane.xlu0 %4565
      %4567 = vmax.xlane.f32.xlu0 %v4517
      %v4568 = vpop.xlane.xlu0 %4567
      %4569 = vmax.xlane.f32.xlu0 %v4520
      %v4570 = vpop.xlane.xlu0 %4569
      %v4571 = vsub.f32 %v4461, %v4540
      %v4572 = vsub.f32 %v4464, %v4542
      %v4573 = vsub.f32 %v4469, %v4544
      %v4574 = vsub.f32 %v4472, %v4546
      %v4575 = vsub.f32 %v4477, %v4548
      %v4576 = vsub.f32 %v4480, %v4550
      %v4577 = vsub.f32 %v4485, %v4552
      %v4578 = vsub.f32 %v4488, %v4554
      %v4579 = vsub.f32 %v4493, %v4556
      %v4580 = vsub.f32 %v4496, %v4558
      %v4581 = vsub.f32 %v4501, %v4560
      %v4582 = vsub.f32 %v4504, %v4562
      %v4583 = vsub.f32 %v4509, %v4564
      %v4584 = vsub.f32 %v4512, %v4566
      %v4585 = vsub.f32 %v4517, %v4568
      %v4586 = vsub.f32 %v4520, %v4570
      %v4587 = vmul.f32 %v4571, 1.442695
      %v4588 = vpow.pop %v4587
      %v4589 = vmul.f32 %v4572, 1.442695
      %v4590 = vpow.pop %v4589
      %v4591 = vmul.f32 %v4573, 1.442695
      %v4592 = vpow.pop %v4591
      %v4593 = vmul.f32 %v4574, 1.442695
      %v4594 = vpow.pop %v4593
      %v4595 = vmul.f32 %v4575, 1.442695
      %v4596 = vpow.pop %v4595
      %v4597 = vmul.f32 %v4576, 1.442695
      %v4598 = vpow.pop %v4597
      %v4599 = vmul.f32 %v4577, 1.442695
      %v4600 = vpow.pop %v4599
      %v4601 = vmul.f32 %v4578, 1.442695
      %v4602 = vpow.pop %v4601
      %v4603 = vmul.f32 %v4579, 1.442695
      %v4604 = vpow.pop %v4603
      %v4605 = vmul.f32 %v4580, 1.442695
      %v4606 = vpow.pop %v4605
      %v4607 = vmul.f32 %v4581, 1.442695
      %v4608 = vpow.pop %v4607
      %v4609 = vmul.f32 %v4582, 1.442695
      %v4610 = vpow.pop %v4609
      %v4611 = vmul.f32 %v4583, 1.442695
      %v4612 = vpow.pop %v4611
      %v4613 = vmul.f32 %v4584, 1.442695
      %v4614 = vpow.pop %v4613
      %v4615 = vmul.f32 %v4585, 1.442695
      %v4616 = vpow.pop %v4615
      %v4617 = vmul.f32 %v4586, 1.442695
      %v4618 = vpow.pop %v4617
      %4619 = vadd.xlane.f32.xlu0 %v4588
      %v4620 = vpop.xlane.xlu0 %4619
      %4621 = vadd.xlane.f32.xlu0 %v4590
      %v4622 = vpop.xlane.xlu0 %4621
      %4623 = vadd.xlane.f32.xlu0 %v4592
      %v4624 = vpop.xlane.xlu0 %4623
      %4625 = vadd.xlane.f32.xlu0 %v4594
      %v4626 = vpop.xlane.xlu0 %4625
      %4627 = vadd.xlane.f32.xlu0 %v4596
      %v4628 = vpop.xlane.xlu0 %4627
      %4629 = vadd.xlane.f32.xlu0 %v4598
      %v4630 = vpop.xlane.xlu0 %4629
      %4631 = vadd.xlane.f32.xlu0 %v4600
      %v4632 = vpop.xlane.xlu0 %4631
      %4633 = vadd.xlane.f32.xlu0 %v4602
      %v4634 = vpop.xlane.xlu0 %4633
      %4635 = vadd.xlane.f32.xlu0 %v4604
      %v4636 = vpop.xlane.xlu0 %4635
      %4637 = vadd.xlane.f32.xlu0 %v4606
      %v4638 = vpop.xlane.xlu0 %4637
      %4639 = vadd.xlane.f32.xlu0 %v4608
      %v4640 = vpop.xlane.xlu0 %4639
      %4641 = vadd.xlane.f32.xlu0 %v4610
      %v4642 = vpop.xlane.xlu0 %4641
      %4643 = vadd.xlane.f32.xlu0 %v4612
      %v4644 = vpop.xlane.xlu0 %4643
      %4645 = vadd.xlane.f32.xlu0 %v4614
      %v4646 = vpop.xlane.xlu0 %4645
      %4647 = vadd.xlane.f32.xlu0 %v4616
      %v4648 = vpop.xlane.xlu0 %4647
      %4649 = vadd.xlane.f32.xlu0 %v4618
      %v4650 = vpop.xlane.xlu0 %4649
      %v4651 = vlog2.pop %v4620
      %v4652 = vmul.f32 %v4651, 0.6931472
      %v4653 = vlog2.pop %v4622
      %v4654 = vmul.f32 %v4653, 0.6931472
      %v4655 = vlog2.pop %v4624
      %v4656 = vmul.f32 %v4655, 0.6931472
      %v4657 = vlog2.pop %v4626
      %v4658 = vmul.f32 %v4657, 0.6931472
      %v4659 = vlog2.pop %v4628
      %v4660 = vmul.f32 %v4659, 0.6931472
      %v4661 = vlog2.pop %v4630
      %v4662 = vmul.f32 %v4661, 0.6931472
      %v4663 = vlog2.pop %v4632
      %v4664 = vmul.f32 %v4663, 0.6931472
      %v4665 = vlog2.pop %v4634
      %v4666 = vmul.f32 %v4665, 0.6931472
      %v4667 = vlog2.pop %v4636
      %v4668 = vmul.f32 %v4667, 0.6931472
      %v4669 = vlog2.pop %v4638
      %v4670 = vmul.f32 %v4669, 0.6931472
      %v4671 = vlog2.pop %v4640
      %v4672 = vmul.f32 %v4671, 0.6931472
      %v4673 = vlog2.pop %v4642
      %v4674 = vmul.f32 %v4673, 0.6931472
      %v4675 = vlog2.pop %v4644
      %v4676 = vmul.f32 %v4675, 0.6931472
      %v4677 = vlog2.pop %v4646
      %v4678 = vmul.f32 %v4677, 0.6931472
      %v4679 = vlog2.pop %v4648
      %v4680 = vmul.f32 %v4679, 0.6931472
      %v4681 = vlog2.pop %v4650
      %v4682 = vmul.f32 %v4681, 0.6931472
      %v4683 = vadd.f32 %v4652, %v4540
      %v4684 = vadd.f32 %v4654, %v4542
      %v4685 = vadd.f32 %v4656, %v4544
      %v4686 = vadd.f32 %v4658, %v4546
      %v4687 = vadd.f32 %v4660, %v4548
      %v4688 = vadd.f32 %v4662, %v4550
      %v4689 = vadd.f32 %v4664, %v4552
      %v4690 = vadd.f32 %v4666, %v4554
      %v4691 = vadd.f32 %v4668, %v4556
      %v4692 = vadd.f32 %v4670, %v4558
      %v4693 = vadd.f32 %v4672, %v4560
      %v4694 = vadd.f32 %v4674, %v4562
      %v4695 = vadd.f32 %v4676, %v4564
      %v4696 = vadd.f32 %v4678, %v4566
      %v4697 = vadd.f32 %v4680, %v4568
      %v4698 = vadd.f32 %v4682, %v4570
      %v4699 = vsub.f32 %v4683, %v4461
      %v4700 = vsub.f32 %v4684, %v4464
      %v4701 = vsub.f32 %v4685, %v4469
      %v4702 = vsub.f32 %v4686, %v4472
      %v4703 = vsub.f32 %v4687, %v4477
      %v4704 = vsub.f32 %v4688, %v4480
      %v4705 = vsub.f32 %v4689, %v4485
      %v4706 = vsub.f32 %v4690, %v4488
      %v4707 = vsub.f32 %v4691, %v4493
      %v4708 = vsub.f32 %v4692, %v4496
      %v4709 = vsub.f32 %v4693, %v4501
      %v4710 = vsub.f32 %v4694, %v4504
      %v4711 = vsub.f32 %v4695, %v4509
      %v4712 = vsub.f32 %v4696, %v4512
      %v4713 = vsub.f32 %v4697, %v4517
      %v4714 = vsub.f32 %v4698, %v4520
      %v4715 = vmul.f32 %v4699, %v3700
      %v4716 = vmul.f32 %v4700, %v3701
      %v4717 = vmul.f32 %v4701, %v3702
      %v4718 = vmul.f32 %v4702, %v3703
      %v4719 = vmul.f32 %v4703, %v3704
      %v4720 = vmul.f32 %v4704, %v3705
      %v4721 = vmul.f32 %v4705, %v3706
      %v4722 = vmul.f32 %v4706, %v3707
      %v4723 = vmul.f32 %v4707, %v3708
      %v4724 = vmul.f32 %v4708, %v3709
      %v4725 = vmul.f32 %v4709, %v3710
      %v4726 = vmul.f32 %v4710, %v3711
      %v4727 = vmul.f32 %v4711, %v3712
      %v4728 = vmul.f32 %v4712, %v3713
      %v4729 = vmul.f32 %v4713, %v3714
      %v4730 = vmul.f32 %v4714, %v3715
      %v4731 = vadd.f32 %v4715, %v4716
      %v4732 = vadd.f32 %v4731, %v4717
      %v4733 = vadd.f32 %v4732, %v4718
      %v4734 = vadd.f32 %v4733, %v4719
      %v4735 = vadd.f32 %v4734, %v4720
      %v4736 = vadd.f32 %v4735, %v4721
      %v4737 = vadd.f32 %v4736, %v4722
      %v4738 = vadd.f32 %v4737, %v4723
      %v4739 = vadd.f32 %v4738, %v4724
      %v4740 = vadd.f32 %v4739, %v4725
      %v4741 = vadd.f32 %v4740, %v4726
      %v4742 = vadd.f32 %v4741, %v4727
      %v4743 = vadd.f32 %v4742, %v4728
      %v4744 = vadd.f32 %v4743, %v4729
      %v4745 = vadd.f32 %v4744, %v4730
      %4746 = vadd.xlane.f32.xlu0 %v4745
      %v4747 = vpop.xlane.xlu0 %4746
      %v4748 = vrot.slane %v4747, 4
      %v4749 = vadd.f32 %v4747, %v4748
      %v4750 = vrot.slane %v4749, 2
      %v4751 = vadd.f32 %v4749, %v4750
      %v4752 = vrot.slane %v4751, 1
      %v4753 = vadd.f32 %v4751, %v4752
      %s4754 = vtos %v4753
      %v4755 = vstv %s4754
      %v4756 = vadd.f32 %v3621, %v4755
      %v4757 = vadd.f32 %v3700, %v3701
      %v4758 = vadd.f32 %v4757, %v3702
      %v4759 = vadd.f32 %v4758, %v3703
      %v4760 = vadd.f32 %v4759, %v3704
      %v4761 = vadd.f32 %v4760, %v3705
      %v4762 = vadd.f32 %v4761, %v3706
      %v4763 = vadd.f32 %v4762, %v3707
      %v4764 = vadd.f32 %v4763, %v3708
      %v4765 = vadd.f32 %v4764, %v3709
      %v4766 = vadd.f32 %v4765, %v3710
      %v4767 = vadd.f32 %v4766, %v3711
      %v4768 = vadd.f32 %v4767, %v3712
      %v4769 = vadd.f32 %v4768, %v3713
      %v4770 = vadd.f32 %v4769, %v3714
      %v4771 = vadd.f32 %v4770, %v3715
      %4772 = vadd.xlane.f32.xlu0 %v4771
      %v4773 = vpop.xlane.xlu0 %4772
      %v4774 = vrot.slane %v4773, 4
      %v4775 = vadd.f32 %v4773, %v4774
      %v4776 = vrot.slane %v4775, 2
      %v4777 = vadd.f32 %v4775, %v4776
      %v4778 = vrot.slane %v4777, 1
      %v4779 = vadd.f32 %v4777, %v4778
      %s4780 = vtos %v4779
      %v4781 = vstv %s4780
      %v4782 = vadd.f32 %v3647, %v4781
      %v4783 = vld [vmem:[%s554 + $0x18] sm:$0xff]
      %v4784 = vld [vmem:[%s554 + $0x38] sm:$0xff]
      %v4785 = vld [vmem:[%s554 + $0x58] sm:$0xff]
      %v4786 = vld [vmem:[%s554 + $0x78] sm:$0xff]
      %v4787 = vunpack.c.0.s8 %v4783
      %v4788 = vunpack.c.1.s8 %v4783
      %v4789 = vunpack.c.2.s8 %v4783
      %v4790 = vunpack.c.3.s8 %v4783
      %v4791 = vunpack.c.0.s8 %v4784
      %v4792 = vunpack.c.1.s8 %v4784
      %v4793 = vunpack.c.2.s8 %v4784
      %v4794 = vunpack.c.3.s8 %v4784
      %v4795 = vunpack.c.0.s8 %v4785
      %v4796 = vunpack.c.1.s8 %v4785
      %v4797 = vunpack.c.2.s8 %v4785
      %v4798 = vunpack.c.3.s8 %v4785
      %v4799 = vunpack.c.0.s8 %v4786
      %v4800 = vunpack.c.1.s8 %v4786
      %v4801 = vunpack.c.2.s8 %v4786
      %v4802 = vunpack.c.3.s8 %v4786
      %v4803 = vcvt.s32.f32 %v4787
      %v4804 = vcvt.s32.f32 %v4788
      %v4805 = vcvt.s32.f32 %v4789
      %v4806 = vcvt.s32.f32 %v4790
      %v4807 = vcvt.s32.f32 %v4791
      %v4808 = vcvt.s32.f32 %v4792
      %v4809 = vcvt.s32.f32 %v4793
      %v4810 = vcvt.s32.f32 %v4794
      %v4811 = vcvt.s32.f32 %v4795
      %v4812 = vcvt.s32.f32 %v4796
      %v4813 = vcvt.s32.f32 %v4797
      %v4814 = vcvt.s32.f32 %v4798
      %v4815 = vcvt.s32.f32 %v4799
      %v4816 = vcvt.s32.f32 %v4800
      %v4817 = vcvt.s32.f32 %v4801
      %v4818 = vcvt.s32.f32 %v4802
      %v4819 = vld [vmem:[%s565 + $0xc] sm:$0xf]
      %v4820 = vld [vmem:[%s565 + $0x1c] sm:$0xf]
      %v4821 = vld [vmem:[%s565 + $0x2c] sm:$0xf]
      %v4822 = vld [vmem:[%s565 + $0x3c] sm:$0xf]
      %v4823 = vld [vmem:[%s565 + $0x4c] sm:$0xf]
      %v4824 = vld [vmem:[%s565 + $0x5c] sm:$0xf]
      %v4825 = vld [vmem:[%s565 + $0x6c] sm:$0xf]
      %v4826 = vld [vmem:[%s565 + $0x7c] sm:$0xf]
      %v4827 = vld [vmem:[%s565 + $0x8c] sm:$0xf]
      %v4828 = vld [vmem:[%s565 + $0x9c] sm:$0xf]
      %v4829 = vld [vmem:[%s565 + $0xac] sm:$0xf]
      %v4830 = vld [vmem:[%s565 + $0xbc] sm:$0xf]
      %v4831 = vld [vmem:[%s565 + $0xcc] sm:$0xf]
      %v4832 = vld [vmem:[%s565 + $0xdc] sm:$0xf]
      %v4833 = vld [vmem:[%s565 + $0xec] sm:$0xf]
      %v4834 = vld [vmem:[%s565 + $0xfc] sm:$0xf]
      %v4835 = vunpack.c.l.bf16 %v4819
      %v4836 = vunpack.c.l.bf16 %v4820
      %v4837 = vunpack.c.l.bf16 %v4821
      %v4838 = vunpack.c.l.bf16 %v4822
      %v4839 = vunpack.c.l.bf16 %v4823
      %v4840 = vunpack.c.l.bf16 %v4824
      %v4841 = vunpack.c.l.bf16 %v4825
      %v4842 = vunpack.c.l.bf16 %v4826
      %v4843 = vunpack.c.l.bf16 %v4827
      %v4844 = vunpack.c.l.bf16 %v4828
      %v4845 = vunpack.c.l.bf16 %v4829
      %v4846 = vunpack.c.l.bf16 %v4830
      %v4847 = vunpack.c.l.bf16 %v4831
      %v4848 = vunpack.c.l.bf16 %v4832
      %v4849 = vunpack.c.l.bf16 %v4833
      %v4850 = vunpack.c.l.bf16 %v4834
      %v4851 = vmul.f32 %v4803, %v1383
      %v4852 = vmul.f32 %v4804, %v1383
      %v4853 = vmul.f32 %v4805, %v1383
      %v4854 = vmul.f32 %v4806, %v1383
      %v4855 = vmul.f32 %v4807, %v1383
      %v4856 = vmul.f32 %v4808, %v1383
      %v4857 = vmul.f32 %v4809, %v1383
      %v4858 = vmul.f32 %v4810, %v1383
      %v4859 = vmul.f32 %v4811, %v1383
      %v4860 = vmul.f32 %v4812, %v1383
      %v4861 = vmul.f32 %v4813, %v1383
      %v4862 = vmul.f32 %v4814, %v1383
      %v4863 = vmul.f32 %v4815, %v1383
      %v4864 = vmul.f32 %v4816, %v1383
      %v4865 = vmul.f32 %v4817, %v1383
      %v4866 = vmul.f32 %v4818, %v1383
      %v4867 = vsub.f32 1.0, %v4851
      %v4868 = vsub.f32 1.0, %v4852
      %v4869 = vsub.f32 1.0, %v4853
      %v4870 = vsub.f32 1.0, %v4854
      %v4871 = vsub.f32 1.0, %v4855
      %v4872 = vsub.f32 1.0, %v4856
      %v4873 = vsub.f32 1.0, %v4857
      %v4874 = vsub.f32 1.0, %v4858
      %v4875 = vsub.f32 1.0, %v4859
      %v4876 = vsub.f32 1.0, %v4860
      %v4877 = vsub.f32 1.0, %v4861
      %v4878 = vsub.f32 1.0, %v4862
      %v4879 = vsub.f32 1.0, %v4863
      %v4880 = vsub.f32 1.0, %v4864
      %v4881 = vsub.f32 1.0, %v4865
      %v4882 = vsub.f32 1.0, %v4866
      %v4883 = vmul.f32 %v4867, -1024.0
      %v4884 = vmul.f32 %v4868, -1024.0
      %v4885 = vmul.f32 %v4869, -1024.0
      %v4886 = vmul.f32 %v4870, -1024.0
      %v4887 = vmul.f32 %v4871, -1024.0
      %v4888 = vmul.f32 %v4872, -1024.0
      %v4889 = vmul.f32 %v4873, -1024.0
      %v4890 = vmul.f32 %v4874, -1024.0
      %v4891 = vmul.f32 %v4875, -1024.0
      %v4892 = vmul.f32 %v4876, -1024.0
      %v4893 = vmul.f32 %v4877, -1024.0
      %v4894 = vmul.f32 %v4878, -1024.0
      %v4895 = vmul.f32 %v4879, -1024.0
      %v4896 = vmul.f32 %v4880, -1024.0
      %v4897 = vmul.f32 %v4881, -1024.0
      %v4898 = vmul.f32 %v4882, -1024.0
      %v4899 = vadd.f32 %v4883, %v1310
      %v4900 = vadd.f32 %v4884, %v1310
      %v4901 = vadd.f32 %v4885, %v1310
      %v4902 = vadd.f32 %v4886, %v1310
      %v4903 = vadd.f32 %v4887, %v1310
      %v4904 = vadd.f32 %v4888, %v1310
      %v4905 = vadd.f32 %v4889, %v1310
      %v4906 = vadd.f32 %v4890, %v1310
      %v4907 = vadd.f32 %v4891, %v1310
      %v4908 = vadd.f32 %v4892, %v1310
      %v4909 = vadd.f32 %v4893, %v1310
      %v4910 = vadd.f32 %v4894, %v1310
      %v4911 = vadd.f32 %v4895, %v1310
      %v4912 = vadd.f32 %v4896, %v1310
      %v4913 = vadd.f32 %v4897, %v1310
      %v4914 = vadd.f32 %v4898, %v1310
      %v4915 = vadd.f32 %v4835, %v4899
      %v4916 = vadd.f32 %v4836, %v4900
      %v4917 = vadd.f32 %v4837, %v4901
      %v4918 = vadd.f32 %v4838, %v4902
      %v4919 = vadd.f32 %v4839, %v4903
      %v4920 = vadd.f32 %v4840, %v4904
      %v4921 = vadd.f32 %v4841, %v4905
      %v4922 = vadd.f32 %v4842, %v4906
      %v4923 = vadd.f32 %v4843, %v4907
      %v4924 = vadd.f32 %v4844, %v4908
      %v4925 = vadd.f32 %v4845, %v4909
      %v4926 = vadd.f32 %v4846, %v4910
      %v4927 = vadd.f32 %v4847, %v4911
      %v4928 = vadd.f32 %v4848, %v4912
      %v4929 = vadd.f32 %v4849, %v4913
      %v4930 = vadd.f32 %v4850, %v4914
      %4931 = vmax.xlane.f32.xlu0 %v4915
      %v4932 = vpop.xlane.xlu0 %4931
      %4933 = vmax.xlane.f32.xlu0 %v4916
      %v4934 = vpop.xlane.xlu0 %4933
      %4935 = vmax.xlane.f32.xlu0 %v4917
      %v4936 = vpop.xlane.xlu0 %4935
      %4937 = vmax.xlane.f32.xlu0 %v4918
      %v4938 = vpop.xlane.xlu0 %4937
      %4939 = vmax.xlane.f32.xlu0 %v4919
      %v4940 = vpop.xlane.xlu0 %4939
      %4941 = vmax.xlane.f32.xlu0 %v4920
      %v4942 = vpop.xlane.xlu0 %4941
      %4943 = vmax.xlane.f32.xlu0 %v4921
      %v4944 = vpop.xlane.xlu0 %4943
      %4945 = vmax.xlane.f32.xlu0 %v4922
      %v4946 = vpop.xlane.xlu0 %4945
      %4947 = vmax.xlane.f32.xlu0 %v4923
      %v4948 = vpop.xlane.xlu0 %4947
      %4949 = vmax.xlane.f32.xlu0 %v4924
      %v4950 = vpop.xlane.xlu0 %4949
      %4951 = vmax.xlane.f32.xlu0 %v4925
      %v4952 = vpop.xlane.xlu0 %4951
      %4953 = vmax.xlane.f32.xlu0 %v4926
      %v4954 = vpop.xlane.xlu0 %4953
      %4955 = vmax.xlane.f32.xlu0 %v4927
      %v4956 = vpop.xlane.xlu0 %4955
      %4957 = vmax.xlane.f32.xlu0 %v4928
      %v4958 = vpop.xlane.xlu0 %4957
      %4959 = vmax.xlane.f32.xlu0 %v4929
      %v4960 = vpop.xlane.xlu0 %4959
      %4961 = vmax.xlane.f32.xlu0 %v4930
      %v4962 = vpop.xlane.xlu0 %4961
      %v4963 = vsub.f32 %v4915, %v4932
      %v4964 = vsub.f32 %v4916, %v4934
      %v4965 = vsub.f32 %v4917, %v4936
      %v4966 = vsub.f32 %v4918, %v4938
      %v4967 = vsub.f32 %v4919, %v4940
      %v4968 = vsub.f32 %v4920, %v4942
      %v4969 = vsub.f32 %v4921, %v4944
      %v4970 = vsub.f32 %v4922, %v4946
      %v4971 = vsub.f32 %v4923, %v4948
      %v4972 = vsub.f32 %v4924, %v4950
      %v4973 = vsub.f32 %v4925, %v4952
      %v4974 = vsub.f32 %v4926, %v4954
      %v4975 = vsub.f32 %v4927, %v4956
      %v4976 = vsub.f32 %v4928, %v4958
      %v4977 = vsub.f32 %v4929, %v4960
      %v4978 = vsub.f32 %v4930, %v4962
      %v4979 = vmul.f32 %v4963, 1.442695
      %v4980 = vpow.pop %v4979
      %v4981 = vmul.f32 %v4964, 1.442695
      %v4982 = vpow.pop %v4981
      %v4983 = vmul.f32 %v4965, 1.442695
      %v4984 = vpow.pop %v4983
      %v4985 = vmul.f32 %v4966, 1.442695
      %v4986 = vpow.pop %v4985
      %v4987 = vmul.f32 %v4967, 1.442695
      %v4988 = vpow.pop %v4987
      %v4989 = vmul.f32 %v4968, 1.442695
      %v4990 = vpow.pop %v4989
      %v4991 = vmul.f32 %v4969, 1.442695
      %v4992 = vpow.pop %v4991
      %v4993 = vmul.f32 %v4970, 1.442695
      %v4994 = vpow.pop %v4993
      %v4995 = vmul.f32 %v4971, 1.442695
      %v4996 = vpow.pop %v4995
      %v4997 = vmul.f32 %v4972, 1.442695
      %v4998 = vpow.pop %v4997
      %v4999 = vmul.f32 %v4973, 1.442695
      %v5000 = vpow.pop %v4999
      %v5001 = vmul.f32 %v4974, 1.442695
      %v5002 = vpow.pop %v5001
      %v5003 = vmul.f32 %v4975, 1.442695
      %v5004 = vpow.pop %v5003
      %v5005 = vmul.f32 %v4976, 1.442695
      %v5006 = vpow.pop %v5005
      %v5007 = vmul.f32 %v4977, 1.442695
      %v5008 = vpow.pop %v5007
      %v5009 = vmul.f32 %v4978, 1.442695
      %v5010 = vpow.pop %v5009
      %5011 = vadd.xlane.f32.xlu0 %v4980
      %v5012 = vpop.xlane.xlu0 %5011
      %5013 = vadd.xlane.f32.xlu0 %v4982
      %v5014 = vpop.xlane.xlu0 %5013
      %5015 = vadd.xlane.f32.xlu0 %v4984
      %v5016 = vpop.xlane.xlu0 %5015
      %5017 = vadd.xlane.f32.xlu0 %v4986
      %v5018 = vpop.xlane.xlu0 %5017
      %5019 = vadd.xlane.f32.xlu0 %v4988
      %v5020 = vpop.xlane.xlu0 %5019
      %5021 = vadd.xlane.f32.xlu0 %v4990
      %v5022 = vpop.xlane.xlu0 %5021
      %5023 = vadd.xlane.f32.xlu0 %v4992
      %v5024 = vpop.xlane.xlu0 %5023
      %5025 = vadd.xlane.f32.xlu0 %v4994
      %v5026 = vpop.xlane.xlu0 %5025
      %5027 = vadd.xlane.f32.xlu0 %v4996
      %v5028 = vpop.xlane.xlu0 %5027
      %5029 = vadd.xlane.f32.xlu0 %v4998
      %v5030 = vpop.xlane.xlu0 %5029
      %5031 = vadd.xlane.f32.xlu0 %v5000
      %v5032 = vpop.xlane.xlu0 %5031
      %5033 = vadd.xlane.f32.xlu0 %v5002
      %v5034 = vpop.xlane.xlu0 %5033
      %5035 = vadd.xlane.f32.xlu0 %v5004
      %v5036 = vpop.xlane.xlu0 %5035
      %5037 = vadd.xlane.f32.xlu0 %v5006
      %v5038 = vpop.xlane.xlu0 %5037
      %5039 = vadd.xlane.f32.xlu0 %v5008
      %v5040 = vpop.xlane.xlu0 %5039
      %5041 = vadd.xlane.f32.xlu0 %v5010
      %v5042 = vpop.xlane.xlu0 %5041
      %v5043 = vrcp.pop %v5012
      %v5044 = vrcp.pop %v5014
      %v5045 = vrcp.pop %v5016
      %v5046 = vrcp.pop %v5018
      %v5047 = vrcp.pop %v5020
      %v5048 = vrcp.pop %v5022
      %v5049 = vrcp.pop %v5024
      %v5050 = vrcp.pop %v5026
      %v5051 = vrcp.pop %v5028
      %v5052 = vrcp.pop %v5030
      %v5053 = vrcp.pop %v5032
      %v5054 = vrcp.pop %v5034
      %v5055 = vrcp.pop %v5036
      %v5056 = vrcp.pop %v5038
      %v5057 = vrcp.pop %v5040
      %v5058 = vrcp.pop %v5042
      %v5059 = vmul.f32 %v4980, %v5043
      %v5060 = vmul.f32 %v4982, %v5044
      %v5061 = vmul.f32 %v4984, %v5045
      %v5062 = vmul.f32 %v4986, %v5046
      %v5063 = vmul.f32 %v4988, %v5047
      %v5064 = vmul.f32 %v4990, %v5048
      %v5065 = vmul.f32 %v4992, %v5049
      %v5066 = vmul.f32 %v4994, %v5050
      %v5067 = vmul.f32 %v4996, %v5051
      %v5068 = vmul.f32 %v4998, %v5052
      %v5069 = vmul.f32 %v5000, %v5053
      %v5070 = vmul.f32 %v5002, %v5054
      %v5071 = vmul.f32 %v5004, %v5055
      %v5072 = vmul.f32 %v5006, %v5056
      %v5073 = vmul.f32 %v5008, %v5057
      %v5074 = vmul.f32 %v5010, %v5058
      %s5075 = scalar_lea.vmem [#allocation2], 192
      %v5076 = vld [vmem:[%s5075] sm:$0xff]
      %v5077 = vld [vmem:[%s5075 + $0x8] sm:$0xff]
      %v5078 = vld [vmem:[%s5075 + $0x10] sm:$0xff]
      %v5079 = vld [vmem:[%s5075 + $0x18] sm:$0xff]
      %v5080 = vld [vmem:[%s5075 + $0x20] sm:$0xff]
      %v5081 = vld [vmem:[%s5075 + $0x28] sm:$0xff]
      %v5082 = vld [vmem:[%s5075 + $0x30] sm:$0xff]
      %v5083 = vld [vmem:[%s5075 + $0x38] sm:$0xff]
      %v5084 = vpack.c.bf16 %v5060, %v5059
      %v5085 = vpack.c.bf16 %v5062, %v5061
      %v5086 = vpack.c.bf16 %v5064, %v5063
      %v5087 = vpack.c.bf16 %v5066, %v5065
      %v5088 = vpack.c.bf16 %v5068, %v5067
      %v5089 = vpack.c.bf16 %v5070, %v5069
      %v5090 = vpack.c.bf16 %v5072, %v5071
      %v5091 = vpack.c.bf16 %v5074, %v5073
      %5092 = vmatprep.subr.bf16.mxu0 0
      %5093 = vmatpush1.bf16.msra.mxu0 %v5076
      %5094 = vmatprep.subr.bf16.mxu0 0
      %5095 = vmatpush1.bf16.msra.mxu0 %v5077
      %5096 = vmatprep.subr.bf16.mxu0 0
      %5097 = vmatpush1.bf16.msra.mxu0 %v5078
      %5098 = vmatprep.subr.bf16.mxu0 0
      %5099 = vmatpush1.bf16.msra.mxu0 %v5079
      %5100 = vmatprep.subr.bf16.mxu0 0
      %5101 = vmatpush1.bf16.msra.mxu0 %v5080
      %5102 = vmatprep.subr.bf16.mxu0 0
      %5103 = vmatpush1.bf16.msra.mxu0 %v5081
      %5104 = vmatprep.subr.bf16.mxu0 0
      %5105 = vmatpush1.bf16.msra.mxu0 %v5082
      %5106 = vmatprep.subr.bf16.mxu0 0
      %5107 = vmatpush1.bf16.msra.mxu0 %v5083
      %5108 = vmatprep.subr.bf16.mxu0 0
      %5109 = vmatpush1.bf16.msra.mxu0 0
      %5110 = vmatprep.subr.bf16.mxu0 0
      %5111 = vmatpush1.bf16.msra.mxu0 0
      %5112 = vmatprep.subr.bf16.mxu0 0
      %5113 = vmatpush1.bf16.msra.mxu0 0
      %5114 = vmatprep.subr.bf16.mxu0 0
      %5115 = vmatpush1.bf16.msra.mxu0 0
      %5116 = vmatprep.subr.bf16.mxu0 0
      %5117 = vmatpush1.bf16.msra.mxu0 0
      %5118 = vmatprep.subr.bf16.mxu0 0
      %5119 = vmatpush1.bf16.msra.mxu0 0
      %5120 = vmatprep.subr.bf16.mxu0 0
      %5121 = vmatpush1.bf16.msra.mxu0 0
      %5122 = vmatprep.subr.bf16.mxu0 0
      %5123 = vmatpush1.bf16.msra.mxu0 0
      %5124 = vmatprep.mubr.bf16.mxu0 0
      %5125 = vmatmul.mubr.bf16.gmra.mrb[0].mxu0 %v5084
      %v5126 = vpop.f32.mrb[0].mxu0
      %v5127 = vadd.f32 0.0, %v5126
      %v5128 = vpop.f32.mrb[0].mxu0
      %v5129 = vpop.f32.mrb[0].mxu0
      %v5130 = vadd.f32 0.0, %v5129
      %v5131 = vpop.f32.mrb[0].mxu0
      %5132 = vmatprep.mubr.bf16.mxu0 0
      %5133 = vmatmul.mubr.bf16.gmra.mrb[0].mxu0 %v5085
      %v5134 = vpop.f32.mrb[0].mxu0
      %v5135 = vadd.f32 0.0, %v5134
      %v5136 = vpop.f32.mrb[0].mxu0
      %v5137 = vpop.f32.mrb[0].mxu0
      %v5138 = vadd.f32 0.0, %v5137
      %v5139 = vpop.f32.mrb[0].mxu0
      %5140 = vmatprep.mubr.bf16.mxu0 0
      %5141 = vmatmul.mubr.bf16.gmra.mrb[0].mxu0 %v5086
      %v5142 = vpop.f32.mrb[0].mxu0
      %v5143 = vadd.f32 0.0, %v5142
      %v5144 = vpop.f32.mrb[0].mxu0
      %v5145 = vpop.f32.mrb[0].mxu0
      %v5146 = vadd.f32 0.0, %v5145
      %v5147 = vpop.f32.mrb[0].mxu0
      %5148 = vmatprep.mubr.bf16.mxu0 0
      %5149 = vmatmul.mubr.bf16.gmra.mrb[0].mxu0 %v5087
      %v5150 = vpop.f32.mrb[0].mxu0
      %v5151 = vadd.f32 0.0, %v5150
      %v5152 = vpop.f32.mrb[0].mxu0
      %v5153 = vpop.f32.mrb[0].mxu0
      %v5154 = vadd.f32 0.0, %v5153
      %v5155 = vpop.f32.mrb[0].mxu0
      %5156 = vmatprep.mubr.bf16.mxu0 0
      %5157 = vmatmul.mubr.bf16.gmra.mrb[0].mxu0 %v5088
      %v5158 = vpop.f32.mrb[0].mxu0
      %v5159 = vadd.f32 0.0, %v5158
      %v5160 = vpop.f32.mrb[0].mxu0
      %v5161 = vpop.f32.mrb[0].mxu0
      %v5162 = vadd.f32 0.0, %v5161
      %v5163 = vpop.f32.mrb[0].mxu0
      %5164 = vmatprep.mubr.bf16.mxu0 0
      %5165 = vmatmul.mubr.bf16.gmra.mrb[0].mxu0 %v5089
      %v5166 = vpop.f32.mrb[0].mxu0
      %v5167 = vadd.f32 0.0, %v5166
      %v5168 = vpop.f32.mrb[0].mxu0
      %v5169 = vpop.f32.mrb[0].mxu0
      %v5170 = vadd.f32 0.0, %v5169
      %v5171 = vpop.f32.mrb[0].mxu0
      %5172 = vmatprep.mubr.bf16.mxu0 0
      %5173 = vmatmul.mubr.bf16.gmra.mrb[0].mxu0 %v5090
      %v5174 = vpop.f32.mrb[0].mxu0
      %v5175 = vadd.f32 0.0, %v5174
      %v5176 = vpop.f32.mrb[0].mxu0
      %v5177 = vpop.f32.mrb[0].mxu0
      %v5178 = vadd.f32 0.0, %v5177
      %v5179 = vpop.f32.mrb[0].mxu0
      %5180 = vmatprep.mubr.bf16.mxu0 0
      %5181 = vmatmul.mubr.bf16.gmra.mrb[0].mxu0 %v5091
      %v5182 = vpop.f32.mrb[0].mxu0
      %v5183 = vadd.f32 0.0, %v5182
      %v5184 = vpop.f32.mrb[0].mxu0
      %v5185 = vpop.f32.mrb[0].mxu0
      %v5186 = vadd.f32 0.0, %v5185
      %v5187 = vpop.f32.mrb[0].mxu0
      %5188 = vdwg.mxu0
      %s5189 = scalar_lea.vmem %s5, 48
      %v5190 = vld [vmem:[%s5189] sm:$0xf]
      %v5191 = vld [vmem:[%s5189 + $0x4] sm:$0xf]
      %v5192 = vld [vmem:[%s5189 + $0x8] sm:$0xf]
      %v5193 = vld [vmem:[%s5189 + $0xc] sm:$0xf]
      %s5194 = scalar_lea.vmem %s6, 3
      %v5195 = vld [vmem:[%s5194] sm:$0x1]
      %v5197 = vlaneseq
      %v5198 = vshrl.u32 %v5197, 7
      %v5199 = vsub.s32 0, %v5198
      %v5200 = vrot.slane %v5195, %v5199
      %v5206 = vunpack.c.l.b16 %v5190
      %v5207 = vunpack.c.l.b16 %v5191
      %v5208 = vunpack.c.l.b16 %v5192
      %v5209 = vunpack.c.l.b16 %v5193
      %v5210 = vpack.c.b16 %v5207, %v5206
      %v5211 = vpack.c.b16 %v5209, %v5208
      %5214 = vmatprep.subr.bf16.mxu0 0
      %5215 = vmatpush1.bf16.msra.mxu0 %v5210
      %5216 = vmatprep.subr.bf16.mxu0 0
      %5217 = vmatpush1.bf16.msra.mxu0 %v5211
      %5218 = vmatprep.subr.bf16.mxu0 0
      %5219 = vmatpush1.bf16.msra.mxu0 0
      %5220 = vmatprep.subr.bf16.mxu0 0
      %5221 = vmatpush1.bf16.msra.mxu0 0
      %5222 = vmatprep.subr.bf16.mxu0 0
      %5223 = vmatpush1.bf16.msra.mxu0 0
      %5224 = vmatprep.subr.bf16.mxu0 0
      %5225 = vmatpush1.bf16.msra.mxu0 0
      %5226 = vmatprep.subr.bf16.mxu0 0
      %5227 = vmatpush1.bf16.msra.mxu0 0
      %5228 = vmatprep.subr.bf16.mxu0 0
      %5229 = vmatpush1.bf16.msra.mxu0 0
      %5230 = vmatprep.subr.bf16.mxu0 0
      %5231 = vmatpush1.bf16.msra.mxu0 0
      %5232 = vmatprep.subr.bf16.mxu0 0
      %5233 = vmatpush1.bf16.msra.mxu0 0
      %5234 = vmatprep.subr.bf16.mxu0 0
      %5235 = vmatpush1.bf16.msra.mxu0 0
      %5236 = vmatprep.subr.bf16.mxu0 0
      %5237 = vmatpush1.bf16.msra.mxu0 0
      %5238 = vmatprep.subr.bf16.mxu0 0
      %5239 = vmatpush1.bf16.msra.mxu0 0
      %5240 = vmatprep.subr.bf16.mxu0 0
      %5241 = vmatpush1.bf16.msra.mxu0 0
      %5242 = vmatprep.subr.bf16.mxu0 0
      %5243 = vmatpush1.bf16.msra.mxu0 0
      %5244 = vmatprep.subr.bf16.mxu0 0
      %5245 = vmatpush1.bf16.msra.mxu0 0
      %5246 = vmatprep.mubr.bf16.mxu0 0
      %5247 = vmatmul.mubr.bf16.gmra.mrb[0].mxu0 %v1787
      %v5248 = vpop.f32.mrb[0].mxu0
      %v5249 = vadd.f32 %v5200, %v5248
      %v5250 = vpop.f32.mrb[0].mxu0
      %v5251 = vpop.f32.mrb[0].mxu0
      %v5252 = vadd.f32 %v5200, %v5251
      %v5253 = vpop.f32.mrb[0].mxu0
      %5254 = vmatprep.mubr.bf16.mxu0 0
      %5255 = vmatmul.mubr.bf16.gmra.mrb[0].mxu0 %v1790
      %v5256 = vpop.f32.mrb[0].mxu0
      %v5257 = vadd.f32 %v5200, %v5256
      %v5258 = vpop.f32.mrb[0].mxu0
      %v5259 = vpop.f32.mrb[0].mxu0
      %v5260 = vadd.f32 %v5200, %v5259
      %v5261 = vpop.f32.mrb[0].mxu0
      %5262 = vmatprep.mubr.bf16.mxu0 0
      %5263 = vmatmul.mubr.bf16.gmra.mrb[0].mxu0 %v1793
      %v5264 = vpop.f32.mrb[0].mxu0
      %v5265 = vadd.f32 %v5200, %v5264
      %v5266 = vpop.f32.mrb[0].mxu0
      %v5267 = vpop.f32.mrb[0].mxu0
      %v5268 = vadd.f32 %v5200, %v5267
      %v5269 = vpop.f32.mrb[0].mxu0
      %5270 = vmatprep.mubr.bf16.mxu0 0
      %5271 = vmatmul.mubr.bf16.gmra.mrb[0].mxu0 %v1796
      %v5272 = vpop.f32.mrb[0].mxu0
      %v5273 = vadd.f32 %v5200, %v5272
      %v5274 = vpop.f32.mrb[0].mxu0
      %v5275 = vpop.f32.mrb[0].mxu0
      %v5276 = vadd.f32 %v5200, %v5275
      %v5277 = vpop.f32.mrb[0].mxu0
      %5278 = vmatprep.mubr.bf16.mxu0 0
      %5279 = vmatmul.mubr.bf16.gmra.mrb[0].mxu0 %v1799
      %v5280 = vpop.f32.mrb[0].mxu0
      %v5281 = vadd.f32 %v5200, %v5280
      %v5282 = vpop.f32.mrb[0].mxu0
      %v5283 = vpop.f32.mrb[0].mxu0
      %v5284 = vadd.f32 %v5200, %v5283
      %v5285 = vpop.f32.mrb[0].mxu0
      %5286 = vmatprep.mubr.bf16.mxu0 0
      %5287 = vmatmul.mubr.bf16.gmra.mrb[0].mxu0 %v1802
      %v5288 = vpop.f32.mrb[0].mxu0
      %v5289 = vadd.f32 %v5200, %v5288
      %v5290 = vpop.f32.mrb[0].mxu0
      %v5291 = vpop.f32.mrb[0].mxu0
      %v5292 = vadd.f32 %v5200, %v5291
      %v5293 = vpop.f32.mrb[0].mxu0
      %5294 = vmatprep.mubr.bf16.mxu0 0
      %5295 = vmatmul.mubr.bf16.gmra.mrb[0].mxu0 %v1805
      %v5296 = vpop.f32.mrb[0].mxu0
      %v5297 = vadd.f32 %v5200, %v5296
      %v5298 = vpop.f32.mrb[0].mxu0
      %v5299 = vpop.f32.mrb[0].mxu0
      %v5300 = vadd.f32 %v5200, %v5299
      %v5301 = vpop.f32.mrb[0].mxu0
      %5302 = vmatprep.mubr.bf16.mxu0 0
      %5303 = vmatmul.mubr.bf16.gmra.mrb[0].mxu0 %v1808
      %v5304 = vpop.f32.mrb[0].mxu0
      %v5305 = vadd.f32 %v5200, %v5304
      %v5306 = vpop.f32.mrb[0].mxu0
      %v5307 = vpop.f32.mrb[0].mxu0
      %v5308 = vadd.f32 %v5200, %v5307
      %v5309 = vpop.f32.mrb[0].mxu0
      %5310 = vdwg.mxu0
      %v5311 = vtanh.pop %v5249
      %v5312 = vtanh.pop %v5252
      %v5313 = vtanh.pop %v5257
      %v5314 = vtanh.pop %v5260
      %v5315 = vtanh.pop %v5265
      %v5316 = vtanh.pop %v5268
      %v5317 = vtanh.pop %v5273
      %v5318 = vtanh.pop %v5276
      %v5319 = vtanh.pop %v5281
      %v5320 = vtanh.pop %v5284
      %v5321 = vtanh.pop %v5289
      %v5322 = vtanh.pop %v5292
      %v5323 = vtanh.pop %v5297
      %v5324 = vtanh.pop %v5300
      %v5325 = vtanh.pop %v5305
      %v5326 = vtanh.pop %v5308
      %v5327 = vpack.c.bf16 %v5130, %v5127
      %v5328 = vpack.c.bf16 %v5138, %v5135
      %v5329 = vpack.c.bf16 %v5146, %v5143
      %v5330 = vpack.c.bf16 %v5154, %v5151
      %v5331 = vpack.c.bf16 %v5162, %v5159
      %v5332 = vpack.c.bf16 %v5170, %v5167
      %v5333 = vpack.c.bf16 %v5178, %v5175
      %v5334 = vpack.c.bf16 %v5186, %v5183
      %s5335 = scalar_lea.vmem %s9, 48
      %v5336 = vld [vmem:[%s5335] sm:$0xf]
      %v5337 = vld [vmem:[%s5335 + $0x4] sm:$0xf]
      %v5338 = vld [vmem:[%s5335 + $0x8] sm:$0xf]
      %v5339 = vld [vmem:[%s5335 + $0xc] sm:$0xf]
      %v5344 = vunpack.c.l.b16 %v5336
      %v5345 = vunpack.c.l.b16 %v5337
      %v5346 = vunpack.c.l.b16 %v5338
      %v5347 = vunpack.c.l.b16 %v5339
      %v5348 = vpack.c.b16 %v5345, %v5344
      %v5349 = vpack.c.b16 %v5347, %v5346
      %v5353 = vsel %vm1785, %v5327, 0
      %v5356 = vsel %vm1785, %v5328, 0
      %v5359 = vsel %vm1785, %v5329, 0
      %v5362 = vsel %vm1785, %v5330, 0
      %v5365 = vsel %vm1785, %v5331, 0
      %v5368 = vsel %vm1785, %v5332, 0
      %v5371 = vsel %vm1785, %v5333, 0
      %v5374 = vsel %vm1785, %v5334, 0
      %5376 = vmatprep.subr.bf16.mxu0 0
      %5377 = vmatpush1.bf16.msra.mxu0 %v5348
      %5378 = vmatprep.subr.bf16.mxu0 0
      %5379 = vmatpush1.bf16.msra.mxu0 %v5349
      %5380 = vmatprep.subr.bf16.mxu0 0
      %5381 = vmatpush1.bf16.msra.mxu0 0
      %5382 = vmatprep.subr.bf16.mxu0 0
      %5383 = vmatpush1.bf16.msra.mxu0 0
      %5384 = vmatprep.subr.bf16.mxu0 0
      %5385 = vmatpush1.bf16.msra.mxu0 0
      %5386 = vmatprep.subr.bf16.mxu0 0
      %5387 = vmatpush1.bf16.msra.mxu0 0
      %5388 = vmatprep.subr.bf16.mxu0 0
      %5389 = vmatpush1.bf16.msra.mxu0 0
      %5390 = vmatprep.subr.bf16.mxu0 0
      %5391 = vmatpush1.bf16.msra.mxu0 0
      %5392 = vmatprep.subr.bf16.mxu0 0
      %5393 = vmatpush1.bf16.msra.mxu0 0
      %5394 = vmatprep.subr.bf16.mxu0 0
      %5395 = vmatpush1.bf16.msra.mxu0 0
      %5396 = vmatprep.subr.bf16.mxu0 0
      %5397 = vmatpush1.bf16.msra.mxu0 0
      %5398 = vmatprep.subr.bf16.mxu0 0
      %5399 = vmatpush1.bf16.msra.mxu0 0
      %5400 = vmatprep.subr.bf16.mxu0 0
      %5401 = vmatpush1.bf16.msra.mxu0 0
      %5402 = vmatprep.subr.bf16.mxu0 0
      %5403 = vmatpush1.bf16.msra.mxu0 0
      %5404 = vmatprep.subr.bf16.mxu0 0
      %5405 = vmatpush1.bf16.msra.mxu0 0
      %5406 = vmatprep.subr.bf16.mxu0 0
      %5407 = vmatpush1.bf16.msra.mxu0 0
      %5408 = vmatprep.mubr.bf16.mxu0 0
      %5409 = vmatmul.mubr.bf16.gmra.mrb[0].mxu0 %v5353
      %v5410 = vpop.f32.mrb[0].mxu0
      %v5411 = vadd.f32 0.0, %v5410
      %v5412 = vpop.f32.mrb[0].mxu0
      %v5413 = vpop.f32.mrb[0].mxu0
      %v5414 = vadd.f32 0.0, %v5413
      %v5415 = vpop.f32.mrb[0].mxu0
      %5416 = vmatprep.mubr.bf16.mxu0 0
      %5417 = vmatmul.mubr.bf16.gmra.mrb[0].mxu0 %v5356
      %v5418 = vpop.f32.mrb[0].mxu0
      %v5419 = vadd.f32 0.0, %v5418
      %v5420 = vpop.f32.mrb[0].mxu0
      %v5421 = vpop.f32.mrb[0].mxu0
      %v5422 = vadd.f32 0.0, %v5421
      %v5423 = vpop.f32.mrb[0].mxu0
      %5424 = vmatprep.mubr.bf16.mxu0 0
      %5425 = vmatmul.mubr.bf16.gmra.mrb[0].mxu0 %v5359
      %v5426 = vpop.f32.mrb[0].mxu0
      %v5427 = vadd.f32 0.0, %v5426
      %v5428 = vpop.f32.mrb[0].mxu0
      %v5429 = vpop.f32.mrb[0].mxu0
      %v5430 = vadd.f32 0.0, %v5429
      %v5431 = vpop.f32.mrb[0].mxu0
      %5432 = vmatprep.mubr.bf16.mxu0 0
      %5433 = vmatmul.mubr.bf16.gmra.mrb[0].mxu0 %v5362
      %v5434 = vpop.f32.mrb[0].mxu0
      %v5435 = vadd.f32 0.0, %v5434
      %v5436 = vpop.f32.mrb[0].mxu0
      %v5437 = vpop.f32.mrb[0].mxu0
      %v5438 = vadd.f32 0.0, %v5437
      %v5439 = vpop.f32.mrb[0].mxu0
      %5440 = vmatprep.mubr.bf16.mxu0 0
      %5441 = vmatmul.mubr.bf16.gmra.mrb[0].mxu0 %v5365
      %v5442 = vpop.f32.mrb[0].mxu0
      %v5443 = vadd.f32 0.0, %v5442
      %v5444 = vpop.f32.mrb[0].mxu0
      %v5445 = vpop.f32.mrb[0].mxu0
      %v5446 = vadd.f32 0.0, %v5445
      %v5447 = vpop.f32.mrb[0].mxu0
      %5448 = vmatprep.mubr.bf16.mxu0 0
      %5449 = vmatmul.mubr.bf16.gmra.mrb[0].mxu0 %v5368
      %v5450 = vpop.f32.mrb[0].mxu0
      %v5451 = vadd.f32 0.0, %v5450
      %v5452 = vpop.f32.mrb[0].mxu0
      %v5453 = vpop.f32.mrb[0].mxu0
      %v5454 = vadd.f32 0.0, %v5453
      %v5455 = vpop.f32.mrb[0].mxu0
      %5456 = vmatprep.mubr.bf16.mxu0 0
      %5457 = vmatmul.mubr.bf16.gmra.mrb[0].mxu0 %v5371
      %v5458 = vpop.f32.mrb[0].mxu0
      %v5459 = vadd.f32 0.0, %v5458
      %v5460 = vpop.f32.mrb[0].mxu0
      %v5461 = vpop.f32.mrb[0].mxu0
      %v5462 = vadd.f32 0.0, %v5461
      %v5463 = vpop.f32.mrb[0].mxu0
      %5464 = vmatprep.mubr.bf16.mxu0 0
      %5465 = vmatmul.mubr.bf16.gmra.mrb[0].mxu0 %v5374
      %v5466 = vpop.f32.mrb[0].mxu0
      %v5467 = vadd.f32 0.0, %v5466
      %v5468 = vpop.f32.mrb[0].mxu0
      %v5469 = vpop.f32.mrb[0].mxu0
      %v5470 = vadd.f32 0.0, %v5469
      %v5471 = vpop.f32.mrb[0].mxu0
      %5472 = vdwg.mxu0
      %v5473 = vadd.f32 %v5311, %v5411
      %v5474 = vadd.f32 %v5312, %v5414
      %v5475 = vadd.f32 %v5313, %v5419
      %v5476 = vadd.f32 %v5314, %v5422
      %v5477 = vadd.f32 %v5315, %v5427
      %v5478 = vadd.f32 %v5316, %v5430
      %v5479 = vadd.f32 %v5317, %v5435
      %v5480 = vadd.f32 %v5318, %v5438
      %v5481 = vadd.f32 %v5319, %v5443
      %v5482 = vadd.f32 %v5320, %v5446
      %v5483 = vadd.f32 %v5321, %v5451
      %v5484 = vadd.f32 %v5322, %v5454
      %v5485 = vadd.f32 %v5323, %v5459
      %v5486 = vadd.f32 %v5324, %v5462
      %v5487 = vadd.f32 %v5325, %v5467
      %v5488 = vadd.f32 %v5326, %v5470
      %v5489 = vmul.f32 %v5473, 0.17677669
      %v5490 = vmul.f32 %v5474, 0.17677669
      %v5491 = vmul.f32 %v5475, 0.17677669
      %v5492 = vmul.f32 %v5476, 0.17677669
      %v5493 = vmul.f32 %v5477, 0.17677669
      %v5494 = vmul.f32 %v5478, 0.17677669
      %v5495 = vmul.f32 %v5479, 0.17677669
      %v5496 = vmul.f32 %v5480, 0.17677669
      %v5497 = vmul.f32 %v5481, 0.17677669
      %v5498 = vmul.f32 %v5482, 0.17677669
      %v5499 = vmul.f32 %v5483, 0.17677669
      %v5500 = vmul.f32 %v5484, 0.17677669
      %v5501 = vmul.f32 %v5485, 0.17677669
      %v5502 = vmul.f32 %v5486, 0.17677669
      %v5503 = vmul.f32 %v5487, 0.17677669
      %v5504 = vmul.f32 %v5488, 0.17677669
      %v5505 = vpack.c.bf16 %v5490, %v5489
      %v5506 = vpack.c.bf16 %v5492, %v5491
      %v5507 = vpack.c.bf16 %v5494, %v5493
      %v5508 = vpack.c.bf16 %v5496, %v5495
      %v5509 = vpack.c.bf16 %v5498, %v5497
      %v5510 = vpack.c.bf16 %v5500, %v5499
      %v5511 = vpack.c.bf16 %v5502, %v5501
      %v5512 = vpack.c.bf16 %v5504, %v5503
      %v5514 = vsel %vm1785, %v5505, 0
      %v5517 = vsel %vm1785, %v5506, 0
      %v5520 = vsel %vm1785, %v5507, 0
      %v5523 = vsel %vm1785, %v5508, 0
      %v5526 = vsel %vm1785, %v5509, 0
      %v5529 = vsel %vm1785, %v5510, 0
      %v5532 = vsel %vm1785, %v5511, 0
      %v5535 = vsel %vm1785, %v5512, 0
      %v5538 = vsel %vm1785, %v5076, 0
      %v5541 = vsel %vm1785, %v5077, 0
      %v5544 = vsel %vm1785, %v5078, 0
      %v5547 = vsel %vm1785, %v5079, 0
      %v5550 = vsel %vm1785, %v5080, 0
      %v5553 = vsel %vm1785, %v5081, 0
      %v5556 = vsel %vm1785, %v5082, 0
      %v5559 = vsel %vm1785, %v5083, 0
      %5561 = vmatprep.subr.bf16.mxu0 0
      %5562 = vmatpush1.bf16.xpose.msra.mxu0 %v5538
      %5563 = vmatprep.subr.bf16.mxu0 0
      %5564 = vmatpush1.bf16.xpose.msra.mxu0 %v5541
      %5565 = vmatprep.subr.bf16.mxu0 0
      %5566 = vmatpush1.bf16.xpose.msra.mxu0 %v5544
      %5567 = vmatprep.subr.bf16.mxu0 0
      %5568 = vmatpush1.bf16.xpose.msra.mxu0 %v5547
      %5569 = vmatprep.subr.bf16.mxu0 0
      %5570 = vmatpush1.bf16.xpose.msra.mxu0 %v5550
      %5571 = vmatprep.subr.bf16.mxu0 0
      %5572 = vmatpush1.bf16.xpose.msra.mxu0 %v5553
      %5573 = vmatprep.subr.bf16.mxu0 0
      %5574 = vmatpush1.bf16.xpose.msra.mxu0 %v5556
      %5575 = vmatprep.subr.bf16.mxu0 0
      %5576 = vmatpush1.bf16.xpose.msra.mxu0 %v5559
      %5577 = vmatprep.subr.bf16.mxu0 0
      %5578 = vmatpush1.bf16.xpose.msra.mxu0 0
      %5579 = vmatprep.subr.bf16.mxu0 0
      %5580 = vmatpush1.bf16.xpose.msra.mxu0 0
      %5581 = vmatprep.subr.bf16.mxu0 0
      %5582 = vmatpush1.bf16.xpose.msra.mxu0 0
      %5583 = vmatprep.subr.bf16.mxu0 0
      %5584 = vmatpush1.bf16.xpose.msra.mxu0 0
      %5585 = vmatprep.subr.bf16.mxu0 0
      %5586 = vmatpush1.bf16.xpose.msra.mxu0 0
      %5587 = vmatprep.subr.bf16.mxu0 0
      %5588 = vmatpush1.bf16.xpose.msra.mxu0 0
      %5589 = vmatprep.subr.bf16.mxu0 0
      %5590 = vmatpush1.bf16.xpose.msra.mxu0 0
      %5591 = vmatprep.subr.bf16.mxu0 0
      %5592 = vmatpush1.bf16.xpose.msra.mxu0 0
      %5593 = vmatprep.mubr.bf16.mxu0 0
      %5594 = vmatmul.mubr.bf16.gmra.mrb[0].mxu0 %v5514
      %v5595 = vpop.f32.mrb[0].mxu0
      %v5596 = vadd.f32 %v4899, %v5595
      %v5597 = vpop.f32.mrb[0].mxu0
      %v5598 = vpop.f32.mrb[0].mxu0
      %v5599 = vadd.f32 %v4900, %v5598
      %v5600 = vpop.f32.mrb[0].mxu0
      %5601 = vmatprep.mubr.bf16.mxu0 0
      %5602 = vmatmul.mubr.bf16.gmra.mrb[0].mxu0 %v5517
      %v5603 = vpop.f32.mrb[0].mxu0
      %v5604 = vadd.f32 %v4901, %v5603
      %v5605 = vpop.f32.mrb[0].mxu0
      %v5606 = vpop.f32.mrb[0].mxu0
      %v5607 = vadd.f32 %v4902, %v5606
      %v5608 = vpop.f32.mrb[0].mxu0
      %5609 = vmatprep.mubr.bf16.mxu0 0
      %5610 = vmatmul.mubr.bf16.gmra.mrb[0].mxu0 %v5520
      %v5611 = vpop.f32.mrb[0].mxu0
      %v5612 = vadd.f32 %v4903, %v5611
      %v5613 = vpop.f32.mrb[0].mxu0
      %v5614 = vpop.f32.mrb[0].mxu0
      %v5615 = vadd.f32 %v4904, %v5614
      %v5616 = vpop.f32.mrb[0].mxu0
      %5617 = vmatprep.mubr.bf16.mxu0 0
      %5618 = vmatmul.mubr.bf16.gmra.mrb[0].mxu0 %v5523
      %v5619 = vpop.f32.mrb[0].mxu0
      %v5620 = vadd.f32 %v4905, %v5619
      %v5621 = vpop.f32.mrb[0].mxu0
      %v5622 = vpop.f32.mrb[0].mxu0
      %v5623 = vadd.f32 %v4906, %v5622
      %v5624 = vpop.f32.mrb[0].mxu0
      %5625 = vmatprep.mubr.bf16.mxu0 0
      %5626 = vmatmul.mubr.bf16.gmra.mrb[0].mxu0 %v5526
      %v5627 = vpop.f32.mrb[0].mxu0
      %v5628 = vadd.f32 %v4907, %v5627
      %v5629 = vpop.f32.mrb[0].mxu0
      %v5630 = vpop.f32.mrb[0].mxu0
      %v5631 = vadd.f32 %v4908, %v5630
      %v5632 = vpop.f32.mrb[0].mxu0
      %5633 = vmatprep.mubr.bf16.mxu0 0
      %5634 = vmatmul.mubr.bf16.gmra.mrb[0].mxu0 %v5529
      %v5635 = vpop.f32.mrb[0].mxu0
      %v5636 = vadd.f32 %v4909, %v5635
      %v5637 = vpop.f32.mrb[0].mxu0
      %v5638 = vpop.f32.mrb[0].mxu0
      %v5639 = vadd.f32 %v4910, %v5638
      %v5640 = vpop.f32.mrb[0].mxu0
      %5641 = vmatprep.mubr.bf16.mxu0 0
      %5642 = vmatmul.mubr.bf16.gmra.mrb[0].mxu0 %v5532
      %v5643 = vpop.f32.mrb[0].mxu0
      %v5644 = vadd.f32 %v4911, %v5643
      %v5645 = vpop.f32.mrb[0].mxu0
      %v5646 = vpop.f32.mrb[0].mxu0
      %v5647 = vadd.f32 %v4912, %v5646
      %v5648 = vpop.f32.mrb[0].mxu0
      %5649 = vmatprep.mubr.bf16.mxu0 0
      %5650 = vmatmul.mubr.bf16.gmra.mrb[0].mxu0 %v5535
      %v5651 = vpop.f32.mrb[0].mxu0
      %v5652 = vadd.f32 %v4913, %v5651
      %v5653 = vpop.f32.mrb[0].mxu0
      %v5654 = vpop.f32.mrb[0].mxu0
      %v5655 = vadd.f32 %v4914, %v5654
      %v5656 = vpop.f32.mrb[0].mxu0
      %5657 = vdwg.mxu0
      %5658 = vst [vmem:[%s576 + $0x18] sm:$0xff] %v5596
      %5659 = vst [vmem:[%s576 + $0x38] sm:$0xff] %v5599
      %5660 = vst [vmem:[%s576 + $0x58] sm:$0xff] %v5604
      %5661 = vst [vmem:[%s576 + $0x78] sm:$0xff] %v5607
      %5662 = vst [vmem:[%s576 + $0x98] sm:$0xff] %v5612
      %5663 = vst [vmem:[%s576 + $0xb8] sm:$0xff] %v5615
      %5664 = vst [vmem:[%s576 + $0xd8] sm:$0xff] %v5620
      %5665 = vst [vmem:[%s576 + $0xf8] sm:$0xff] %v5623
      %5666 = vst [vmem:[%s576 + $0x118] sm:$0xff] %v5628
      %5667 = vst [vmem:[%s576 + $0x138] sm:$0xff] %v5631
      %5668 = vst [vmem:[%s576 + $0x158] sm:$0xff] %v5636
      %5669 = vst [vmem:[%s576 + $0x178] sm:$0xff] %v5639
      %5670 = vst [vmem:[%s576 + $0x198] sm:$0xff] %v5644
      %5671 = vst [vmem:[%s576 + $0x1b8] sm:$0xff] %v5647
      %5672 = vst [vmem:[%s576 + $0x1d8] sm:$0xff] %v5652
      %5673 = vst [vmem:[%s576 + $0x1f8] sm:$0xff] %v5655
      %5674 = vmax.xlane.f32.xlu0 %v5596
      %v5675 = vpop.xlane.xlu0 %5674
      %5676 = vmax.xlane.f32.xlu0 %v5599
      %v5677 = vpop.xlane.xlu0 %5676
      %5678 = vmax.xlane.f32.xlu0 %v5604
      %v5679 = vpop.xlane.xlu0 %5678
      %5680 = vmax.xlane.f32.xlu0 %v5607
      %v5681 = vpop.xlane.xlu0 %5680
      %5682 = vmax.xlane.f32.xlu0 %v5612
      %v5683 = vpop.xlane.xlu0 %5682
      %5684 = vmax.xlane.f32.xlu0 %v5615
      %v5685 = vpop.xlane.xlu0 %5684
      %5686 = vmax.xlane.f32.xlu0 %v5620
      %v5687 = vpop.xlane.xlu0 %5686
      %5688 = vmax.xlane.f32.xlu0 %v5623
      %v5689 = vpop.xlane.xlu0 %5688
      %5690 = vmax.xlane.f32.xlu0 %v5628
      %v5691 = vpop.xlane.xlu0 %5690
      %5692 = vmax.xlane.f32.xlu0 %v5631
      %v5693 = vpop.xlane.xlu0 %5692
      %5694 = vmax.xlane.f32.xlu0 %v5636
      %v5695 = vpop.xlane.xlu0 %5694
      %5696 = vmax.xlane.f32.xlu0 %v5639
      %v5697 = vpop.xlane.xlu0 %5696
      %5698 = vmax.xlane.f32.xlu0 %v5644
      %v5699 = vpop.xlane.xlu0 %5698
      %5700 = vmax.xlane.f32.xlu0 %v5647
      %v5701 = vpop.xlane.xlu0 %5700
      %5702 = vmax.xlane.f32.xlu0 %v5652
      %v5703 = vpop.xlane.xlu0 %5702
      %5704 = vmax.xlane.f32.xlu0 %v5655
      %v5705 = vpop.xlane.xlu0 %5704
      %v5706 = vsub.f32 %v5596, %v5675
      %v5707 = vsub.f32 %v5599, %v5677
      %v5708 = vsub.f32 %v5604, %v5679
      %v5709 = vsub.f32 %v5607, %v5681
      %v5710 = vsub.f32 %v5612, %v5683
      %v5711 = vsub.f32 %v5615, %v5685
      %v5712 = vsub.f32 %v5620, %v5687
      %v5713 = vsub.f32 %v5623, %v5689
      %v5714 = vsub.f32 %v5628, %v5691
      %v5715 = vsub.f32 %v5631, %v5693
      %v5716 = vsub.f32 %v5636, %v5695
      %v5717 = vsub.f32 %v5639, %v5697
      %v5718 = vsub.f32 %v5644, %v5699
      %v5719 = vsub.f32 %v5647, %v5701
      %v5720 = vsub.f32 %v5652, %v5703
      %v5721 = vsub.f32 %v5655, %v5705
      %v5722 = vmul.f32 %v5706, 1.442695
      %v5723 = vpow.pop %v5722
      %v5724 = vmul.f32 %v5707, 1.442695
      %v5725 = vpow.pop %v5724
      %v5726 = vmul.f32 %v5708, 1.442695
      %v5727 = vpow.pop %v5726
      %v5728 = vmul.f32 %v5709, 1.442695
      %v5729 = vpow.pop %v5728
      %v5730 = vmul.f32 %v5710, 1.442695
      %v5731 = vpow.pop %v5730
      %v5732 = vmul.f32 %v5711, 1.442695
      %v5733 = vpow.pop %v5732
      %v5734 = vmul.f32 %v5712, 1.442695
      %v5735 = vpow.pop %v5734
      %v5736 = vmul.f32 %v5713, 1.442695
      %v5737 = vpow.pop %v5736
      %v5738 = vmul.f32 %v5714, 1.442695
      %v5739 = vpow.pop %v5738
      %v5740 = vmul.f32 %v5715, 1.442695
      %v5741 = vpow.pop %v5740
      %v5742 = vmul.f32 %v5716, 1.442695
      %v5743 = vpow.pop %v5742
      %v5744 = vmul.f32 %v5717, 1.442695
      %v5745 = vpow.pop %v5744
      %v5746 = vmul.f32 %v5718, 1.442695
      %v5747 = vpow.pop %v5746
      %v5748 = vmul.f32 %v5719, 1.442695
      %v5749 = vpow.pop %v5748
      %v5750 = vmul.f32 %v5720, 1.442695
      %v5751 = vpow.pop %v5750
      %v5752 = vmul.f32 %v5721, 1.442695
      %v5753 = vpow.pop %v5752
      %5754 = vadd.xlane.f32.xlu0 %v5723
      %v5755 = vpop.xlane.xlu0 %5754
      %5756 = vadd.xlane.f32.xlu0 %v5725
      %v5757 = vpop.xlane.xlu0 %5756
      %5758 = vadd.xlane.f32.xlu0 %v5727
      %v5759 = vpop.xlane.xlu0 %5758
      %5760 = vadd.xlane.f32.xlu0 %v5729
      %v5761 = vpop.xlane.xlu0 %5760
      %5762 = vadd.xlane.f32.xlu0 %v5731
      %v5763 = vpop.xlane.xlu0 %5762
      %5764 = vadd.xlane.f32.xlu0 %v5733
      %v5765 = vpop.xlane.xlu0 %5764
      %5766 = vadd.xlane.f32.xlu0 %v5735
      %v5767 = vpop.xlane.xlu0 %5766
      %5768 = vadd.xlane.f32.xlu0 %v5737
      %v5769 = vpop.xlane.xlu0 %5768
      %5770 = vadd.xlane.f32.xlu0 %v5739
      %v5771 = vpop.xlane.xlu0 %5770
      %5772 = vadd.xlane.f32.xlu0 %v5741
      %v5773 = vpop.xlane.xlu0 %5772
      %5774 = vadd.xlane.f32.xlu0 %v5743
      %v5775 = vpop.xlane.xlu0 %5774
      %5776 = vadd.xlane.f32.xlu0 %v5745
      %v5777 = vpop.xlane.xlu0 %5776
      %5778 = vadd.xlane.f32.xlu0 %v5747
      %v5779 = vpop.xlane.xlu0 %5778
      %5780 = vadd.xlane.f32.xlu0 %v5749
      %v5781 = vpop.xlane.xlu0 %5780
      %5782 = vadd.xlane.f32.xlu0 %v5751
      %v5783 = vpop.xlane.xlu0 %5782
      %5784 = vadd.xlane.f32.xlu0 %v5753
      %v5785 = vpop.xlane.xlu0 %5784
      %v5786 = vlog2.pop %v5755
      %v5787 = vmul.f32 %v5786, 0.6931472
      %v5788 = vlog2.pop %v5757
      %v5789 = vmul.f32 %v5788, 0.6931472
      %v5790 = vlog2.pop %v5759
      %v5791 = vmul.f32 %v5790, 0.6931472
      %v5792 = vlog2.pop %v5761
      %v5793 = vmul.f32 %v5792, 0.6931472
      %v5794 = vlog2.pop %v5763
      %v5795 = vmul.f32 %v5794, 0.6931472
      %v5796 = vlog2.pop %v5765
      %v5797 = vmul.f32 %v5796, 0.6931472
      %v5798 = vlog2.pop %v5767
      %v5799 = vmul.f32 %v5798, 0.6931472
      %v5800 = vlog2.pop %v5769
      %v5801 = vmul.f32 %v5800, 0.6931472
      %v5802 = vlog2.pop %v5771
      %v5803 = vmul.f32 %v5802, 0.6931472
      %v5804 = vlog2.pop %v5773
      %v5805 = vmul.f32 %v5804, 0.6931472
      %v5806 = vlog2.pop %v5775
      %v5807 = vmul.f32 %v5806, 0.6931472
      %v5808 = vlog2.pop %v5777
      %v5809 = vmul.f32 %v5808, 0.6931472
      %v5810 = vlog2.pop %v5779
      %v5811 = vmul.f32 %v5810, 0.6931472
      %v5812 = vlog2.pop %v5781
      %v5813 = vmul.f32 %v5812, 0.6931472
      %v5814 = vlog2.pop %v5783
      %v5815 = vmul.f32 %v5814, 0.6931472
      %v5816 = vlog2.pop %v5785
      %v5817 = vmul.f32 %v5816, 0.6931472
      %v5818 = vadd.f32 %v5787, %v5675
      %v5819 = vadd.f32 %v5789, %v5677
      %v5820 = vadd.f32 %v5791, %v5679
      %v5821 = vadd.f32 %v5793, %v5681
      %v5822 = vadd.f32 %v5795, %v5683
      %v5823 = vadd.f32 %v5797, %v5685
      %v5824 = vadd.f32 %v5799, %v5687
      %v5825 = vadd.f32 %v5801, %v5689
      %v5826 = vadd.f32 %v5803, %v5691
      %v5827 = vadd.f32 %v5805, %v5693
      %v5828 = vadd.f32 %v5807, %v5695
      %v5829 = vadd.f32 %v5809, %v5697
      %v5830 = vadd.f32 %v5811, %v5699
      %v5831 = vadd.f32 %v5813, %v5701
      %v5832 = vadd.f32 %v5815, %v5703
      %v5833 = vadd.f32 %v5817, %v5705
      %v5834 = vsub.f32 %v5818, %v5596
      %v5835 = vsub.f32 %v5819, %v5599
      %v5836 = vsub.f32 %v5820, %v5604
      %v5837 = vsub.f32 %v5821, %v5607
      %v5838 = vsub.f32 %v5822, %v5612
      %v5839 = vsub.f32 %v5823, %v5615
      %v5840 = vsub.f32 %v5824, %v5620
      %v5841 = vsub.f32 %v5825, %v5623
      %v5842 = vsub.f32 %v5826, %v5628
      %v5843 = vsub.f32 %v5827, %v5631
      %v5844 = vsub.f32 %v5828, %v5636
      %v5845 = vsub.f32 %v5829, %v5639
      %v5846 = vsub.f32 %v5830, %v5644
      %v5847 = vsub.f32 %v5831, %v5647
      %v5848 = vsub.f32 %v5832, %v5652
      %v5849 = vsub.f32 %v5833, %v5655
      %v5850 = vmul.f32 %v5834, %v4835
      %v5851 = vmul.f32 %v5835, %v4836
      %v5852 = vmul.f32 %v5836, %v4837
      %v5853 = vmul.f32 %v5837, %v4838
      %v5854 = vmul.f32 %v5838, %v4839
      %v5855 = vmul.f32 %v5839, %v4840
      %v5856 = vmul.f32 %v5840, %v4841
      %v5857 = vmul.f32 %v5841, %v4842
      %v5858 = vmul.f32 %v5842, %v4843
      %v5859 = vmul.f32 %v5843, %v4844
      %v5860 = vmul.f32 %v5844, %v4845
      %v5861 = vmul.f32 %v5845, %v4846
      %v5862 = vmul.f32 %v5846, %v4847
      %v5863 = vmul.f32 %v5847, %v4848
      %v5864 = vmul.f32 %v5848, %v4849
      %v5865 = vmul.f32 %v5849, %v4850
      %v5866 = vadd.f32 %v5850, %v5851
      %v5867 = vadd.f32 %v5866, %v5852
      %v5868 = vadd.f32 %v5867, %v5853
      %v5869 = vadd.f32 %v5868, %v5854
      %v5870 = vadd.f32 %v5869, %v5855
      %v5871 = vadd.f32 %v5870, %v5856
      %v5872 = vadd.f32 %v5871, %v5857
      %v5873 = vadd.f32 %v5872, %v5858
      %v5874 = vadd.f32 %v5873, %v5859
      %v5875 = vadd.f32 %v5874, %v5860
      %v5876 = vadd.f32 %v5875, %v5861
      %v5877 = vadd.f32 %v5876, %v5862
      %v5878 = vadd.f32 %v5877, %v5863
      %v5879 = vadd.f32 %v5878, %v5864
      %v5880 = vadd.f32 %v5879, %v5865
      %5881 = vadd.xlane.f32.xlu0 %v5880
      %v5882 = vpop.xlane.xlu0 %5881
      %v5883 = vrot.slane %v5882, 4
      %v5884 = vadd.f32 %v5882, %v5883
      %v5885 = vrot.slane %v5884, 2
      %v5886 = vadd.f32 %v5884, %v5885
      %v5887 = vrot.slane %v5886, 1
      %v5888 = vadd.f32 %v5886, %v5887
      %s5889 = vtos %v5888
      %v5890 = vstv %s5889
      %v5891 = vadd.f32 %v4756, %v5890
      %v5892 = vadd.f32 %v4835, %v4836
      %v5893 = vadd.f32 %v5892, %v4837
      %v5894 = vadd.f32 %v5893, %v4838
      %v5895 = vadd.f32 %v5894, %v4839
      %v5896 = vadd.f32 %v5895, %v4840
      %v5897 = vadd.f32 %v5896, %v4841
      %v5898 = vadd.f32 %v5897, %v4842
      %v5899 = vadd.f32 %v5898, %v4843
      %v5900 = vadd.f32 %v5899, %v4844
      %v5901 = vadd.f32 %v5900, %v4845
      %v5902 = vadd.f32 %v5901, %v4846
      %v5903 = vadd.f32 %v5902, %v4847
      %v5904 = vadd.f32 %v5903, %v4848
      %v5905 = vadd.f32 %v5904, %v4849
      %v5906 = vadd.f32 %v5905, %v4850
      %5907 = vadd.xlane.f32.xlu0 %v5906
      %v5908 = vpop.xlane.xlu0 %5907
      %v5909 = vrot.slane %v5908, 4
      %v5910 = vadd.f32 %v5908, %v5909
      %v5911 = vrot.slane %v5910, 2
      %v5912 = vadd.f32 %v5910, %v5911
      %v5913 = vrot.slane %v5912, 1
      %v5914 = vadd.f32 %v5912, %v5913
      %s5915 = vtos %v5914
      %v5916 = vstv %s5915
      %v5917 = vadd.f32 %v4782, %v5916
      %v5918 = vld [vmem:[%s580] sm:$0x1]
      %v5919 = vadd.f32 %v5918, %v5891
      %vm5920 = vcmask 0
      %5921 = vst.msk [vmem:[%s580] sm:$0x1] %vm5920, %v5919
      %v5922 = vld [vmem:[%s583] sm:$0x1]
      %v5923 = vadd.f32 %v5922, %v5917
      %5924 = vst.msk [vmem:[%s583] sm:$0x1] %vm5920, %v5923
      %s5925 = smul.u32 16, %s29
      %p5926 = scmp.lt.s32.totalorder %s28, 1
      %s5927 = scalar_select %p5926, %s28, 1
      %p5928 = scmp.lt.s32.totalorder %s5925, 15
      %s5929 = scalar_select %p5928, %s5925, 15
      %s5930 = smul.addr %s5929, 4
      %s5931 = smul.addr %s5927, 64
      %s5932 = sadd.s32 %s5930, %s5931
      %s5933 = smul.addr %s5932, 8
      %s5934 = scalar_lea.vmem %s10, %s5933
      %p5935 = scmp.lt.s32.totalorder %s28, 1
      %s5936 = scalar_select %p5935, %s28, 1
      %s5937 = scalar_lea.vmem %s11, %s5936
      %p5938 = scmp.lt.s32.totalorder %s28, 1
      %s5939 = scalar_select %p5938, %s28, 1
      %s5940 = scalar_lea.vmem %s12, %s5939
      // Predicated region
      $region65: #{full_gold_conditional_forward.1} parent=59 // pred_check
        %p5941 = pneg %p297
      $region66: #{full_gold_conditional_forward.1} parent=59 // pred_check_branch
        %5943 = sbr.rel (%p5941) target = $region68
      $region67: #{full_gold_conditional_forward.1} parent=59 // pred_region
        %s5944 = smul.u32 16, %s29
      $region68: #{full_gold_conditional_forward.1} parent=59 // pred_fallthru
        _
      // Predicated region
      $region69: #{full_gold_conditional_forward.1} parent=59 // pred_check
        %p5945 = pneg %p323
      $region70: #{full_gold_conditional_forward.1} parent=59 // pred_check_branch
        %5947 = sbr.rel (%p5945) target = $region72
      $region71: #{full_gold_conditional_forward.1} parent=59 // pred_region
        _
      $region72: #{full_gold_conditional_forward.1} parent=59 // pred_fallthru
        _
      // Predicated region
      $region73: #{full_gold_conditional_forward.1} parent=59 // pred_check
        %p5948 = pneg %p349
      $region74: #{full_gold_conditional_forward.1} parent=59 // pred_check_branch
        %5950 = sbr.rel (%p5948) target = $region76
      $region75: #{full_gold_conditional_forward.1} parent=59 // pred_region
        _
      $region76: #{full_gold_conditional_forward.1} parent=59 // pred_fallthru
        _
    $region60: #{full_gold_conditional_forward.1} parent=5 // pred_fallthru
      _
    %p5951 = scmp.le.s32.totalorder 2, %s19
    // Predicated region
    $region77: #{full_gold_conditional_forward.1} parent=5 // pred_check
      %p5952 = pneg %p5951
    $region78: #{full_gold_conditional_forward.1} parent=5 // pred_check_branch
      %5954 = sbr.rel (%p5952) target = $region80
    $region79: #{full_gold_conditional_forward.1} parent=5 // pred_region
      %s5955 = ssub.s32 %s19, 2
      // Predicated region
      $region81: #{full_gold_conditional_forward.1} parent=79 // pred_check
        %p5956 = pneg %p303
      $region82: #{full_gold_conditional_forward.1} parent=79 // pred_check_branch
        %5958 = sbr.rel (%p5956) target = $region84
      $region83: #{full_gold_conditional_forward.1} parent=79 // pred_region
        %s5959 = smul.u32 16, %s31
        %p5960 = scmp.lt.s32.totalorder %s30, 1
        %s5961 = scalar_select %p5960, %s30, 1
        %p5962 = scmp.lt.s32.totalorder %s5959, 15
        %s5963 = scalar_select %p5962, %s5959, 15
        %s5964 = smul.addr %s5963, 4
        %s5965 = smul.addr %s5961, 64
        %s5966 = sadd.s32 %s5964, %s5965
        %s5967 = smul.addr %s5966, 8
        %s5968 = scalar_lea.vmem %s10, %s5967
      $region84: #{full_gold_conditional_forward.1} parent=79 // pred_fallthru
        _
      // Predicated region
      $region85: #{full_gold_conditional_forward.1} parent=79 // pred_check
        %p5969 = pneg %p329
      $region86: #{full_gold_conditional_forward.1} parent=79 // pred_check_branch
        %5971 = sbr.rel (%p5969) target = $region88
      $region87: #{full_gold_conditional_forward.1} parent=79 // pred_region
        %p5972 = scmp.lt.s32.totalorder %s30, 1
        %s5973 = scalar_select %p5972, %s30, 1
        %s5974 = scalar_lea.vmem %s11, %s5973
      $region88: #{full_gold_conditional_forward.1} parent=79 // pred_fallthru
        _
      // Predicated region
      $region89: #{full_gold_conditional_forward.1} parent=79 // pred_check
        %p5975 = pneg %p355
      $region90: #{full_gold_conditional_forward.1} parent=79 // pred_check_branch
        %5977 = sbr.rel (%p5975) target = $region92
      $region91: #{full_gold_conditional_forward.1} parent=79 // pred_region
        %p5978 = scmp.lt.s32.totalorder %s30, 1
        %s5979 = scalar_select %p5978, %s30, 1
        %s5980 = scalar_lea.vmem %s12, %s5979
      $region92: #{full_gold_conditional_forward.1} parent=79 // pred_fallthru
        _
    $region80: #{full_gold_conditional_forward.1} parent=5 // pred_fallthru
      _
  $region6: #{full_gold_conditional_forward.1} parent=0 // loop_footer
    %s23 = sadd.s32 1, %s19
  $region7: #{full_gold_conditional_forward.1} parent=0 // loop_footer_branch
    %18 = sbr.rel target = $region3
  $region8: #{full_gold_conditional_forward.1} parent=0 // loop_exit
    _

</llo_original>
